<compile_context>
chip_gen: v7x
topology: tpu7x:2x2x1
jax: 0.10.0
libtpu: 0.0.40
codegen_flags: <defaults>
</compile_context>

<pallas_src>
import jax
import jax.numpy as jnp
from jax import lax
from jax.experimental import pallas as pl
from jax.experimental.pallas import tpu as pltpu

# Small, module-consistent sizes.
H = 32   # hidden_dim
E = 32   # embedding_dim
L = 8    # sequence length (all sequences full length)
B = 2    # batch size


def _sigmoid(x):
  return 1.0 / (1.0 + jnp.exp(-x))


def _softmax_lastdim(x):
  m = jnp.max(x, axis=-1, keepdims=True)
  e = jnp.exp(x - m)
  return e / jnp.sum(e, axis=-1, keepdims=True)


# ------------------------- Fused PointerNet kernel ----------------------------

def pointer_net_kernel(emb_ref, msk_ref, h0_ref, c0_ref, in0_ref,
                       enc_w_ih_ref, enc_w_hh_ref, enc_b_ref,
                       w_ctx_ref, b_ctx_ref,
                       dec_w_ih_ref, dec_w_hh_ref, dec_b_ref,
                       w_ht_ref, b_in_ref, v_ref, w_out_h_ref, b_out_ref,
                       alpha_out_ref, attn_out_ref, ptr_out_ref):
  """Encoder LSTM + pointer decoder (all L steps, batched over B), fused."""
  Bn, Ln, En = emb_ref.shape
  Hd = h0_ref.shape[-1]
  G = 4 * Hd

  emb3 = emb_ref[...]                 # (B, L, E)
  msk = msk_ref[...]                  # (B, L)
  h = h0_ref[...]                     # (B, H)  encoder h0
  c = c0_ref[...]                     # (B, H)  encoder c0

  enc_w_hh = enc_w_hh_ref[...]        # (H, 4H)
  dec_w_hh = dec_w_hh_ref[...]        # (H, 4H)
  dec_b = dec_b_ref[...]              # (1, 4H)
  w_ht = w_ht_ref[...]                # (H, 2H)  [att.input_linear | hidden_out recurrent half]
  b_in = b_in_ref[...]                # (1, H)
  v = v_ref[...]                      # (1, H)
  b_out = b_out_ref[...]              # (1, H)

  # ---- Hoisted input->gate projections (single large-M matmuls, off the
  #      serial recurrences). ----
  emb_flat = emb3.reshape(Bn * Ln, En)                                    # (B*L, E)
  enc_xg3 = (jnp.dot(emb_flat, enc_w_ih_ref[...],
                     preferred_element_type=jnp.float32)
             + enc_b_ref[...]).reshape(Bn, Ln, G)                         # (B, L, 4H)
  dec_xg3 = jnp.dot(emb_flat, dec_w_ih_ref[...],
                    preferred_element_type=jnp.float32).reshape(Bn, Ln, G)

  # ---- Encoder: unrolled single-layer LSTM, 1 MXU op per step. ----
  step_iota3 = lax.broadcasted_iota(jnp.int32, (Bn, Ln, Hd), 1)
  enc3 = jnp.zeros((Bn, Ln, Hd), jnp.float32)
  for t in range(Ln):                 # fully unrolled, static trip count
    gates = enc_xg3[:, t, :] + jnp.dot(h, enc_w_hh,
                                       preferred_element_type=jnp.float32)
    sig = _sigmoid(gates)
    th = jnp.tanh(gates)
    i_g = sig[:, 0 * Hd:1 * Hd]
    f_g = sig[:, 1 * Hd:2 * Hd]
    g_g = th[:, 2 * Hd:3 * Hd]
    o_g = sig[:, 3 * Hd:4 * Hd]
    c = f_g * c + i_g * g_g
    h = o_g * jnp.tanh(c)
    enc3 = jnp.where(step_iota3 == t, h[:, None, :], enc3)   # register accumulate

  # ---- Context projections, hoisted out of the decode loop (stacked matmuls). ----
  enc_flat = enc3.reshape(Bn * Ln, Hd)
  ctxp_flat = (jnp.dot(enc_flat, w_ctx_ref[...],
                       preferred_element_type=jnp.float32) + b_ctx_ref[...])
  ctxp3 = ctxp_flat.reshape(Bn, Ln, Hd)            # Conv1d(k=1) context projection
  # hidden_out's attention half pre-applied to the context:
  ctxoh3 = jnp.dot(ctxp_flat, w_out_h_ref[...],
                   preferred_element_type=jnp.float32).reshape(Bn, Ln, Hd)

  # ---- Decoder: batched over B, all L steps in this invocation. ----
  col_iota = lax.broadcasted_iota(jnp.int32, (Bn, Ln), 1)
  row_iota3 = lax.broadcasted_iota(jnp.int32, (Bn, Ln, Ln), 1)

  # Step-0 input gates from decoder_input0 (broadcasts over batch).
  xg = jnp.dot(in0_ref[...], dec_w_ih_ref[...],
               preferred_element_type=jnp.float32)                         # (1, 4H)

  alpha_acc = jnp.zeros((Bn, Ln, Ln), jnp.float32)
  attn_acc = jnp.zeros((Bn, Ln, Ln), jnp.float32)
  ptr_acc = jnp.zeros((Bn, Ln), jnp.int32)

  for t in range(Ln):                 # fully unrolled, static trip count
    # ---- LSTM cell (gate order i, f, g, o); x@W_ih was precomputed. ----
    gates = xg + jnp.dot(h, dec_w_hh, preferred_element_type=jnp.float32) + dec_b
    sig = _sigmoid(gates)
    th = jnp.tanh(gates)
    i_g = sig[:, 0 * Hd:1 * Hd]
    f_g = sig[:, 1 * Hd:2 * Hd]
    g_g = th[:, 2 * Hd:3 * Hd]
    o_g = sig[:, 3 * Hd:4 * Hd]
    c = f_g * c + i_g * g_g
    h_t = o_g * jnp.tanh(c)                                                # (B, H)

    # ---- Fused h_t projection: [attention input_linear | hidden_out recurrent]. ----
    proj = jnp.dot(h_t, w_ht, preferred_element_type=jnp.float32)           # (B, 2H)
    inp_proj = proj[:, 0:Hd] + b_in                                         # (B, H)
    outr = proj[:, Hd:2 * Hd]                                               # (B, H)

    # ---- Additive attention (VPU multiply + reduces; MXU-free). ----
    t_act = jnp.tanh(inp_proj[:, None, :] + ctxp3)                          # (B, L, H)
    att = jnp.sum(v[None, :, :] * t_act, axis=-1)                           # (B, L)
    attn = _softmax_lastdim(att)                    # pre-mask softmax (reference)
    att_m = jnp.where(msk == 0.0, -jnp.inf, att)
    alpha = _softmax_lastdim(att_m)                 # post-mask softmax

    # ---- hidden_out: tanh(W_out . [hidden_state ; h_t] + b); attention half
    #      folded into ctxoh3 via the alpha-weighted sum. ----
    h = jnp.tanh(jnp.sum(alpha[:, :, None] * ctxoh3, axis=1) + outr + b_out)

    # ---- Pointer selection (first argmax of masked alpha), mask update, and
    #      next-step input-gate gather (VPU select + reduce, off the MXU). ----
    masked = alpha * msk
    m_val = jnp.max(masked, axis=-1, keepdims=True)
    ptr = jnp.min(jnp.where(masked == m_val, col_iota, Ln),
                  axis=-1, keepdims=True)                                   # (B, 1)
    one_hot = (col_iota == ptr).astype(jnp.float32)                         # (B, L)
    msk = msk * (1.0 - one_hot)
    xg = jnp.sum(one_hot[:, :, None] * dec_xg3, axis=1)                     # (B, 4H)

    # ---- accumulate per-step results in registers; store once at the end. ----
    alpha_acc = jnp.where(row_iota3 == t, alpha[:, None, :], alpha_acc)
    attn_acc = jnp.where(row_iota3 == t, attn[:, None, :], attn_acc)
    ptr_acc = jnp.where(col_iota == t, ptr, ptr_acc)

  alpha_out_ref[...] = alpha_acc
  attn_out_ref[...] = attn_acc
  ptr_out_ref[...] = ptr_acc


# ------------------------------ Forward ---------------------------------------

@jax.jit
def pointer_net_forward(embedded, masks, params, h0, c0):
  Bn, Ln, En = embedded.shape
  Hn = params['enc_w_hh'].shape[0]

  # Weight prep (pure parameter reshuffling, done once per call in XLA):
  w_out_h = params['w_out'][:Hn, :]         # acts on attention hidden_state
  w_out_r = params['w_out'][Hn:, :]         # acts on recurrent h_t
  # Fuse the two h_t-consuming projections into one (H, 2H) weight so the
  # kernel runs a single matmul per decode step on h_t.
  w_ht_cat = jnp.concatenate([params['att_w_in'], w_out_r], axis=1)   # (H, 2H)
  in0 = params['decoder_input0'].reshape(1, En)

  def vspec():
    return pl.BlockSpec(memory_space=pltpu.MemorySpace.VMEM)

  alphas, attns, ptrs = pl.pallas_call(
      pointer_net_kernel,
      out_shape=(jax.ShapeDtypeStruct((Bn, Ln, Ln), jnp.float32),
                 jax.ShapeDtypeStruct((Bn, Ln, Ln), jnp.float32),
                 jax.ShapeDtypeStruct((Bn, Ln), jnp.int32)),
      in_specs=[vspec() for _ in range(18)],
      out_specs=(vspec(), vspec(), vspec()),
  )(embedded, masks, h0, c0, in0,
    params['enc_w_ih'], params['enc_w_hh'], params['enc_b'],
    params['att_w_ctx'], params['att_b_ctx'],
    params['dec_w_ih'], params['dec_w_hh'], params['dec_b'],
    w_ht_cat, params['att_b_in'], params['att_v'],
    w_out_h, params['b_out'])

  return alphas, ptrs, attns


# --------------------------- Parameter init -----------------------------------

def init_params(key):
  keys = jax.random.split(key, 16)

  def u(k, shape, a=0.1):
    return jax.random.uniform(k, shape, jnp.float32, -a, a)

  params = dict(
      # Encoder LSTM (weights stored (in, 4H); gate order i,f,g,o; b = b_ih+b_hh)
      enc_w_ih=u(keys[0], (E, 4 * H)),
      enc_w_hh=u(keys[1], (H, 4 * H)),
      enc_b=u(keys[2], (1, 4 * H)),
      # Decoder manual LSTM cell
      dec_w_ih=u(keys[3], (E, 4 * H)),
      dec_w_hh=u(keys[4], (H, 4 * H)),
      dec_b=u(keys[5], (1, 4 * H)),
      # Attention
      att_w_in=u(keys[6], (H, H)),
      att_b_in=u(keys[7], (1, H)),
      att_w_ctx=u(keys[8], (H, H)),      # Conv1d(H, H, 1) weight, channels-last
      att_b_ctx=u(keys[9], (1, H)),
      att_v=jax.random.uniform(keys[10], (1, H), jnp.float32, -1.0, 1.0),
      # hidden_out: Linear(2H, H)
      w_out=u(keys[11], (2 * H, H)),
      b_out=u(keys[12], (1, H)),
      # decoder_input0
      decoder_input0=jax.random.uniform(keys[13], (E,), jnp.float32, -1.0, 1.0),
  )
  return params, keys[14], keys[15]


if __name__ == "__main__":
  key = jax.random.PRNGKey(0)
  kp, kx = jax.random.split(key, 2)
  params, kh0, kc0 = init_params(kp)

  embedded = jax.random.normal(kx, (B, L, E), jnp.float32)   # embedded inputs
  masks = jnp.ones((B, L), jnp.float32)                      # all positions valid
  # Encoder.init_hidden: uniform(-1, 1) hidden state
  h0 = jax.random.uniform(kh0, (B, H), jnp.float32, -1.0, 1.0)
  c0 = jax.random.uniform(kc0, (B, H), jnp.float32, -1.0, 1.0)

  outputs, pointers, atts = pointer_net_forward(embedded, masks, params, h0, c0)
  jax.block_until_ready((outputs, pointers, atts))
  print("KERNEL_OK")
</pallas_src>

<mosaic_0001>
module attributes {stable_mosaic.version = 11 : i64} {
  func.func @pointer_net_kernel(%arg0: memref<2x8x32xf32, #tpu.memory_space<vmem>>, %arg1: memref<2x8xf32, #tpu.memory_space<vmem>>, %arg2: memref<2x32xf32, #tpu.memory_space<vmem>>, %arg3: memref<2x32xf32, #tpu.memory_space<vmem>>, %arg4: memref<1x32xf32, #tpu.memory_space<vmem>>, %arg5: memref<32x128xf32, #tpu.memory_space<vmem>>, %arg6: memref<32x128xf32, #tpu.memory_space<vmem>>, %arg7: memref<1x128xf32, #tpu.memory_space<vmem>>, %arg8: memref<32x32xf32, #tpu.memory_space<vmem>>, %arg9: memref<1x32xf32, #tpu.memory_space<vmem>>, %arg10: memref<32x128xf32, #tpu.memory_space<vmem>>, %arg11: memref<32x128xf32, #tpu.memory_space<vmem>>, %arg12: memref<1x128xf32, #tpu.memory_space<vmem>>, %arg13: memref<32x64xf32, #tpu.memory_space<vmem>>, %arg14: memref<1x32xf32, #tpu.memory_space<vmem>>, %arg15: memref<1x32xf32, #tpu.memory_space<vmem>>, %arg16: memref<32x32xf32, #tpu.memory_space<vmem>>, %arg17: memref<1x32xf32, #tpu.memory_space<vmem>>, %arg18: memref<2x8x8xf32, #tpu.memory_space<vmem>>, %arg19: memref<2x8x8xf32, #tpu.memory_space<vmem>>, %arg20: memref<2x8xi32, #tpu.memory_space<vmem>>) attributes {dimension_semantics = [], scalar_prefetch = 0 : i64, scratch_operands = 0 : i64, tpu.core_type = #tpu.core_type<tc>} {
    %c0 = arith.constant 0 : index
    %c0_0 = arith.constant 0 : index
    %c0_1 = arith.constant 0 : index
    %0 = vector.load %arg0[%c0, %c0_0, %c0_1] : memref<2x8x32xf32, #tpu.memory_space<vmem>>, vector<2x8x32xf32>
    %c0_2 = arith.constant 0 : index
    %c0_3 = arith.constant 0 : index
    %1 = vector.load %arg1[%c0_2, %c0_3] : memref<2x8xf32, #tpu.memory_space<vmem>>, vector<2x8xf32>
    %c0_4 = arith.constant 0 : index
    %c0_5 = arith.constant 0 : index
    %2 = vector.load %arg2[%c0_4, %c0_5] : memref<2x32xf32, #tpu.memory_space<vmem>>, vector<2x32xf32>
    %c0_6 = arith.constant 0 : index
    %c0_7 = arith.constant 0 : index
    %3 = vector.load %arg3[%c0_6, %c0_7] : memref<2x32xf32, #tpu.memory_space<vmem>>, vector<2x32xf32>
    %c0_8 = arith.constant 0 : index
    %c0_9 = arith.constant 0 : index
    %4 = vector.load %arg6[%c0_8, %c0_9] : memref<32x128xf32, #tpu.memory_space<vmem>>, vector<32x128xf32>
    %c0_10 = arith.constant 0 : index
    %c0_11 = arith.constant 0 : index
    %5 = vector.load %arg11[%c0_10, %c0_11] : memref<32x128xf32, #tpu.memory_space<vmem>>, vector<32x128xf32>
    %c0_12 = arith.constant 0 : index
    %c0_13 = arith.constant 0 : index
    %6 = vector.load %arg12[%c0_12, %c0_13] : memref<1x128xf32, #tpu.memory_space<vmem>>, vector<1x128xf32>
    %c0_14 = arith.constant 0 : index
    %c0_15 = arith.constant 0 : index
    %7 = vector.load %arg13[%c0_14, %c0_15] : memref<32x64xf32, #tpu.memory_space<vmem>>, vector<32x64xf32>
    %c0_16 = arith.constant 0 : index
    %c0_17 = arith.constant 0 : index
    %8 = vector.load %arg14[%c0_16, %c0_17] : memref<1x32xf32, #tpu.memory_space<vmem>>, vector<1x32xf32>
    %c0_18 = arith.constant 0 : index
    %c0_19 = arith.constant 0 : index
    %9 = vector.load %arg15[%c0_18, %c0_19] : memref<1x32xf32, #tpu.memory_space<vmem>>, vector<1x32xf32>
    %c0_20 = arith.constant 0 : index
    %c0_21 = arith.constant 0 : index
    %10 = vector.load %arg17[%c0_20, %c0_21] : memref<1x32xf32, #tpu.memory_space<vmem>>, vector<1x32xf32>
    %11 = vector.shape_cast %0 : vector<2x8x32xf32> to vector<16x32xf32>
    %c0_22 = arith.constant 0 : index
    %c0_23 = arith.constant 0 : index
    %12 = vector.load %arg5[%c0_22, %c0_23] : memref<32x128xf32, #tpu.memory_space<vmem>>, vector<32x128xf32>
    %cst = arith.constant dense<0.000000e+00> : vector<16x128xf32>
    %13 = tpu.matmul %11, %12, %cst {dimension_numbers = #tpu.dot_dimension_numbers<[1], [0], [0], [1], [0, 0, 1, 1], [], []>} : vector<16x32xf32>, vector<32x128xf32>, vector<16x128xf32> -> vector<16x128xf32>
    %c0_24 = arith.constant 0 : index
    %c0_25 = arith.constant 0 : index
    %14 = vector.load %arg7[%c0_24, %c0_25] : memref<1x128xf32, #tpu.memory_space<vmem>>, vector<1x128xf32>
    %15 = vector.broadcast %14 : vector<1x128xf32> to vector<16x128xf32>
    %16 = arith.addf %13, %15 : vector<16x128xf32>
    %17 = vector.shape_cast %16 : vector<16x128xf32> to vector<2x8x128xf32>
    %c0_26 = arith.constant 0 : index
    %c0_27 = arith.constant 0 : index
    %18 = vector.load %arg10[%c0_26, %c0_27] : memref<32x128xf32, #tpu.memory_space<vmem>>, vector<32x128xf32>
    %cst_28 = arith.constant dense<0.000000e+00> : vector<16x128xf32>
    %19 = tpu.matmul %11, %18, %cst_28 {dimension_numbers = #tpu.dot_dimension_numbers<[1], [0], [0], [1], [0, 0, 1, 1], [], []>} : vector<16x32xf32>, vector<32x128xf32>, vector<16x128xf32> -> vector<16x128xf32>
    %20 = vector.shape_cast %19 : vector<16x128xf32> to vector<2x8x128xf32>
    %21 = tpu.iota {dimensions = array<i32: 1>} : vector<2x8x32xi32>
    %cst_29 = arith.constant 0.000000e+00 : f32
    %22 = vector.broadcast %cst_29 : f32 to vector<2x8x32xf32>
    %23 = vector.extract_strided_slice %17 {offsets = [0, 0, 0], sizes = [2, 1, 128], strides = [1, 1, 1]} : vector<2x8x128xf32> to vector<2x1x128xf32>
    %24 = vector.shape_cast %23 : vector<2x1x128xf32> to vector<2x128xf32>
    %cst_30 = arith.constant dense<0.000000e+00> : vector<2x128xf32>
    %25 = tpu.matmul %2, %4, %cst_30 {dimension_numbers = #tpu.dot_dimension_numbers<[1], [0], [0], [1], [0, 0, 1, 1], [], []>} : vector<2x32xf32>, vector<32x128xf32>, vector<2x128xf32> -> vector<2x128xf32>
    %26 = arith.addf %24, %25 : vector<2x128xf32>
    %cst_31 = arith.constant 0.000000e+00 : f32
    %27 = vector.broadcast %cst_31 : f32 to vector<2x128xf32>
    %28 = arith.subf %27, %26 : vector<2x128xf32>
    %29 = math.exp %28 : vector<2x128xf32>
    %cst_32 = arith.constant 1.000000e+00 : f32
    %30 = vector.broadcast %cst_32 : f32 to vector<2x128xf32>
    %31 = arith.addf %30, %29 : vector<2x128xf32>
    %cst_33 = arith.constant 1.000000e+00 : f32
    %32 = vector.broadcast %cst_33 : f32 to vector<2x128xf32>
    %33 = arith.divf %32, %31 : vector<2x128xf32>
    %34 = math.tanh %26 : vector<2x128xf32>
    %35 = vector.extract_strided_slice %33 {offsets = [0, 0], sizes = [2, 32], strides = [1, 1]} : vector<2x128xf32> to vector<2x32xf32>
    %36 = vector.extract_strided_slice %33 {offsets = [0, 32], sizes = [2, 32], strides = [1, 1]} : vector<2x128xf32> to vector<2x32xf32>
    %37 = vector.extract_strided_slice %34 {offsets = [0, 64], sizes = [2, 32], strides = [1, 1]} : vector<2x128xf32> to vector<2x32xf32>
    %38 = vector.extract_strided_slice %33 {offsets = [0, 96], sizes = [2, 32], strides = [1, 1]} : vector<2x128xf32> to vector<2x32xf32>
    %39 = arith.mulf %36, %3 : vector<2x32xf32>
    %40 = arith.mulf %35, %37 : vector<2x32xf32>
    %41 = arith.addf %39, %40 : vector<2x32xf32>
    %42 = math.tanh %41 : vector<2x32xf32>
    %43 = arith.mulf %38, %42 : vector<2x32xf32>
    %c0_i32 = arith.constant 0 : i32
    %44 = vector.broadcast %c0_i32 : i32 to vector<2x8x32xi32>
    %45 = arith.cmpi eq, %21, %44 : vector<2x8x32xi32>
    %46 = vector.shape_cast %43 : vector<2x32xf32> to vector<2x1x32xf32>
    %47 = vector.shape_cast %46 : vector<2x1x32xf32> to vector<2x1x32xf32>
    %48 = vector.broadcast %47 : vector<2x1x32xf32> to vector<2x8x32xf32>
    %49 = arith.select %45, %48, %22 : vector<2x8x32xi1>, vector<2x8x32xf32>
    %50 = vector.extract_strided_slice %17 {offsets = [0, 1, 0], sizes = [2, 1, 128], strides = [1, 1, 1]} : vector<2x8x128xf32> to vector<2x1x128xf32>
    %51 = vector.shape_cast %50 : vector<2x1x128xf32> to vector<2x128xf32>
    %cst_34 = arith.constant dense<0.000000e+00> : vector<2x128xf32>
    %52 = tpu.matmul %43, %4, %cst_34 {dimension_numbers = #tpu.dot_dimension_numbers<[1], [0], [0], [1], [0, 0, 1, 1], [], []>} : vector<2x32xf32>, vector<32x128xf32>, vector<2x128xf32> -> vector<2x128xf32>
    %53 = arith.addf %51, %52 : vector<2x128xf32>
    %cst_35 = arith.constant 0.000000e+00 : f32
    %54 = vector.broadcast %cst_35 : f32 to vector<2x128xf32>
    %55 = arith.subf %54, %53 : vector<2x128xf32>
    %56 = math.exp %55 : vector<2x128xf32>
    %cst_36 = arith.constant 1.000000e+00 : f32
    %57 = vector.broadcast %cst_36 : f32 to vector<2x128xf32>
    %58 = arith.addf %57, %56 : vector<2x128xf32>
    %cst_37 = arith.constant 1.000000e+00 : f32
    %59 = vector.broadcast %cst_37 : f32 to vector<2x128xf32>
    %60 = arith.divf %59, %58 : vector<2x128xf32>
    %61 = math.tanh %53 : vector<2x128xf32>
    %62 = vector.extract_strided_slice %60 {offsets = [0, 0], sizes = [2, 32], strides = [1, 1]} : vector<2x128xf32> to vector<2x32xf32>
    %63 = vector.extract_strided_slice %60 {offsets = [0, 32], sizes = [2, 32], strides = [1, 1]} : vector<2x128xf32> to vector<2x32xf32>
    %64 = vector.extract_strided_slice %61 {offsets = [0, 64], sizes = [2, 32], strides = [1, 1]} : vector<2x128xf32> to vector<2x32xf32>
    %65 = vector.extract_strided_slice %60 {offsets = [0, 96], sizes = [2, 32], strides = [1, 1]} : vector<2x128xf32> to vector<2x32xf32>
    %66 = arith.mulf %63, %41 : vector<2x32xf32>
    %67 = arith.mulf %62, %64 : vector<2x32xf32>
    %68 = arith.addf %66, %67 : vector<2x32xf32>
    %69 = math.tanh %68 : vector<2x32xf32>
    %70 = arith.mulf %65, %69 : vector<2x32xf32>
    %c1_i32 = arith.constant 1 : i32
    %71 = vector.broadcast %c1_i32 : i32 to vector<2x8x32xi32>
    %72 = arith.cmpi eq, %21, %71 : vector<2x8x32xi32>
    %73 = vector.shape_cast %70 : vector<2x32xf32> to vector<2x1x32xf32>
    %74 = vector.shape_cast %73 : vector<2x1x32xf32> to vector<2x1x32xf32>
    %75 = vector.broadcast %74 : vector<2x1x32xf32> to vector<2x8x32xf32>
    %76 = arith.select %72, %75, %49 : vector<2x8x32xi1>, vector<2x8x32xf32>
    %77 = vector.extract_strided_slice %17 {offsets = [0, 2, 0], sizes = [2, 1, 128], strides = [1, 1, 1]} : vector<2x8x128xf32> to vector<2x1x128xf32>
    %78 = vector.shape_cast %77 : vector<2x1x128xf32> to vector<2x128xf32>
    %cst_38 = arith.constant dense<0.000000e+00> : vector<2x128xf32>
    %79 = tpu.matmul %70, %4, %cst_38 {dimension_numbers = #tpu.dot_dimension_numbers<[1], [0], [0], [1], [0, 0, 1, 1], [], []>} : vector<2x32xf32>, vector<32x128xf32>, vector<2x128xf32> -> vector<2x128xf32>
    %80 = arith.addf %78, %79 : vector<2x128xf32>
    %cst_39 = arith.constant 0.000000e+00 : f32
    %81 = vector.broadcast %cst_39 : f32 to vector<2x128xf32>
    %82 = arith.subf %81, %80 : vector<2x128xf32>
    %83 = math.exp %82 : vector<2x128xf32>
    %cst_40 = arith.constant 1.000000e+00 : f32
    %84 = vector.broadcast %cst_40 : f32 to vector<2x128xf32>
    %85 = arith.addf %84, %83 : vector<2x128xf32>
    %cst_41 = arith.constant 1.000000e+00 : f32
    %86 = vector.broadcast %cst_41 : f32 to vector<2x128xf32>
    %87 = arith.divf %86, %85 : vector<2x128xf32>
    %88 = math.tanh %80 : vector<2x128xf32>
    %89 = vector.extract_strided_slice %87 {offsets = [0, 0], sizes = [2, 32], strides = [1, 1]} : vector<2x128xf32> to vector<2x32xf32>
    %90 = vector.extract_strided_slice %87 {offsets = [0, 32], sizes = [2, 32], strides = [1, 1]} : vector<2x128xf32> to vector<2x32xf32>
    %91 = vector.extract_strided_slice %88 {offsets = [0, 64], sizes = [2, 32], strides = [1, 1]} : vector<2x128xf32> to vector<2x32xf32>
    %92 = vector.extract_strided_slice %87 {offsets = [0, 96], sizes = [2, 32], strides = [1, 1]} : vector<2x128xf32> to vector<2x32xf32>
    %93 = arith.mulf %90, %68 : vector<2x32xf32>
    %94 = arith.mulf %89, %91 : vector<2x32xf32>
    %95 = arith.addf %93, %94 : vector<2x32xf32>
    %96 = math.tanh %95 : vector<2x32xf32>
    %97 = arith.mulf %92, %96 : vector<2x32xf32>
    %c2_i32 = arith.constant 2 : i32
    %98 = vector.broadcast %c2_i32 : i32 to vector<2x8x32xi32>
    %99 = arith.cmpi eq, %21, %98 : vector<2x8x32xi32>
    %100 = vector.shape_cast %97 : vector<2x32xf32> to vector<2x1x32xf32>
    %101 = vector.shape_cast %100 : vector<2x1x32xf32> to vector<2x1x32xf32>
    %102 = vector.broadcast %101 : vector<2x1x32xf32> to vector<2x8x32xf32>
    %103 = arith.select %99, %102, %76 : vector<2x8x32xi1>, vector<2x8x32xf32>
    %104 = vector.extract_strided_slice %17 {offsets = [0, 3, 0], sizes = [2, 1, 128], strides = [1, 1, 1]} : vector<2x8x128xf32> to vector<2x1x128xf32>
    %105 = vector.shape_cast %104 : vector<2x1x128xf32> to vector<2x128xf32>
    %cst_42 = arith.constant dense<0.000000e+00> : vector<2x128xf32>
    %106 = tpu.matmul %97, %4, %cst_42 {dimension_numbers = #tpu.dot_dimension_numbers<[1], [0], [0], [1], [0, 0, 1, 1], [], []>} : vector<2x32xf32>, vector<32x128xf32>, vector<2x128xf32> -> vector<2x128xf32>
    %107 = arith.addf %105, %106 : vector<2x128xf32>
    %cst_43 = arith.constant 0.000000e+00 : f32
    %108 = vector.broadcast %cst_43 : f32 to vector<2x128xf32>
    %109 = arith.subf %108, %107 : vector<2x128xf32>
    %110 = math.exp %109 : vector<2x128xf32>
    %cst_44 = arith.constant 1.000000e+00 : f32
    %111 = vector.broadcast %cst_44 : f32 to vector<2x128xf32>
    %112 = arith.addf %111, %110 : vector<2x128xf32>
    %cst_45 = arith.constant 1.000000e+00 : f32
    %113 = vector.broadcast %cst_45 : f32 to vector<2x128xf32>
    %114 = arith.divf %113, %112 : vector<2x128xf32>
    %115 = math.tanh %107 : vector<2x128xf32>
    %116 = vector.extract_strided_slice %114 {offsets = [0, 0], sizes = [2, 32], strides = [1, 1]} : vector<2x128xf32> to vector<2x32xf32>
    %117 = vector.extract_strided_slice %114 {offsets = [0, 32], sizes = [2, 32], strides = [1, 1]} : vector<2x128xf32> to vector<2x32xf32>
    %118 = vector.extract_strided_slice %115 {offsets = [0, 64], sizes = [2, 32], strides = [1, 1]} : vector<2x128xf32> to vector<2x32xf32>
    %119 = vector.extract_strided_slice %114 {offsets = [0, 96], sizes = [2, 32], strides = [1, 1]} : vector<2x128xf32> to vector<2x32xf32>
    %120 = arith.mulf %117, %95 : vector<2x32xf32>
    %121 = arith.mulf %116, %118 : vector<2x32xf32>
    %122 = arith.addf %120, %121 : vector<2x32xf32>
    %123 = math.tanh %122 : vector<2x32xf32>
    %124 = arith.mulf %119, %123 : vector<2x32xf32>
    %c3_i32 = arith.constant 3 : i32
    %125 = vector.broadcast %c3_i32 : i32 to vector<2x8x32xi32>
    %126 = arith.cmpi eq, %21, %125 : vector<2x8x32xi32>
    %127 = vector.shape_cast %124 : vector<2x32xf32> to vector<2x1x32xf32>
    %128 = vector.shape_cast %127 : vector<2x1x32xf32> to vector<2x1x32xf32>
    %129 = vector.broadcast %128 : vector<2x1x32xf32> to vector<2x8x32xf32>
    %130 = arith.select %126, %129, %103 : vector<2x8x32xi1>, vector<2x8x32xf32>
    %131 = vector.extract_strided_slice %17 {offsets = [0, 4, 0], sizes = [2, 1, 128], strides = [1, 1, 1]} : vector<2x8x128xf32> to vector<2x1x128xf32>
    %132 = vector.shape_cast %131 : vector<2x1x128xf32> to vector<2x128xf32>
    %cst_46 = arith.constant dense<0.000000e+00> : vector<2x128xf32>
    %133 = tpu.matmul %124, %4, %cst_46 {dimension_numbers = #tpu.dot_dimension_numbers<[1], [0], [0], [1], [0, 0, 1, 1], [], []>} : vector<2x32xf32>, vector<32x128xf32>, vector<2x128xf32> -> vector<2x128xf32>
    %134 = arith.addf %132, %133 : vector<2x128xf32>
    %cst_47 = arith.constant 0.000000e+00 : f32
    %135 = vector.broadcast %cst_47 : f32 to vector<2x128xf32>
    %136 = arith.subf %135, %134 : vector<2x128xf32>
    %137 = math.exp %136 : vector<2x128xf32>
    %cst_48 = arith.constant 1.000000e+00 : f32
    %138 = vector.broadcast %cst_48 : f32 to vector<2x128xf32>
    %139 = arith.addf %138, %137 : vector<2x128xf32>
    %cst_49 = arith.constant 1.000000e+00 : f32
    %140 = vector.broadcast %cst_49 : f32 to vector<2x128xf32>
    %141 = arith.divf %140, %139 : vector<2x128xf32>
    %142 = math.tanh %134 : vector<2x128xf32>
    %143 = vector.extract_strided_slice %141 {offsets = [0, 0], sizes = [2, 32], strides = [1, 1]} : vector<2x128xf32> to vector<2x32xf32>
    %144 = vector.extract_strided_slice %141 {offsets = [0, 32], sizes = [2, 32], strides = [1, 1]} : vector<2x128xf32> to vector<2x32xf32>
    %145 = vector.extract_strided_slice %142 {offsets = [0, 64], sizes = [2, 32], strides = [1, 1]} : vector<2x128xf32> to vector<2x32xf32>
    %146 = vector.extract_strided_slice %141 {offsets = [0, 96], sizes = [2, 32], strides = [1, 1]} : vector<2x128xf32> to vector<2x32xf32>
    %147 = arith.mulf %144, %122 : vector<2x32xf32>
    %148 = arith.mulf %143, %145 : vector<2x32xf32>
    %149 = arith.addf %147, %148 : vector<2x32xf32>
    %150 = math.tanh %149 : vector<2x32xf32>
    %151 = arith.mulf %146, %150 : vector<2x32xf32>
    %c4_i32 = arith.constant 4 : i32
    %152 = vector.broadcast %c4_i32 : i32 to vector<2x8x32xi32>
    %153 = arith.cmpi eq, %21, %152 : vector<2x8x32xi32>
    %154 = vector.shape_cast %151 : vector<2x32xf32> to vector<2x1x32xf32>
    %155 = vector.shape_cast %154 : vector<2x1x32xf32> to vector<2x1x32xf32>
    %156 = vector.broadcast %155 : vector<2x1x32xf32> to vector<2x8x32xf32>
    %157 = arith.select %153, %156, %130 : vector<2x8x32xi1>, vector<2x8x32xf32>
    %158 = vector.extract_strided_slice %17 {offsets = [0, 5, 0], sizes = [2, 1, 128], strides = [1, 1, 1]} : vector<2x8x128xf32> to vector<2x1x128xf32>
    %159 = vector.shape_cast %158 : vector<2x1x128xf32> to vector<2x128xf32>
    %cst_50 = arith.constant dense<0.000000e+00> : vector<2x128xf32>
    %160 = tpu.matmul %151, %4, %cst_50 {dimension_numbers = #tpu.dot_dimension_numbers<[1], [0], [0], [1], [0, 0, 1, 1], [], []>} : vector<2x32xf32>, vector<32x128xf32>, vector<2x128xf32> -> vector<2x128xf32>
    %161 = arith.addf %159, %160 : vector<2x128xf32>
    %cst_51 = arith.constant 0.000000e+00 : f32
    %162 = vector.broadcast %cst_51 : f32 to vector<2x128xf32>
    %163 = arith.subf %162, %161 : vector<2x128xf32>
    %164 = math.exp %163 : vector<2x128xf32>
    %cst_52 = arith.constant 1.000000e+00 : f32
    %165 = vector.broadcast %cst_52 : f32 to vector<2x128xf32>
    %166 = arith.addf %165, %164 : vector<2x128xf32>
    %cst_53 = arith.constant 1.000000e+00 : f32
    %167 = vector.broadcast %cst_53 : f32 to vector<2x128xf32>
    %168 = arith.divf %167, %166 : vector<2x128xf32>
    %169 = math.tanh %161 : vector<2x128xf32>
    %170 = vector.extract_strided_slice %168 {offsets = [0, 0], sizes = [2, 32], strides = [1, 1]} : vector<2x128xf32> to vector<2x32xf32>
    %171 = vector.extract_strided_slice %168 {offsets = [0, 32], sizes = [2, 32], strides = [1, 1]} : vector<2x128xf32> to vector<2x32xf32>
    %172 = vector.extract_strided_slice %169 {offsets = [0, 64], sizes = [2, 32], strides = [1, 1]} : vector<2x128xf32> to vector<2x32xf32>
    %173 = vector.extract_strided_slice %168 {offsets = [0, 96], sizes = [2, 32], strides = [1, 1]} : vector<2x128xf32> to vector<2x32xf32>
    %174 = arith.mulf %171, %149 : vector<2x32xf32>
    %175 = arith.mulf %170, %172 : vector<2x32xf32>
    %176 = arith.addf %174, %175 : vector<2x32xf32>
    %177 = math.tanh %176 : vector<2x32xf32>
    %178 = arith.mulf %173, %177 : vector<2x32xf32>
    %c5_i32 = arith.constant 5 : i32
    %179 = vector.broadcast %c5_i32 : i32 to vector<2x8x32xi32>
    %180 = arith.cmpi eq, %21, %179 : vector<2x8x32xi32>
    %181 = vector.shape_cast %178 : vector<2x32xf32> to vector<2x1x32xf32>
    %182 = vector.shape_cast %181 : vector<2x1x32xf32> to vector<2x1x32xf32>
    %183 = vector.broadcast %182 : vector<2x1x32xf32> to vector<2x8x32xf32>
    %184 = arith.select %180, %183, %157 : vector<2x8x32xi1>, vector<2x8x32xf32>
    %185 = vector.extract_strided_slice %17 {offsets = [0, 6, 0], sizes = [2, 1, 128], strides = [1, 1, 1]} : vector<2x8x128xf32> to vector<2x1x128xf32>
    %186 = vector.shape_cast %185 : vector<2x1x128xf32> to vector<2x128xf32>
    %cst_54 = arith.constant dense<0.000000e+00> : vector<2x128xf32>
    %187 = tpu.matmul %178, %4, %cst_54 {dimension_numbers = #tpu.dot_dimension_numbers<[1], [0], [0], [1], [0, 0, 1, 1], [], []>} : vector<2x32xf32>, vector<32x128xf32>, vector<2x128xf32> -> vector<2x128xf32>
    %188 = arith.addf %186, %187 : vector<2x128xf32>
    %cst_55 = arith.constant 0.000000e+00 : f32
    %189 = vector.broadcast %cst_55 : f32 to vector<2x128xf32>
    %190 = arith.subf %189, %188 : vector<2x128xf32>
    %191 = math.exp %190 : vector<2x128xf32>
    %cst_56 = arith.constant 1.000000e+00 : f32
    %192 = vector.broadcast %cst_56 : f32 to vector<2x128xf32>
    %193 = arith.addf %192, %191 : vector<2x128xf32>
    %cst_57 = arith.constant 1.000000e+00 : f32
    %194 = vector.broadcast %cst_57 : f32 to vector<2x128xf32>
    %195 = arith.divf %194, %193 : vector<2x128xf32>
    %196 = math.tanh %188 : vector<2x128xf32>
    %197 = vector.extract_strided_slice %195 {offsets = [0, 0], sizes = [2, 32], strides = [1, 1]} : vector<2x128xf32> to vector<2x32xf32>
    %198 = vector.extract_strided_slice %195 {offsets = [0, 32], sizes = [2, 32], strides = [1, 1]} : vector<2x128xf32> to vector<2x32xf32>
    %199 = vector.extract_strided_slice %196 {offsets = [0, 64], sizes = [2, 32], strides = [1, 1]} : vector<2x128xf32> to vector<2x32xf32>
    %200 = vector.extract_strided_slice %195 {offsets = [0, 96], sizes = [2, 32], strides = [1, 1]} : vector<2x128xf32> to vector<2x32xf32>
    %201 = arith.mulf %198, %176 : vector<2x32xf32>
    %202 = arith.mulf %197, %199 : vector<2x32xf32>
    %203 = arith.addf %201, %202 : vector<2x32xf32>
    %204 = math.tanh %203 : vector<2x32xf32>
    %205 = arith.mulf %200, %204 : vector<2x32xf32>
    %c6_i32 = arith.constant 6 : i32
    %206 = vector.broadcast %c6_i32 : i32 to vector<2x8x32xi32>
    %207 = arith.cmpi eq, %21, %206 : vector<2x8x32xi32>
    %208 = vector.shape_cast %205 : vector<2x32xf32> to vector<2x1x32xf32>
    %209 = vector.shape_cast %208 : vector<2x1x32xf32> to vector<2x1x32xf32>
    %210 = vector.broadcast %209 : vector<2x1x32xf32> to vector<2x8x32xf32>
    %211 = arith.select %207, %210, %184 : vector<2x8x32xi1>, vector<2x8x32xf32>
    %212 = vector.extract_strided_slice %17 {offsets = [0, 7, 0], sizes = [2, 1, 128], strides = [1, 1, 1]} : vector<2x8x128xf32> to vector<2x1x128xf32>
    %213 = vector.shape_cast %212 : vector<2x1x128xf32> to vector<2x128xf32>
    %cst_58 = arith.constant dense<0.000000e+00> : vector<2x128xf32>
    %214 = tpu.matmul %205, %4, %cst_58 {dimension_numbers = #tpu.dot_dimension_numbers<[1], [0], [0], [1], [0, 0, 1, 1], [], []>} : vector<2x32xf32>, vector<32x128xf32>, vector<2x128xf32> -> vector<2x128xf32>
    %215 = arith.addf %213, %214 : vector<2x128xf32>
    %cst_59 = arith.constant 0.000000e+00 : f32
    %216 = vector.broadcast %cst_59 : f32 to vector<2x128xf32>
    %217 = arith.subf %216, %215 : vector<2x128xf32>
    %218 = math.exp %217 : vector<2x128xf32>
    %cst_60 = arith.constant 1.000000e+00 : f32
    %219 = vector.broadcast %cst_60 : f32 to vector<2x128xf32>
    %220 = arith.addf %219, %218 : vector<2x128xf32>
    %cst_61 = arith.constant 1.000000e+00 : f32
    %221 = vector.broadcast %cst_61 : f32 to vector<2x128xf32>
    %222 = arith.divf %221, %220 : vector<2x128xf32>
    %223 = math.tanh %215 : vector<2x128xf32>
    %224 = vector.extract_strided_slice %222 {offsets = [0, 0], sizes = [2, 32], strides = [1, 1]} : vector<2x128xf32> to vector<2x32xf32>
    %225 = vector.extract_strided_slice %222 {offsets = [0, 32], sizes = [2, 32], strides = [1, 1]} : vector<2x128xf32> to vector<2x32xf32>
    %226 = vector.extract_strided_slice %223 {offsets = [0, 64], sizes = [2, 32], strides = [1, 1]} : vector<2x128xf32> to vector<2x32xf32>
    %227 = vector.extract_strided_slice %222 {offsets = [0, 96], sizes = [2, 32], strides = [1, 1]} : vector<2x128xf32> to vector<2x32xf32>
    %228 = arith.mulf %225, %203 : vector<2x32xf32>
    %229 = arith.mulf %224, %226 : vector<2x32xf32>
    %230 = arith.addf %228, %229 : vector<2x32xf32>
    %231 = math.tanh %230 : vector<2x32xf32>
    %232 = arith.mulf %227, %231 : vector<2x32xf32>
    %c7_i32 = arith.constant 7 : i32
    %233 = vector.broadcast %c7_i32 : i32 to vector<2x8x32xi32>
    %234 = arith.cmpi eq, %21, %233 : vector<2x8x32xi32>
    %235 = vector.shape_cast %232 : vector<2x32xf32> to vector<2x1x32xf32>
    %236 = vector.shape_cast %235 : vector<2x1x32xf32> to vector<2x1x32xf32>
    %237 = vector.broadcast %236 : vector<2x1x32xf32> to vector<2x8x32xf32>
    %238 = arith.select %234, %237, %211 : vector<2x8x32xi1>, vector<2x8x32xf32>
    %239 = vector.shape_cast %238 : vector<2x8x32xf32> to vector<16x32xf32>
    %c0_62 = arith.constant 0 : index
    %c0_63 = arith.constant 0 : index
    %240 = vector.load %arg8[%c0_62, %c0_63] : memref<32x32xf32, #tpu.memory_space<vmem>>, vector<32x32xf32>
    %cst_64 = arith.constant dense<0.000000e+00> : vector<16x32xf32>
    %241 = tpu.matmul %239, %240, %cst_64 {dimension_numbers = #tpu.dot_dimension_numbers<[1], [0], [0], [1], [0, 0, 1, 1], [], []>} : vector<16x32xf32>, vector<32x32xf32>, vector<16x32xf32> -> vector<16x32xf32>
    %c0_65 = arith.constant 0 : index
    %c0_66 = arith.constant 0 : index
    %242 = vector.load %arg9[%c0_65, %c0_66] : memref<1x32xf32, #tpu.memory_space<vmem>>, vector<1x32xf32>
    %243 = vector.broadcast %242 : vector<1x32xf32> to vector<16x32xf32>
    %244 = arith.addf %241, %243 : vector<16x32xf32>
    %245 = vector.shape_cast %244 : vector<16x32xf32> to vector<2x8x32xf32>
    %c0_67 = arith.constant 0 : index
    %c0_68 = arith.constant 0 : index
    %246 = vector.load %arg16[%c0_67, %c0_68] : memref<32x32xf32, #tpu.memory_space<vmem>>, vector<32x32xf32>
    %cst_69 = arith.constant dense<0.000000e+00> : vector<16x32xf32>
    %247 = tpu.matmul %244, %246, %cst_69 {dimension_numbers = #tpu.dot_dimension_numbers<[1], [0], [0], [1], [0, 0, 1, 1], [], []>} : vector<16x32xf32>, vector<32x32xf32>, vector<16x32xf32> -> vector<16x32xf32>
    %248 = vector.shape_cast %247 : vector<16x32xf32> to vector<2x8x32xf32>
    %249 = tpu.iota {dimensions = array<i32: 1>} : vector<2x8xi32>
    %250 = tpu.iota {dimensions = array<i32: 1>} : vector<2x8x8xi32>
    %c0_70 = arith.constant 0 : index
    %c0_71 = arith.constant 0 : index
    %251 = vector.load %arg4[%c0_70, %c0_71] : memref<1x32xf32, #tpu.memory_space<vmem>>, vector<1x32xf32>
    %c0_72 = arith.constant 0 : index
    %c0_73 = arith.constant 0 : index
    %252 = vector.load %arg10[%c0_72, %c0_73] : memref<32x128xf32, #tpu.memory_space<vmem>>, vector<32x128xf32>
    %cst_74 = arith.constant dense<0.000000e+00> : vector<1x128xf32>
    %253 = tpu.matmul %251, %252, %cst_74 {dimension_numbers = #tpu.dot_dimension_numbers<[1], [0], [0], [1], [0, 0, 1, 1], [], []>} : vector<1x32xf32>, vector<32x128xf32>, vector<1x128xf32> -> vector<1x128xf32>
    %cst_75 = arith.constant 0.000000e+00 : f32
    %254 = vector.broadcast %cst_75 : f32 to vector<2x8x8xf32>
    %cst_76 = arith.constant 0.000000e+00 : f32
    %255 = vector.broadcast %cst_76 : f32 to vector<2x8x8xf32>
    %c0_i32_77 = arith.constant 0 : i32
    %256 = vector.broadcast %c0_i32_77 : i32 to vector<2x8xi32>
    %cst_78 = arith.constant dense<0.000000e+00> : vector<2x128xf32>
    %257 = tpu.matmul %232, %5, %cst_78 {dimension_numbers = #tpu.dot_dimension_numbers<[1], [0], [0], [1], [0, 0, 1, 1], [], []>} : vector<2x32xf32>, vector<32x128xf32>, vector<2x128xf32> -> vector<2x128xf32>
    %258 = vector.broadcast %253 : vector<1x128xf32> to vector<2x128xf32>
    %259 = arith.addf %258, %257 : vector<2x128xf32>
    %260 = vector.broadcast %6 : vector<1x128xf32> to vector<2x128xf32>
    %261 = arith.addf %259, %260 : vector<2x128xf32>
    %cst_79 = arith.constant 0.000000e+00 : f32
    %262 = vector.broadcast %cst_79 : f32 to vector<2x128xf32>
    %263 = arith.subf %262, %261 : vector<2x128xf32>
    %264 = math.exp %263 : vector<2x128xf32>
    %cst_80 = arith.constant 1.000000e+00 : f32
    %265 = vector.broadcast %cst_80 : f32 to vector<2x128xf32>
    %266 = arith.addf %265, %264 : vector<2x128xf32>
    %cst_81 = arith.constant 1.000000e+00 : f32
    %267 = vector.broadcast %cst_81 : f32 to vector<2x128xf32>
    %268 = arith.divf %267, %266 : vector<2x128xf32>
    %269 = math.tanh %261 : vector<2x128xf32>
    %270 = vector.extract_strided_slice %268 {offsets = [0, 0], sizes = [2, 32], strides = [1, 1]} : vector<2x128xf32> to vector<2x32xf32>
    %271 = vector.extract_strided_slice %268 {offsets = [0, 32], sizes = [2, 32], strides = [1, 1]} : vector<2x128xf32> to vector<2x32xf32>
    %272 = vector.extract_strided_slice %269 {offsets = [0, 64], sizes = [2, 32], strides = [1, 1]} : vector<2x128xf32> to vector<2x32xf32>
    %273 = vector.extract_strided_slice %268 {offsets = [0, 96], sizes = [2, 32], strides = [1, 1]} : vector<2x128xf32> to vector<2x32xf32>
    %274 = arith.mulf %271, %230 : vector<2x32xf32>
    %275 = arith.mulf %270, %272 : vector<2x32xf32>
    %276 = arith.addf %274, %275 : vector<2x32xf32>
    %277 = math.tanh %276 : vector<2x32xf32>
    %278 = arith.mulf %273, %277 : vector<2x32xf32>
    %cst_82 = arith.constant dense<0.000000e+00> : vector<2x64xf32>
    %279 = tpu.matmul %278, %7, %cst_82 {dimension_numbers = #tpu.dot_dimension_numbers<[1], [0], [0], [1], [0, 0, 1, 1], [], []>} : vector<2x32xf32>, vector<32x64xf32>, vector<2x64xf32> -> vector<2x64xf32>
    %280 = vector.extract_strided_slice %279 {offsets = [0, 0], sizes = [2, 32], strides = [1, 1]} : vector<2x64xf32> to vector<2x32xf32>
    %281 = vector.broadcast %8 : vector<1x32xf32> to vector<2x32xf32>
    %282 = arith.addf %280, %281 : vector<2x32xf32>
    %283 = vector.extract_strided_slice %279 {offsets = [0, 32], sizes = [2, 32], strides = [1, 1]} : vector<2x64xf32> to vector<2x32xf32>
    %284 = vector.shape_cast %282 : vector<2x32xf32> to vector<2x1x32xf32>
    %285 = vector.broadcast %284 : vector<2x1x32xf32> to vector<2x8x32xf32>
    %286 = arith.addf %285, %245 : vector<2x8x32xf32>
    %287 = math.tanh %286 : vector<2x8x32xf32>
    %288 = vector.shape_cast %9 : vector<1x32xf32> to vector<1x1x32xf32>
    %289 = vector.broadcast %288 : vector<1x1x32xf32> to vector<2x8x32xf32>
    %290 = arith.mulf %289, %287 : vector<2x8x32xf32>
    %cst_83 = arith.constant dense<0.000000e+00> : vector<2x8xf32>
    %291 = vector.multi_reduction <add>, %290, %cst_83 [2] : vector<2x8x32xf32> to vector<2x8xf32>
    %cst_84 = arith.constant dense<0xFF800000> : vector<2xf32>
    %292 = vector.multi_reduction <maximumf>, %291, %cst_84 [1] : vector<2x8xf32> to vector<2xf32>
    %293 = vector.shape_cast %292 : vector<2xf32> to vector<2x1xf32>
    %294 = vector.broadcast %293 : vector<2x1xf32> to vector<2x8xf32>
    %295 = arith.subf %291, %294 : vector<2x8xf32>
    %296 = math.exp %295 : vector<2x8xf32>
    %cst_85 = arith.constant dense<0.000000e+00> : vector<2xf32>
    %297 = vector.multi_reduction <add>, %296, %cst_85 [1] : vector<2x8xf32> to vector<2xf32>
    %298 = vector.shape_cast %297 : vector<2xf32> to vector<2x1xf32>
    %299 = vector.broadcast %298 : vector<2x1xf32> to vector<2x8xf32>
    %300 = arith.divf %296, %299 : vector<2x8xf32>
    %cst_86 = arith.constant 0.000000e+00 : f32
    %301 = vector.broadcast %cst_86 : f32 to vector<2x8xf32>
    %302 = arith.cmpf oeq, %1, %301 : vector<2x8xf32>
    %cst_87 = arith.constant 0xFF800000 : f32
    %303 = vector.broadcast %cst_87 : f32 to vector<2x8xf32>
    %304 = arith.select %302, %303, %291 : vector<2x8xi1>, vector<2x8xf32>
    %cst_88 = arith.constant dense<0xFF800000> : vector<2xf32>
    %305 = vector.multi_reduction <maximumf>, %304, %cst_88 [1] : vector<2x8xf32> to vector<2xf32>
    %306 = vector.shape_cast %305 : vector<2xf32> to vector<2x1xf32>
    %307 = vector.broadcast %306 : vector<2x1xf32> to vector<2x8xf32>
    %308 = arith.subf %304, %307 : vector<2x8xf32>
    %309 = math.exp %308 : vector<2x8xf32>
    %cst_89 = arith.constant dense<0.000000e+00> : vector<2xf32>
    %310 = vector.multi_reduction <add>, %309, %cst_89 [1] : vector<2x8xf32> to vector<2xf32>
    %311 = vector.shape_cast %310 : vector<2xf32> to vector<2x1xf32>
    %312 = vector.broadcast %311 : vector<2x1xf32> to vector<2x8xf32>
    %313 = arith.divf %309, %312 : vector<2x8xf32>
    %314 = vector.shape_cast %313 : vector<2x8xf32> to vector<2x8x1xf32>
    %315 = vector.broadcast %314 : vector<2x8x1xf32> to vector<2x8x32xf32>
    %316 = arith.mulf %315, %248 : vector<2x8x32xf32>
    %cst_90 = arith.constant dense<0.000000e+00> : vector<2x32xf32>
    %317 = vector.multi_reduction <add>, %316, %cst_90 [1] : vector<2x8x32xf32> to vector<2x32xf32>
    %318 = arith.addf %317, %283 : vector<2x32xf32>
    %319 = vector.broadcast %10 : vector<1x32xf32> to vector<2x32xf32>
    %320 = arith.addf %318, %319 : vector<2x32xf32>
    %321 = math.tanh %320 : vector<2x32xf32>
    %322 = arith.mulf %313, %1 : vector<2x8xf32>
    %cst_91 = arith.constant dense<0xFF800000> : vector<2xf32>
    %323 = vector.multi_reduction <maximumf>, %322, %cst_91 [1] : vector<2x8xf32> to vector<2xf32>
    %324 = vector.shape_cast %323 : vector<2xf32> to vector<2x1xf32>
    %325 = vector.broadcast %324 : vector<2x1xf32> to vector<2x8xf32>
    %326 = arith.cmpf oeq, %322, %325 : vector<2x8xf32>
    %c8_i32 = arith.constant 8 : i32
    %327 = vector.broadcast %c8_i32 : i32 to vector<2x8xi32>
    %328 = arith.select %326, %249, %327 : vector<2x8xi1>, vector<2x8xi32>
    %cst_92 = arith.constant dense<2147483647> : vector<2xi32>
    %329 = vector.multi_reduction <minsi>, %328, %cst_92 [1] : vector<2x8xi32> to vector<2xi32>
    %330 = vector.shape_cast %329 : vector<2xi32> to vector<2x1xi32>
    %331 = vector.broadcast %330 : vector<2x1xi32> to vector<2x8xi32>
    %332 = arith.cmpi eq, %249, %331 : vector<2x8xi32>
    %333 = arith.extui %332 : vector<2x8xi1> to vector<2x8xi32>
    %334 = arith.sitofp %333 : vector<2x8xi32> to vector<2x8xf32>
    %cst_93 = arith.constant 1.000000e+00 : f32
    %335 = vector.broadcast %cst_93 : f32 to vector<2x8xf32>
    %336 = arith.subf %335, %334 : vector<2x8xf32>
    %337 = arith.mulf %1, %336 : vector<2x8xf32>
    %338 = vector.shape_cast %334 : vector<2x8xf32> to vector<2x8x1xf32>
    %339 = vector.broadcast %338 : vector<2x8x1xf32> to vector<2x8x128xf32>
    %340 = arith.mulf %339, %20 : vector<2x8x128xf32>
    %cst_94 = arith.constant dense<0.000000e+00> : vector<2x128xf32>
    %341 = vector.multi_reduction <add>, %340, %cst_94 [1] : vector<2x8x128xf32> to vector<2x128xf32>
    %c0_i32_95 = arith.constant 0 : i32
    %342 = vector.broadcast %c0_i32_95 : i32 to vector<2x8x8xi32>
    %343 = arith.cmpi eq, %250, %342 : vector<2x8x8xi32>
    %344 = vector.shape_cast %313 : vector<2x8xf32> to vector<2x1x8xf32>
    %345 = vector.shape_cast %344 : vector<2x1x8xf32> to vector<2x1x8xf32>
    %346 = vector.broadcast %345 : vector<2x1x8xf32> to vector<2x8x8xf32>
    %347 = arith.select %343, %346, %254 : vector<2x8x8xi1>, vector<2x8x8xf32>
    %c0_i32_96 = arith.constant 0 : i32
    %348 = vector.broadcast %c0_i32_96 : i32 to vector<2x8x8xi32>
    %349 = arith.cmpi eq, %250, %348 : vector<2x8x8xi32>
    %350 = vector.shape_cast %300 : vector<2x8xf32> to vector<2x1x8xf32>
    %351 = vector.shape_cast %350 : vector<2x1x8xf32> to vector<2x1x8xf32>
    %352 = vector.broadcast %351 : vector<2x1x8xf32> to vector<2x8x8xf32>
    %353 = arith.select %349, %352, %255 : vector<2x8x8xi1>, vector<2x8x8xf32>
    %c0_i32_97 = arith.constant 0 : i32
    %354 = vector.broadcast %c0_i32_97 : i32 to vector<2x8xi32>
    %355 = arith.cmpi eq, %249, %354 : vector<2x8xi32>
    %356 = vector.shape_cast %330 : vector<2x1xi32> to vector<2x1xi32>
    %357 = vector.broadcast %356 : vector<2x1xi32> to vector<2x8xi32>
    %358 = arith.select %355, %357, %256 : vector<2x8xi1>, vector<2x8xi32>
    %cst_98 = arith.constant dense<0.000000e+00> : vector<2x128xf32>
    %359 = tpu.matmul %321, %5, %cst_98 {dimension_numbers = #tpu.dot_dimension_numbers<[1], [0], [0], [1], [0, 0, 1, 1], [], []>} : vector<2x32xf32>, vector<32x128xf32>, vector<2x128xf32> -> vector<2x128xf32>
    %360 = arith.addf %341, %359 : vector<2x128xf32>
    %361 = vector.broadcast %6 : vector<1x128xf32> to vector<2x128xf32>
    %362 = arith.addf %360, %361 : vector<2x128xf32>
    %cst_99 = arith.constant 0.000000e+00 : f32
    %363 = vector.broadcast %cst_99 : f32 to vector<2x128xf32>
    %364 = arith.subf %363, %362 : vector<2x128xf32>
    %365 = math.exp %364 : vector<2x128xf32>
    %cst_100 = arith.constant 1.000000e+00 : f32
    %366 = vector.broadcast %cst_100 : f32 to vector<2x128xf32>
    %367 = arith.addf %366, %365 : vector<2x128xf32>
    %cst_101 = arith.constant 1.000000e+00 : f32
    %368 = vector.broadcast %cst_101 : f32 to vector<2x128xf32>
    %369 = arith.divf %368, %367 : vector<2x128xf32>
    %370 = math.tanh %362 : vector<2x128xf32>
    %371 = vector.extract_strided_slice %369 {offsets = [0, 0], sizes = [2, 32], strides = [1, 1]} : vector<2x128xf32> to vector<2x32xf32>
    %372 = vector.extract_strided_slice %369 {offsets = [0, 32], sizes = [2, 32], strides = [1, 1]} : vector<2x128xf32> to vector<2x32xf32>
    %373 = vector.extract_strided_slice %370 {offsets = [0, 64], sizes = [2, 32], strides = [1, 1]} : vector<2x128xf32> to vector<2x32xf32>
    %374 = vector.extract_strided_slice %369 {offsets = [0, 96], sizes = [2, 32], strides = [1, 1]} : vector<2x128xf32> to vector<2x32xf32>
    %375 = arith.mulf %372, %276 : vector<2x32xf32>
    %376 = arith.mulf %371, %373 : vector<2x32xf32>
    %377 = arith.addf %375, %376 : vector<2x32xf32>
    %378 = math.tanh %377 : vector<2x32xf32>
    %379 = arith.mulf %374, %378 : vector<2x32xf32>
    %cst_102 = arith.constant dense<0.000000e+00> : vector<2x64xf32>
    %380 = tpu.matmul %379, %7, %cst_102 {dimension_numbers = #tpu.dot_dimension_numbers<[1], [0], [0], [1], [0, 0, 1, 1], [], []>} : vector<2x32xf32>, vector<32x64xf32>, vector<2x64xf32> -> vector<2x64xf32>
    %381 = vector.extract_strided_slice %380 {offsets = [0, 0], sizes = [2, 32], strides = [1, 1]} : vector<2x64xf32> to vector<2x32xf32>
    %382 = vector.broadcast %8 : vector<1x32xf32> to vector<2x32xf32>
    %383 = arith.addf %381, %382 : vector<2x32xf32>
    %384 = vector.extract_strided_slice %380 {offsets = [0, 32], sizes = [2, 32], strides = [1, 1]} : vector<2x64xf32> to vector<2x32xf32>
    %385 = vector.shape_cast %383 : vector<2x32xf32> to vector<2x1x32xf32>
    %386 = vector.broadcast %385 : vector<2x1x32xf32> to vector<2x8x32xf32>
    %387 = arith.addf %386, %245 : vector<2x8x32xf32>
    %388 = math.tanh %387 : vector<2x8x32xf32>
    %389 = vector.shape_cast %9 : vector<1x32xf32> to vector<1x1x32xf32>
    %390 = vector.broadcast %389 : vector<1x1x32xf32> to vector<2x8x32xf32>
    %391 = arith.mulf %390, %388 : vector<2x8x32xf32>
    %cst_103 = arith.constant dense<0.000000e+00> : vector<2x8xf32>
    %392 = vector.multi_reduction <add>, %391, %cst_103 [2] : vector<2x8x32xf32> to vector<2x8xf32>
    %cst_104 = arith.constant dense<0xFF800000> : vector<2xf32>
    %393 = vector.multi_reduction <maximumf>, %392, %cst_104 [1] : vector<2x8xf32> to vector<2xf32>
    %394 = vector.shape_cast %393 : vector<2xf32> to vector<2x1xf32>
    %395 = vector.broadcast %394 : vector<2x1xf32> to vector<2x8xf32>
    %396 = arith.subf %392, %395 : vector<2x8xf32>
    %397 = math.exp %396 : vector<2x8xf32>
    %cst_105 = arith.constant dense<0.000000e+00> : vector<2xf32>
    %398 = vector.multi_reduction <add>, %397, %cst_105 [1] : vector<2x8xf32> to vector<2xf32>
    %399 = vector.shape_cast %398 : vector<2xf32> to vector<2x1xf32>
    %400 = vector.broadcast %399 : vector<2x1xf32> to vector<2x8xf32>
    %401 = arith.divf %397, %400 : vector<2x8xf32>
    %cst_106 = arith.constant 0.000000e+00 : f32
    %402 = vector.broadcast %cst_106 : f32 to vector<2x8xf32>
    %403 = arith.cmpf oeq, %337, %402 : vector<2x8xf32>
    %cst_107 = arith.constant 0xFF800000 : f32
    %404 = vector.broadcast %cst_107 : f32 to vector<2x8xf32>
    %405 = arith.select %403, %404, %392 : vector<2x8xi1>, vector<2x8xf32>
    %cst_108 = arith.constant dense<0xFF800000> : vector<2xf32>
    %406 = vector.multi_reduction <maximumf>, %405, %cst_108 [1] : vector<2x8xf32> to vector<2xf32>
    %407 = vector.shape_cast %406 : vector<2xf32> to vector<2x1xf32>
    %408 = vector.broadcast %407 : vector<2x1xf32> to vector<2x8xf32>
    %409 = arith.subf %405, %408 : vector<2x8xf32>
    %410 = math.exp %409 : vector<2x8xf32>
    %cst_109 = arith.constant dense<0.000000e+00> : vector<2xf32>
    %411 = vector.multi_reduction <add>, %410, %cst_109 [1] : vector<2x8xf32> to vector<2xf32>
    %412 = vector.shape_cast %411 : vector<2xf32> to vector<2x1xf32>
    %413 = vector.broadcast %412 : vector<2x1xf32> to vector<2x8xf32>
    %414 = arith.divf %410, %413 : vector<2x8xf32>
    %415 = vector.shape_cast %414 : vector<2x8xf32> to vector<2x8x1xf32>
    %416 = vector.broadcast %415 : vector<2x8x1xf32> to vector<2x8x32xf32>
    %417 = arith.mulf %416, %248 : vector<2x8x32xf32>
    %cst_110 = arith.constant dense<0.000000e+00> : vector<2x32xf32>
    %418 = vector.multi_reduction <add>, %417, %cst_110 [1] : vector<2x8x32xf32> to vector<2x32xf32>
    %419 = arith.addf %418, %384 : vector<2x32xf32>
    %420 = vector.broadcast %10 : vector<1x32xf32> to vector<2x32xf32>
    %421 = arith.addf %419, %420 : vector<2x32xf32>
    %422 = math.tanh %421 : vector<2x32xf32>
    %423 = arith.mulf %414, %337 : vector<2x8xf32>
    %cst_111 = arith.constant dense<0xFF800000> : vector<2xf32>
    %424 = vector.multi_reduction <maximumf>, %423, %cst_111 [1] : vector<2x8xf32> to vector<2xf32>
    %425 = vector.shape_cast %424 : vector<2xf32> to vector<2x1xf32>
    %426 = vector.broadcast %425 : vector<2x1xf32> to vector<2x8xf32>
    %427 = arith.cmpf oeq, %423, %426 : vector<2x8xf32>
    %c8_i32_112 = arith.constant 8 : i32
    %428 = vector.broadcast %c8_i32_112 : i32 to vector<2x8xi32>
    %429 = arith.select %427, %249, %428 : vector<2x8xi1>, vector<2x8xi32>
    %cst_113 = arith.constant dense<2147483647> : vector<2xi32>
    %430 = vector.multi_reduction <minsi>, %429, %cst_113 [1] : vector<2x8xi32> to vector<2xi32>
    %431 = vector.shape_cast %430 : vector<2xi32> to vector<2x1xi32>
    %432 = vector.broadcast %431 : vector<2x1xi32> to vector<2x8xi32>
    %433 = arith.cmpi eq, %249, %432 : vector<2x8xi32>
    %434 = arith.extui %433 : vector<2x8xi1> to vector<2x8xi32>
    %435 = arith.sitofp %434 : vector<2x8xi32> to vector<2x8xf32>
    %cst_114 = arith.constant 1.000000e+00 : f32
    %436 = vector.broadcast %cst_114 : f32 to vector<2x8xf32>
    %437 = arith.subf %436, %435 : vector<2x8xf32>
    %438 = arith.mulf %337, %437 : vector<2x8xf32>
    %439 = vector.shape_cast %435 : vector<2x8xf32> to vector<2x8x1xf32>
    %440 = vector.broadcast %439 : vector<2x8x1xf32> to vector<2x8x128xf32>
    %441 = arith.mulf %440, %20 : vector<2x8x128xf32>
    %cst_115 = arith.constant dense<0.000000e+00> : vector<2x128xf32>
    %442 = vector.multi_reduction <add>, %441, %cst_115 [1] : vector<2x8x128xf32> to vector<2x128xf32>
    %c1_i32_116 = arith.constant 1 : i32
    %443 = vector.broadcast %c1_i32_116 : i32 to vector<2x8x8xi32>
    %444 = arith.cmpi eq, %250, %443 : vector<2x8x8xi32>
    %445 = vector.shape_cast %414 : vector<2x8xf32> to vector<2x1x8xf32>
    %446 = vector.shape_cast %445 : vector<2x1x8xf32> to vector<2x1x8xf32>
    %447 = vector.broadcast %446 : vector<2x1x8xf32> to vector<2x8x8xf32>
    %448 = arith.select %444, %447, %347 : vector<2x8x8xi1>, vector<2x8x8xf32>
    %c1_i32_117 = arith.constant 1 : i32
    %449 = vector.broadcast %c1_i32_117 : i32 to vector<2x8x8xi32>
    %450 = arith.cmpi eq, %250, %449 : vector<2x8x8xi32>
    %451 = vector.shape_cast %401 : vector<2x8xf32> to vector<2x1x8xf32>
    %452 = vector.shape_cast %451 : vector<2x1x8xf32> to vector<2x1x8xf32>
    %453 = vector.broadcast %452 : vector<2x1x8xf32> to vector<2x8x8xf32>
    %454 = arith.select %450, %453, %353 : vector<2x8x8xi1>, vector<2x8x8xf32>
    %c1_i32_118 = arith.constant 1 : i32
    %455 = vector.broadcast %c1_i32_118 : i32 to vector<2x8xi32>
    %456 = arith.cmpi eq, %249, %455 : vector<2x8xi32>
    %457 = vector.shape_cast %431 : vector<2x1xi32> to vector<2x1xi32>
    %458 = vector.broadcast %457 : vector<2x1xi32> to vector<2x8xi32>
    %459 = arith.select %456, %458, %358 : vector<2x8xi1>, vector<2x8xi32>
    %cst_119 = arith.constant dense<0.000000e+00> : vector<2x128xf32>
    %460 = tpu.matmul %422, %5, %cst_119 {dimension_numbers = #tpu.dot_dimension_numbers<[1], [0], [0], [1], [0, 0, 1, 1], [], []>} : vector<2x32xf32>, vector<32x128xf32>, vector<2x128xf32> -> vector<2x128xf32>
    %461 = arith.addf %442, %460 : vector<2x128xf32>
    %462 = vector.broadcast %6 : vector<1x128xf32> to vector<2x128xf32>
    %463 = arith.addf %461, %462 : vector<2x128xf32>
    %cst_120 = arith.constant 0.000000e+00 : f32
    %464 = vector.broadcast %cst_120 : f32 to vector<2x128xf32>
    %465 = arith.subf %464, %463 : vector<2x128xf32>
    %466 = math.exp %465 : vector<2x128xf32>
    %cst_121 = arith.constant 1.000000e+00 : f32
    %467 = vector.broadcast %cst_121 : f32 to vector<2x128xf32>
    %468 = arith.addf %467, %466 : vector<2x128xf32>
    %cst_122 = arith.constant 1.000000e+00 : f32
    %469 = vector.broadcast %cst_122 : f32 to vector<2x128xf32>
    %470 = arith.divf %469, %468 : vector<2x128xf32>
    %471 = math.tanh %463 : vector<2x128xf32>
    %472 = vector.extract_strided_slice %470 {offsets = [0, 0], sizes = [2, 32], strides = [1, 1]} : vector<2x128xf32> to vector<2x32xf32>
    %473 = vector.extract_strided_slice %470 {offsets = [0, 32], sizes = [2, 32], strides = [1, 1]} : vector<2x128xf32> to vector<2x32xf32>
    %474 = vector.extract_strided_slice %471 {offsets = [0, 64], sizes = [2, 32], strides = [1, 1]} : vector<2x128xf32> to vector<2x32xf32>
    %475 = vector.extract_strided_slice %470 {offsets = [0, 96], sizes = [2, 32], strides = [1, 1]} : vector<2x128xf32> to vector<2x32xf32>
    %476 = arith.mulf %473, %377 : vector<2x32xf32>
    %477 = arith.mulf %472, %474 : vector<2x32xf32>
    %478 = arith.addf %476, %477 : vector<2x32xf32>
    %479 = math.tanh %478 : vector<2x32xf32>
    %480 = arith.mulf %475, %479 : vector<2x32xf32>
    %cst_123 = arith.constant dense<0.000000e+00> : vector<2x64xf32>
    %481 = tpu.matmul %480, %7, %cst_123 {dimension_numbers = #tpu.dot_dimension_numbers<[1], [0], [0], [1], [0, 0, 1, 1], [], []>} : vector<2x32xf32>, vector<32x64xf32>, vector<2x64xf32> -> vector<2x64xf32>
    %482 = vector.extract_strided_slice %481 {offsets = [0, 0], sizes = [2, 32], strides = [1, 1]} : vector<2x64xf32> to vector<2x32xf32>
    %483 = vector.broadcast %8 : vector<1x32xf32> to vector<2x32xf32>
    %484 = arith.addf %482, %483 : vector<2x32xf32>
    %485 = vector.extract_strided_slice %481 {offsets = [0, 32], sizes = [2, 32], strides = [1, 1]} : vector<2x64xf32> to vector<2x32xf32>
    %486 = vector.shape_cast %484 : vector<2x32xf32> to vector<2x1x32xf32>
    %487 = vector.broadcast %486 : vector<2x1x32xf32> to vector<2x8x32xf32>
    %488 = arith.addf %487, %245 : vector<2x8x32xf32>
    %489 = math.tanh %488 : vector<2x8x32xf32>
    %490 = vector.shape_cast %9 : vector<1x32xf32> to vector<1x1x32xf32>
    %491 = vector.broadcast %490 : vector<1x1x32xf32> to vector<2x8x32xf32>
    %492 = arith.mulf %491, %489 : vector<2x8x32xf32>
    %cst_124 = arith.constant dense<0.000000e+00> : vector<2x8xf32>
    %493 = vector.multi_reduction <add>, %492, %cst_124 [2] : vector<2x8x32xf32> to vector<2x8xf32>
    %cst_125 = arith.constant dense<0xFF800000> : vector<2xf32>
    %494 = vector.multi_reduction <maximumf>, %493, %cst_125 [1] : vector<2x8xf32> to vector<2xf32>
    %495 = vector.shape_cast %494 : vector<2xf32> to vector<2x1xf32>
    %496 = vector.broadcast %495 : vector<2x1xf32> to vector<2x8xf32>
    %497 = arith.subf %493, %496 : vector<2x8xf32>
    %498 = math.exp %497 : vector<2x8xf32>
    %cst_126 = arith.constant dense<0.000000e+00> : vector<2xf32>
    %499 = vector.multi_reduction <add>, %498, %cst_126 [1] : vector<2x8xf32> to vector<2xf32>
    %500 = vector.shape_cast %499 : vector<2xf32> to vector<2x1xf32>
    %501 = vector.broadcast %500 : vector<2x1xf32> to vector<2x8xf32>
    %502 = arith.divf %498, %501 : vector<2x8xf32>
    %cst_127 = arith.constant 0.000000e+00 : f32
    %503 = vector.broadcast %cst_127 : f32 to vector<2x8xf32>
    %504 = arith.cmpf oeq, %438, %503 : vector<2x8xf32>
    %cst_128 = arith.constant 0xFF800000 : f32
    %505 = vector.broadcast %cst_128 : f32 to vector<2x8xf32>
    %506 = arith.select %504, %505, %493 : vector<2x8xi1>, vector<2x8xf32>
    %cst_129 = arith.constant dense<0xFF800000> : vector<2xf32>
    %507 = vector.multi_reduction <maximumf>, %506, %cst_129 [1] : vector<2x8xf32> to vector<2xf32>
    %508 = vector.shape_cast %507 : vector<2xf32> to vector<2x1xf32>
    %509 = vector.broadcast %508 : vector<2x1xf32> to vector<2x8xf32>
    %510 = arith.subf %506, %509 : vector<2x8xf32>
    %511 = math.exp %510 : vector<2x8xf32>
    %cst_130 = arith.constant dense<0.000000e+00> : vector<2xf32>
    %512 = vector.multi_reduction <add>, %511, %cst_130 [1] : vector<2x8xf32> to vector<2xf32>
    %513 = vector.shape_cast %512 : vector<2xf32> to vector<2x1xf32>
    %514 = vector.broadcast %513 : vector<2x1xf32> to vector<2x8xf32>
    %515 = arith.divf %511, %514 : vector<2x8xf32>
    %516 = vector.shape_cast %515 : vector<2x8xf32> to vector<2x8x1xf32>
    %517 = vector.broadcast %516 : vector<2x8x1xf32> to vector<2x8x32xf32>
    %518 = arith.mulf %517, %248 : vector<2x8x32xf32>
    %cst_131 = arith.constant dense<0.000000e+00> : vector<2x32xf32>
    %519 = vector.multi_reduction <add>, %518, %cst_131 [1] : vector<2x8x32xf32> to vector<2x32xf32>
    %520 = arith.addf %519, %485 : vector<2x32xf32>
    %521 = vector.broadcast %10 : vector<1x32xf32> to vector<2x32xf32>
    %522 = arith.addf %520, %521 : vector<2x32xf32>
    %523 = math.tanh %522 : vector<2x32xf32>
    %524 = arith.mulf %515, %438 : vector<2x8xf32>
    %cst_132 = arith.constant dense<0xFF800000> : vector<2xf32>
    %525 = vector.multi_reduction <maximumf>, %524, %cst_132 [1] : vector<2x8xf32> to vector<2xf32>
    %526 = vector.shape_cast %525 : vector<2xf32> to vector<2x1xf32>
    %527 = vector.broadcast %526 : vector<2x1xf32> to vector<2x8xf32>
    %528 = arith.cmpf oeq, %524, %527 : vector<2x8xf32>
    %c8_i32_133 = arith.constant 8 : i32
    %529 = vector.broadcast %c8_i32_133 : i32 to vector<2x8xi32>
    %530 = arith.select %528, %249, %529 : vector<2x8xi1>, vector<2x8xi32>
    %cst_134 = arith.constant dense<2147483647> : vector<2xi32>
    %531 = vector.multi_reduction <minsi>, %530, %cst_134 [1] : vector<2x8xi32> to vector<2xi32>
    %532 = vector.shape_cast %531 : vector<2xi32> to vector<2x1xi32>
    %533 = vector.broadcast %532 : vector<2x1xi32> to vector<2x8xi32>
    %534 = arith.cmpi eq, %249, %533 : vector<2x8xi32>
    %535 = arith.extui %534 : vector<2x8xi1> to vector<2x8xi32>
    %536 = arith.sitofp %535 : vector<2x8xi32> to vector<2x8xf32>
    %cst_135 = arith.constant 1.000000e+00 : f32
    %537 = vector.broadcast %cst_135 : f32 to vector<2x8xf32>
    %538 = arith.subf %537, %536 : vector<2x8xf32>
    %539 = arith.mulf %438, %538 : vector<2x8xf32>
    %540 = vector.shape_cast %536 : vector<2x8xf32> to vector<2x8x1xf32>
    %541 = vector.broadcast %540 : vector<2x8x1xf32> to vector<2x8x128xf32>
    %542 = arith.mulf %541, %20 : vector<2x8x128xf32>
    %cst_136 = arith.constant dense<0.000000e+00> : vector<2x128xf32>
    %543 = vector.multi_reduction <add>, %542, %cst_136 [1] : vector<2x8x128xf32> to vector<2x128xf32>
    %c2_i32_137 = arith.constant 2 : i32
    %544 = vector.broadcast %c2_i32_137 : i32 to vector<2x8x8xi32>
    %545 = arith.cmpi eq, %250, %544 : vector<2x8x8xi32>
    %546 = vector.shape_cast %515 : vector<2x8xf32> to vector<2x1x8xf32>
    %547 = vector.shape_cast %546 : vector<2x1x8xf32> to vector<2x1x8xf32>
    %548 = vector.broadcast %547 : vector<2x1x8xf32> to vector<2x8x8xf32>
    %549 = arith.select %545, %548, %448 : vector<2x8x8xi1>, vector<2x8x8xf32>
    %c2_i32_138 = arith.constant 2 : i32
    %550 = vector.broadcast %c2_i32_138 : i32 to vector<2x8x8xi32>
    %551 = arith.cmpi eq, %250, %550 : vector<2x8x8xi32>
    %552 = vector.shape_cast %502 : vector<2x8xf32> to vector<2x1x8xf32>
    %553 = vector.shape_cast %552 : vector<2x1x8xf32> to vector<2x1x8xf32>
    %554 = vector.broadcast %553 : vector<2x1x8xf32> to vector<2x8x8xf32>
    %555 = arith.select %551, %554, %454 : vector<2x8x8xi1>, vector<2x8x8xf32>
    %c2_i32_139 = arith.constant 2 : i32
    %556 = vector.broadcast %c2_i32_139 : i32 to vector<2x8xi32>
    %557 = arith.cmpi eq, %249, %556 : vector<2x8xi32>
    %558 = vector.shape_cast %532 : vector<2x1xi32> to vector<2x1xi32>
    %559 = vector.broadcast %558 : vector<2x1xi32> to vector<2x8xi32>
    %560 = arith.select %557, %559, %459 : vector<2x8xi1>, vector<2x8xi32>
    %cst_140 = arith.constant dense<0.000000e+00> : vector<2x128xf32>
    %561 = tpu.matmul %523, %5, %cst_140 {dimension_numbers = #tpu.dot_dimension_numbers<[1], [0], [0], [1], [0, 0, 1, 1], [], []>} : vector<2x32xf32>, vector<32x128xf32>, vector<2x128xf32> -> vector<2x128xf32>
    %562 = arith.addf %543, %561 : vector<2x128xf32>
    %563 = vector.broadcast %6 : vector<1x128xf32> to vector<2x128xf32>
    %564 = arith.addf %562, %563 : vector<2x128xf32>
    %cst_141 = arith.constant 0.000000e+00 : f32
    %565 = vector.broadcast %cst_141 : f32 to vector<2x128xf32>
    %566 = arith.subf %565, %564 : vector<2x128xf32>
    %567 = math.exp %566 : vector<2x128xf32>
    %cst_142 = arith.constant 1.000000e+00 : f32
    %568 = vector.broadcast %cst_142 : f32 to vector<2x128xf32>
    %569 = arith.addf %568, %567 : vector<2x128xf32>
    %cst_143 = arith.constant 1.000000e+00 : f32
    %570 = vector.broadcast %cst_143 : f32 to vector<2x128xf32>
    %571 = arith.divf %570, %569 : vector<2x128xf32>
    %572 = math.tanh %564 : vector<2x128xf32>
    %573 = vector.extract_strided_slice %571 {offsets = [0, 0], sizes = [2, 32], strides = [1, 1]} : vector<2x128xf32> to vector<2x32xf32>
    %574 = vector.extract_strided_slice %571 {offsets = [0, 32], sizes = [2, 32], strides = [1, 1]} : vector<2x128xf32> to vector<2x32xf32>
    %575 = vector.extract_strided_slice %572 {offsets = [0, 64], sizes = [2, 32], strides = [1, 1]} : vector<2x128xf32> to vector<2x32xf32>
    %576 = vector.extract_strided_slice %571 {offsets = [0, 96], sizes = [2, 32], strides = [1, 1]} : vector<2x128xf32> to vector<2x32xf32>
    %577 = arith.mulf %574, %478 : vector<2x32xf32>
    %578 = arith.mulf %573, %575 : vector<2x32xf32>
    %579 = arith.addf %577, %578 : vector<2x32xf32>
    %580 = math.tanh %579 : vector<2x32xf32>
    %581 = arith.mulf %576, %580 : vector<2x32xf32>
    %cst_144 = arith.constant dense<0.000000e+00> : vector<2x64xf32>
    %582 = tpu.matmul %581, %7, %cst_144 {dimension_numbers = #tpu.dot_dimension_numbers<[1], [0], [0], [1], [0, 0, 1, 1], [], []>} : vector<2x32xf32>, vector<32x64xf32>, vector<2x64xf32> -> vector<2x64xf32>
    %583 = vector.extract_strided_slice %582 {offsets = [0, 0], sizes = [2, 32], strides = [1, 1]} : vector<2x64xf32> to vector<2x32xf32>
    %584 = vector.broadcast %8 : vector<1x32xf32> to vector<2x32xf32>
    %585 = arith.addf %583, %584 : vector<2x32xf32>
    %586 = vector.extract_strided_slice %582 {offsets = [0, 32], sizes = [2, 32], strides = [1, 1]} : vector<2x64xf32> to vector<2x32xf32>
    %587 = vector.shape_cast %585 : vector<2x32xf32> to vector<2x1x32xf32>
    %588 = vector.broadcast %587 : vector<2x1x32xf32> to vector<2x8x32xf32>
    %589 = arith.addf %588, %245 : vector<2x8x32xf32>
    %590 = math.tanh %589 : vector<2x8x32xf32>
    %591 = vector.shape_cast %9 : vector<1x32xf32> to vector<1x1x32xf32>
    %592 = vector.broadcast %591 : vector<1x1x32xf32> to vector<2x8x32xf32>
    %593 = arith.mulf %592, %590 : vector<2x8x32xf32>
    %cst_145 = arith.constant dense<0.000000e+00> : vector<2x8xf32>
    %594 = vector.multi_reduction <add>, %593, %cst_145 [2] : vector<2x8x32xf32> to vector<2x8xf32>
    %cst_146 = arith.constant dense<0xFF800000> : vector<2xf32>
    %595 = vector.multi_reduction <maximumf>, %594, %cst_146 [1] : vector<2x8xf32> to vector<2xf32>
    %596 = vector.shape_cast %595 : vector<2xf32> to vector<2x1xf32>
    %597 = vector.broadcast %596 : vector<2x1xf32> to vector<2x8xf32>
    %598 = arith.subf %594, %597 : vector<2x8xf32>
    %599 = math.exp %598 : vector<2x8xf32>
    %cst_147 = arith.constant dense<0.000000e+00> : vector<2xf32>
    %600 = vector.multi_reduction <add>, %599, %cst_147 [1] : vector<2x8xf32> to vector<2xf32>
    %601 = vector.shape_cast %600 : vector<2xf32> to vector<2x1xf32>
    %602 = vector.broadcast %601 : vector<2x1xf32> to vector<2x8xf32>
    %603 = arith.divf %599, %602 : vector<2x8xf32>
    %cst_148 = arith.constant 0.000000e+00 : f32
    %604 = vector.broadcast %cst_148 : f32 to vector<2x8xf32>
    %605 = arith.cmpf oeq, %539, %604 : vector<2x8xf32>
    %cst_149 = arith.constant 0xFF800000 : f32
    %606 = vector.broadcast %cst_149 : f32 to vector<2x8xf32>
    %607 = arith.select %605, %606, %594 : vector<2x8xi1>, vector<2x8xf32>
    %cst_150 = arith.constant dense<0xFF800000> : vector<2xf32>
    %608 = vector.multi_reduction <maximumf>, %607, %cst_150 [1] : vector<2x8xf32> to vector<2xf32>
    %609 = vector.shape_cast %608 : vector<2xf32> to vector<2x1xf32>
    %610 = vector.broadcast %609 : vector<2x1xf32> to vector<2x8xf32>
    %611 = arith.subf %607, %610 : vector<2x8xf32>
    %612 = math.exp %611 : vector<2x8xf32>
    %cst_151 = arith.constant dense<0.000000e+00> : vector<2xf32>
    %613 = vector.multi_reduction <add>, %612, %cst_151 [1] : vector<2x8xf32> to vector<2xf32>
    %614 = vector.shape_cast %613 : vector<2xf32> to vector<2x1xf32>
    %615 = vector.broadcast %614 : vector<2x1xf32> to vector<2x8xf32>
    %616 = arith.divf %612, %615 : vector<2x8xf32>
    %617 = vector.shape_cast %616 : vector<2x8xf32> to vector<2x8x1xf32>
    %618 = vector.broadcast %617 : vector<2x8x1xf32> to vector<2x8x32xf32>
    %619 = arith.mulf %618, %248 : vector<2x8x32xf32>
    %cst_152 = arith.constant dense<0.000000e+00> : vector<2x32xf32>
    %620 = vector.multi_reduction <add>, %619, %cst_152 [1] : vector<2x8x32xf32> to vector<2x32xf32>
    %621 = arith.addf %620, %586 : vector<2x32xf32>
    %622 = vector.broadcast %10 : vector<1x32xf32> to vector<2x32xf32>
    %623 = arith.addf %621, %622 : vector<2x32xf32>
    %624 = math.tanh %623 : vector<2x32xf32>
    %625 = arith.mulf %616, %539 : vector<2x8xf32>
    %cst_153 = arith.constant dense<0xFF800000> : vector<2xf32>
    %626 = vector.multi_reduction <maximumf>, %625, %cst_153 [1] : vector<2x8xf32> to vector<2xf32>
    %627 = vector.shape_cast %626 : vector<2xf32> to vector<2x1xf32>
    %628 = vector.broadcast %627 : vector<2x1xf32> to vector<2x8xf32>
    %629 = arith.cmpf oeq, %625, %628 : vector<2x8xf32>
    %c8_i32_154 = arith.constant 8 : i32
    %630 = vector.broadcast %c8_i32_154 : i32 to vector<2x8xi32>
    %631 = arith.select %629, %249, %630 : vector<2x8xi1>, vector<2x8xi32>
    %cst_155 = arith.constant dense<2147483647> : vector<2xi32>
    %632 = vector.multi_reduction <minsi>, %631, %cst_155 [1] : vector<2x8xi32> to vector<2xi32>
    %633 = vector.shape_cast %632 : vector<2xi32> to vector<2x1xi32>
    %634 = vector.broadcast %633 : vector<2x1xi32> to vector<2x8xi32>
    %635 = arith.cmpi eq, %249, %634 : vector<2x8xi32>
    %636 = arith.extui %635 : vector<2x8xi1> to vector<2x8xi32>
    %637 = arith.sitofp %636 : vector<2x8xi32> to vector<2x8xf32>
    %cst_156 = arith.constant 1.000000e+00 : f32
    %638 = vector.broadcast %cst_156 : f32 to vector<2x8xf32>
    %639 = arith.subf %638, %637 : vector<2x8xf32>
    %640 = arith.mulf %539, %639 : vector<2x8xf32>
    %641 = vector.shape_cast %637 : vector<2x8xf32> to vector<2x8x1xf32>
    %642 = vector.broadcast %641 : vector<2x8x1xf32> to vector<2x8x128xf32>
    %643 = arith.mulf %642, %20 : vector<2x8x128xf32>
    %cst_157 = arith.constant dense<0.000000e+00> : vector<2x128xf32>
    %644 = vector.multi_reduction <add>, %643, %cst_157 [1] : vector<2x8x128xf32> to vector<2x128xf32>
    %c3_i32_158 = arith.constant 3 : i32
    %645 = vector.broadcast %c3_i32_158 : i32 to vector<2x8x8xi32>
    %646 = arith.cmpi eq, %250, %645 : vector<2x8x8xi32>
    %647 = vector.shape_cast %616 : vector<2x8xf32> to vector<2x1x8xf32>
    %648 = vector.shape_cast %647 : vector<2x1x8xf32> to vector<2x1x8xf32>
    %649 = vector.broadcast %648 : vector<2x1x8xf32> to vector<2x8x8xf32>
    %650 = arith.select %646, %649, %549 : vector<2x8x8xi1>, vector<2x8x8xf32>
    %c3_i32_159 = arith.constant 3 : i32
    %651 = vector.broadcast %c3_i32_159 : i32 to vector<2x8x8xi32>
    %652 = arith.cmpi eq, %250, %651 : vector<2x8x8xi32>
    %653 = vector.shape_cast %603 : vector<2x8xf32> to vector<2x1x8xf32>
    %654 = vector.shape_cast %653 : vector<2x1x8xf32> to vector<2x1x8xf32>
    %655 = vector.broadcast %654 : vector<2x1x8xf32> to vector<2x8x8xf32>
    %656 = arith.select %652, %655, %555 : vector<2x8x8xi1>, vector<2x8x8xf32>
    %c3_i32_160 = arith.constant 3 : i32
    %657 = vector.broadcast %c3_i32_160 : i32 to vector<2x8xi32>
    %658 = arith.cmpi eq, %249, %657 : vector<2x8xi32>
    %659 = vector.shape_cast %633 : vector<2x1xi32> to vector<2x1xi32>
    %660 = vector.broadcast %659 : vector<2x1xi32> to vector<2x8xi32>
    %661 = arith.select %658, %660, %560 : vector<2x8xi1>, vector<2x8xi32>
    %cst_161 = arith.constant dense<0.000000e+00> : vector<2x128xf32>
    %662 = tpu.matmul %624, %5, %cst_161 {dimension_numbers = #tpu.dot_dimension_numbers<[1], [0], [0], [1], [0, 0, 1, 1], [], []>} : vector<2x32xf32>, vector<32x128xf32>, vector<2x128xf32> -> vector<2x128xf32>
    %663 = arith.addf %644, %662 : vector<2x128xf32>
    %664 = vector.broadcast %6 : vector<1x128xf32> to vector<2x128xf32>
    %665 = arith.addf %663, %664 : vector<2x128xf32>
    %cst_162 = arith.constant 0.000000e+00 : f32
    %666 = vector.broadcast %cst_162 : f32 to vector<2x128xf32>
    %667 = arith.subf %666, %665 : vector<2x128xf32>
    %668 = math.exp %667 : vector<2x128xf32>
    %cst_163 = arith.constant 1.000000e+00 : f32
    %669 = vector.broadcast %cst_163 : f32 to vector<2x128xf32>
    %670 = arith.addf %669, %668 : vector<2x128xf32>
    %cst_164 = arith.constant 1.000000e+00 : f32
    %671 = vector.broadcast %cst_164 : f32 to vector<2x128xf32>
    %672 = arith.divf %671, %670 : vector<2x128xf32>
    %673 = math.tanh %665 : vector<2x128xf32>
    %674 = vector.extract_strided_slice %672 {offsets = [0, 0], sizes = [2, 32], strides = [1, 1]} : vector<2x128xf32> to vector<2x32xf32>
    %675 = vector.extract_strided_slice %672 {offsets = [0, 32], sizes = [2, 32], strides = [1, 1]} : vector<2x128xf32> to vector<2x32xf32>
    %676 = vector.extract_strided_slice %673 {offsets = [0, 64], sizes = [2, 32], strides = [1, 1]} : vector<2x128xf32> to vector<2x32xf32>
    %677 = vector.extract_strided_slice %672 {offsets = [0, 96], sizes = [2, 32], strides = [1, 1]} : vector<2x128xf32> to vector<2x32xf32>
    %678 = arith.mulf %675, %579 : vector<2x32xf32>
    %679 = arith.mulf %674, %676 : vector<2x32xf32>
    %680 = arith.addf %678, %679 : vector<2x32xf32>
    %681 = math.tanh %680 : vector<2x32xf32>
    %682 = arith.mulf %677, %681 : vector<2x32xf32>
    %cst_165 = arith.constant dense<0.000000e+00> : vector<2x64xf32>
    %683 = tpu.matmul %682, %7, %cst_165 {dimension_numbers = #tpu.dot_dimension_numbers<[1], [0], [0], [1], [0, 0, 1, 1], [], []>} : vector<2x32xf32>, vector<32x64xf32>, vector<2x64xf32> -> vector<2x64xf32>
    %684 = vector.extract_strided_slice %683 {offsets = [0, 0], sizes = [2, 32], strides = [1, 1]} : vector<2x64xf32> to vector<2x32xf32>
    %685 = vector.broadcast %8 : vector<1x32xf32> to vector<2x32xf32>
    %686 = arith.addf %684, %685 : vector<2x32xf32>
    %687 = vector.extract_strided_slice %683 {offsets = [0, 32], sizes = [2, 32], strides = [1, 1]} : vector<2x64xf32> to vector<2x32xf32>
    %688 = vector.shape_cast %686 : vector<2x32xf32> to vector<2x1x32xf32>
    %689 = vector.broadcast %688 : vector<2x1x32xf32> to vector<2x8x32xf32>
    %690 = arith.addf %689, %245 : vector<2x8x32xf32>
    %691 = math.tanh %690 : vector<2x8x32xf32>
    %692 = vector.shape_cast %9 : vector<1x32xf32> to vector<1x1x32xf32>
    %693 = vector.broadcast %692 : vector<1x1x32xf32> to vector<2x8x32xf32>
    %694 = arith.mulf %693, %691 : vector<2x8x32xf32>
    %cst_166 = arith.constant dense<0.000000e+00> : vector<2x8xf32>
    %695 = vector.multi_reduction <add>, %694, %cst_166 [2] : vector<2x8x32xf32> to vector<2x8xf32>
    %cst_167 = arith.constant dense<0xFF800000> : vector<2xf32>
    %696 = vector.multi_reduction <maximumf>, %695, %cst_167 [1] : vector<2x8xf32> to vector<2xf32>
    %697 = vector.shape_cast %696 : vector<2xf32> to vector<2x1xf32>
    %698 = vector.broadcast %697 : vector<2x1xf32> to vector<2x8xf32>
    %699 = arith.subf %695, %698 : vector<2x8xf32>
    %700 = math.exp %699 : vector<2x8xf32>
    %cst_168 = arith.constant dense<0.000000e+00> : vector<2xf32>
    %701 = vector.multi_reduction <add>, %700, %cst_168 [1] : vector<2x8xf32> to vector<2xf32>
    %702 = vector.shape_cast %701 : vector<2xf32> to vector<2x1xf32>
    %703 = vector.broadcast %702 : vector<2x1xf32> to vector<2x8xf32>
    %704 = arith.divf %700, %703 : vector<2x8xf32>
    %cst_169 = arith.constant 0.000000e+00 : f32
    %705 = vector.broadcast %cst_169 : f32 to vector<2x8xf32>
    %706 = arith.cmpf oeq, %640, %705 : vector<2x8xf32>
    %cst_170 = arith.constant 0xFF800000 : f32
    %707 = vector.broadcast %cst_170 : f32 to vector<2x8xf32>
    %708 = arith.select %706, %707, %695 : vector<2x8xi1>, vector<2x8xf32>
    %cst_171 = arith.constant dense<0xFF800000> : vector<2xf32>
    %709 = vector.multi_reduction <maximumf>, %708, %cst_171 [1] : vector<2x8xf32> to vector<2xf32>
    %710 = vector.shape_cast %709 : vector<2xf32> to vector<2x1xf32>
    %711 = vector.broadcast %710 : vector<2x1xf32> to vector<2x8xf32>
    %712 = arith.subf %708, %711 : vector<2x8xf32>
    %713 = math.exp %712 : vector<2x8xf32>
    %cst_172 = arith.constant dense<0.000000e+00> : vector<2xf32>
    %714 = vector.multi_reduction <add>, %713, %cst_172 [1] : vector<2x8xf32> to vector<2xf32>
    %715 = vector.shape_cast %714 : vector<2xf32> to vector<2x1xf32>
    %716 = vector.broadcast %715 : vector<2x1xf32> to vector<2x8xf32>
    %717 = arith.divf %713, %716 : vector<2x8xf32>
    %718 = vector.shape_cast %717 : vector<2x8xf32> to vector<2x8x1xf32>
    %719 = vector.broadcast %718 : vector<2x8x1xf32> to vector<2x8x32xf32>
    %720 = arith.mulf %719, %248 : vector<2x8x32xf32>
    %cst_173 = arith.constant dense<0.000000e+00> : vector<2x32xf32>
    %721 = vector.multi_reduction <add>, %720, %cst_173 [1] : vector<2x8x32xf32> to vector<2x32xf32>
    %722 = arith.addf %721, %687 : vector<2x32xf32>
    %723 = vector.broadcast %10 : vector<1x32xf32> to vector<2x32xf32>
    %724 = arith.addf %722, %723 : vector<2x32xf32>
    %725 = math.tanh %724 : vector<2x32xf32>
    %726 = arith.mulf %717, %640 : vector<2x8xf32>
    %cst_174 = arith.constant dense<0xFF800000> : vector<2xf32>
    %727 = vector.multi_reduction <maximumf>, %726, %cst_174 [1] : vector<2x8xf32> to vector<2xf32>
    %728 = vector.shape_cast %727 : vector<2xf32> to vector<2x1xf32>
    %729 = vector.broadcast %728 : vector<2x1xf32> to vector<2x8xf32>
    %730 = arith.cmpf oeq, %726, %729 : vector<2x8xf32>
    %c8_i32_175 = arith.constant 8 : i32
    %731 = vector.broadcast %c8_i32_175 : i32 to vector<2x8xi32>
    %732 = arith.select %730, %249, %731 : vector<2x8xi1>, vector<2x8xi32>
    %cst_176 = arith.constant dense<2147483647> : vector<2xi32>
    %733 = vector.multi_reduction <minsi>, %732, %cst_176 [1] : vector<2x8xi32> to vector<2xi32>
    %734 = vector.shape_cast %733 : vector<2xi32> to vector<2x1xi32>
    %735 = vector.broadcast %734 : vector<2x1xi32> to vector<2x8xi32>
    %736 = arith.cmpi eq, %249, %735 : vector<2x8xi32>
    %737 = arith.extui %736 : vector<2x8xi1> to vector<2x8xi32>
    %738 = arith.sitofp %737 : vector<2x8xi32> to vector<2x8xf32>
    %cst_177 = arith.constant 1.000000e+00 : f32
    %739 = vector.broadcast %cst_177 : f32 to vector<2x8xf32>
    %740 = arith.subf %739, %738 : vector<2x8xf32>
    %741 = arith.mulf %640, %740 : vector<2x8xf32>
    %742 = vector.shape_cast %738 : vector<2x8xf32> to vector<2x8x1xf32>
    %743 = vector.broadcast %742 : vector<2x8x1xf32> to vector<2x8x128xf32>
    %744 = arith.mulf %743, %20 : vector<2x8x128xf32>
    %cst_178 = arith.constant dense<0.000000e+00> : vector<2x128xf32>
    %745 = vector.multi_reduction <add>, %744, %cst_178 [1] : vector<2x8x128xf32> to vector<2x128xf32>
    %c4_i32_179 = arith.constant 4 : i32
    %746 = vector.broadcast %c4_i32_179 : i32 to vector<2x8x8xi32>
    %747 = arith.cmpi eq, %250, %746 : vector<2x8x8xi32>
    %748 = vector.shape_cast %717 : vector<2x8xf32> to vector<2x1x8xf32>
    %749 = vector.shape_cast %748 : vector<2x1x8xf32> to vector<2x1x8xf32>
    %750 = vector.broadcast %749 : vector<2x1x8xf32> to vector<2x8x8xf32>
    %751 = arith.select %747, %750, %650 : vector<2x8x8xi1>, vector<2x8x8xf32>
    %c4_i32_180 = arith.constant 4 : i32
    %752 = vector.broadcast %c4_i32_180 : i32 to vector<2x8x8xi32>
    %753 = arith.cmpi eq, %250, %752 : vector<2x8x8xi32>
    %754 = vector.shape_cast %704 : vector<2x8xf32> to vector<2x1x8xf32>
    %755 = vector.shape_cast %754 : vector<2x1x8xf32> to vector<2x1x8xf32>
    %756 = vector.broadcast %755 : vector<2x1x8xf32> to vector<2x8x8xf32>
    %757 = arith.select %753, %756, %656 : vector<2x8x8xi1>, vector<2x8x8xf32>
    %c4_i32_181 = arith.constant 4 : i32
    %758 = vector.broadcast %c4_i32_181 : i32 to vector<2x8xi32>
    %759 = arith.cmpi eq, %249, %758 : vector<2x8xi32>
    %760 = vector.shape_cast %734 : vector<2x1xi32> to vector<2x1xi32>
    %761 = vector.broadcast %760 : vector<2x1xi32> to vector<2x8xi32>
    %762 = arith.select %759, %761, %661 : vector<2x8xi1>, vector<2x8xi32>
    %cst_182 = arith.constant dense<0.000000e+00> : vector<2x128xf32>
    %763 = tpu.matmul %725, %5, %cst_182 {dimension_numbers = #tpu.dot_dimension_numbers<[1], [0], [0], [1], [0, 0, 1, 1], [], []>} : vector<2x32xf32>, vector<32x128xf32>, vector<2x128xf32> -> vector<2x128xf32>
    %764 = arith.addf %745, %763 : vector<2x128xf32>
    %765 = vector.broadcast %6 : vector<1x128xf32> to vector<2x128xf32>
    %766 = arith.addf %764, %765 : vector<2x128xf32>
    %cst_183 = arith.constant 0.000000e+00 : f32
    %767 = vector.broadcast %cst_183 : f32 to vector<2x128xf32>
    %768 = arith.subf %767, %766 : vector<2x128xf32>
    %769 = math.exp %768 : vector<2x128xf32>
    %cst_184 = arith.constant 1.000000e+00 : f32
    %770 = vector.broadcast %cst_184 : f32 to vector<2x128xf32>
    %771 = arith.addf %770, %769 : vector<2x128xf32>
    %cst_185 = arith.constant 1.000000e+00 : f32
    %772 = vector.broadcast %cst_185 : f32 to vector<2x128xf32>
    %773 = arith.divf %772, %771 : vector<2x128xf32>
    %774 = math.tanh %766 : vector<2x128xf32>
    %775 = vector.extract_strided_slice %773 {offsets = [0, 0], sizes = [2, 32], strides = [1, 1]} : vector<2x128xf32> to vector<2x32xf32>
    %776 = vector.extract_strided_slice %773 {offsets = [0, 32], sizes = [2, 32], strides = [1, 1]} : vector<2x128xf32> to vector<2x32xf32>
    %777 = vector.extract_strided_slice %774 {offsets = [0, 64], sizes = [2, 32], strides = [1, 1]} : vector<2x128xf32> to vector<2x32xf32>
    %778 = vector.extract_strided_slice %773 {offsets = [0, 96], sizes = [2, 32], strides = [1, 1]} : vector<2x128xf32> to vector<2x32xf32>
    %779 = arith.mulf %776, %680 : vector<2x32xf32>
    %780 = arith.mulf %775, %777 : vector<2x32xf32>
    %781 = arith.addf %779, %780 : vector<2x32xf32>
    %782 = math.tanh %781 : vector<2x32xf32>
    %783 = arith.mulf %778, %782 : vector<2x32xf32>
    %cst_186 = arith.constant dense<0.000000e+00> : vector<2x64xf32>
    %784 = tpu.matmul %783, %7, %cst_186 {dimension_numbers = #tpu.dot_dimension_numbers<[1], [0], [0], [1], [0, 0, 1, 1], [], []>} : vector<2x32xf32>, vector<32x64xf32>, vector<2x64xf32> -> vector<2x64xf32>
    %785 = vector.extract_strided_slice %784 {offsets = [0, 0], sizes = [2, 32], strides = [1, 1]} : vector<2x64xf32> to vector<2x32xf32>
    %786 = vector.broadcast %8 : vector<1x32xf32> to vector<2x32xf32>
    %787 = arith.addf %785, %786 : vector<2x32xf32>
    %788 = vector.extract_strided_slice %784 {offsets = [0, 32], sizes = [2, 32], strides = [1, 1]} : vector<2x64xf32> to vector<2x32xf32>
    %789 = vector.shape_cast %787 : vector<2x32xf32> to vector<2x1x32xf32>
    %790 = vector.broadcast %789 : vector<2x1x32xf32> to vector<2x8x32xf32>
    %791 = arith.addf %790, %245 : vector<2x8x32xf32>
    %792 = math.tanh %791 : vector<2x8x32xf32>
    %793 = vector.shape_cast %9 : vector<1x32xf32> to vector<1x1x32xf32>
    %794 = vector.broadcast %793 : vector<1x1x32xf32> to vector<2x8x32xf32>
    %795 = arith.mulf %794, %792 : vector<2x8x32xf32>
    %cst_187 = arith.constant dense<0.000000e+00> : vector<2x8xf32>
    %796 = vector.multi_reduction <add>, %795, %cst_187 [2] : vector<2x8x32xf32> to vector<2x8xf32>
    %cst_188 = arith.constant dense<0xFF800000> : vector<2xf32>
    %797 = vector.multi_reduction <maximumf>, %796, %cst_188 [1] : vector<2x8xf32> to vector<2xf32>
    %798 = vector.shape_cast %797 : vector<2xf32> to vector<2x1xf32>
    %799 = vector.broadcast %798 : vector<2x1xf32> to vector<2x8xf32>
    %800 = arith.subf %796, %799 : vector<2x8xf32>
    %801 = math.exp %800 : vector<2x8xf32>
    %cst_189 = arith.constant dense<0.000000e+00> : vector<2xf32>
    %802 = vector.multi_reduction <add>, %801, %cst_189 [1] : vector<2x8xf32> to vector<2xf32>
    %803 = vector.shape_cast %802 : vector<2xf32> to vector<2x1xf32>
    %804 = vector.broadcast %803 : vector<2x1xf32> to vector<2x8xf32>
    %805 = arith.divf %801, %804 : vector<2x8xf32>
    %cst_190 = arith.constant 0.000000e+00 : f32
    %806 = vector.broadcast %cst_190 : f32 to vector<2x8xf32>
    %807 = arith.cmpf oeq, %741, %806 : vector<2x8xf32>
    %cst_191 = arith.constant 0xFF800000 : f32
    %808 = vector.broadcast %cst_191 : f32 to vector<2x8xf32>
    %809 = arith.select %807, %808, %796 : vector<2x8xi1>, vector<2x8xf32>
    %cst_192 = arith.constant dense<0xFF800000> : vector<2xf32>
    %810 = vector.multi_reduction <maximumf>, %809, %cst_192 [1] : vector<2x8xf32> to vector<2xf32>
    %811 = vector.shape_cast %810 : vector<2xf32> to vector<2x1xf32>
    %812 = vector.broadcast %811 : vector<2x1xf32> to vector<2x8xf32>
    %813 = arith.subf %809, %812 : vector<2x8xf32>
    %814 = math.exp %813 : vector<2x8xf32>
    %cst_193 = arith.constant dense<0.000000e+00> : vector<2xf32>
    %815 = vector.multi_reduction <add>, %814, %cst_193 [1] : vector<2x8xf32> to vector<2xf32>
    %816 = vector.shape_cast %815 : vector<2xf32> to vector<2x1xf32>
    %817 = vector.broadcast %816 : vector<2x1xf32> to vector<2x8xf32>
    %818 = arith.divf %814, %817 : vector<2x8xf32>
    %819 = vector.shape_cast %818 : vector<2x8xf32> to vector<2x8x1xf32>
    %820 = vector.broadcast %819 : vector<2x8x1xf32> to vector<2x8x32xf32>
    %821 = arith.mulf %820, %248 : vector<2x8x32xf32>
    %cst_194 = arith.constant dense<0.000000e+00> : vector<2x32xf32>
    %822 = vector.multi_reduction <add>, %821, %cst_194 [1] : vector<2x8x32xf32> to vector<2x32xf32>
    %823 = arith.addf %822, %788 : vector<2x32xf32>
    %824 = vector.broadcast %10 : vector<1x32xf32> to vector<2x32xf32>
    %825 = arith.addf %823, %824 : vector<2x32xf32>
    %826 = math.tanh %825 : vector<2x32xf32>
    %827 = arith.mulf %818, %741 : vector<2x8xf32>
    %cst_195 = arith.constant dense<0xFF800000> : vector<2xf32>
    %828 = vector.multi_reduction <maximumf>, %827, %cst_195 [1] : vector<2x8xf32> to vector<2xf32>
    %829 = vector.shape_cast %828 : vector<2xf32> to vector<2x1xf32>
    %830 = vector.broadcast %829 : vector<2x1xf32> to vector<2x8xf32>
    %831 = arith.cmpf oeq, %827, %830 : vector<2x8xf32>
    %c8_i32_196 = arith.constant 8 : i32
    %832 = vector.broadcast %c8_i32_196 : i32 to vector<2x8xi32>
    %833 = arith.select %831, %249, %832 : vector<2x8xi1>, vector<2x8xi32>
    %cst_197 = arith.constant dense<2147483647> : vector<2xi32>
    %834 = vector.multi_reduction <minsi>, %833, %cst_197 [1] : vector<2x8xi32> to vector<2xi32>
    %835 = vector.shape_cast %834 : vector<2xi32> to vector<2x1xi32>
    %836 = vector.broadcast %835 : vector<2x1xi32> to vector<2x8xi32>
    %837 = arith.cmpi eq, %249, %836 : vector<2x8xi32>
    %838 = arith.extui %837 : vector<2x8xi1> to vector<2x8xi32>
    %839 = arith.sitofp %838 : vector<2x8xi32> to vector<2x8xf32>
    %cst_198 = arith.constant 1.000000e+00 : f32
    %840 = vector.broadcast %cst_198 : f32 to vector<2x8xf32>
    %841 = arith.subf %840, %839 : vector<2x8xf32>
    %842 = arith.mulf %741, %841 : vector<2x8xf32>
    %843 = vector.shape_cast %839 : vector<2x8xf32> to vector<2x8x1xf32>
    %844 = vector.broadcast %843 : vector<2x8x1xf32> to vector<2x8x128xf32>
    %845 = arith.mulf %844, %20 : vector<2x8x128xf32>
    %cst_199 = arith.constant dense<0.000000e+00> : vector<2x128xf32>
    %846 = vector.multi_reduction <add>, %845, %cst_199 [1] : vector<2x8x128xf32> to vector<2x128xf32>
    %c5_i32_200 = arith.constant 5 : i32
    %847 = vector.broadcast %c5_i32_200 : i32 to vector<2x8x8xi32>
    %848 = arith.cmpi eq, %250, %847 : vector<2x8x8xi32>
    %849 = vector.shape_cast %818 : vector<2x8xf32> to vector<2x1x8xf32>
    %850 = vector.shape_cast %849 : vector<2x1x8xf32> to vector<2x1x8xf32>
    %851 = vector.broadcast %850 : vector<2x1x8xf32> to vector<2x8x8xf32>
    %852 = arith.select %848, %851, %751 : vector<2x8x8xi1>, vector<2x8x8xf32>
    %c5_i32_201 = arith.constant 5 : i32
    %853 = vector.broadcast %c5_i32_201 : i32 to vector<2x8x8xi32>
    %854 = arith.cmpi eq, %250, %853 : vector<2x8x8xi32>
    %855 = vector.shape_cast %805 : vector<2x8xf32> to vector<2x1x8xf32>
    %856 = vector.shape_cast %855 : vector<2x1x8xf32> to vector<2x1x8xf32>
    %857 = vector.broadcast %856 : vector<2x1x8xf32> to vector<2x8x8xf32>
    %858 = arith.select %854, %857, %757 : vector<2x8x8xi1>, vector<2x8x8xf32>
    %c5_i32_202 = arith.constant 5 : i32
    %859 = vector.broadcast %c5_i32_202 : i32 to vector<2x8xi32>
    %860 = arith.cmpi eq, %249, %859 : vector<2x8xi32>
    %861 = vector.shape_cast %835 : vector<2x1xi32> to vector<2x1xi32>
    %862 = vector.broadcast %861 : vector<2x1xi32> to vector<2x8xi32>
    %863 = arith.select %860, %862, %762 : vector<2x8xi1>, vector<2x8xi32>
    %cst_203 = arith.constant dense<0.000000e+00> : vector<2x128xf32>
    %864 = tpu.matmul %826, %5, %cst_203 {dimension_numbers = #tpu.dot_dimension_numbers<[1], [0], [0], [1], [0, 0, 1, 1], [], []>} : vector<2x32xf32>, vector<32x128xf32>, vector<2x128xf32> -> vector<2x128xf32>
    %865 = arith.addf %846, %864 : vector<2x128xf32>
    %866 = vector.broadcast %6 : vector<1x128xf32> to vector<2x128xf32>
    %867 = arith.addf %865, %866 : vector<2x128xf32>
    %cst_204 = arith.constant 0.000000e+00 : f32
    %868 = vector.broadcast %cst_204 : f32 to vector<2x128xf32>
    %869 = arith.subf %868, %867 : vector<2x128xf32>
    %870 = math.exp %869 : vector<2x128xf32>
    %cst_205 = arith.constant 1.000000e+00 : f32
    %871 = vector.broadcast %cst_205 : f32 to vector<2x128xf32>
    %872 = arith.addf %871, %870 : vector<2x128xf32>
    %cst_206 = arith.constant 1.000000e+00 : f32
    %873 = vector.broadcast %cst_206 : f32 to vector<2x128xf32>
    %874 = arith.divf %873, %872 : vector<2x128xf32>
    %875 = math.tanh %867 : vector<2x128xf32>
    %876 = vector.extract_strided_slice %874 {offsets = [0, 0], sizes = [2, 32], strides = [1, 1]} : vector<2x128xf32> to vector<2x32xf32>
    %877 = vector.extract_strided_slice %874 {offsets = [0, 32], sizes = [2, 32], strides = [1, 1]} : vector<2x128xf32> to vector<2x32xf32>
    %878 = vector.extract_strided_slice %875 {offsets = [0, 64], sizes = [2, 32], strides = [1, 1]} : vector<2x128xf32> to vector<2x32xf32>
    %879 = vector.extract_strided_slice %874 {offsets = [0, 96], sizes = [2, 32], strides = [1, 1]} : vector<2x128xf32> to vector<2x32xf32>
    %880 = arith.mulf %877, %781 : vector<2x32xf32>
    %881 = arith.mulf %876, %878 : vector<2x32xf32>
    %882 = arith.addf %880, %881 : vector<2x32xf32>
    %883 = math.tanh %882 : vector<2x32xf32>
    %884 = arith.mulf %879, %883 : vector<2x32xf32>
    %cst_207 = arith.constant dense<0.000000e+00> : vector<2x64xf32>
    %885 = tpu.matmul %884, %7, %cst_207 {dimension_numbers = #tpu.dot_dimension_numbers<[1], [0], [0], [1], [0, 0, 1, 1], [], []>} : vector<2x32xf32>, vector<32x64xf32>, vector<2x64xf32> -> vector<2x64xf32>
    %886 = vector.extract_strided_slice %885 {offsets = [0, 0], sizes = [2, 32], strides = [1, 1]} : vector<2x64xf32> to vector<2x32xf32>
    %887 = vector.broadcast %8 : vector<1x32xf32> to vector<2x32xf32>
    %888 = arith.addf %886, %887 : vector<2x32xf32>
    %889 = vector.extract_strided_slice %885 {offsets = [0, 32], sizes = [2, 32], strides = [1, 1]} : vector<2x64xf32> to vector<2x32xf32>
    %890 = vector.shape_cast %888 : vector<2x32xf32> to vector<2x1x32xf32>
    %891 = vector.broadcast %890 : vector<2x1x32xf32> to vector<2x8x32xf32>
    %892 = arith.addf %891, %245 : vector<2x8x32xf32>
    %893 = math.tanh %892 : vector<2x8x32xf32>
    %894 = vector.shape_cast %9 : vector<1x32xf32> to vector<1x1x32xf32>
    %895 = vector.broadcast %894 : vector<1x1x32xf32> to vector<2x8x32xf32>
    %896 = arith.mulf %895, %893 : vector<2x8x32xf32>
    %cst_208 = arith.constant dense<0.000000e+00> : vector<2x8xf32>
    %897 = vector.multi_reduction <add>, %896, %cst_208 [2] : vector<2x8x32xf32> to vector<2x8xf32>
    %cst_209 = arith.constant dense<0xFF800000> : vector<2xf32>
    %898 = vector.multi_reduction <maximumf>, %897, %cst_209 [1] : vector<2x8xf32> to vector<2xf32>
    %899 = vector.shape_cast %898 : vector<2xf32> to vector<2x1xf32>
    %900 = vector.broadcast %899 : vector<2x1xf32> to vector<2x8xf32>
    %901 = arith.subf %897, %900 : vector<2x8xf32>
    %902 = math.exp %901 : vector<2x8xf32>
    %cst_210 = arith.constant dense<0.000000e+00> : vector<2xf32>
    %903 = vector.multi_reduction <add>, %902, %cst_210 [1] : vector<2x8xf32> to vector<2xf32>
    %904 = vector.shape_cast %903 : vector<2xf32> to vector<2x1xf32>
    %905 = vector.broadcast %904 : vector<2x1xf32> to vector<2x8xf32>
    %906 = arith.divf %902, %905 : vector<2x8xf32>
    %cst_211 = arith.constant 0.000000e+00 : f32
    %907 = vector.broadcast %cst_211 : f32 to vector<2x8xf32>
    %908 = arith.cmpf oeq, %842, %907 : vector<2x8xf32>
    %cst_212 = arith.constant 0xFF800000 : f32
    %909 = vector.broadcast %cst_212 : f32 to vector<2x8xf32>
    %910 = arith.select %908, %909, %897 : vector<2x8xi1>, vector<2x8xf32>
    %cst_213 = arith.constant dense<0xFF800000> : vector<2xf32>
    %911 = vector.multi_reduction <maximumf>, %910, %cst_213 [1] : vector<2x8xf32> to vector<2xf32>
    %912 = vector.shape_cast %911 : vector<2xf32> to vector<2x1xf32>
    %913 = vector.broadcast %912 : vector<2x1xf32> to vector<2x8xf32>
    %914 = arith.subf %910, %913 : vector<2x8xf32>
    %915 = math.exp %914 : vector<2x8xf32>
    %cst_214 = arith.constant dense<0.000000e+00> : vector<2xf32>
    %916 = vector.multi_reduction <add>, %915, %cst_214 [1] : vector<2x8xf32> to vector<2xf32>
    %917 = vector.shape_cast %916 : vector<2xf32> to vector<2x1xf32>
    %918 = vector.broadcast %917 : vector<2x1xf32> to vector<2x8xf32>
    %919 = arith.divf %915, %918 : vector<2x8xf32>
    %920 = vector.shape_cast %919 : vector<2x8xf32> to vector<2x8x1xf32>
    %921 = vector.broadcast %920 : vector<2x8x1xf32> to vector<2x8x32xf32>
    %922 = arith.mulf %921, %248 : vector<2x8x32xf32>
    %cst_215 = arith.constant dense<0.000000e+00> : vector<2x32xf32>
    %923 = vector.multi_reduction <add>, %922, %cst_215 [1] : vector<2x8x32xf32> to vector<2x32xf32>
    %924 = arith.addf %923, %889 : vector<2x32xf32>
    %925 = vector.broadcast %10 : vector<1x32xf32> to vector<2x32xf32>
    %926 = arith.addf %924, %925 : vector<2x32xf32>
    %927 = math.tanh %926 : vector<2x32xf32>
    %928 = arith.mulf %919, %842 : vector<2x8xf32>
    %cst_216 = arith.constant dense<0xFF800000> : vector<2xf32>
    %929 = vector.multi_reduction <maximumf>, %928, %cst_216 [1] : vector<2x8xf32> to vector<2xf32>
    %930 = vector.shape_cast %929 : vector<2xf32> to vector<2x1xf32>
    %931 = vector.broadcast %930 : vector<2x1xf32> to vector<2x8xf32>
    %932 = arith.cmpf oeq, %928, %931 : vector<2x8xf32>
    %c8_i32_217 = arith.constant 8 : i32
    %933 = vector.broadcast %c8_i32_217 : i32 to vector<2x8xi32>
    %934 = arith.select %932, %249, %933 : vector<2x8xi1>, vector<2x8xi32>
    %cst_218 = arith.constant dense<2147483647> : vector<2xi32>
    %935 = vector.multi_reduction <minsi>, %934, %cst_218 [1] : vector<2x8xi32> to vector<2xi32>
    %936 = vector.shape_cast %935 : vector<2xi32> to vector<2x1xi32>
    %937 = vector.broadcast %936 : vector<2x1xi32> to vector<2x8xi32>
    %938 = arith.cmpi eq, %249, %937 : vector<2x8xi32>
    %939 = arith.extui %938 : vector<2x8xi1> to vector<2x8xi32>
    %940 = arith.sitofp %939 : vector<2x8xi32> to vector<2x8xf32>
    %cst_219 = arith.constant 1.000000e+00 : f32
    %941 = vector.broadcast %cst_219 : f32 to vector<2x8xf32>
    %942 = arith.subf %941, %940 : vector<2x8xf32>
    %943 = arith.mulf %842, %942 : vector<2x8xf32>
    %944 = vector.shape_cast %940 : vector<2x8xf32> to vector<2x8x1xf32>
    %945 = vector.broadcast %944 : vector<2x8x1xf32> to vector<2x8x128xf32>
    %946 = arith.mulf %945, %20 : vector<2x8x128xf32>
    %cst_220 = arith.constant dense<0.000000e+00> : vector<2x128xf32>
    %947 = vector.multi_reduction <add>, %946, %cst_220 [1] : vector<2x8x128xf32> to vector<2x128xf32>
    %c6_i32_221 = arith.constant 6 : i32
    %948 = vector.broadcast %c6_i32_221 : i32 to vector<2x8x8xi32>
    %949 = arith.cmpi eq, %250, %948 : vector<2x8x8xi32>
    %950 = vector.shape_cast %919 : vector<2x8xf32> to vector<2x1x8xf32>
    %951 = vector.shape_cast %950 : vector<2x1x8xf32> to vector<2x1x8xf32>
    %952 = vector.broadcast %951 : vector<2x1x8xf32> to vector<2x8x8xf32>
    %953 = arith.select %949, %952, %852 : vector<2x8x8xi1>, vector<2x8x8xf32>
    %c6_i32_222 = arith.constant 6 : i32
    %954 = vector.broadcast %c6_i32_222 : i32 to vector<2x8x8xi32>
    %955 = arith.cmpi eq, %250, %954 : vector<2x8x8xi32>
    %956 = vector.shape_cast %906 : vector<2x8xf32> to vector<2x1x8xf32>
    %957 = vector.shape_cast %956 : vector<2x1x8xf32> to vector<2x1x8xf32>
    %958 = vector.broadcast %957 : vector<2x1x8xf32> to vector<2x8x8xf32>
    %959 = arith.select %955, %958, %858 : vector<2x8x8xi1>, vector<2x8x8xf32>
    %c6_i32_223 = arith.constant 6 : i32
    %960 = vector.broadcast %c6_i32_223 : i32 to vector<2x8xi32>
    %961 = arith.cmpi eq, %249, %960 : vector<2x8xi32>
    %962 = vector.shape_cast %936 : vector<2x1xi32> to vector<2x1xi32>
    %963 = vector.broadcast %962 : vector<2x1xi32> to vector<2x8xi32>
    %964 = arith.select %961, %963, %863 : vector<2x8xi1>, vector<2x8xi32>
    %cst_224 = arith.constant dense<0.000000e+00> : vector<2x128xf32>
    %965 = tpu.matmul %927, %5, %cst_224 {dimension_numbers = #tpu.dot_dimension_numbers<[1], [0], [0], [1], [0, 0, 1, 1], [], []>} : vector<2x32xf32>, vector<32x128xf32>, vector<2x128xf32> -> vector<2x128xf32>
    %966 = arith.addf %947, %965 : vector<2x128xf32>
    %967 = vector.broadcast %6 : vector<1x128xf32> to vector<2x128xf32>
    %968 = arith.addf %966, %967 : vector<2x128xf32>
    %cst_225 = arith.constant 0.000000e+00 : f32
    %969 = vector.broadcast %cst_225 : f32 to vector<2x128xf32>
    %970 = arith.subf %969, %968 : vector<2x128xf32>
    %971 = math.exp %970 : vector<2x128xf32>
    %cst_226 = arith.constant 1.000000e+00 : f32
    %972 = vector.broadcast %cst_226 : f32 to vector<2x128xf32>
    %973 = arith.addf %972, %971 : vector<2x128xf32>
    %cst_227 = arith.constant 1.000000e+00 : f32
    %974 = vector.broadcast %cst_227 : f32 to vector<2x128xf32>
    %975 = arith.divf %974, %973 : vector<2x128xf32>
    %976 = math.tanh %968 : vector<2x128xf32>
    %977 = vector.extract_strided_slice %975 {offsets = [0, 0], sizes = [2, 32], strides = [1, 1]} : vector<2x128xf32> to vector<2x32xf32>
    %978 = vector.extract_strided_slice %975 {offsets = [0, 32], sizes = [2, 32], strides = [1, 1]} : vector<2x128xf32> to vector<2x32xf32>
    %979 = vector.extract_strided_slice %976 {offsets = [0, 64], sizes = [2, 32], strides = [1, 1]} : vector<2x128xf32> to vector<2x32xf32>
    %980 = vector.extract_strided_slice %975 {offsets = [0, 96], sizes = [2, 32], strides = [1, 1]} : vector<2x128xf32> to vector<2x32xf32>
    %981 = arith.mulf %978, %882 : vector<2x32xf32>
    %982 = arith.mulf %977, %979 : vector<2x32xf32>
    %983 = arith.addf %981, %982 : vector<2x32xf32>
    %984 = math.tanh %983 : vector<2x32xf32>
    %985 = arith.mulf %980, %984 : vector<2x32xf32>
    %cst_228 = arith.constant dense<0.000000e+00> : vector<2x64xf32>
    %986 = tpu.matmul %985, %7, %cst_228 {dimension_numbers = #tpu.dot_dimension_numbers<[1], [0], [0], [1], [0, 0, 1, 1], [], []>} : vector<2x32xf32>, vector<32x64xf32>, vector<2x64xf32> -> vector<2x64xf32>
    %987 = vector.extract_strided_slice %986 {offsets = [0, 0], sizes = [2, 32], strides = [1, 1]} : vector<2x64xf32> to vector<2x32xf32>
    %988 = vector.broadcast %8 : vector<1x32xf32> to vector<2x32xf32>
    %989 = arith.addf %987, %988 : vector<2x32xf32>
    %990 = vector.shape_cast %989 : vector<2x32xf32> to vector<2x1x32xf32>
    %991 = vector.broadcast %990 : vector<2x1x32xf32> to vector<2x8x32xf32>
    %992 = arith.addf %991, %245 : vector<2x8x32xf32>
    %993 = math.tanh %992 : vector<2x8x32xf32>
    %994 = vector.shape_cast %9 : vector<1x32xf32> to vector<1x1x32xf32>
    %995 = vector.broadcast %994 : vector<1x1x32xf32> to vector<2x8x32xf32>
    %996 = arith.mulf %995, %993 : vector<2x8x32xf32>
    %cst_229 = arith.constant dense<0.000000e+00> : vector<2x8xf32>
    %997 = vector.multi_reduction <add>, %996, %cst_229 [2] : vector<2x8x32xf32> to vector<2x8xf32>
    %cst_230 = arith.constant dense<0xFF800000> : vector<2xf32>
    %998 = vector.multi_reduction <maximumf>, %997, %cst_230 [1] : vector<2x8xf32> to vector<2xf32>
    %999 = vector.shape_cast %998 : vector<2xf32> to vector<2x1xf32>
    %1000 = vector.broadcast %999 : vector<2x1xf32> to vector<2x8xf32>
    %1001 = arith.subf %997, %1000 : vector<2x8xf32>
    %1002 = math.exp %1001 : vector<2x8xf32>
    %cst_231 = arith.constant dense<0.000000e+00> : vector<2xf32>
    %1003 = vector.multi_reduction <add>, %1002, %cst_231 [1] : vector<2x8xf32> to vector<2xf32>
    %1004 = vector.shape_cast %1003 : vector<2xf32> to vector<2x1xf32>
    %1005 = vector.broadcast %1004 : vector<2x1xf32> to vector<2x8xf32>
    %1006 = arith.divf %1002, %1005 : vector<2x8xf32>
    %cst_232 = arith.constant 0.000000e+00 : f32
    %1007 = vector.broadcast %cst_232 : f32 to vector<2x8xf32>
    %1008 = arith.cmpf oeq, %943, %1007 : vector<2x8xf32>
    %cst_233 = arith.constant 0xFF800000 : f32
    %1009 = vector.broadcast %cst_233 : f32 to vector<2x8xf32>
    %1010 = arith.select %1008, %1009, %997 : vector<2x8xi1>, vector<2x8xf32>
    %cst_234 = arith.constant dense<0xFF800000> : vector<2xf32>
    %1011 = vector.multi_reduction <maximumf>, %1010, %cst_234 [1] : vector<2x8xf32> to vector<2xf32>
    %1012 = vector.shape_cast %1011 : vector<2xf32> to vector<2x1xf32>
    %1013 = vector.broadcast %1012 : vector<2x1xf32> to vector<2x8xf32>
    %1014 = arith.subf %1010, %1013 : vector<2x8xf32>
    %1015 = math.exp %1014 : vector<2x8xf32>
    %cst_235 = arith.constant dense<0.000000e+00> : vector<2xf32>
    %1016 = vector.multi_reduction <add>, %1015, %cst_235 [1] : vector<2x8xf32> to vector<2xf32>
    %1017 = vector.shape_cast %1016 : vector<2xf32> to vector<2x1xf32>
    %1018 = vector.broadcast %1017 : vector<2x1xf32> to vector<2x8xf32>
    %1019 = arith.divf %1015, %1018 : vector<2x8xf32>
    %1020 = arith.mulf %1019, %943 : vector<2x8xf32>
    %cst_236 = arith.constant dense<0xFF800000> : vector<2xf32>
    %1021 = vector.multi_reduction <maximumf>, %1020, %cst_236 [1] : vector<2x8xf32> to vector<2xf32>
    %1022 = vector.shape_cast %1021 : vector<2xf32> to vector<2x1xf32>
    %1023 = vector.broadcast %1022 : vector<2x1xf32> to vector<2x8xf32>
    %1024 = arith.cmpf oeq, %1020, %1023 : vector<2x8xf32>
    %c8_i32_237 = arith.constant 8 : i32
    %1025 = vector.broadcast %c8_i32_237 : i32 to vector<2x8xi32>
    %1026 = arith.select %1024, %249, %1025 : vector<2x8xi1>, vector<2x8xi32>
    %cst_238 = arith.constant dense<2147483647> : vector<2xi32>
    %1027 = vector.multi_reduction <minsi>, %1026, %cst_238 [1] : vector<2x8xi32> to vector<2xi32>
    %1028 = vector.shape_cast %1027 : vector<2xi32> to vector<2x1xi32>
    %c7_i32_239 = arith.constant 7 : i32
    %1029 = vector.broadcast %c7_i32_239 : i32 to vector<2x8x8xi32>
    %1030 = arith.cmpi eq, %250, %1029 : vector<2x8x8xi32>
    %1031 = vector.shape_cast %1019 : vector<2x8xf32> to vector<2x1x8xf32>
    %1032 = vector.shape_cast %1031 : vector<2x1x8xf32> to vector<2x1x8xf32>
    %1033 = vector.broadcast %1032 : vector<2x1x8xf32> to vector<2x8x8xf32>
    %1034 = arith.select %1030, %1033, %953 : vector<2x8x8xi1>, vector<2x8x8xf32>
    %c7_i32_240 = arith.constant 7 : i32
    %1035 = vector.broadcast %c7_i32_240 : i32 to vector<2x8x8xi32>
    %1036 = arith.cmpi eq, %250, %1035 : vector<2x8x8xi32>
    %1037 = vector.shape_cast %1006 : vector<2x8xf32> to vector<2x1x8xf32>
    %1038 = vector.shape_cast %1037 : vector<2x1x8xf32> to vector<2x1x8xf32>
    %1039 = vector.broadcast %1038 : vector<2x1x8xf32> to vector<2x8x8xf32>
    %1040 = arith.select %1036, %1039, %959 : vector<2x8x8xi1>, vector<2x8x8xf32>
    %c7_i32_241 = arith.constant 7 : i32
    %1041 = vector.broadcast %c7_i32_241 : i32 to vector<2x8xi32>
    %1042 = arith.cmpi eq, %249, %1041 : vector<2x8xi32>
    %1043 = vector.shape_cast %1028 : vector<2x1xi32> to vector<2x1xi32>
    %1044 = vector.broadcast %1043 : vector<2x1xi32> to vector<2x8xi32>
    %1045 = arith.select %1042, %1044, %964 : vector<2x8xi1>, vector<2x8xi32>
    %c0_242 = arith.constant 0 : index
    %c0_243 = arith.constant 0 : index
    %c0_244 = arith.constant 0 : index
    %1046 = vector.load %arg18[%c0_242, %c0_243, %c0_244] : memref<2x8x8xf32, #tpu.memory_space<vmem>>, vector<2x8x8xf32>
    tpu.vector_store %arg18[%c0_242, %c0_243, %c0_244], %1034 {strides = array<i32>} : memref<2x8x8xf32, #tpu.memory_space<vmem>>, vector<2x8x8xf32>,
    %c0_245 = arith.constant 0 : index
    %c0_246 = arith.constant 0 : index
    %c0_247 = arith.constant 0 : index
    %1047 = vector.load %arg19[%c0_245, %c0_246, %c0_247] : memref<2x8x8xf32, #tpu.memory_space<vmem>>, vector<2x8x8xf32>
    tpu.vector_store %arg19[%c0_245, %c0_246, %c0_247], %1040 {strides = array<i32>} : memref<2x8x8xf32, #tpu.memory_space<vmem>>, vector<2x8x8xf32>,
    %c0_248 = arith.constant 0 : index
    %c0_249 = arith.constant 0 : index
    %1048 = vector.load %arg20[%c0_248, %c0_249] : memref<2x8xi32, #tpu.memory_space<vmem>>, vector<2x8xi32>
    tpu.vector_store %arg20[%c0_248, %c0_249], %1045 {strides = array<i32>} : memref<2x8xi32, #tpu.memory_space<vmem>>, vector<2x8xi32>,
    return
  }
}

</mosaic_0001>

<llo_original>
// kernel: pointer_net_forward.1
$region0: #{pointer_net_forward.1}
  #allocation0 [shape = 'u32[]', space=smem, size = 0x4, offset = 0x4, fixed_abs, tag = 'smem constant byte address 0x4 - core index']
  #allocation1 [shape = 'u32[144,128]{1,0:T(1,128)}', space=vmem, size = 0x12000, scoped, tag = 'internal scratch']
  %s0 = inlined_call_operand.vmem [shape: f32[2,8,32], index: 0, kind: input, shape index: {}]
  %s1 = inlined_call_operand.vmem [shape: f32[2,8], index: 1, kind: input, shape index: {}]
  %s2 = inlined_call_operand.vmem [shape: f32[2,32], index: 2, kind: input, shape index: {}]
  %s3 = inlined_call_operand.vmem [shape: f32[2,32], index: 3, kind: input, shape index: {}]
  %s4 = inlined_call_operand.vmem [shape: f32[1,32], index: 4, kind: input, shape index: {}]
  %s5 = inlined_call_operand.vmem [shape: f32[32,128], index: 5, kind: input, shape index: {}]
  %s6 = inlined_call_operand.vmem [shape: f32[32,128], index: 6, kind: input, shape index: {}]
  %s7 = inlined_call_operand.vmem [shape: f32[1,128], index: 7, kind: input, shape index: {}]
  %s8 = inlined_call_operand.vmem [shape: f32[32,32], index: 8, kind: input, shape index: {}]
  %s9 = inlined_call_operand.vmem [shape: f32[1,32], index: 9, kind: input, shape index: {}]
  %s10 = inlined_call_operand.vmem [shape: f32[32,128], index: 10, kind: input, shape index: {}]
  %s11 = inlined_call_operand.vmem [shape: f32[32,128], index: 11, kind: input, shape index: {}]
  %s12 = inlined_call_operand.vmem [shape: f32[1,128], index: 12, kind: input, shape index: {}]
  %s13 = inlined_call_operand.vmem [shape: f32[32,64], index: 13, kind: input, shape index: {}]
  %s14 = inlined_call_operand.vmem [shape: f32[1,32], index: 14, kind: input, shape index: {}]
  %s15 = inlined_call_operand.vmem [shape: f32[1,32], index: 15, kind: input, shape index: {}]
  %s16 = inlined_call_operand.vmem [shape: f32[32,32], index: 16, kind: input, shape index: {}]
  %s17 = inlined_call_operand.vmem [shape: f32[1,32], index: 17, kind: input, shape index: {}]
  %s18 = inlined_call_operand.hbm [shape: f32[2,8,8], index: 18, kind: output, shape index: {0}]
  %s19 = inlined_call_operand.hbm [shape: f32[2,8,8], index: 19, kind: output, shape index: {1}]
  %s20 = inlined_call_operand.hbm [shape: s32[2,8], index: 20, kind: output, shape index: {2}]
  %21 = xla_tuple %s18, %s19, %s20
  %s22 = sld [smem:[#allocation0]]
  $region98: #{pointer_net_forward.1} parent=0
    _
  %s24 = ssub.s32 1, %s22
  %s25 = scalar_select 0, %s24, %s22
  $region1: #{pointer_net_forward.1} parent=0
    #allocation2 [shape = 'u8[8192]{0}', space=vmem, size = 0x2000, scoped, tag = 'output window, operand 0, single buffered']
    #allocation3 [shape = 's32[1]{0}', space=sflag, size = 0x4, scoped, tag = 'scoped memory for pointer_net_forward.1']
    #allocation4 [shape = 'u8[8192]{0}', space=vmem, size = 0x2000, scoped, tag = 'output window, operand 1, single buffered']
    #allocation5 [shape = 's32[1]{0}', space=sflag, size = 0x4, scoped, tag = 'scoped memory for pointer_net_forward.1']
    #allocation6 [shape = 'u8[1024]{0}', space=vmem, size = 0x400, scoped, tag = 'output window, operand 2, single buffered']
    %26 = vsyncpa [#allocation3], 0
    %27 = vsyncpa [#allocation5], 0
    // Predicated region
    $region2: #{pointer_net_forward.1} parent=1 // pred_check
      _
    $region3: #{pointer_net_forward.1} parent=1 // pred_check_branch
      %29 = sbr.rel (0) target = $region5
    $region4: #{pointer_net_forward.1} parent=1 // pred_region
      _
    $region5: #{pointer_net_forward.1} parent=1 // pred_fallthru
      _
    // Predicated region
    $region6: #{pointer_net_forward.1} parent=1 // pred_check
      _
    $region7: #{pointer_net_forward.1} parent=1 // pred_check_branch
      %31 = sbr.rel (0) target = $region9
    $region8: #{pointer_net_forward.1} parent=1 // pred_region
      _
    $region9: #{pointer_net_forward.1} parent=1 // pred_fallthru
      _
    // Predicated region
    $region10: #{pointer_net_forward.1} parent=1 // pred_check
      _
    $region11: #{pointer_net_forward.1} parent=1 // pred_check_branch
      %33 = sbr.rel (0) target = $region13
    $region12: #{pointer_net_forward.1} parent=1 // pred_region
      _
    $region13: #{pointer_net_forward.1} parent=1 // pred_fallthru
      _
    // Predicated region
    $region14: #{pointer_net_forward.1} parent=1 // pred_check
      _
    $region15: #{pointer_net_forward.1} parent=1 // pred_check_branch
      %35 = sbr.rel (0) target = $region17
    $region16: #{pointer_net_forward.1} parent=1 // pred_region
      _
    $region17: #{pointer_net_forward.1} parent=1 // pred_fallthru
      _
    // Predicated region
    $region18: #{pointer_net_forward.1} parent=1 // pred_check
      _
    $region19: #{pointer_net_forward.1} parent=1 // pred_check_branch
      %37 = sbr.rel (0) target = $region21
    $region20: #{pointer_net_forward.1} parent=1 // pred_region
      _
    $region21: #{pointer_net_forward.1} parent=1 // pred_fallthru
      _
    // Predicated region
    $region22: #{pointer_net_forward.1} parent=1 // pred_check
      _
    $region23: #{pointer_net_forward.1} parent=1 // pred_check_branch
      %39 = sbr.rel (0) target = $region25
    $region24: #{pointer_net_forward.1} parent=1 // pred_region
      _
    $region25: #{pointer_net_forward.1} parent=1 // pred_fallthru
      _
    // Predicated region
    $region26: #{pointer_net_forward.1} parent=1 // pred_check
      _
    $region27: #{pointer_net_forward.1} parent=1 // pred_check_branch
      %41 = sbr.rel (0) target = $region29
    $region28: #{pointer_net_forward.1} parent=1 // pred_region
      _
    $region29: #{pointer_net_forward.1} parent=1 // pred_fallthru
      _
    // Predicated region
    $region30: #{pointer_net_forward.1} parent=1 // pred_check
      _
    $region31: #{pointer_net_forward.1} parent=1 // pred_check_branch
      %43 = sbr.rel (0) target = $region33
    $region32: #{pointer_net_forward.1} parent=1 // pred_region
      _
    $region33: #{pointer_net_forward.1} parent=1 // pred_fallthru
      _
    // Predicated region
    $region34: #{pointer_net_forward.1} parent=1 // pred_check
      _
    $region35: #{pointer_net_forward.1} parent=1 // pred_check_branch
      %45 = sbr.rel (0) target = $region37
    $region36: #{pointer_net_forward.1} parent=1 // pred_region
      _
    $region37: #{pointer_net_forward.1} parent=1 // pred_fallthru
      _
    // Predicated region
    $region38: #{pointer_net_forward.1} parent=1 // pred_check
      _
    $region39: #{pointer_net_forward.1} parent=1 // pred_check_branch
      %47 = sbr.rel (0) target = $region41
    $region40: #{pointer_net_forward.1} parent=1 // pred_region
      _
    $region41: #{pointer_net_forward.1} parent=1 // pred_fallthru
      _
    // Predicated region
    $region42: #{pointer_net_forward.1} parent=1 // pred_check
      _
    $region43: #{pointer_net_forward.1} parent=1 // pred_check_branch
      %49 = sbr.rel (0) target = $region45
    $region44: #{pointer_net_forward.1} parent=1 // pred_region
      _
    $region45: #{pointer_net_forward.1} parent=1 // pred_fallthru
      _
    // Predicated region
    $region46: #{pointer_net_forward.1} parent=1 // pred_check
      _
    $region47: #{pointer_net_forward.1} parent=1 // pred_check_branch
      %51 = sbr.rel (0) target = $region49
    $region48: #{pointer_net_forward.1} parent=1 // pred_region
      _
    $region49: #{pointer_net_forward.1} parent=1 // pred_fallthru
      _
    // Predicated region
    $region50: #{pointer_net_forward.1} parent=1 // pred_check
      _
    $region51: #{pointer_net_forward.1} parent=1 // pred_check_branch
      %53 = sbr.rel (0) target = $region53
    $region52: #{pointer_net_forward.1} parent=1 // pred_region
      _
    $region53: #{pointer_net_forward.1} parent=1 // pred_fallthru
      _
    // Predicated region
    $region54: #{pointer_net_forward.1} parent=1 // pred_check
      _
    $region55: #{pointer_net_forward.1} parent=1 // pred_check_branch
      %55 = sbr.rel (0) target = $region57
    $region56: #{pointer_net_forward.1} parent=1 // pred_region
      _
    $region57: #{pointer_net_forward.1} parent=1 // pred_fallthru
      _
    // Predicated region
    $region58: #{pointer_net_forward.1} parent=1 // pred_check
      _
    $region59: #{pointer_net_forward.1} parent=1 // pred_check_branch
      %57 = sbr.rel (0) target = $region61
    $region60: #{pointer_net_forward.1} parent=1 // pred_region
      _
    $region61: #{pointer_net_forward.1} parent=1 // pred_fallthru
      _
    // Predicated region
    $region62: #{pointer_net_forward.1} parent=1 // pred_check
      _
    $region63: #{pointer_net_forward.1} parent=1 // pred_check_branch
      %59 = sbr.rel (0) target = $region65
    $region64: #{pointer_net_forward.1} parent=1 // pred_region
      _
    $region65: #{pointer_net_forward.1} parent=1 // pred_fallthru
      _
    // Predicated region
    $region66: #{pointer_net_forward.1} parent=1 // pred_check
      _
    $region67: #{pointer_net_forward.1} parent=1 // pred_check_branch
      %61 = sbr.rel (0) target = $region69
    $region68: #{pointer_net_forward.1} parent=1 // pred_region
      _
    $region69: #{pointer_net_forward.1} parent=1 // pred_fallthru
      _
    // Predicated region
    $region70: #{pointer_net_forward.1} parent=1 // pred_check
      _
    $region71: #{pointer_net_forward.1} parent=1 // pred_check_branch
      %63 = sbr.rel (0) target = $region73
    $region72: #{pointer_net_forward.1} parent=1 // pred_region
      _
    $region73: #{pointer_net_forward.1} parent=1 // pred_fallthru
      _
    %v64 = vld [vmem:[%s0] sm:$0xff]
    %v65 = vld [vmem:[%s0 + $0x8] sm:$0xff]
    %v66 = vld [vmem:[%s1] sm:$0x3]
    %v67 = vld [vmem:[%s2] sm:$0x3]
    %v68 = vld [vmem:[%s3] sm:$0x3]
    %v69 = vld [vmem:[%s6] sm:$0xff]
    %v70 = vld [vmem:[%s6 + $0x8] sm:$0xff]
    %v71 = vld [vmem:[%s6 + $0x10] sm:$0xff]
    %v72 = vld [vmem:[%s6 + $0x18] sm:$0xff]
    %v73 = vld [vmem:[%s11] sm:$0xff]
    %v74 = vld [vmem:[%s11 + $0x8] sm:$0xff]
    %v75 = vld [vmem:[%s11 + $0x10] sm:$0xff]
    %v76 = vld [vmem:[%s11 + $0x18] sm:$0xff]
    %v77 = vld [vmem:[%s12] sm:$0x1]
    %v78 = vld [vmem:[%s13] sm:$0xff]
    %v79 = vld [vmem:[%s13 + $0x8] sm:$0xff]
    %v80 = vld [vmem:[%s13 + $0x10] sm:$0xff]
    %v81 = vld [vmem:[%s13 + $0x18] sm:$0xff]
    %v82 = vld [vmem:[%s14] sm:$0x1]
    %v83 = vld [vmem:[%s15] sm:$0x1]
    %v84 = vld [vmem:[%s17] sm:$0x1]
    %v85 = vld [vmem:[%s5] sm:$0xff]
    %v86 = vld [vmem:[%s5 + $0x8] sm:$0xff]
    %v87 = vld [vmem:[%s5 + $0x10] sm:$0xff]
    %v88 = vld [vmem:[%s5 + $0x18] sm:$0xff]
    %v89 = vld [vmem:[%s7] sm:$0x1]
    %v91 = vlaneseq
    %v92 = vshrl.u32 %v91, 7
    %v93 = vsub.s32 0, %v92
    %v94 = vrot.slane %v89, %v93
    %vm96 = vcmask 261120
    %v98 = vsel %vm96, %v64, 0
    %v101 = vsel %vm96, %v65, 0
    %103 = vmatprep.subr.mxu0 0.0
    %104 = vmatpush1.msra.mxu0 %v85
    %105 = vmatprep.subr.mxu0 0.0
    %106 = vmatpush1.msra.mxu0 %v86
    %107 = vmatprep.subr.mxu0 0.0
    %108 = vmatpush1.msra.mxu0 %v87
    %109 = vmatprep.subr.mxu0 0.0
    %110 = vmatpush1.msra.mxu0 %v88
    %111 = vmatprep.subr.mxu0 0.0
    %112 = vmatpush1.msra.mxu0 0.0
    %113 = vmatprep.subr.mxu0 0.0
    %114 = vmatpush1.msra.mxu0 0.0
    %115 = vmatprep.subr.mxu0 0.0
    %116 = vmatpush1.msra.mxu0 0.0
    %117 = vmatprep.subr.mxu0 0.0
    %118 = vmatpush1.msra.mxu0 0.0
    %119 = vmatprep.subr.mxu0 0.0
    %120 = vmatpush1.msra.mxu0 0.0
    %121 = vmatprep.subr.mxu0 0.0
    %122 = vmatpush1.msra.mxu0 0.0
    %123 = vmatprep.subr.mxu0 0.0
    %124 = vmatpush1.msra.mxu0 0.0
    %125 = vmatprep.subr.mxu0 0.0
    %126 = vmatpush1.msra.mxu0 0.0
    %127 = vmatprep.subr.mxu0 0.0
    %128 = vmatpush1.msra.mxu0 0.0
    %129 = vmatprep.subr.mxu0 0.0
    %130 = vmatpush1.msra.mxu0 0.0
    %131 = vmatprep.subr.mxu0 0.0
    %132 = vmatpush1.msra.mxu0 0.0
    %133 = vmatprep.subr.mxu0 0.0
    %134 = vmatpush1.msra.mxu0 0.0
    %135 = vmatprep.subr.mxu0 0.0
    %136 = vmatpush1.msra.mxu0 0.0
    %137 = vmatprep.subr.mxu0 0.0
    %138 = vmatpush1.msra.mxu0 0.0
    %139 = vmatprep.subr.mxu0 0.0
    %140 = vmatpush1.msra.mxu0 0.0
    %141 = vmatprep.subr.mxu0 0.0
    %142 = vmatpush1.msra.mxu0 0.0
    %143 = vmatprep.subr.mxu0 0.0
    %144 = vmatpush1.msra.mxu0 0.0
    %145 = vmatprep.subr.mxu0 0.0
    %146 = vmatpush1.msra.mxu0 0.0
    %147 = vmatprep.subr.mxu0 0.0
    %148 = vmatpush1.msra.mxu0 0.0
    %149 = vmatprep.subr.mxu0 0.0
    %150 = vmatpush1.msra.mxu0 0.0
    %151 = vmatprep.subr.mxu0 0.0
    %152 = vmatpush1.msra.mxu0 0.0
    %153 = vmatprep.subr.mxu0 0.0
    %154 = vmatpush1.msra.mxu0 0.0
    %155 = vmatprep.subr.mxu0 0.0
    %156 = vmatpush1.msra.mxu0 0.0
    %157 = vmatprep.subr.mxu0 0.0
    %158 = vmatpush1.msra.mxu0 0.0
    %159 = vmatprep.subr.mxu0 0.0
    %160 = vmatpush1.msra.mxu0 0.0
    %161 = vmatprep.subr.mxu0 0.0
    %162 = vmatpush1.msra.mxu0 0.0
    %163 = vmatprep.subr.mxu0 0.0
    %164 = vmatpush1.msra.mxu0 0.0
    %165 = vmatprep.subr.mxu0 0.0
    %166 = vmatpush1.msra.mxu0 0.0
    %167 = vmatprep.mubr.f32.mxu0 0.0
    %168 = vmatmul.mubr.f32.gmra.mrb[0].mxu0 %v98
    %v169 = vpop.f32.mrb[0].mxu0
    %v170 = vadd.f32 %v94, %v169
    %v171 = vpop.f32.mrb[0].mxu0
    %172 = vmatprep.mubr.f32.mxu0 0.0
    %173 = vmatmul.mubr.f32.gmra.mrb[0].mxu0 %v101
    %v174 = vpop.f32.mrb[0].mxu0
    %v175 = vadd.f32 %v94, %v174
    %v176 = vpop.f32.mrb[0].mxu0
    %177 = vdwg.mxu0
    %v178 = vld [vmem:[%s10] sm:$0xff]
    %v179 = vld [vmem:[%s10 + $0x8] sm:$0xff]
    %v180 = vld [vmem:[%s10 + $0x10] sm:$0xff]
    %v181 = vld [vmem:[%s10 + $0x18] sm:$0xff]
    %182 = vmatprep.subr.mxu0 0.0
    %183 = vmatpush1.msra.mxu0 %v178
    %184 = vmatprep.subr.mxu0 0.0
    %185 = vmatpush1.msra.mxu0 %v179
    %186 = vmatprep.subr.mxu0 0.0
    %187 = vmatpush1.msra.mxu0 %v180
    %188 = vmatprep.subr.mxu0 0.0
    %189 = vmatpush1.msra.mxu0 %v181
    %190 = vmatprep.subr.mxu0 0.0
    %191 = vmatpush1.msra.mxu0 0.0
    %192 = vmatprep.subr.mxu0 0.0
    %193 = vmatpush1.msra.mxu0 0.0
    %194 = vmatprep.subr.mxu0 0.0
    %195 = vmatpush1.msra.mxu0 0.0
    %196 = vmatprep.subr.mxu0 0.0
    %197 = vmatpush1.msra.mxu0 0.0
    %198 = vmatprep.subr.mxu0 0.0
    %199 = vmatpush1.msra.mxu0 0.0
    %200 = vmatprep.subr.mxu0 0.0
    %201 = vmatpush1.msra.mxu0 0.0
    %202 = vmatprep.subr.mxu0 0.0
    %203 = vmatpush1.msra.mxu0 0.0
    %204 = vmatprep.subr.mxu0 0.0
    %205 = vmatpush1.msra.mxu0 0.0
    %206 = vmatprep.subr.mxu0 0.0
    %207 = vmatpush1.msra.mxu0 0.0
    %208 = vmatprep.subr.mxu0 0.0
    %209 = vmatpush1.msra.mxu0 0.0
    %210 = vmatprep.subr.mxu0 0.0
    %211 = vmatpush1.msra.mxu0 0.0
    %212 = vmatprep.subr.mxu0 0.0
    %213 = vmatpush1.msra.mxu0 0.0
    %214 = vmatprep.subr.mxu0 0.0
    %215 = vmatpush1.msra.mxu0 0.0
    %216 = vmatprep.subr.mxu0 0.0
    %217 = vmatpush1.msra.mxu0 0.0
    %218 = vmatprep.subr.mxu0 0.0
    %219 = vmatpush1.msra.mxu0 0.0
    %220 = vmatprep.subr.mxu0 0.0
    %221 = vmatpush1.msra.mxu0 0.0
    %222 = vmatprep.subr.mxu0 0.0
    %223 = vmatpush1.msra.mxu0 0.0
    %224 = vmatprep.subr.mxu0 0.0
    %225 = vmatpush1.msra.mxu0 0.0
    %226 = vmatprep.subr.mxu0 0.0
    %227 = vmatpush1.msra.mxu0 0.0
    %228 = vmatprep.subr.mxu0 0.0
    %229 = vmatpush1.msra.mxu0 0.0
    %230 = vmatprep.subr.mxu0 0.0
    %231 = vmatpush1.msra.mxu0 0.0
    %232 = vmatprep.subr.mxu0 0.0
    %233 = vmatpush1.msra.mxu0 0.0
    %234 = vmatprep.subr.mxu0 0.0
    %235 = vmatpush1.msra.mxu0 0.0
    %236 = vmatprep.subr.mxu0 0.0
    %237 = vmatpush1.msra.mxu0 0.0
    %238 = vmatprep.subr.mxu0 0.0
    %239 = vmatpush1.msra.mxu0 0.0
    %240 = vmatprep.subr.mxu0 0.0
    %241 = vmatpush1.msra.mxu0 0.0
    %242 = vmatprep.subr.mxu0 0.0
    %243 = vmatpush1.msra.mxu0 0.0
    %244 = vmatprep.subr.mxu0 0.0
    %245 = vmatpush1.msra.mxu0 0.0
    %246 = vmatprep.mubr.f32.mxu0 0.0
    %247 = vmatmul.mubr.f32.gmra.mrb[0].mxu0 %v98
    %v248 = vpop.f32.mrb[0].mxu0
    %v249 = vadd.f32 0.0, %v248
    %v250 = vpop.f32.mrb[0].mxu0
    %251 = vmatprep.mubr.f32.mxu0 0.0
    %252 = vmatmul.mubr.f32.gmra.mrb[0].mxu0 %v101
    %v253 = vpop.f32.mrb[0].mxu0
    %v254 = vadd.f32 0.0, %v253
    %v255 = vpop.f32.mrb[0].mxu0
    %256 = vdwg.mxu0
    %v257 = vlaneseq
    %v258 = vshrl.u32 %v257, 7
    %v260 = vsel %vm96, %v67, 0
    %262 = vmatprep.subr.mxu0 0.0
    %263 = vmatpush1.msra.mxu0 %v69
    %264 = vmatprep.subr.mxu0 0.0
    %265 = vmatpush1.msra.mxu0 %v70
    %266 = vmatprep.subr.mxu0 0.0
    %267 = vmatpush1.msra.mxu0 %v71
    %268 = vmatprep.subr.mxu0 0.0
    %269 = vmatpush1.msra.mxu0 %v72
    %270 = vmatprep.subr.mxu0 0.0
    %271 = vmatpush1.msra.mxu0 0.0
    %272 = vmatprep.subr.mxu0 0.0
    %273 = vmatpush1.msra.mxu0 0.0
    %274 = vmatprep.subr.mxu0 0.0
    %275 = vmatpush1.msra.mxu0 0.0
    %276 = vmatprep.subr.mxu0 0.0
    %277 = vmatpush1.msra.mxu0 0.0
    %278 = vmatprep.subr.mxu0 0.0
    %279 = vmatpush1.msra.mxu0 0.0
    %280 = vmatprep.subr.mxu0 0.0
    %281 = vmatpush1.msra.mxu0 0.0
    %282 = vmatprep.subr.mxu0 0.0
    %283 = vmatpush1.msra.mxu0 0.0
    %284 = vmatprep.subr.mxu0 0.0
    %285 = vmatpush1.msra.mxu0 0.0
    %286 = vmatprep.subr.mxu0 0.0
    %287 = vmatpush1.msra.mxu0 0.0
    %288 = vmatprep.subr.mxu0 0.0
    %289 = vmatpush1.msra.mxu0 0.0
    %290 = vmatprep.subr.mxu0 0.0
    %291 = vmatpush1.msra.mxu0 0.0
    %292 = vmatprep.subr.mxu0 0.0
    %293 = vmatpush1.msra.mxu0 0.0
    %294 = vmatprep.subr.mxu0 0.0
    %295 = vmatpush1.msra.mxu0 0.0
    %296 = vmatprep.subr.mxu0 0.0
    %297 = vmatpush1.msra.mxu0 0.0
    %298 = vmatprep.subr.mxu0 0.0
    %299 = vmatpush1.msra.mxu0 0.0
    %300 = vmatprep.subr.mxu0 0.0
    %301 = vmatpush1.msra.mxu0 0.0
    %302 = vmatprep.subr.mxu0 0.0
    %303 = vmatpush1.msra.mxu0 0.0
    %304 = vmatprep.subr.mxu0 0.0
    %305 = vmatpush1.msra.mxu0 0.0
    %306 = vmatprep.subr.mxu0 0.0
    %307 = vmatpush1.msra.mxu0 0.0
    %308 = vmatprep.subr.mxu0 0.0
    %309 = vmatpush1.msra.mxu0 0.0
    %310 = vmatprep.subr.mxu0 0.0
    %311 = vmatpush1.msra.mxu0 0.0
    %312 = vmatprep.subr.mxu0 0.0
    %313 = vmatpush1.msra.mxu0 0.0
    %314 = vmatprep.subr.mxu0 0.0
    %315 = vmatpush1.msra.mxu0 0.0
    %316 = vmatprep.subr.mxu0 0.0
    %317 = vmatpush1.msra.mxu0 0.0
    %318 = vmatprep.subr.mxu0 0.0
    %319 = vmatpush1.msra.mxu0 0.0
    %320 = vmatprep.subr.mxu0 0.0
    %321 = vmatpush1.msra.mxu0 0.0
    %322 = vmatprep.subr.mxu0 0.0
    %323 = vmatpush1.msra.mxu0 0.0
    %324 = vmatprep.subr.mxu0 0.0
    %325 = vmatpush1.msra.mxu0 0.0
    %326 = vmatprep.mubr.f32.mxu0 0.0
    %327 = vmatmul.mubr.f32.gmra.mrb[0].mxu0 %v260
    %v328 = vpop.f32.mrb[0].mxu0
    %v329 = vadd.f32 0.0, %v328
    %v330 = vpop.f32.mrb[0].mxu0
    %331 = vdwg.mxu0
    %v333 = vrot.slane %v329, 1
    %v336 = vadd.f32 %v170, %v329
    %v337 = vadd.f32 %v175, %v333
    %v338 = vsub.f32 0.0, %v336
    %v339 = vsub.f32 0.0, %v337
    %v340 = vmul.f32 %v338, 1.442695
    %v341 = vpow.pop %v340
    %v342 = vmul.f32 %v339, 1.442695
    %v343 = vpow.pop %v342
    %v344 = vadd.f32 %v341, 1.0
    %v345 = vadd.f32 %v343, 1.0
    %v346 = vrcp.pop %v344
    %v347 = vmul.f32 1.0, %v346
    %v348 = vrcp.pop %v345
    %v349 = vmul.f32 1.0, %v348
    %v350 = vtanh.pop %v336
    %v351 = vtanh.pop %v337
    %v353 = vrot.slane %v68, 1
    %354 = vrot.lane.b32.xlu0 %v68, 32
    %v355 = vpop.permute.xlu0 %354
    %356 = vrot.lane.b32.xlu0 %v353, 32
    %v357 = vpop.permute.xlu0 %356
    %v360 = vmul.f32 %v347, %v355
    %v361 = vmul.f32 %v349, %v357
    %364 = vrot.lane.b32.xlu0 %v350, 64
    %v365 = vpop.permute.xlu0 %364
    %366 = vrot.lane.b32.xlu0 %v351, 64
    %v367 = vpop.permute.xlu0 %366
    %v370 = vmul.f32 %v347, %v365
    %v371 = vmul.f32 %v349, %v367
    %374 = vrot.lane.b32.xlu0 %v370, 32
    %v375 = vpop.permute.xlu0 %374
    %376 = vrot.lane.b32.xlu0 %v371, 32
    %v377 = vpop.permute.xlu0 %376
    %v380 = vadd.f32 %v360, %v375
    %v381 = vadd.f32 %v361, %v377
    %v382 = vtanh.pop %v380
    %v383 = vtanh.pop %v381
    %386 = vrot.lane.b32.xlu0 %v382, 64
    %v387 = vpop.permute.xlu0 %386
    %388 = vrot.lane.b32.xlu0 %v383, 64
    %v389 = vpop.permute.xlu0 %388
    %v392 = vmul.f32 %v347, %v387
    %v393 = vmul.f32 %v349, %v389
    %vm394 = vcmp.eq.s32.totalorder %v258, 0
    %v395 = vlaneseq
    %v396 = vshrl.u32 %v395, 7
    %v397 = vsub.s32 0, %v396
    %v398 = vrot.slane %v392, %v397
    %v399 = vlaneseq
    %v400 = vshrl.u32 %v399, 7
    %v401 = vsub.s32 0, %v400
    %v402 = vrot.slane %v393, %v401
    %v403 = vsel %vm394, %v398, 0.0
    %v404 = vsel %vm394, %v402, 0.0
    %v407 = vrot.slane %v393, 7
    %vm408 = vcmask 1041409
    %v409 = vsel %vm408, %v407, %v392
    %410 = vrot.lane.b32.xlu0 %v409, 32
    %v411 = vpop.permute.xlu0 %410
    %v412 = vsel %vm96, %v411, 0
    %414 = vmatprep.subr.mxu0 0.0
    %415 = vmatpush1.msra.mxu0 %v69
    %416 = vmatprep.subr.mxu0 0.0
    %417 = vmatpush1.msra.mxu0 %v70
    %418 = vmatprep.subr.mxu0 0.0
    %419 = vmatpush1.msra.mxu0 %v71
    %420 = vmatprep.subr.mxu0 0.0
    %421 = vmatpush1.msra.mxu0 %v72
    %422 = vmatprep.subr.mxu0 0.0
    %423 = vmatpush1.msra.mxu0 0.0
    %424 = vmatprep.subr.mxu0 0.0
    %425 = vmatpush1.msra.mxu0 0.0
    %426 = vmatprep.subr.mxu0 0.0
    %427 = vmatpush1.msra.mxu0 0.0
    %428 = vmatprep.subr.mxu0 0.0
    %429 = vmatpush1.msra.mxu0 0.0
    %430 = vmatprep.subr.mxu0 0.0
    %431 = vmatpush1.msra.mxu0 0.0
    %432 = vmatprep.subr.mxu0 0.0
    %433 = vmatpush1.msra.mxu0 0.0
    %434 = vmatprep.subr.mxu0 0.0
    %435 = vmatpush1.msra.mxu0 0.0
    %436 = vmatprep.subr.mxu0 0.0
    %437 = vmatpush1.msra.mxu0 0.0
    %438 = vmatprep.subr.mxu0 0.0
    %439 = vmatpush1.msra.mxu0 0.0
    %440 = vmatprep.subr.mxu0 0.0
    %441 = vmatpush1.msra.mxu0 0.0
    %442 = vmatprep.subr.mxu0 0.0
    %443 = vmatpush1.msra.mxu0 0.0
    %444 = vmatprep.subr.mxu0 0.0
    %445 = vmatpush1.msra.mxu0 0.0
    %446 = vmatprep.subr.mxu0 0.0
    %447 = vmatpush1.msra.mxu0 0.0
    %448 = vmatprep.subr.mxu0 0.0
    %449 = vmatpush1.msra.mxu0 0.0
    %450 = vmatprep.subr.mxu0 0.0
    %451 = vmatpush1.msra.mxu0 0.0
    %452 = vmatprep.subr.mxu0 0.0
    %453 = vmatpush1.msra.mxu0 0.0
    %454 = vmatprep.subr.mxu0 0.0
    %455 = vmatpush1.msra.mxu0 0.0
    %456 = vmatprep.subr.mxu0 0.0
    %457 = vmatpush1.msra.mxu0 0.0
    %458 = vmatprep.subr.mxu0 0.0
    %459 = vmatpush1.msra.mxu0 0.0
    %460 = vmatprep.subr.mxu0 0.0
    %461 = vmatpush1.msra.mxu0 0.0
    %462 = vmatprep.subr.mxu0 0.0
    %463 = vmatpush1.msra.mxu0 0.0
    %464 = vmatprep.subr.mxu0 0.0
    %465 = vmatpush1.msra.mxu0 0.0
    %466 = vmatprep.subr.mxu0 0.0
    %467 = vmatpush1.msra.mxu0 0.0
    %468 = vmatprep.subr.mxu0 0.0
    %469 = vmatpush1.msra.mxu0 0.0
    %470 = vmatprep.subr.mxu0 0.0
    %471 = vmatpush1.msra.mxu0 0.0
    %472 = vmatprep.subr.mxu0 0.0
    %473 = vmatpush1.msra.mxu0 0.0
    %474 = vmatprep.subr.mxu0 0.0
    %475 = vmatpush1.msra.mxu0 0.0
    %476 = vmatprep.subr.mxu0 0.0
    %477 = vmatpush1.msra.mxu0 0.0
    %478 = vmatprep.mubr.f32.mxu0 0.0
    %479 = vmatmul.mubr.f32.gmra.mrb[0].mxu0 %v412
    %v480 = vpop.f32.mrb[0].mxu0
    %v481 = vadd.f32 0.0, %v480
    %v482 = vpop.f32.mrb[0].mxu0
    %483 = vdwg.mxu0
    %v485 = vrot.slane %v481, 7
    %v488 = vadd.f32 %v170, %v485
    %v489 = vadd.f32 %v175, %v481
    %v490 = vsub.f32 0.0, %v488
    %v491 = vsub.f32 0.0, %v489
    %v492 = vmul.f32 %v490, 1.442695
    %v493 = vpow.pop %v492
    %v494 = vmul.f32 %v491, 1.442695
    %v495 = vpow.pop %v494
    %v496 = vadd.f32 %v493, 1.0
    %v497 = vadd.f32 %v495, 1.0
    %v498 = vrcp.pop %v496
    %v499 = vmul.f32 1.0, %v498
    %v500 = vrcp.pop %v497
    %v501 = vmul.f32 1.0, %v500
    %v502 = vtanh.pop %v488
    %v503 = vtanh.pop %v489
    %v506 = vrot.slane %v380, 7
    %v507 = vrot.slane %v381, 7
    %v510 = vmul.f32 %v499, %v506
    %v511 = vmul.f32 %v501, %v507
    %514 = vrot.lane.b32.xlu0 %v502, 64
    %v515 = vpop.permute.xlu0 %514
    %516 = vrot.lane.b32.xlu0 %v503, 64
    %v517 = vpop.permute.xlu0 %516
    %v520 = vmul.f32 %v499, %v515
    %v521 = vmul.f32 %v501, %v517
    %524 = vrot.lane.b32.xlu0 %v520, 32
    %v525 = vpop.permute.xlu0 %524
    %526 = vrot.lane.b32.xlu0 %v521, 32
    %v527 = vpop.permute.xlu0 %526
    %v530 = vadd.f32 %v510, %v525
    %v531 = vadd.f32 %v511, %v527
    %v532 = vtanh.pop %v530
    %v533 = vtanh.pop %v531
    %536 = vrot.lane.b32.xlu0 %v532, 64
    %v537 = vpop.permute.xlu0 %536
    %538 = vrot.lane.b32.xlu0 %v533, 64
    %v539 = vpop.permute.xlu0 %538
    %v542 = vmul.f32 %v499, %v537
    %v543 = vmul.f32 %v501, %v539
    %vm544 = vcmp.eq.s32.totalorder %v258, 1
    %v545 = vlaneseq
    %v546 = vshrl.u32 %v545, 7
    %v547 = vsub.s32 1, %v546
    %v548 = vrot.slane %v542, %v547
    %v549 = vlaneseq
    %v550 = vshrl.u32 %v549, 7
    %v551 = vsub.s32 1, %v550
    %v552 = vrot.slane %v543, %v551
    %v553 = vsel %vm544, %v548, %v403
    %v554 = vsel %vm544, %v552, %v404
    %v557 = vrot.slane %v542, 1
    %v558 = vsel %vm408, %v543, %v557
    %559 = vrot.lane.b32.xlu0 %v558, 32
    %v560 = vpop.permute.xlu0 %559
    %v561 = vsel %vm96, %v560, 0
    %563 = vmatprep.subr.mxu0 0.0
    %564 = vmatpush1.msra.mxu0 %v69
    %565 = vmatprep.subr.mxu0 0.0
    %566 = vmatpush1.msra.mxu0 %v70
    %567 = vmatprep.subr.mxu0 0.0
    %568 = vmatpush1.msra.mxu0 %v71
    %569 = vmatprep.subr.mxu0 0.0
    %570 = vmatpush1.msra.mxu0 %v72
    %571 = vmatprep.subr.mxu0 0.0
    %572 = vmatpush1.msra.mxu0 0.0
    %573 = vmatprep.subr.mxu0 0.0
    %574 = vmatpush1.msra.mxu0 0.0
    %575 = vmatprep.subr.mxu0 0.0
    %576 = vmatpush1.msra.mxu0 0.0
    %577 = vmatprep.subr.mxu0 0.0
    %578 = vmatpush1.msra.mxu0 0.0
    %579 = vmatprep.subr.mxu0 0.0
    %580 = vmatpush1.msra.mxu0 0.0
    %581 = vmatprep.subr.mxu0 0.0
    %582 = vmatpush1.msra.mxu0 0.0
    %583 = vmatprep.subr.mxu0 0.0
    %584 = vmatpush1.msra.mxu0 0.0
    %585 = vmatprep.subr.mxu0 0.0
    %586 = vmatpush1.msra.mxu0 0.0
    %587 = vmatprep.subr.mxu0 0.0
    %588 = vmatpush1.msra.mxu0 0.0
    %589 = vmatprep.subr.mxu0 0.0
    %590 = vmatpush1.msra.mxu0 0.0
    %591 = vmatprep.subr.mxu0 0.0
    %592 = vmatpush1.msra.mxu0 0.0
    %593 = vmatprep.subr.mxu0 0.0
    %594 = vmatpush1.msra.mxu0 0.0
    %595 = vmatprep.subr.mxu0 0.0
    %596 = vmatpush1.msra.mxu0 0.0
    %597 = vmatprep.subr.mxu0 0.0
    %598 = vmatpush1.msra.mxu0 0.0
    %599 = vmatprep.subr.mxu0 0.0
    %600 = vmatpush1.msra.mxu0 0.0
    %601 = vmatprep.subr.mxu0 0.0
    %602 = vmatpush1.msra.mxu0 0.0
    %603 = vmatprep.subr.mxu0 0.0
    %604 = vmatpush1.msra.mxu0 0.0
    %605 = vmatprep.subr.mxu0 0.0
    %606 = vmatpush1.msra.mxu0 0.0
    %607 = vmatprep.subr.mxu0 0.0
    %608 = vmatpush1.msra.mxu0 0.0
    %609 = vmatprep.subr.mxu0 0.0
    %610 = vmatpush1.msra.mxu0 0.0
    %611 = vmatprep.subr.mxu0 0.0
    %612 = vmatpush1.msra.mxu0 0.0
    %613 = vmatprep.subr.mxu0 0.0
    %614 = vmatpush1.msra.mxu0 0.0
    %615 = vmatprep.subr.mxu0 0.0
    %616 = vmatpush1.msra.mxu0 0.0
    %617 = vmatprep.subr.mxu0 0.0
    %618 = vmatpush1.msra.mxu0 0.0
    %619 = vmatprep.subr.mxu0 0.0
    %620 = vmatpush1.msra.mxu0 0.0
    %621 = vmatprep.subr.mxu0 0.0
    %622 = vmatpush1.msra.mxu0 0.0
    %623 = vmatprep.subr.mxu0 0.0
    %624 = vmatpush1.msra.mxu0 0.0
    %625 = vmatprep.subr.mxu0 0.0
    %626 = vmatpush1.msra.mxu0 0.0
    %627 = vmatprep.mubr.f32.mxu0 0.0
    %628 = vmatmul.mubr.f32.gmra.mrb[0].mxu0 %v561
    %v629 = vpop.f32.mrb[0].mxu0
    %v630 = vadd.f32 0.0, %v629
    %v631 = vpop.f32.mrb[0].mxu0
    %632 = vdwg.mxu0
    %v634 = vrot.slane %v630, 6
    %v635 = vrot.slane %v630, 7
    %v638 = vadd.f32 %v170, %v634
    %v639 = vadd.f32 %v175, %v635
    %v640 = vsub.f32 0.0, %v638
    %v641 = vsub.f32 0.0, %v639
    %v642 = vmul.f32 %v640, 1.442695
    %v643 = vpow.pop %v642
    %v644 = vmul.f32 %v641, 1.442695
    %v645 = vpow.pop %v644
    %v646 = vadd.f32 %v643, 1.0
    %v647 = vadd.f32 %v645, 1.0
    %v648 = vrcp.pop %v646
    %v649 = vmul.f32 1.0, %v648
    %v650 = vrcp.pop %v647
    %v651 = vmul.f32 1.0, %v650
    %v652 = vtanh.pop %v638
    %v653 = vtanh.pop %v639
    %v656 = vrot.slane %v530, 7
    %v657 = vrot.slane %v531, 7
    %v660 = vmul.f32 %v649, %v656
    %v661 = vmul.f32 %v651, %v657
    %664 = vrot.lane.b32.xlu0 %v652, 64
    %v665 = vpop.permute.xlu0 %664
    %666 = vrot.lane.b32.xlu0 %v653, 64
    %v667 = vpop.permute.xlu0 %666
    %v670 = vmul.f32 %v649, %v665
    %v671 = vmul.f32 %v651, %v667
    %674 = vrot.lane.b32.xlu0 %v670, 32
    %v675 = vpop.permute.xlu0 %674
    %676 = vrot.lane.b32.xlu0 %v671, 32
    %v677 = vpop.permute.xlu0 %676
    %v680 = vadd.f32 %v660, %v675
    %v681 = vadd.f32 %v661, %v677
    %v682 = vtanh.pop %v680
    %v683 = vtanh.pop %v681
    %686 = vrot.lane.b32.xlu0 %v682, 64
    %v687 = vpop.permute.xlu0 %686
    %688 = vrot.lane.b32.xlu0 %v683, 64
    %v689 = vpop.permute.xlu0 %688
    %v692 = vmul.f32 %v649, %v687
    %v693 = vmul.f32 %v651, %v689
    %vm694 = vcmp.eq.s32.totalorder %v258, 2
    %v695 = vlaneseq
    %v696 = vshrl.u32 %v695, 7
    %v697 = vsub.s32 2, %v696
    %v698 = vrot.slane %v692, %v697
    %v699 = vlaneseq
    %v700 = vshrl.u32 %v699, 7
    %v701 = vsub.s32 2, %v700
    %v702 = vrot.slane %v693, %v701
    %v703 = vsel %vm694, %v698, %v553
    %v704 = vsel %vm694, %v702, %v554
    %v707 = vrot.slane %v692, 2
    %v708 = vrot.slane %v693, 1
    %v709 = vsel %vm408, %v708, %v707
    %710 = vrot.lane.b32.xlu0 %v709, 32
    %v711 = vpop.permute.xlu0 %710
    %v712 = vsel %vm96, %v711, 0
    %714 = vmatprep.subr.mxu0 0.0
    %715 = vmatpush1.msra.mxu0 %v69
    %716 = vmatprep.subr.mxu0 0.0
    %717 = vmatpush1.msra.mxu0 %v70
    %718 = vmatprep.subr.mxu0 0.0
    %719 = vmatpush1.msra.mxu0 %v71
    %720 = vmatprep.subr.mxu0 0.0
    %721 = vmatpush1.msra.mxu0 %v72
    %722 = vmatprep.subr.mxu0 0.0
    %723 = vmatpush1.msra.mxu0 0.0
    %724 = vmatprep.subr.mxu0 0.0
    %725 = vmatpush1.msra.mxu0 0.0
    %726 = vmatprep.subr.mxu0 0.0
    %727 = vmatpush1.msra.mxu0 0.0
    %728 = vmatprep.subr.mxu0 0.0
    %729 = vmatpush1.msra.mxu0 0.0
    %730 = vmatprep.subr.mxu0 0.0
    %731 = vmatpush1.msra.mxu0 0.0
    %732 = vmatprep.subr.mxu0 0.0
    %733 = vmatpush1.msra.mxu0 0.0
    %734 = vmatprep.subr.mxu0 0.0
    %735 = vmatpush1.msra.mxu0 0.0
    %736 = vmatprep.subr.mxu0 0.0
    %737 = vmatpush1.msra.mxu0 0.0
    %738 = vmatprep.subr.mxu0 0.0
    %739 = vmatpush1.msra.mxu0 0.0
    %740 = vmatprep.subr.mxu0 0.0
    %741 = vmatpush1.msra.mxu0 0.0
    %742 = vmatprep.subr.mxu0 0.0
    %743 = vmatpush1.msra.mxu0 0.0
    %744 = vmatprep.subr.mxu0 0.0
    %745 = vmatpush1.msra.mxu0 0.0
    %746 = vmatprep.subr.mxu0 0.0
    %747 = vmatpush1.msra.mxu0 0.0
    %748 = vmatprep.subr.mxu0 0.0
    %749 = vmatpush1.msra.mxu0 0.0
    %750 = vmatprep.subr.mxu0 0.0
    %751 = vmatpush1.msra.mxu0 0.0
    %752 = vmatprep.subr.mxu0 0.0
    %753 = vmatpush1.msra.mxu0 0.0
    %754 = vmatprep.subr.mxu0 0.0
    %755 = vmatpush1.msra.mxu0 0.0
    %756 = vmatprep.subr.mxu0 0.0
    %757 = vmatpush1.msra.mxu0 0.0
    %758 = vmatprep.subr.mxu0 0.0
    %759 = vmatpush1.msra.mxu0 0.0
    %760 = vmatprep.subr.mxu0 0.0
    %761 = vmatpush1.msra.mxu0 0.0
    %762 = vmatprep.subr.mxu0 0.0
    %763 = vmatpush1.msra.mxu0 0.0
    %764 = vmatprep.subr.mxu0 0.0
    %765 = vmatpush1.msra.mxu0 0.0
    %766 = vmatprep.subr.mxu0 0.0
    %767 = vmatpush1.msra.mxu0 0.0
    %768 = vmatprep.subr.mxu0 0.0
    %769 = vmatpush1.msra.mxu0 0.0
    %770 = vmatprep.subr.mxu0 0.0
    %771 = vmatpush1.msra.mxu0 0.0
    %772 = vmatprep.subr.mxu0 0.0
    %773 = vmatpush1.msra.mxu0 0.0
    %774 = vmatprep.subr.mxu0 0.0
    %775 = vmatpush1.msra.mxu0 0.0
    %776 = vmatprep.subr.mxu0 0.0
    %777 = vmatpush1.msra.mxu0 0.0
    %778 = vmatprep.mubr.f32.mxu0 0.0
    %779 = vmatmul.mubr.f32.gmra.mrb[0].mxu0 %v712
    %v780 = vpop.f32.mrb[0].mxu0
    %v781 = vadd.f32 0.0, %v780
    %v782 = vpop.f32.mrb[0].mxu0
    %783 = vdwg.mxu0
    %v785 = vrot.slane %v781, 5
    %v786 = vrot.slane %v781, 6
    %v789 = vadd.f32 %v170, %v785
    %v790 = vadd.f32 %v175, %v786
    %v791 = vsub.f32 0.0, %v789
    %v792 = vsub.f32 0.0, %v790
    %v793 = vmul.f32 %v791, 1.442695
    %v794 = vpow.pop %v793
    %v795 = vmul.f32 %v792, 1.442695
    %v796 = vpow.pop %v795
    %v797 = vadd.f32 %v794, 1.0
    %v798 = vadd.f32 %v796, 1.0
    %v799 = vrcp.pop %v797
    %v800 = vmul.f32 1.0, %v799
    %v801 = vrcp.pop %v798
    %v802 = vmul.f32 1.0, %v801
    %v803 = vtanh.pop %v789
    %v804 = vtanh.pop %v790
    %v807 = vrot.slane %v680, 7
    %v808 = vrot.slane %v681, 7
    %v811 = vmul.f32 %v800, %v807
    %v812 = vmul.f32 %v802, %v808
    %815 = vrot.lane.b32.xlu0 %v803, 64
    %v816 = vpop.permute.xlu0 %815
    %817 = vrot.lane.b32.xlu0 %v804, 64
    %v818 = vpop.permute.xlu0 %817
    %v821 = vmul.f32 %v800, %v816
    %v822 = vmul.f32 %v802, %v818
    %825 = vrot.lane.b32.xlu0 %v821, 32
    %v826 = vpop.permute.xlu0 %825
    %827 = vrot.lane.b32.xlu0 %v822, 32
    %v828 = vpop.permute.xlu0 %827
    %v831 = vadd.f32 %v811, %v826
    %v832 = vadd.f32 %v812, %v828
    %v833 = vtanh.pop %v831
    %v834 = vtanh.pop %v832
    %837 = vrot.lane.b32.xlu0 %v833, 64
    %v838 = vpop.permute.xlu0 %837
    %839 = vrot.lane.b32.xlu0 %v834, 64
    %v840 = vpop.permute.xlu0 %839
    %v843 = vmul.f32 %v800, %v838
    %v844 = vmul.f32 %v802, %v840
    %vm845 = vcmp.eq.s32.totalorder %v258, 3
    %v846 = vlaneseq
    %v847 = vshrl.u32 %v846, 7
    %v848 = vsub.s32 3, %v847
    %v849 = vrot.slane %v843, %v848
    %v850 = vlaneseq
    %v851 = vshrl.u32 %v850, 7
    %v852 = vsub.s32 3, %v851
    %v853 = vrot.slane %v844, %v852
    %v854 = vsel %vm845, %v849, %v703
    %v855 = vsel %vm845, %v853, %v704
    %v858 = vrot.slane %v843, 3
    %v859 = vrot.slane %v844, 2
    %v860 = vsel %vm408, %v859, %v858
    %861 = vrot.lane.b32.xlu0 %v860, 32
    %v862 = vpop.permute.xlu0 %861
    %v863 = vsel %vm96, %v862, 0
    %865 = vmatprep.subr.mxu0 0.0
    %866 = vmatpush1.msra.mxu0 %v69
    %867 = vmatprep.subr.mxu0 0.0
    %868 = vmatpush1.msra.mxu0 %v70
    %869 = vmatprep.subr.mxu0 0.0
    %870 = vmatpush1.msra.mxu0 %v71
    %871 = vmatprep.subr.mxu0 0.0
    %872 = vmatpush1.msra.mxu0 %v72
    %873 = vmatprep.subr.mxu0 0.0
    %874 = vmatpush1.msra.mxu0 0.0
    %875 = vmatprep.subr.mxu0 0.0
    %876 = vmatpush1.msra.mxu0 0.0
    %877 = vmatprep.subr.mxu0 0.0
    %878 = vmatpush1.msra.mxu0 0.0
    %879 = vmatprep.subr.mxu0 0.0
    %880 = vmatpush1.msra.mxu0 0.0
    %881 = vmatprep.subr.mxu0 0.0
    %882 = vmatpush1.msra.mxu0 0.0
    %883 = vmatprep.subr.mxu0 0.0
    %884 = vmatpush1.msra.mxu0 0.0
    %885 = vmatprep.subr.mxu0 0.0
    %886 = vmatpush1.msra.mxu0 0.0
    %887 = vmatprep.subr.mxu0 0.0
    %888 = vmatpush1.msra.mxu0 0.0
    %889 = vmatprep.subr.mxu0 0.0
    %890 = vmatpush1.msra.mxu0 0.0
    %891 = vmatprep.subr.mxu0 0.0
    %892 = vmatpush1.msra.mxu0 0.0
    %893 = vmatprep.subr.mxu0 0.0
    %894 = vmatpush1.msra.mxu0 0.0
    %895 = vmatprep.subr.mxu0 0.0
    %896 = vmatpush1.msra.mxu0 0.0
    %897 = vmatprep.subr.mxu0 0.0
    %898 = vmatpush1.msra.mxu0 0.0
    %899 = vmatprep.subr.mxu0 0.0
    %900 = vmatpush1.msra.mxu0 0.0
    %901 = vmatprep.subr.mxu0 0.0
    %902 = vmatpush1.msra.mxu0 0.0
    %903 = vmatprep.subr.mxu0 0.0
    %904 = vmatpush1.msra.mxu0 0.0
    %905 = vmatprep.subr.mxu0 0.0
    %906 = vmatpush1.msra.mxu0 0.0
    %907 = vmatprep.subr.mxu0 0.0
    %908 = vmatpush1.msra.mxu0 0.0
    %909 = vmatprep.subr.mxu0 0.0
    %910 = vmatpush1.msra.mxu0 0.0
    %911 = vmatprep.subr.mxu0 0.0
    %912 = vmatpush1.msra.mxu0 0.0
    %913 = vmatprep.subr.mxu0 0.0
    %914 = vmatpush1.msra.mxu0 0.0
    %915 = vmatprep.subr.mxu0 0.0
    %916 = vmatpush1.msra.mxu0 0.0
    %917 = vmatprep.subr.mxu0 0.0
    %918 = vmatpush1.msra.mxu0 0.0
    %919 = vmatprep.subr.mxu0 0.0
    %920 = vmatpush1.msra.mxu0 0.0
    %921 = vmatprep.subr.mxu0 0.0
    %922 = vmatpush1.msra.mxu0 0.0
    %923 = vmatprep.subr.mxu0 0.0
    %924 = vmatpush1.msra.mxu0 0.0
    %925 = vmatprep.subr.mxu0 0.0
    %926 = vmatpush1.msra.mxu0 0.0
    %927 = vmatprep.subr.mxu0 0.0
    %928 = vmatpush1.msra.mxu0 0.0
    %929 = vmatprep.mubr.f32.mxu0 0.0
    %930 = vmatmul.mubr.f32.gmra.mrb[0].mxu0 %v863
    %v931 = vpop.f32.mrb[0].mxu0
    %v932 = vadd.f32 0.0, %v931
    %v933 = vpop.f32.mrb[0].mxu0
    %934 = vdwg.mxu0
    %v936 = vrot.slane %v932, 4
    %v937 = vrot.slane %v932, 5
    %v940 = vadd.f32 %v170, %v936
    %v941 = vadd.f32 %v175, %v937
    %v942 = vsub.f32 0.0, %v940
    %v943 = vsub.f32 0.0, %v941
    %v944 = vmul.f32 %v942, 1.442695
    %v945 = vpow.pop %v944
    %v946 = vmul.f32 %v943, 1.442695
    %v947 = vpow.pop %v946
    %v948 = vadd.f32 %v945, 1.0
    %v949 = vadd.f32 %v947, 1.0
    %v950 = vrcp.pop %v948
    %v951 = vmul.f32 1.0, %v950
    %v952 = vrcp.pop %v949
    %v953 = vmul.f32 1.0, %v952
    %v954 = vtanh.pop %v940
    %v955 = vtanh.pop %v941
    %v958 = vrot.slane %v831, 7
    %v959 = vrot.slane %v832, 7
    %v962 = vmul.f32 %v951, %v958
    %v963 = vmul.f32 %v953, %v959
    %966 = vrot.lane.b32.xlu0 %v954, 64
    %v967 = vpop.permute.xlu0 %966
    %968 = vrot.lane.b32.xlu0 %v955, 64
    %v969 = vpop.permute.xlu0 %968
    %v972 = vmul.f32 %v951, %v967
    %v973 = vmul.f32 %v953, %v969
    %976 = vrot.lane.b32.xlu0 %v972, 32
    %v977 = vpop.permute.xlu0 %976
    %978 = vrot.lane.b32.xlu0 %v973, 32
    %v979 = vpop.permute.xlu0 %978
    %v982 = vadd.f32 %v962, %v977
    %v983 = vadd.f32 %v963, %v979
    %v984 = vtanh.pop %v982
    %v985 = vtanh.pop %v983
    %988 = vrot.lane.b32.xlu0 %v984, 64
    %v989 = vpop.permute.xlu0 %988
    %990 = vrot.lane.b32.xlu0 %v985, 64
    %v991 = vpop.permute.xlu0 %990
    %v994 = vmul.f32 %v951, %v989
    %v995 = vmul.f32 %v953, %v991
    %vm996 = vcmp.eq.s32.totalorder %v258, 4
    %v997 = vlaneseq
    %v998 = vshrl.u32 %v997, 7
    %v999 = vsub.s32 4, %v998
    %v1000 = vrot.slane %v994, %v999
    %v1001 = vlaneseq
    %v1002 = vshrl.u32 %v1001, 7
    %v1003 = vsub.s32 4, %v1002
    %v1004 = vrot.slane %v995, %v1003
    %v1005 = vsel %vm996, %v1000, %v854
    %v1006 = vsel %vm996, %v1004, %v855
    %v1009 = vrot.slane %v994, 4
    %v1010 = vrot.slane %v995, 3
    %v1011 = vsel %vm408, %v1010, %v1009
    %1012 = vrot.lane.b32.xlu0 %v1011, 32
    %v1013 = vpop.permute.xlu0 %1012
    %v1014 = vsel %vm96, %v1013, 0
    %1016 = vmatprep.subr.mxu0 0.0
    %1017 = vmatpush1.msra.mxu0 %v69
    %1018 = vmatprep.subr.mxu0 0.0
    %1019 = vmatpush1.msra.mxu0 %v70
    %1020 = vmatprep.subr.mxu0 0.0
    %1021 = vmatpush1.msra.mxu0 %v71
    %1022 = vmatprep.subr.mxu0 0.0
    %1023 = vmatpush1.msra.mxu0 %v72
    %1024 = vmatprep.subr.mxu0 0.0
    %1025 = vmatpush1.msra.mxu0 0.0
    %1026 = vmatprep.subr.mxu0 0.0
    %1027 = vmatpush1.msra.mxu0 0.0
    %1028 = vmatprep.subr.mxu0 0.0
    %1029 = vmatpush1.msra.mxu0 0.0
    %1030 = vmatprep.subr.mxu0 0.0
    %1031 = vmatpush1.msra.mxu0 0.0
    %1032 = vmatprep.subr.mxu0 0.0
    %1033 = vmatpush1.msra.mxu0 0.0
    %1034 = vmatprep.subr.mxu0 0.0
    %1035 = vmatpush1.msra.mxu0 0.0
    %1036 = vmatprep.subr.mxu0 0.0
    %1037 = vmatpush1.msra.mxu0 0.0
    %1038 = vmatprep.subr.mxu0 0.0
    %1039 = vmatpush1.msra.mxu0 0.0
    %1040 = vmatprep.subr.mxu0 0.0
    %1041 = vmatpush1.msra.mxu0 0.0
    %1042 = vmatprep.subr.mxu0 0.0
    %1043 = vmatpush1.msra.mxu0 0.0
    %1044 = vmatprep.subr.mxu0 0.0
    %1045 = vmatpush1.msra.mxu0 0.0
    %1046 = vmatprep.subr.mxu0 0.0
    %1047 = vmatpush1.msra.mxu0 0.0
    %1048 = vmatprep.subr.mxu0 0.0
    %1049 = vmatpush1.msra.mxu0 0.0
    %1050 = vmatprep.subr.mxu0 0.0
    %1051 = vmatpush1.msra.mxu0 0.0
    %1052 = vmatprep.subr.mxu0 0.0
    %1053 = vmatpush1.msra.mxu0 0.0
    %1054 = vmatprep.subr.mxu0 0.0
    %1055 = vmatpush1.msra.mxu0 0.0
    %1056 = vmatprep.subr.mxu0 0.0
    %1057 = vmatpush1.msra.mxu0 0.0
    %1058 = vmatprep.subr.mxu0 0.0
    %1059 = vmatpush1.msra.mxu0 0.0
    %1060 = vmatprep.subr.mxu0 0.0
    %1061 = vmatpush1.msra.mxu0 0.0
    %1062 = vmatprep.subr.mxu0 0.0
    %1063 = vmatpush1.msra.mxu0 0.0
    %1064 = vmatprep.subr.mxu0 0.0
    %1065 = vmatpush1.msra.mxu0 0.0
    %1066 = vmatprep.subr.mxu0 0.0
    %1067 = vmatpush1.msra.mxu0 0.0
    %1068 = vmatprep.subr.mxu0 0.0
    %1069 = vmatpush1.msra.mxu0 0.0
    %1070 = vmatprep.subr.mxu0 0.0
    %1071 = vmatpush1.msra.mxu0 0.0
    %1072 = vmatprep.subr.mxu0 0.0
    %1073 = vmatpush1.msra.mxu0 0.0
    %1074 = vmatprep.subr.mxu0 0.0
    %1075 = vmatpush1.msra.mxu0 0.0
    %1076 = vmatprep.subr.mxu0 0.0
    %1077 = vmatpush1.msra.mxu0 0.0
    %1078 = vmatprep.subr.mxu0 0.0
    %1079 = vmatpush1.msra.mxu0 0.0
    %1080 = vmatprep.mubr.f32.mxu0 0.0
    %1081 = vmatmul.mubr.f32.gmra.mrb[0].mxu0 %v1014
    %v1082 = vpop.f32.mrb[0].mxu0
    %v1083 = vadd.f32 0.0, %v1082
    %v1084 = vpop.f32.mrb[0].mxu0
    %1085 = vdwg.mxu0
    %v1087 = vrot.slane %v1083, 3
    %v1088 = vrot.slane %v1083, 4
    %v1091 = vadd.f32 %v170, %v1087
    %v1092 = vadd.f32 %v175, %v1088
    %v1093 = vsub.f32 0.0, %v1091
    %v1094 = vsub.f32 0.0, %v1092
    %v1095 = vmul.f32 %v1093, 1.442695
    %v1096 = vpow.pop %v1095
    %v1097 = vmul.f32 %v1094, 1.442695
    %v1098 = vpow.pop %v1097
    %v1099 = vadd.f32 %v1096, 1.0
    %v1100 = vadd.f32 %v1098, 1.0
    %v1101 = vrcp.pop %v1099
    %v1102 = vmul.f32 1.0, %v1101
    %v1103 = vrcp.pop %v1100
    %v1104 = vmul.f32 1.0, %v1103
    %v1105 = vtanh.pop %v1091
    %v1106 = vtanh.pop %v1092
    %v1109 = vrot.slane %v982, 7
    %v1110 = vrot.slane %v983, 7
    %v1113 = vmul.f32 %v1102, %v1109
    %v1114 = vmul.f32 %v1104, %v1110
    %1117 = vrot.lane.b32.xlu0 %v1105, 64
    %v1118 = vpop.permute.xlu0 %1117
    %1119 = vrot.lane.b32.xlu0 %v1106, 64
    %v1120 = vpop.permute.xlu0 %1119
    %v1123 = vmul.f32 %v1102, %v1118
    %v1124 = vmul.f32 %v1104, %v1120
    %1127 = vrot.lane.b32.xlu0 %v1123, 32
    %v1128 = vpop.permute.xlu0 %1127
    %1129 = vrot.lane.b32.xlu0 %v1124, 32
    %v1130 = vpop.permute.xlu0 %1129
    %v1133 = vadd.f32 %v1113, %v1128
    %v1134 = vadd.f32 %v1114, %v1130
    %v1135 = vtanh.pop %v1133
    %v1136 = vtanh.pop %v1134
    %1139 = vrot.lane.b32.xlu0 %v1135, 64
    %v1140 = vpop.permute.xlu0 %1139
    %1141 = vrot.lane.b32.xlu0 %v1136, 64
    %v1142 = vpop.permute.xlu0 %1141
    %v1145 = vmul.f32 %v1102, %v1140
    %v1146 = vmul.f32 %v1104, %v1142
    %vm1147 = vcmp.eq.s32.totalorder %v258, 5
    %v1148 = vlaneseq
    %v1149 = vshrl.u32 %v1148, 7
    %v1150 = vsub.s32 5, %v1149
    %v1151 = vrot.slane %v1145, %v1150
    %v1152 = vlaneseq
    %v1153 = vshrl.u32 %v1152, 7
    %v1154 = vsub.s32 5, %v1153
    %v1155 = vrot.slane %v1146, %v1154
    %v1156 = vsel %vm1147, %v1151, %v1005
    %v1157 = vsel %vm1147, %v1155, %v1006
    %v1160 = vrot.slane %v1145, 5
    %v1161 = vrot.slane %v1146, 4
    %v1162 = vsel %vm408, %v1161, %v1160
    %1163 = vrot.lane.b32.xlu0 %v1162, 32
    %v1164 = vpop.permute.xlu0 %1163
    %v1165 = vsel %vm96, %v1164, 0
    %1167 = vmatprep.subr.mxu0 0.0
    %1168 = vmatpush1.msra.mxu0 %v69
    %1169 = vmatprep.subr.mxu0 0.0
    %1170 = vmatpush1.msra.mxu0 %v70
    %1171 = vmatprep.subr.mxu0 0.0
    %1172 = vmatpush1.msra.mxu0 %v71
    %1173 = vmatprep.subr.mxu0 0.0
    %1174 = vmatpush1.msra.mxu0 %v72
    %1175 = vmatprep.subr.mxu0 0.0
    %1176 = vmatpush1.msra.mxu0 0.0
    %1177 = vmatprep.subr.mxu0 0.0
    %1178 = vmatpush1.msra.mxu0 0.0
    %1179 = vmatprep.subr.mxu0 0.0
    %1180 = vmatpush1.msra.mxu0 0.0
    %1181 = vmatprep.subr.mxu0 0.0
    %1182 = vmatpush1.msra.mxu0 0.0
    %1183 = vmatprep.subr.mxu0 0.0
    %1184 = vmatpush1.msra.mxu0 0.0
    %1185 = vmatprep.subr.mxu0 0.0
    %1186 = vmatpush1.msra.mxu0 0.0
    %1187 = vmatprep.subr.mxu0 0.0
    %1188 = vmatpush1.msra.mxu0 0.0
    %1189 = vmatprep.subr.mxu0 0.0
    %1190 = vmatpush1.msra.mxu0 0.0
    %1191 = vmatprep.subr.mxu0 0.0
    %1192 = vmatpush1.msra.mxu0 0.0
    %1193 = vmatprep.subr.mxu0 0.0
    %1194 = vmatpush1.msra.mxu0 0.0
    %1195 = vmatprep.subr.mxu0 0.0
    %1196 = vmatpush1.msra.mxu0 0.0
    %1197 = vmatprep.subr.mxu0 0.0
    %1198 = vmatpush1.msra.mxu0 0.0
    %1199 = vmatprep.subr.mxu0 0.0
    %1200 = vmatpush1.msra.mxu0 0.0
    %1201 = vmatprep.subr.mxu0 0.0
    %1202 = vmatpush1.msra.mxu0 0.0
    %1203 = vmatprep.subr.mxu0 0.0
    %1204 = vmatpush1.msra.mxu0 0.0
    %1205 = vmatprep.subr.mxu0 0.0
    %1206 = vmatpush1.msra.mxu0 0.0
    %1207 = vmatprep.subr.mxu0 0.0
    %1208 = vmatpush1.msra.mxu0 0.0
    %1209 = vmatprep.subr.mxu0 0.0
    %1210 = vmatpush1.msra.mxu0 0.0
    %1211 = vmatprep.subr.mxu0 0.0
    %1212 = vmatpush1.msra.mxu0 0.0
    %1213 = vmatprep.subr.mxu0 0.0
    %1214 = vmatpush1.msra.mxu0 0.0
    %1215 = vmatprep.subr.mxu0 0.0
    %1216 = vmatpush1.msra.mxu0 0.0
    %1217 = vmatprep.subr.mxu0 0.0
    %1218 = vmatpush1.msra.mxu0 0.0
    %1219 = vmatprep.subr.mxu0 0.0
    %1220 = vmatpush1.msra.mxu0 0.0
    %1221 = vmatprep.subr.mxu0 0.0
    %1222 = vmatpush1.msra.mxu0 0.0
    %1223 = vmatprep.subr.mxu0 0.0
    %1224 = vmatpush1.msra.mxu0 0.0
    %1225 = vmatprep.subr.mxu0 0.0
    %1226 = vmatpush1.msra.mxu0 0.0
    %1227 = vmatprep.subr.mxu0 0.0
    %1228 = vmatpush1.msra.mxu0 0.0
    %1229 = vmatprep.subr.mxu0 0.0
    %1230 = vmatpush1.msra.mxu0 0.0
    %1231 = vmatprep.mubr.f32.mxu0 0.0
    %1232 = vmatmul.mubr.f32.gmra.mrb[0].mxu0 %v1165
    %v1233 = vpop.f32.mrb[0].mxu0
    %v1234 = vadd.f32 0.0, %v1233
    %v1235 = vpop.f32.mrb[0].mxu0
    %1236 = vdwg.mxu0
    %v1238 = vrot.slane %v1234, 2
    %v1239 = vrot.slane %v1234, 3
    %v1242 = vadd.f32 %v170, %v1238
    %v1243 = vadd.f32 %v175, %v1239
    %v1244 = vsub.f32 0.0, %v1242
    %v1245 = vsub.f32 0.0, %v1243
    %v1246 = vmul.f32 %v1244, 1.442695
    %v1247 = vpow.pop %v1246
    %v1248 = vmul.f32 %v1245, 1.442695
    %v1249 = vpow.pop %v1248
    %v1250 = vadd.f32 %v1247, 1.0
    %v1251 = vadd.f32 %v1249, 1.0
    %v1252 = vrcp.pop %v1250
    %v1253 = vmul.f32 1.0, %v1252
    %v1254 = vrcp.pop %v1251
    %v1255 = vmul.f32 1.0, %v1254
    %v1256 = vtanh.pop %v1242
    %v1257 = vtanh.pop %v1243
    %v1260 = vrot.slane %v1133, 7
    %v1261 = vrot.slane %v1134, 7
    %v1264 = vmul.f32 %v1253, %v1260
    %v1265 = vmul.f32 %v1255, %v1261
    %1268 = vrot.lane.b32.xlu0 %v1256, 64
    %v1269 = vpop.permute.xlu0 %1268
    %1270 = vrot.lane.b32.xlu0 %v1257, 64
    %v1271 = vpop.permute.xlu0 %1270
    %v1274 = vmul.f32 %v1253, %v1269
    %v1275 = vmul.f32 %v1255, %v1271
    %1278 = vrot.lane.b32.xlu0 %v1274, 32
    %v1279 = vpop.permute.xlu0 %1278
    %1280 = vrot.lane.b32.xlu0 %v1275, 32
    %v1281 = vpop.permute.xlu0 %1280
    %v1284 = vadd.f32 %v1264, %v1279
    %v1285 = vadd.f32 %v1265, %v1281
    %v1286 = vtanh.pop %v1284
    %v1287 = vtanh.pop %v1285
    %1290 = vrot.lane.b32.xlu0 %v1286, 64
    %v1291 = vpop.permute.xlu0 %1290
    %1292 = vrot.lane.b32.xlu0 %v1287, 64
    %v1293 = vpop.permute.xlu0 %1292
    %v1296 = vmul.f32 %v1253, %v1291
    %v1297 = vmul.f32 %v1255, %v1293
    %vm1298 = vcmp.eq.s32.totalorder %v258, 6
    %v1299 = vlaneseq
    %v1300 = vshrl.u32 %v1299, 7
    %v1301 = vsub.s32 6, %v1300
    %v1302 = vrot.slane %v1296, %v1301
    %v1303 = vlaneseq
    %v1304 = vshrl.u32 %v1303, 7
    %v1305 = vsub.s32 6, %v1304
    %v1306 = vrot.slane %v1297, %v1305
    %v1307 = vsel %vm1298, %v1302, %v1156
    %v1308 = vsel %vm1298, %v1306, %v1157
    %v1311 = vrot.slane %v1296, 6
    %v1312 = vrot.slane %v1297, 5
    %v1313 = vsel %vm408, %v1312, %v1311
    %1314 = vrot.lane.b32.xlu0 %v1313, 32
    %v1315 = vpop.permute.xlu0 %1314
    %v1316 = vsel %vm96, %v1315, 0
    %1318 = vmatprep.subr.mxu0 0.0
    %1319 = vmatpush1.msra.mxu0 %v69
    %1320 = vmatprep.subr.mxu0 0.0
    %1321 = vmatpush1.msra.mxu0 %v70
    %1322 = vmatprep.subr.mxu0 0.0
    %1323 = vmatpush1.msra.mxu0 %v71
    %1324 = vmatprep.subr.mxu0 0.0
    %1325 = vmatpush1.msra.mxu0 %v72
    %1326 = vmatprep.subr.mxu0 0.0
    %1327 = vmatpush1.msra.mxu0 0.0
    %1328 = vmatprep.subr.mxu0 0.0
    %1329 = vmatpush1.msra.mxu0 0.0
    %1330 = vmatprep.subr.mxu0 0.0
    %1331 = vmatpush1.msra.mxu0 0.0
    %1332 = vmatprep.subr.mxu0 0.0
    %1333 = vmatpush1.msra.mxu0 0.0
    %1334 = vmatprep.subr.mxu0 0.0
    %1335 = vmatpush1.msra.mxu0 0.0
    %1336 = vmatprep.subr.mxu0 0.0
    %1337 = vmatpush1.msra.mxu0 0.0
    %1338 = vmatprep.subr.mxu0 0.0
    %1339 = vmatpush1.msra.mxu0 0.0
    %1340 = vmatprep.subr.mxu0 0.0
    %1341 = vmatpush1.msra.mxu0 0.0
    %1342 = vmatprep.subr.mxu0 0.0
    %1343 = vmatpush1.msra.mxu0 0.0
    %1344 = vmatprep.subr.mxu0 0.0
    %1345 = vmatpush1.msra.mxu0 0.0
    %1346 = vmatprep.subr.mxu0 0.0
    %1347 = vmatpush1.msra.mxu0 0.0
    %1348 = vmatprep.subr.mxu0 0.0
    %1349 = vmatpush1.msra.mxu0 0.0
    %1350 = vmatprep.subr.mxu0 0.0
    %1351 = vmatpush1.msra.mxu0 0.0
    %1352 = vmatprep.subr.mxu0 0.0
    %1353 = vmatpush1.msra.mxu0 0.0
    %1354 = vmatprep.subr.mxu0 0.0
    %1355 = vmatpush1.msra.mxu0 0.0
    %1356 = vmatprep.subr.mxu0 0.0
    %1357 = vmatpush1.msra.mxu0 0.0
    %1358 = vmatprep.subr.mxu0 0.0
    %1359 = vmatpush1.msra.mxu0 0.0
    %1360 = vmatprep.subr.mxu0 0.0
    %1361 = vmatpush1.msra.mxu0 0.0
    %1362 = vmatprep.subr.mxu0 0.0
    %1363 = vmatpush1.msra.mxu0 0.0
    %1364 = vmatprep.subr.mxu0 0.0
    %1365 = vmatpush1.msra.mxu0 0.0
    %1366 = vmatprep.subr.mxu0 0.0
    %1367 = vmatpush1.msra.mxu0 0.0
    %1368 = vmatprep.subr.mxu0 0.0
    %1369 = vmatpush1.msra.mxu0 0.0
    %1370 = vmatprep.subr.mxu0 0.0
    %1371 = vmatpush1.msra.mxu0 0.0
    %1372 = vmatprep.subr.mxu0 0.0
    %1373 = vmatpush1.msra.mxu0 0.0
    %1374 = vmatprep.subr.mxu0 0.0
    %1375 = vmatpush1.msra.mxu0 0.0
    %1376 = vmatprep.subr.mxu0 0.0
    %1377 = vmatpush1.msra.mxu0 0.0
    %1378 = vmatprep.subr.mxu0 0.0
    %1379 = vmatpush1.msra.mxu0 0.0
    %1380 = vmatprep.subr.mxu0 0.0
    %1381 = vmatpush1.msra.mxu0 0.0
    %1382 = vmatprep.mubr.f32.mxu0 0.0
    %1383 = vmatmul.mubr.f32.gmra.mrb[0].mxu0 %v1316
    %v1384 = vpop.f32.mrb[0].mxu0
    %v1385 = vadd.f32 0.0, %v1384
    %v1386 = vpop.f32.mrb[0].mxu0
    %1387 = vdwg.mxu0
    %v1389 = vrot.slane %v1385, 1
    %v1390 = vrot.slane %v1385, 2
    %v1393 = vadd.f32 %v170, %v1389
    %v1394 = vadd.f32 %v175, %v1390
    %v1395 = vsub.f32 0.0, %v1393
    %v1396 = vsub.f32 0.0, %v1394
    %v1397 = vmul.f32 %v1395, 1.442695
    %v1398 = vpow.pop %v1397
    %v1399 = vmul.f32 %v1396, 1.442695
    %v1400 = vpow.pop %v1399
    %v1401 = vadd.f32 %v1398, 1.0
    %v1402 = vadd.f32 %v1400, 1.0
    %v1403 = vrcp.pop %v1401
    %v1404 = vmul.f32 1.0, %v1403
    %v1405 = vrcp.pop %v1402
    %v1406 = vmul.f32 1.0, %v1405
    %v1407 = vtanh.pop %v1393
    %v1408 = vtanh.pop %v1394
    %v1411 = vrot.slane %v1284, 7
    %v1412 = vrot.slane %v1285, 7
    %v1415 = vmul.f32 %v1404, %v1411
    %v1416 = vmul.f32 %v1406, %v1412
    %1419 = vrot.lane.b32.xlu0 %v1407, 64
    %v1420 = vpop.permute.xlu0 %1419
    %1421 = vrot.lane.b32.xlu0 %v1408, 64
    %v1422 = vpop.permute.xlu0 %1421
    %v1425 = vmul.f32 %v1404, %v1420
    %v1426 = vmul.f32 %v1406, %v1422
    %1429 = vrot.lane.b32.xlu0 %v1425, 32
    %v1430 = vpop.permute.xlu0 %1429
    %1431 = vrot.lane.b32.xlu0 %v1426, 32
    %v1432 = vpop.permute.xlu0 %1431
    %v1435 = vadd.f32 %v1415, %v1430
    %v1436 = vadd.f32 %v1416, %v1432
    %v1437 = vtanh.pop %v1435
    %v1438 = vtanh.pop %v1436
    %1441 = vrot.lane.b32.xlu0 %v1437, 64
    %v1442 = vpop.permute.xlu0 %1441
    %1443 = vrot.lane.b32.xlu0 %v1438, 64
    %v1444 = vpop.permute.xlu0 %1443
    %v1447 = vmul.f32 %v1404, %v1442
    %v1448 = vmul.f32 %v1406, %v1444
    %vm1449 = vcmp.eq.s32.totalorder %v258, 7
    %v1450 = vlaneseq
    %v1451 = vshrl.u32 %v1450, 7
    %v1452 = vsub.s32 7, %v1451
    %v1453 = vrot.slane %v1447, %v1452
    %v1454 = vlaneseq
    %v1455 = vshrl.u32 %v1454, 7
    %v1456 = vsub.s32 7, %v1455
    %v1457 = vrot.slane %v1448, %v1456
    %v1458 = vsel %vm1449, %v1453, %v1307
    %v1459 = vsel %vm1449, %v1457, %v1308
    %v1460 = vld [vmem:[%s8] sm:$0xff]
    %v1461 = vld [vmem:[%s8 + $0x8] sm:$0xff]
    %v1462 = vld [vmem:[%s8 + $0x10] sm:$0xff]
    %v1463 = vld [vmem:[%s8 + $0x18] sm:$0xff]
    %v1464 = vld [vmem:[%s9] sm:$0x1]
    %v1466 = vlaneseq
    %v1467 = vshrl.u32 %v1466, 7
    %v1468 = vsub.s32 0, %v1467
    %v1469 = vrot.slane %v1464, %v1468
    %1473 = vrot.lane.b32.xlu0 %v1458, 32
    %v1474 = vpop.permute.xlu0 %1473
    %1475 = vrot.lane.b32.xlu0 %v1459, 32
    %v1476 = vpop.permute.xlu0 %1475
    %v1477 = vsel %vm96, %v1474, 0
    %v1479 = vsel %vm96, %v1476, 0
    %1481 = vmatprep.subr.mxu0 0.0
    %1482 = vmatpush1.msra.mxu0 %v1460
    %1483 = vmatprep.subr.mxu0 0.0
    %1484 = vmatpush1.msra.mxu0 %v1461
    %1485 = vmatprep.subr.mxu0 0.0
    %1486 = vmatpush1.msra.mxu0 %v1462
    %1487 = vmatprep.subr.mxu0 0.0
    %1488 = vmatpush1.msra.mxu0 %v1463
    %1489 = vmatprep.subr.mxu0 0.0
    %1490 = vmatpush1.msra.mxu0 0.0
    %1491 = vmatprep.subr.mxu0 0.0
    %1492 = vmatpush1.msra.mxu0 0.0
    %1493 = vmatprep.subr.mxu0 0.0
    %1494 = vmatpush1.msra.mxu0 0.0
    %1495 = vmatprep.subr.mxu0 0.0
    %1496 = vmatpush1.msra.mxu0 0.0
    %1497 = vmatprep.subr.mxu0 0.0
    %1498 = vmatpush1.msra.mxu0 0.0
    %1499 = vmatprep.subr.mxu0 0.0
    %1500 = vmatpush1.msra.mxu0 0.0
    %1501 = vmatprep.subr.mxu0 0.0
    %1502 = vmatpush1.msra.mxu0 0.0
    %1503 = vmatprep.subr.mxu0 0.0
    %1504 = vmatpush1.msra.mxu0 0.0
    %1505 = vmatprep.subr.mxu0 0.0
    %1506 = vmatpush1.msra.mxu0 0.0
    %1507 = vmatprep.subr.mxu0 0.0
    %1508 = vmatpush1.msra.mxu0 0.0
    %1509 = vmatprep.subr.mxu0 0.0
    %1510 = vmatpush1.msra.mxu0 0.0
    %1511 = vmatprep.subr.mxu0 0.0
    %1512 = vmatpush1.msra.mxu0 0.0
    %1513 = vmatprep.subr.mxu0 0.0
    %1514 = vmatpush1.msra.mxu0 0.0
    %1515 = vmatprep.subr.mxu0 0.0
    %1516 = vmatpush1.msra.mxu0 0.0
    %1517 = vmatprep.subr.mxu0 0.0
    %1518 = vmatpush1.msra.mxu0 0.0
    %1519 = vmatprep.subr.mxu0 0.0
    %1520 = vmatpush1.msra.mxu0 0.0
    %1521 = vmatprep.subr.mxu0 0.0
    %1522 = vmatpush1.msra.mxu0 0.0
    %1523 = vmatprep.subr.mxu0 0.0
    %1524 = vmatpush1.msra.mxu0 0.0
    %1525 = vmatprep.subr.mxu0 0.0
    %1526 = vmatpush1.msra.mxu0 0.0
    %1527 = vmatprep.subr.mxu0 0.0
    %1528 = vmatpush1.msra.mxu0 0.0
    %1529 = vmatprep.subr.mxu0 0.0
    %1530 = vmatpush1.msra.mxu0 0.0
    %1531 = vmatprep.subr.mxu0 0.0
    %1532 = vmatpush1.msra.mxu0 0.0
    %1533 = vmatprep.subr.mxu0 0.0
    %1534 = vmatpush1.msra.mxu0 0.0
    %1535 = vmatprep.subr.mxu0 0.0
    %1536 = vmatpush1.msra.mxu0 0.0
    %1537 = vmatprep.subr.mxu0 0.0
    %1538 = vmatpush1.msra.mxu0 0.0
    %1539 = vmatprep.subr.mxu0 0.0
    %1540 = vmatpush1.msra.mxu0 0.0
    %1541 = vmatprep.subr.mxu0 0.0
    %1542 = vmatpush1.msra.mxu0 0.0
    %1543 = vmatprep.subr.mxu0 0.0
    %1544 = vmatpush1.msra.mxu0 0.0
    %1545 = vmatprep.mubr.f32.mxu0 0.0
    %1546 = vmatmul.mubr.f32.gmra.mrb[0].mxu0 %v1477
    %v1547 = vpop.f32.mrb[0].mxu0
    %v1548 = vadd.f32 %v1469, %v1547
    %v1549 = vpop.f32.mrb[0].mxu0
    %1550 = vmatprep.mubr.f32.mxu0 0.0
    %1551 = vmatmul.mubr.f32.gmra.mrb[0].mxu0 %v1479
    %v1552 = vpop.f32.mrb[0].mxu0
    %v1553 = vadd.f32 %v1469, %v1552
    %v1554 = vpop.f32.mrb[0].mxu0
    %1555 = vdwg.mxu0
    %v1556 = vld [vmem:[%s16] sm:$0xff]
    %v1557 = vld [vmem:[%s16 + $0x8] sm:$0xff]
    %v1558 = vld [vmem:[%s16 + $0x10] sm:$0xff]
    %v1559 = vld [vmem:[%s16 + $0x18] sm:$0xff]
    %v1561 = vsel %vm96, %v1548, 0
    %v1564 = vsel %vm96, %v1553, 0
    %1566 = vmatprep.subr.mxu0 0.0
    %1567 = vmatpush1.msra.mxu0 %v1556
    %1568 = vmatprep.subr.mxu0 0.0
    %1569 = vmatpush1.msra.mxu0 %v1557
    %1570 = vmatprep.subr.mxu0 0.0
    %1571 = vmatpush1.msra.mxu0 %v1558
    %1572 = vmatprep.subr.mxu0 0.0
    %1573 = vmatpush1.msra.mxu0 %v1559
    %1574 = vmatprep.subr.mxu0 0.0
    %1575 = vmatpush1.msra.mxu0 0.0
    %1576 = vmatprep.subr.mxu0 0.0
    %1577 = vmatpush1.msra.mxu0 0.0
    %1578 = vmatprep.subr.mxu0 0.0
    %1579 = vmatpush1.msra.mxu0 0.0
    %1580 = vmatprep.subr.mxu0 0.0
    %1581 = vmatpush1.msra.mxu0 0.0
    %1582 = vmatprep.subr.mxu0 0.0
    %1583 = vmatpush1.msra.mxu0 0.0
    %1584 = vmatprep.subr.mxu0 0.0
    %1585 = vmatpush1.msra.mxu0 0.0
    %1586 = vmatprep.subr.mxu0 0.0
    %1587 = vmatpush1.msra.mxu0 0.0
    %1588 = vmatprep.subr.mxu0 0.0
    %1589 = vmatpush1.msra.mxu0 0.0
    %1590 = vmatprep.subr.mxu0 0.0
    %1591 = vmatpush1.msra.mxu0 0.0
    %1592 = vmatprep.subr.mxu0 0.0
    %1593 = vmatpush1.msra.mxu0 0.0
    %1594 = vmatprep.subr.mxu0 0.0
    %1595 = vmatpush1.msra.mxu0 0.0
    %1596 = vmatprep.subr.mxu0 0.0
    %1597 = vmatpush1.msra.mxu0 0.0
    %1598 = vmatprep.subr.mxu0 0.0
    %1599 = vmatpush1.msra.mxu0 0.0
    %1600 = vmatprep.subr.mxu0 0.0
    %1601 = vmatpush1.msra.mxu0 0.0
    %1602 = vmatprep.subr.mxu0 0.0
    %1603 = vmatpush1.msra.mxu0 0.0
    %1604 = vmatprep.subr.mxu0 0.0
    %1605 = vmatpush1.msra.mxu0 0.0
    %1606 = vmatprep.subr.mxu0 0.0
    %1607 = vmatpush1.msra.mxu0 0.0
    %1608 = vmatprep.subr.mxu0 0.0
    %1609 = vmatpush1.msra.mxu0 0.0
    %1610 = vmatprep.subr.mxu0 0.0
    %1611 = vmatpush1.msra.mxu0 0.0
    %1612 = vmatprep.subr.mxu0 0.0
    %1613 = vmatpush1.msra.mxu0 0.0
    %1614 = vmatprep.subr.mxu0 0.0
    %1615 = vmatpush1.msra.mxu0 0.0
    %1616 = vmatprep.subr.mxu0 0.0
    %1617 = vmatpush1.msra.mxu0 0.0
    %1618 = vmatprep.subr.mxu0 0.0
    %1619 = vmatpush1.msra.mxu0 0.0
    %1620 = vmatprep.subr.mxu0 0.0
    %1621 = vmatpush1.msra.mxu0 0.0
    %1622 = vmatprep.subr.mxu0 0.0
    %1623 = vmatpush1.msra.mxu0 0.0
    %1624 = vmatprep.subr.mxu0 0.0
    %1625 = vmatpush1.msra.mxu0 0.0
    %1626 = vmatprep.subr.mxu0 0.0
    %1627 = vmatpush1.msra.mxu0 0.0
    %1628 = vmatprep.subr.mxu0 0.0
    %1629 = vmatpush1.msra.mxu0 0.0
    %1630 = vmatprep.mubr.f32.mxu0 0.0
    %1631 = vmatmul.mubr.f32.gmra.mrb[0].mxu0 %v1561
    %v1632 = vpop.f32.mrb[0].mxu0
    %v1633 = vadd.f32 0.0, %v1632
    %v1634 = vpop.f32.mrb[0].mxu0
    %1635 = vmatprep.mubr.f32.mxu0 0.0
    %1636 = vmatmul.mubr.f32.gmra.mrb[0].mxu0 %v1564
    %v1637 = vpop.f32.mrb[0].mxu0
    %v1638 = vadd.f32 0.0, %v1637
    %v1639 = vpop.f32.mrb[0].mxu0
    %1640 = vdwg.mxu0
    %v1641 = vlaneseq
    %v1642 = vand.u32 %v1641, 127
    %v1643 = vld [vmem:[%s4] sm:$0x1]
    %v1645 = vsel %vm96, %v1643, 0
    %1647 = vmatprep.subr.mxu0 0.0
    %1648 = vmatpush1.msra.mxu0 %v178
    %1649 = vmatprep.subr.mxu0 0.0
    %1650 = vmatpush1.msra.mxu0 %v179
    %1651 = vmatprep.subr.mxu0 0.0
    %1652 = vmatpush1.msra.mxu0 %v180
    %1653 = vmatprep.subr.mxu0 0.0
    %1654 = vmatpush1.msra.mxu0 %v181
    %1655 = vmatprep.subr.mxu0 0.0
    %1656 = vmatpush1.msra.mxu0 0.0
    %1657 = vmatprep.subr.mxu0 0.0
    %1658 = vmatpush1.msra.mxu0 0.0
    %1659 = vmatprep.subr.mxu0 0.0
    %1660 = vmatpush1.msra.mxu0 0.0
    %1661 = vmatprep.subr.mxu0 0.0
    %1662 = vmatpush1.msra.mxu0 0.0
    %1663 = vmatprep.subr.mxu0 0.0
    %1664 = vmatpush1.msra.mxu0 0.0
    %1665 = vmatprep.subr.mxu0 0.0
    %1666 = vmatpush1.msra.mxu0 0.0
    %1667 = vmatprep.subr.mxu0 0.0
    %1668 = vmatpush1.msra.mxu0 0.0
    %1669 = vmatprep.subr.mxu0 0.0
    %1670 = vmatpush1.msra.mxu0 0.0
    %1671 = vmatprep.subr.mxu0 0.0
    %1672 = vmatpush1.msra.mxu0 0.0
    %1673 = vmatprep.subr.mxu0 0.0
    %1674 = vmatpush1.msra.mxu0 0.0
    %1675 = vmatprep.subr.mxu0 0.0
    %1676 = vmatpush1.msra.mxu0 0.0
    %1677 = vmatprep.subr.mxu0 0.0
    %1678 = vmatpush1.msra.mxu0 0.0
    %1679 = vmatprep.subr.mxu0 0.0
    %1680 = vmatpush1.msra.mxu0 0.0
    %1681 = vmatprep.subr.mxu0 0.0
    %1682 = vmatpush1.msra.mxu0 0.0
    %1683 = vmatprep.subr.mxu0 0.0
    %1684 = vmatpush1.msra.mxu0 0.0
    %1685 = vmatprep.subr.mxu0 0.0
    %1686 = vmatpush1.msra.mxu0 0.0
    %1687 = vmatprep.subr.mxu0 0.0
    %1688 = vmatpush1.msra.mxu0 0.0
    %1689 = vmatprep.subr.mxu0 0.0
    %1690 = vmatpush1.msra.mxu0 0.0
    %1691 = vmatprep.subr.mxu0 0.0
    %1692 = vmatpush1.msra.mxu0 0.0
    %1693 = vmatprep.subr.mxu0 0.0
    %1694 = vmatpush1.msra.mxu0 0.0
    %1695 = vmatprep.subr.mxu0 0.0
    %1696 = vmatpush1.msra.mxu0 0.0
    %1697 = vmatprep.subr.mxu0 0.0
    %1698 = vmatpush1.msra.mxu0 0.0
    %1699 = vmatprep.subr.mxu0 0.0
    %1700 = vmatpush1.msra.mxu0 0.0
    %1701 = vmatprep.subr.mxu0 0.0
    %1702 = vmatpush1.msra.mxu0 0.0
    %1703 = vmatprep.subr.mxu0 0.0
    %1704 = vmatpush1.msra.mxu0 0.0
    %1705 = vmatprep.subr.mxu0 0.0
    %1706 = vmatpush1.msra.mxu0 0.0
    %1707 = vmatprep.subr.mxu0 0.0
    %1708 = vmatpush1.msra.mxu0 0.0
    %1709 = vmatprep.subr.mxu0 0.0
    %1710 = vmatpush1.msra.mxu0 0.0
    %1711 = vmatprep.mubr.f32.mxu0 0.0
    %1712 = vmatmul.mubr.f32.gmra.mrb[0].mxu0 %v1645
    %v1713 = vpop.f32.mrb[0].mxu0
    %v1714 = vadd.f32 0.0, %v1713
    %v1715 = vpop.f32.mrb[0].mxu0
    %1716 = vdwg.mxu0
    %v1719 = vrot.slane %v1447, 7
    %v1720 = vrot.slane %v1448, 6
    %v1721 = vsel %vm408, %v1720, %v1719
    %1722 = vrot.lane.b32.xlu0 %v1721, 32
    %v1723 = vpop.permute.xlu0 %1722
    %v1724 = vsel %vm96, %v1723, 0
    %1726 = vmatprep.subr.mxu0 0.0
    %1727 = vmatpush1.msra.mxu0 %v73
    %1728 = vmatprep.subr.mxu0 0.0
    %1729 = vmatpush1.msra.mxu0 %v74
    %1730 = vmatprep.subr.mxu0 0.0
    %1731 = vmatpush1.msra.mxu0 %v75
    %1732 = vmatprep.subr.mxu0 0.0
    %1733 = vmatpush1.msra.mxu0 %v76
    %1734 = vmatprep.subr.mxu0 0.0
    %1735 = vmatpush1.msra.mxu0 0.0
    %1736 = vmatprep.subr.mxu0 0.0
    %1737 = vmatpush1.msra.mxu0 0.0
    %1738 = vmatprep.subr.mxu0 0.0
    %1739 = vmatpush1.msra.mxu0 0.0
    %1740 = vmatprep.subr.mxu0 0.0
    %1741 = vmatpush1.msra.mxu0 0.0
    %1742 = vmatprep.subr.mxu0 0.0
    %1743 = vmatpush1.msra.mxu0 0.0
    %1744 = vmatprep.subr.mxu0 0.0
    %1745 = vmatpush1.msra.mxu0 0.0
    %1746 = vmatprep.subr.mxu0 0.0
    %1747 = vmatpush1.msra.mxu0 0.0
    %1748 = vmatprep.subr.mxu0 0.0
    %1749 = vmatpush1.msra.mxu0 0.0
    %1750 = vmatprep.subr.mxu0 0.0
    %1751 = vmatpush1.msra.mxu0 0.0
    %1752 = vmatprep.subr.mxu0 0.0
    %1753 = vmatpush1.msra.mxu0 0.0
    %1754 = vmatprep.subr.mxu0 0.0
    %1755 = vmatpush1.msra.mxu0 0.0
    %1756 = vmatprep.subr.mxu0 0.0
    %1757 = vmatpush1.msra.mxu0 0.0
    %1758 = vmatprep.subr.mxu0 0.0
    %1759 = vmatpush1.msra.mxu0 0.0
    %1760 = vmatprep.subr.mxu0 0.0
    %1761 = vmatpush1.msra.mxu0 0.0
    %1762 = vmatprep.subr.mxu0 0.0
    %1763 = vmatpush1.msra.mxu0 0.0
    %1764 = vmatprep.subr.mxu0 0.0
    %1765 = vmatpush1.msra.mxu0 0.0
    %1766 = vmatprep.subr.mxu0 0.0
    %1767 = vmatpush1.msra.mxu0 0.0
    %1768 = vmatprep.subr.mxu0 0.0
    %1769 = vmatpush1.msra.mxu0 0.0
    %1770 = vmatprep.subr.mxu0 0.0
    %1771 = vmatpush1.msra.mxu0 0.0
    %1772 = vmatprep.subr.mxu0 0.0
    %1773 = vmatpush1.msra.mxu0 0.0
    %1774 = vmatprep.subr.mxu0 0.0
    %1775 = vmatpush1.msra.mxu0 0.0
    %1776 = vmatprep.subr.mxu0 0.0
    %1777 = vmatpush1.msra.mxu0 0.0
    %1778 = vmatprep.subr.mxu0 0.0
    %1779 = vmatpush1.msra.mxu0 0.0
    %1780 = vmatprep.subr.mxu0 0.0
    %1781 = vmatpush1.msra.mxu0 0.0
    %1782 = vmatprep.subr.mxu0 0.0
    %1783 = vmatpush1.msra.mxu0 0.0
    %1784 = vmatprep.subr.mxu0 0.0
    %1785 = vmatpush1.msra.mxu0 0.0
    %1786 = vmatprep.subr.mxu0 0.0
    %1787 = vmatpush1.msra.mxu0 0.0
    %1788 = vmatprep.subr.mxu0 0.0
    %1789 = vmatpush1.msra.mxu0 0.0
    %1790 = vmatprep.mubr.f32.mxu0 0.0
    %1791 = vmatmul.mubr.f32.gmra.mrb[0].mxu0 %v1724
    %v1792 = vpop.f32.mrb[0].mxu0
    %v1793 = vadd.f32 0.0, %v1792
    %v1794 = vpop.f32.mrb[0].mxu0
    %1795 = vdwg.mxu0
    %v1796 = vlaneseq
    %v1797 = vshrl.u32 %v1796, 7
    %v1798 = vsub.s32 0, %v1797
    %v1799 = vrot.slane %v1714, %v1798
    %v1800 = vadd.f32 %v1799, %v1793
    %v1802 = vlaneseq
    %v1803 = vshrl.u32 %v1802, 7
    %v1804 = vsub.s32 0, %v1803
    %v1805 = vrot.slane %v77, %v1804
    %v1807 = vadd.f32 %v1800, %v1805
    %v1808 = vsub.f32 0.0, %v1807
    %v1809 = vmul.f32 %v1808, 1.442695
    %v1810 = vpow.pop %v1809
    %v1811 = vadd.f32 %v1810, 1.0
    %v1812 = vrcp.pop %v1811
    %v1813 = vmul.f32 1.0, %v1812
    %v1814 = vtanh.pop %v1807
    %v1817 = vrot.slane %v1435, 7
    %v1818 = vrot.slane %v1436, 6
    %v1819 = vsel %vm408, %v1818, %v1817
    %v1821 = vmul.f32 %v1813, %v1819
    %1823 = vrot.lane.b32.xlu0 %v1814, 64
    %v1824 = vpop.permute.xlu0 %1823
    %v1826 = vmul.f32 %v1813, %v1824
    %1828 = vrot.lane.b32.xlu0 %v1826, 32
    %v1829 = vpop.permute.xlu0 %1828
    %v1831 = vadd.f32 %v1821, %v1829
    %v1832 = vtanh.pop %v1831
    %1834 = vrot.lane.b32.xlu0 %v1832, 64
    %v1835 = vpop.permute.xlu0 %1834
    %v1837 = vmul.f32 %v1813, %v1835
    %1839 = vrot.lane.b32.xlu0 %v1837, 32
    %v1840 = vpop.permute.xlu0 %1839
    %v1841 = vsel %vm96, %v1840, 0
    %1843 = vmatprep.subr.mxu0 0.0
    %1844 = vmatpush1.msra.mxu0 %v78
    %1845 = vmatprep.subr.mxu0 0.0
    %1846 = vmatpush1.msra.mxu0 %v79
    %1847 = vmatprep.subr.mxu0 0.0
    %1848 = vmatpush1.msra.mxu0 %v80
    %1849 = vmatprep.subr.mxu0 0.0
    %1850 = vmatpush1.msra.mxu0 %v81
    %1851 = vmatprep.subr.mxu0 0.0
    %1852 = vmatpush1.msra.mxu0 0.0
    %1853 = vmatprep.subr.mxu0 0.0
    %1854 = vmatpush1.msra.mxu0 0.0
    %1855 = vmatprep.subr.mxu0 0.0
    %1856 = vmatpush1.msra.mxu0 0.0
    %1857 = vmatprep.subr.mxu0 0.0
    %1858 = vmatpush1.msra.mxu0 0.0
    %1859 = vmatprep.subr.mxu0 0.0
    %1860 = vmatpush1.msra.mxu0 0.0
    %1861 = vmatprep.subr.mxu0 0.0
    %1862 = vmatpush1.msra.mxu0 0.0
    %1863 = vmatprep.subr.mxu0 0.0
    %1864 = vmatpush1.msra.mxu0 0.0
    %1865 = vmatprep.subr.mxu0 0.0
    %1866 = vmatpush1.msra.mxu0 0.0
    %1867 = vmatprep.subr.mxu0 0.0
    %1868 = vmatpush1.msra.mxu0 0.0
    %1869 = vmatprep.subr.mxu0 0.0
    %1870 = vmatpush1.msra.mxu0 0.0
    %1871 = vmatprep.subr.mxu0 0.0
    %1872 = vmatpush1.msra.mxu0 0.0
    %1873 = vmatprep.subr.mxu0 0.0
    %1874 = vmatpush1.msra.mxu0 0.0
    %1875 = vmatprep.subr.mxu0 0.0
    %1876 = vmatpush1.msra.mxu0 0.0
    %1877 = vmatprep.subr.mxu0 0.0
    %1878 = vmatpush1.msra.mxu0 0.0
    %1879 = vmatprep.subr.mxu0 0.0
    %1880 = vmatpush1.msra.mxu0 0.0
    %1881 = vmatprep.subr.mxu0 0.0
    %1882 = vmatpush1.msra.mxu0 0.0
    %1883 = vmatprep.subr.mxu0 0.0
    %1884 = vmatpush1.msra.mxu0 0.0
    %1885 = vmatprep.subr.mxu0 0.0
    %1886 = vmatpush1.msra.mxu0 0.0
    %1887 = vmatprep.subr.mxu0 0.0
    %1888 = vmatpush1.msra.mxu0 0.0
    %1889 = vmatprep.subr.mxu0 0.0
    %1890 = vmatpush1.msra.mxu0 0.0
    %1891 = vmatprep.subr.mxu0 0.0
    %1892 = vmatpush1.msra.mxu0 0.0
    %1893 = vmatprep.subr.mxu0 0.0
    %1894 = vmatpush1.msra.mxu0 0.0
    %1895 = vmatprep.subr.mxu0 0.0
    %1896 = vmatpush1.msra.mxu0 0.0
    %1897 = vmatprep.subr.mxu0 0.0
    %1898 = vmatpush1.msra.mxu0 0.0
    %1899 = vmatprep.subr.mxu0 0.0
    %1900 = vmatpush1.msra.mxu0 0.0
    %1901 = vmatprep.subr.mxu0 0.0
    %1902 = vmatpush1.msra.mxu0 0.0
    %1903 = vmatprep.subr.mxu0 0.0
    %1904 = vmatpush1.msra.mxu0 0.0
    %1905 = vmatprep.subr.mxu0 0.0
    %1906 = vmatpush1.msra.mxu0 0.0
    %1907 = vmatprep.mubr.f32.mxu0 0.0
    %1908 = vmatmul.mubr.f32.gmra.mrb[0].mxu0 %v1841
    %v1909 = vpop.f32.mrb[0].mxu0
    %v1910 = vadd.f32 0.0, %v1909
    %v1911 = vpop.f32.mrb[0].mxu0
    %1912 = vdwg.mxu0
    %v1914 = vlaneseq
    %v1915 = vshrl.u32 %v1914, 7
    %v1916 = vsub.s32 0, %v1915
    %v1917 = vrot.slane %v82, %v1916
    %v1919 = vadd.f32 %v1910, %v1917
    %v1922 = vunpack.c.l.s4 1966171168
    %v1923 = vunpack.c.0.s8 %v1922
    %v1924 = vlaneseq
    %v1925 = vshrl.u32 %v1924, 7
    %v1926 = vsub.s32 %v1923, %v1925
    %v1927 = vrot.slane %v1919, %v1926
    %v1928 = vcombine.high %v1927, %v1927
    %v1930 = vunpack.c.l.s4 1966171168
    %v1931 = vunpack.c.0.s8 %v1930
    %v1932 = vlaneseq
    %v1933 = vshrl.u32 %v1932, 7
    %v1934 = vsub.s32 %v1931, %v1933
    %v1935 = vrot.slane %v1927, %v1934
    %v1937 = vunpack.c.l.s4 1966171168
    %v1938 = vunpack.c.0.s8 %v1937
    %v1939 = vlaneseq
    %v1940 = vshrl.u32 %v1939, 7
    %v1941 = vsub.s32 %v1938, %v1940
    %v1942 = vrot.slane %v1928, %v1941
    %v1943 = vlaneseq
    %v1944 = vshrl.u32 %v1943, 7
    %v1945 = vsub.s32 0, %v1944
    %v1946 = vrot.slane %v1935, %v1945
    %v1947 = vlaneseq
    %v1948 = vshrl.u32 %v1947, 7
    %v1949 = vsub.s32 0, %v1948
    %v1950 = vrot.slane %v1942, %v1949
    %v1953 = vadd.f32 %v1946, %v1548
    %v1954 = vadd.f32 %v1950, %v1553
    %v1955 = vtanh.pop %v1953
    %v1956 = vtanh.pop %v1954
    %v1958 = vlaneseq
    %v1959 = vshrl.u32 %v1958, 7
    %v1960 = vsub.s32 0, %v1959
    %v1961 = vrot.slane %v83, %v1960
    %v1963 = vmul.f32 %v1961, %v1955
    %v1964 = vmul.f32 %v1961, %v1956
    %v1965 = vsel %vm96, %v1963, 0.0
    %1966 = vadd.xlane.f32.xlu0 %v1965
    %v1967 = vpop.xlane.xlu0 %1966
    %v1968 = vsel %vm96, %v1964, 0.0
    %1969 = vadd.xlane.f32.xlu0 %v1968
    %v1970 = vpop.xlane.xlu0 %1969
    %v1973 = vlaneseq
    %v1974 = vshrl.u32 %v1973, 7
    %v1975 = vsub.s32 %v1642, %v1974
    %v1976 = vrot.slane %v1967, %v1975
    %v1977 = vlaneseq
    %v1978 = vshrl.u32 %v1977, 7
    %v1979 = vsub.s32 %v1642, %v1978
    %v1980 = vrot.slane %v1970, %v1979
    %v1981 = vsel %vm408, %v1980, %v1976
    %vm1983 = vcmask 58368
    %v1984 = vsel %vm1983, %v1981, -inf
    %1985 = vmax.xlane.f32.xlu0 %v1984
    %v1986 = vpop.xlane.xlu0 %1985
    %v1988 = vlaneseq
    %v1989 = vshrl.u32 %v1988, 7
    %v1990 = vsub.s32 0, %v1989
    %v1991 = vrot.slane %v1986, %v1990
    %v1992 = vlaneseq
    %v1993 = vshrl.u32 %v1992, 7
    %v1994 = vsub.s32 1, %v1993
    %v1995 = vrot.slane %v1986, %v1994
    %v1998 = vsub.f32 %v1967, %v1991
    %v1999 = vsub.f32 %v1970, %v1995
    %v2000 = vmul.f32 %v1998, 1.442695
    %v2001 = vpow.pop %v2000
    %v2002 = vmul.f32 %v1999, 1.442695
    %v2003 = vpow.pop %v2002
    %2006 = vset.pattern.permute.xlu0 0
    %2007 = vperm.xlu0 %2006, %v2001
    %v2008 = vpop.permute.xlu0 %2007
    %2009 = vset.pattern.permute.xlu0 0
    %2010 = vperm.xlu0 %2009, %v2003
    %v2011 = vpop.permute.xlu0 %2010
    %v2012 = vlaneseq
    %v2013 = vshrl.u32 %v2012, 7
    %v2014 = vsub.s32 %v1642, %v2013
    %v2015 = vrot.slane %v2008, %v2014
    %v2016 = vlaneseq
    %v2017 = vshrl.u32 %v2016, 7
    %v2018 = vsub.s32 %v1642, %v2017
    %v2019 = vrot.slane %v2011, %v2018
    %v2020 = vsel %vm408, %v2019, %v2015
    %v2022 = vsel %vm1983, %v2020, 0.0
    %2023 = vadd.xlane.f32.xlu0 %v2022
    %v2024 = vpop.xlane.xlu0 %2023
    %v2026 = vlaneseq
    %v2027 = vshrl.u32 %v2026, 7
    %v2028 = vsub.s32 0, %v2027
    %v2029 = vrot.slane %v2024, %v2028
    %v2030 = vlaneseq
    %v2031 = vshrl.u32 %v2030, 7
    %v2032 = vsub.s32 1, %v2031
    %v2033 = vrot.slane %v2024, %v2032
    %v2036 = vrcp.pop %v2029
    %v2037 = vmul.f32 %v2001, %v2036
    %v2038 = vrcp.pop %v2033
    %v2039 = vmul.f32 %v2003, %v2038
    %vm2040 = vcmp.eq.f32.partialorder %v66, 0.0
    %v2041 = vsel %vm2040, -inf, %v1981
    %v2042 = vsel %vm1983, %v2041, -inf
    %2043 = vmax.xlane.f32.xlu0 %v2042
    %v2044 = vpop.xlane.xlu0 %2043
    %v2045 = vsub.f32 %v2041, %v2044
    %v2046 = vmul.f32 %v2045, 1.442695
    %v2047 = vpow.pop %v2046
    %v2048 = vsel %vm1983, %v2047, 0.0
    %2049 = vadd.xlane.f32.xlu0 %v2048
    %v2050 = vpop.xlane.xlu0 %2049
    %v2051 = vrcp.pop %v2050
    %v2052 = vmul.f32 %v2047, %v2051
    %v2053 = vlaneseq
    %v2054 = vshrl.u32 %v2053, 7
    %v2055 = vsub.s32 0, %v2054
    %v2056 = vrot.slane %v2052, %v2055
    %2058 = vbcast.lane.b32.xlu0 %v2056, 256
    %v2059 = vpop.permute.xlu0 %2058
    %v2060 = vlaneseq
    %v2061 = vshrl.u32 %v2060, 7
    %v2062 = vsub.s32 1, %v2061
    %v2063 = vrot.slane %v2052, %v2062
    %2065 = vbcast.lane.b32.xlu0 %v2063, 256
    %v2066 = vpop.permute.xlu0 %2065
    %v2067 = vmul.f32 %v2059, %v1633
    %v2068 = vmul.f32 %v2066, %v1638
    %v2069 = vsel %vm96, %v2067, 0.0
    %v2070 = vrot.slane %v2069, 4
    %v2071 = vadd.f32 %v2069, %v2070
    %v2072 = vrot.slane %v2071, 2
    %v2073 = vadd.f32 %v2071, %v2072
    %v2074 = vrot.slane %v2073, 1
    %v2075 = vadd.f32 %v2073, %v2074
    %v2076 = vsel %vm96, %v2068, 0.0
    %v2077 = vrot.slane %v2076, 4
    %v2078 = vadd.f32 %v2076, %v2077
    %v2079 = vrot.slane %v2078, 2
    %v2080 = vadd.f32 %v2078, %v2079
    %v2081 = vrot.slane %v2080, 1
    %v2082 = vadd.f32 %v2080, %v2081
    %v2084 = vrot.slane %v1910, 1
    %2085 = vrot.lane.b32.xlu0 %v1910, 96
    %v2086 = vpop.permute.xlu0 %2085
    %2087 = vrot.lane.b32.xlu0 %v2084, 96
    %v2088 = vpop.permute.xlu0 %2087
    %v2091 = vadd.f32 %v2075, %v2086
    %v2092 = vadd.f32 %v2082, %v2088
    %v2094 = vlaneseq
    %v2095 = vshrl.u32 %v2094, 7
    %v2096 = vsub.s32 0, %v2095
    %v2097 = vrot.slane %v84, %v2096
    %v2099 = vadd.f32 %v2091, %v2097
    %v2100 = vadd.f32 %v2092, %v2097
    %v2101 = vtanh.pop %v2099
    %v2102 = vtanh.pop %v2100
    %v2103 = vmul.f32 %v2052, %v66
    %v2104 = vsel %vm1983, %v2103, -inf
    %2105 = vmax.xlane.f32.xlu0 %v2104
    %v2106 = vpop.xlane.xlu0 %2105
    %vm2107 = vcmp.eq.f32.partialorder %v2103, %v2106
    %v2108 = vsel %vm2107, %v1642, 8
    %v2109 = vsel %vm1983, %v2108, 2147483647
    %v2110 = vand.u32 %v2109, 65535
    %v2111 = vshra.s32 %v2109, 16
    %v2112 = vcvt.s32.f32 %v2110
    %v2113 = vcvt.s32.f32 %v2111
    %2114 = vmin.xlane.f32.xlu0 %v2113
    %v2115 = vpop.xlane.xlu0 %2114
    %vm2116 = vcmp.eq.f32.partialorder %v2113, %v2115
    %v2117 = vsel %vm2116, %v2112, inf
    %2118 = vmin.xlane.f32.xlu0 %v2117
    %v2119 = vpop.xlane.xlu0 %2118
    %v2120 = vcvt.f32.s32 %v2119
    %v2121 = vcvt.f32.s32 %v2115
    %v2122 = vshll.u32 %v2121, 16
    %v2123 = vadd.s32 %v2122, %v2120
    %vm2124 = vcmp.eq.s32.totalorder %v1642, %v2123
    %v2125 = vsel %vm2124, 1, 0
    %v2126 = vcvt.s32.f32 %v2125
    %v2127 = vsub.f32 1.0, %v2126
    %v2128 = vmul.f32 %v66, %v2127
    %v2129 = vlaneseq
    %v2130 = vshrl.u32 %v2129, 7
    %v2131 = vsub.s32 0, %v2130
    %v2132 = vrot.slane %v2126, %v2131
    %2134 = vbcast.lane.b32.xlu0 %v2132, 256
    %v2135 = vpop.permute.xlu0 %2134
    %v2136 = vlaneseq
    %v2137 = vshrl.u32 %v2136, 7
    %v2138 = vsub.s32 1, %v2137
    %v2139 = vrot.slane %v2126, %v2138
    %2141 = vbcast.lane.b32.xlu0 %v2139, 256
    %v2142 = vpop.permute.xlu0 %2141
    %v2143 = vmul.f32 %v2135, %v249
    %v2144 = vmul.f32 %v2142, %v254
    %v2145 = vrot.slane %v2143, 4
    %v2146 = vadd.f32 %v2143, %v2145
    %v2147 = vrot.slane %v2146, 2
    %v2148 = vadd.f32 %v2146, %v2147
    %v2149 = vrot.slane %v2148, 1
    %v2150 = vadd.f32 %v2148, %v2149
    %v2151 = vrot.slane %v2144, 4
    %v2152 = vadd.f32 %v2144, %v2151
    %v2153 = vrot.slane %v2152, 2
    %v2154 = vadd.f32 %v2152, %v2153
    %v2155 = vrot.slane %v2154, 1
    %v2156 = vadd.f32 %v2154, %v2155
    %v2159 = vunpack.c.l.s4 1966171168
    %v2160 = vunpack.c.0.s8 %v2159
    %v2161 = vlaneseq
    %v2162 = vshrl.u32 %v2161, 7
    %v2163 = vsub.s32 %v2160, %v2162
    %v2164 = vrot.slane %v2052, %v2163
    %v2165 = vcombine.high %v2164, %v2164
    %v2167 = vunpack.c.l.s4 1966171168
    %v2168 = vunpack.c.0.s8 %v2167
    %v2169 = vlaneseq
    %v2170 = vshrl.u32 %v2169, 7
    %v2171 = vsub.s32 %v2168, %v2170
    %v2172 = vrot.slane %v2164, %v2171
    %v2174 = vunpack.c.l.s4 1966171168
    %v2175 = vunpack.c.0.s8 %v2174
    %v2176 = vlaneseq
    %v2177 = vshrl.u32 %v2176, 7
    %v2178 = vsub.s32 %v2175, %v2177
    %v2179 = vrot.slane %v2165, %v2178
    %v2180 = vlaneseq
    %v2181 = vshrl.u32 %v2180, 7
    %v2182 = vsub.s32 0, %v2181
    %v2183 = vrot.slane %v2172, %v2182
    %v2184 = vlaneseq
    %v2185 = vshrl.u32 %v2184, 7
    %v2186 = vsub.s32 0, %v2185
    %v2187 = vrot.slane %v2179, %v2186
    %v2190 = vsel %vm394, %v2183, 0.0
    %v2191 = vsel %vm394, %v2187, 0.0
    %2194 = vset.pattern.permute.xlu0 0
    %2195 = vperm.xlu0 %2194, %v2037
    %v2196 = vpop.permute.xlu0 %2195
    %2197 = vset.pattern.permute.xlu0 0
    %2198 = vperm.xlu0 %2197, %v2039
    %v2199 = vpop.permute.xlu0 %2198
    %v2200 = vlaneseq
    %v2201 = vshrl.u32 %v2200, 7
    %v2202 = vsub.s32 %v1642, %v2201
    %v2203 = vrot.slane %v2196, %v2202
    %v2204 = vlaneseq
    %v2205 = vshrl.u32 %v2204, 7
    %v2206 = vsub.s32 %v1642, %v2205
    %v2207 = vrot.slane %v2199, %v2206
    %vm2208 = vcmask 1042434
    %v2209 = vsel %vm2208, %v2203, %v2203
    %vm2210 = vcmask 1043459
    %v2211 = vsel %vm2210, %v2203, %v2209
    %vm2212 = vcmask 1044484
    %v2213 = vsel %vm2212, %v2203, %v2211
    %vm2214 = vcmask 1045509
    %v2215 = vsel %vm2214, %v2203, %v2213
    %vm2216 = vcmask 1046534
    %v2217 = vsel %vm2216, %v2203, %v2215
    %vm2218 = vcmask 1047559
    %v2219 = vsel %vm2218, %v2203, %v2217
    %v2220 = vsel %vm2208, %v2207, %v2207
    %v2221 = vsel %vm2210, %v2207, %v2220
    %v2222 = vsel %vm2212, %v2207, %v2221
    %v2223 = vsel %vm2214, %v2207, %v2222
    %v2224 = vsel %vm2216, %v2207, %v2223
    %v2225 = vsel %vm2218, %v2207, %v2224
    %v2228 = vsel %vm394, %v2219, 0.0
    %v2229 = vsel %vm394, %v2225, 0.0
    %vm2230 = vcmp.eq.s32.totalorder %v1642, 0
    %v2231 = vsel %vm2230, %v2123, 0
    %v2234 = vrot.slane %v2102, 7
    %v2235 = vsel %vm408, %v2234, %v2101
    %v2236 = vsel %vm96, %v2235, 0
    %2238 = vmatprep.subr.mxu0 0.0
    %2239 = vmatpush1.msra.mxu0 %v73
    %2240 = vmatprep.subr.mxu0 0.0
    %2241 = vmatpush1.msra.mxu0 %v74
    %2242 = vmatprep.subr.mxu0 0.0
    %2243 = vmatpush1.msra.mxu0 %v75
    %2244 = vmatprep.subr.mxu0 0.0
    %2245 = vmatpush1.msra.mxu0 %v76
    %2246 = vmatprep.subr.mxu0 0.0
    %2247 = vmatpush1.msra.mxu0 0.0
    %2248 = vmatprep.subr.mxu0 0.0
    %2249 = vmatpush1.msra.mxu0 0.0
    %2250 = vmatprep.subr.mxu0 0.0
    %2251 = vmatpush1.msra.mxu0 0.0
    %2252 = vmatprep.subr.mxu0 0.0
    %2253 = vmatpush1.msra.mxu0 0.0
    %2254 = vmatprep.subr.mxu0 0.0
    %2255 = vmatpush1.msra.mxu0 0.0
    %2256 = vmatprep.subr.mxu0 0.0
    %2257 = vmatpush1.msra.mxu0 0.0
    %2258 = vmatprep.subr.mxu0 0.0
    %2259 = vmatpush1.msra.mxu0 0.0
    %2260 = vmatprep.subr.mxu0 0.0
    %2261 = vmatpush1.msra.mxu0 0.0
    %2262 = vmatprep.subr.mxu0 0.0
    %2263 = vmatpush1.msra.mxu0 0.0
    %2264 = vmatprep.subr.mxu0 0.0
    %2265 = vmatpush1.msra.mxu0 0.0
    %2266 = vmatprep.subr.mxu0 0.0
    %2267 = vmatpush1.msra.mxu0 0.0
    %2268 = vmatprep.subr.mxu0 0.0
    %2269 = vmatpush1.msra.mxu0 0.0
    %2270 = vmatprep.subr.mxu0 0.0
    %2271 = vmatpush1.msra.mxu0 0.0
    %2272 = vmatprep.subr.mxu0 0.0
    %2273 = vmatpush1.msra.mxu0 0.0
    %2274 = vmatprep.subr.mxu0 0.0
    %2275 = vmatpush1.msra.mxu0 0.0
    %2276 = vmatprep.subr.mxu0 0.0
    %2277 = vmatpush1.msra.mxu0 0.0
    %2278 = vmatprep.subr.mxu0 0.0
    %2279 = vmatpush1.msra.mxu0 0.0
    %2280 = vmatprep.subr.mxu0 0.0
    %2281 = vmatpush1.msra.mxu0 0.0
    %2282 = vmatprep.subr.mxu0 0.0
    %2283 = vmatpush1.msra.mxu0 0.0
    %2284 = vmatprep.subr.mxu0 0.0
    %2285 = vmatpush1.msra.mxu0 0.0
    %2286 = vmatprep.subr.mxu0 0.0
    %2287 = vmatpush1.msra.mxu0 0.0
    %2288 = vmatprep.subr.mxu0 0.0
    %2289 = vmatpush1.msra.mxu0 0.0
    %2290 = vmatprep.subr.mxu0 0.0
    %2291 = vmatpush1.msra.mxu0 0.0
    %2292 = vmatprep.subr.mxu0 0.0
    %2293 = vmatpush1.msra.mxu0 0.0
    %2294 = vmatprep.subr.mxu0 0.0
    %2295 = vmatpush1.msra.mxu0 0.0
    %2296 = vmatprep.subr.mxu0 0.0
    %2297 = vmatpush1.msra.mxu0 0.0
    %2298 = vmatprep.subr.mxu0 0.0
    %2299 = vmatpush1.msra.mxu0 0.0
    %2300 = vmatprep.subr.mxu0 0.0
    %2301 = vmatpush1.msra.mxu0 0.0
    %2302 = vmatprep.mubr.f32.mxu0 0.0
    %2303 = vmatmul.mubr.f32.gmra.mrb[0].mxu0 %v2236
    %v2304 = vpop.f32.mrb[0].mxu0
    %v2305 = vadd.f32 0.0, %v2304
    %v2306 = vpop.f32.mrb[0].mxu0
    %2307 = vdwg.mxu0
    %v2309 = vrot.slane %v2305, 1
    %v2312 = vadd.f32 %v2150, %v2305
    %v2313 = vadd.f32 %v2156, %v2309
    %v2314 = vadd.f32 %v2312, %v1805
    %v2315 = vadd.f32 %v2313, %v1805
    %v2316 = vsub.f32 0.0, %v2314
    %v2317 = vsub.f32 0.0, %v2315
    %v2318 = vmul.f32 %v2316, 1.442695
    %v2319 = vpow.pop %v2318
    %v2320 = vmul.f32 %v2317, 1.442695
    %v2321 = vpow.pop %v2320
    %v2322 = vadd.f32 %v2319, 1.0
    %v2323 = vadd.f32 %v2321, 1.0
    %v2324 = vrcp.pop %v2322
    %v2325 = vmul.f32 1.0, %v2324
    %v2326 = vrcp.pop %v2323
    %v2327 = vmul.f32 1.0, %v2326
    %v2328 = vtanh.pop %v2314
    %v2329 = vtanh.pop %v2315
    %v2331 = vrot.slane %v1831, 1
    %v2334 = vmul.f32 %v2325, %v1831
    %v2335 = vmul.f32 %v2327, %v2331
    %2338 = vrot.lane.b32.xlu0 %v2328, 64
    %v2339 = vpop.permute.xlu0 %2338
    %2340 = vrot.lane.b32.xlu0 %v2329, 64
    %v2341 = vpop.permute.xlu0 %2340
    %v2344 = vmul.f32 %v2325, %v2339
    %v2345 = vmul.f32 %v2327, %v2341
    %2348 = vrot.lane.b32.xlu0 %v2344, 32
    %v2349 = vpop.permute.xlu0 %2348
    %2350 = vrot.lane.b32.xlu0 %v2345, 32
    %v2351 = vpop.permute.xlu0 %2350
    %v2354 = vadd.f32 %v2334, %v2349
    %v2355 = vadd.f32 %v2335, %v2351
    %v2356 = vtanh.pop %v2354
    %v2357 = vtanh.pop %v2355
    %2360 = vrot.lane.b32.xlu0 %v2356, 64
    %v2361 = vpop.permute.xlu0 %2360
    %2362 = vrot.lane.b32.xlu0 %v2357, 64
    %v2363 = vpop.permute.xlu0 %2362
    %v2366 = vmul.f32 %v2325, %v2361
    %v2367 = vmul.f32 %v2327, %v2363
    %v2370 = vrot.slane %v2367, 7
    %v2371 = vsel %vm408, %v2370, %v2366
    %2372 = vrot.lane.b32.xlu0 %v2371, 32
    %v2373 = vpop.permute.xlu0 %2372
    %v2374 = vsel %vm96, %v2373, 0
    %2376 = vmatprep.subr.mxu0 0.0
    %2377 = vmatpush1.msra.mxu0 %v78
    %2378 = vmatprep.subr.mxu0 0.0
    %2379 = vmatpush1.msra.mxu0 %v79
    %2380 = vmatprep.subr.mxu0 0.0
    %2381 = vmatpush1.msra.mxu0 %v80
    %2382 = vmatprep.subr.mxu0 0.0
    %2383 = vmatpush1.msra.mxu0 %v81
    %2384 = vmatprep.subr.mxu0 0.0
    %2385 = vmatpush1.msra.mxu0 0.0
    %2386 = vmatprep.subr.mxu0 0.0
    %2387 = vmatpush1.msra.mxu0 0.0
    %2388 = vmatprep.subr.mxu0 0.0
    %2389 = vmatpush1.msra.mxu0 0.0
    %2390 = vmatprep.subr.mxu0 0.0
    %2391 = vmatpush1.msra.mxu0 0.0
    %2392 = vmatprep.subr.mxu0 0.0
    %2393 = vmatpush1.msra.mxu0 0.0
    %2394 = vmatprep.subr.mxu0 0.0
    %2395 = vmatpush1.msra.mxu0 0.0
    %2396 = vmatprep.subr.mxu0 0.0
    %2397 = vmatpush1.msra.mxu0 0.0
    %2398 = vmatprep.subr.mxu0 0.0
    %2399 = vmatpush1.msra.mxu0 0.0
    %2400 = vmatprep.subr.mxu0 0.0
    %2401 = vmatpush1.msra.mxu0 0.0
    %2402 = vmatprep.subr.mxu0 0.0
    %2403 = vmatpush1.msra.mxu0 0.0
    %2404 = vmatprep.subr.mxu0 0.0
    %2405 = vmatpush1.msra.mxu0 0.0
    %2406 = vmatprep.subr.mxu0 0.0
    %2407 = vmatpush1.msra.mxu0 0.0
    %2408 = vmatprep.subr.mxu0 0.0
    %2409 = vmatpush1.msra.mxu0 0.0
    %2410 = vmatprep.subr.mxu0 0.0
    %2411 = vmatpush1.msra.mxu0 0.0
    %2412 = vmatprep.subr.mxu0 0.0
    %2413 = vmatpush1.msra.mxu0 0.0
    %2414 = vmatprep.subr.mxu0 0.0
    %2415 = vmatpush1.msra.mxu0 0.0
    %2416 = vmatprep.subr.mxu0 0.0
    %2417 = vmatpush1.msra.mxu0 0.0
    %2418 = vmatprep.subr.mxu0 0.0
    %2419 = vmatpush1.msra.mxu0 0.0
    %2420 = vmatprep.subr.mxu0 0.0
    %2421 = vmatpush1.msra.mxu0 0.0
    %2422 = vmatprep.subr.mxu0 0.0
    %2423 = vmatpush1.msra.mxu0 0.0
    %2424 = vmatprep.subr.mxu0 0.0
    %2425 = vmatpush1.msra.mxu0 0.0
    %2426 = vmatprep.subr.mxu0 0.0
    %2427 = vmatpush1.msra.mxu0 0.0
    %2428 = vmatprep.subr.mxu0 0.0
    %2429 = vmatpush1.msra.mxu0 0.0
    %2430 = vmatprep.subr.mxu0 0.0
    %2431 = vmatpush1.msra.mxu0 0.0
    %2432 = vmatprep.subr.mxu0 0.0
    %2433 = vmatpush1.msra.mxu0 0.0
    %2434 = vmatprep.subr.mxu0 0.0
    %2435 = vmatpush1.msra.mxu0 0.0
    %2436 = vmatprep.subr.mxu0 0.0
    %2437 = vmatpush1.msra.mxu0 0.0
    %2438 = vmatprep.subr.mxu0 0.0
    %2439 = vmatpush1.msra.mxu0 0.0
    %2440 = vmatprep.mubr.f32.mxu0 0.0
    %2441 = vmatmul.mubr.f32.gmra.mrb[0].mxu0 %v2374
    %v2442 = vpop.f32.mrb[0].mxu0
    %v2443 = vadd.f32 0.0, %v2442
    %v2444 = vpop.f32.mrb[0].mxu0
    %2445 = vdwg.mxu0
    %v2446 = vadd.f32 %v2443, %v1917
    %v2449 = vunpack.c.l.s4 1966171168
    %v2450 = vunpack.c.0.s8 %v2449
    %v2451 = vlaneseq
    %v2452 = vshrl.u32 %v2451, 7
    %v2453 = vsub.s32 %v2450, %v2452
    %v2454 = vrot.slane %v2446, %v2453
    %v2455 = vcombine.high %v2454, %v2454
    %v2457 = vunpack.c.l.s4 1966171168
    %v2458 = vunpack.c.0.s8 %v2457
    %v2459 = vlaneseq
    %v2460 = vshrl.u32 %v2459, 7
    %v2461 = vsub.s32 %v2458, %v2460
    %v2462 = vrot.slane %v2454, %v2461
    %v2464 = vunpack.c.l.s4 1966171168
    %v2465 = vunpack.c.0.s8 %v2464
    %v2466 = vlaneseq
    %v2467 = vshrl.u32 %v2466, 7
    %v2468 = vsub.s32 %v2465, %v2467
    %v2469 = vrot.slane %v2455, %v2468
    %v2470 = vlaneseq
    %v2471 = vshrl.u32 %v2470, 7
    %v2472 = vsub.s32 0, %v2471
    %v2473 = vrot.slane %v2462, %v2472
    %v2474 = vlaneseq
    %v2475 = vshrl.u32 %v2474, 7
    %v2476 = vsub.s32 0, %v2475
    %v2477 = vrot.slane %v2469, %v2476
    %v2480 = vadd.f32 %v2473, %v1548
    %v2481 = vadd.f32 %v2477, %v1553
    %v2482 = vtanh.pop %v2480
    %v2483 = vtanh.pop %v2481
    %v2484 = vmul.f32 %v1961, %v2482
    %v2485 = vmul.f32 %v1961, %v2483
    %v2486 = vsel %vm96, %v2484, 0.0
    %2487 = vadd.xlane.f32.xlu0 %v2486
    %v2488 = vpop.xlane.xlu0 %2487
    %v2489 = vsel %vm96, %v2485, 0.0
    %2490 = vadd.xlane.f32.xlu0 %v2489
    %v2491 = vpop.xlane.xlu0 %2490
    %v2494 = vlaneseq
    %v2495 = vshrl.u32 %v2494, 7
    %v2496 = vsub.s32 %v1642, %v2495
    %v2497 = vrot.slane %v2488, %v2496
    %v2498 = vlaneseq
    %v2499 = vshrl.u32 %v2498, 7
    %v2500 = vsub.s32 %v1642, %v2499
    %v2501 = vrot.slane %v2491, %v2500
    %v2502 = vsel %vm408, %v2501, %v2497
    %v2504 = vsel %vm1983, %v2502, -inf
    %2505 = vmax.xlane.f32.xlu0 %v2504
    %v2506 = vpop.xlane.xlu0 %2505
    %v2508 = vlaneseq
    %v2509 = vshrl.u32 %v2508, 7
    %v2510 = vsub.s32 0, %v2509
    %v2511 = vrot.slane %v2506, %v2510
    %v2512 = vlaneseq
    %v2513 = vshrl.u32 %v2512, 7
    %v2514 = vsub.s32 1, %v2513
    %v2515 = vrot.slane %v2506, %v2514
    %v2518 = vsub.f32 %v2488, %v2511
    %v2519 = vsub.f32 %v2491, %v2515
    %v2520 = vmul.f32 %v2518, 1.442695
    %v2521 = vpow.pop %v2520
    %v2522 = vmul.f32 %v2519, 1.442695
    %v2523 = vpow.pop %v2522
    %2526 = vset.pattern.permute.xlu0 0
    %2527 = vperm.xlu0 %2526, %v2521
    %v2528 = vpop.permute.xlu0 %2527
    %2529 = vset.pattern.permute.xlu0 0
    %2530 = vperm.xlu0 %2529, %v2523
    %v2531 = vpop.permute.xlu0 %2530
    %v2532 = vlaneseq
    %v2533 = vshrl.u32 %v2532, 7
    %v2534 = vsub.s32 %v1642, %v2533
    %v2535 = vrot.slane %v2528, %v2534
    %v2536 = vlaneseq
    %v2537 = vshrl.u32 %v2536, 7
    %v2538 = vsub.s32 %v1642, %v2537
    %v2539 = vrot.slane %v2531, %v2538
    %v2540 = vsel %vm408, %v2539, %v2535
    %v2542 = vsel %vm1983, %v2540, 0.0
    %2543 = vadd.xlane.f32.xlu0 %v2542
    %v2544 = vpop.xlane.xlu0 %2543
    %v2546 = vlaneseq
    %v2547 = vshrl.u32 %v2546, 7
    %v2548 = vsub.s32 0, %v2547
    %v2549 = vrot.slane %v2544, %v2548
    %v2550 = vlaneseq
    %v2551 = vshrl.u32 %v2550, 7
    %v2552 = vsub.s32 1, %v2551
    %v2553 = vrot.slane %v2544, %v2552
    %v2556 = vrcp.pop %v2549
    %v2557 = vmul.f32 %v2521, %v2556
    %v2558 = vrcp.pop %v2553
    %v2559 = vmul.f32 %v2523, %v2558
    %vm2560 = vcmp.eq.f32.partialorder %v2128, 0.0
    %v2561 = vsel %vm2560, -inf, %v2502
    %v2562 = vsel %vm1983, %v2561, -inf
    %2563 = vmax.xlane.f32.xlu0 %v2562
    %v2564 = vpop.xlane.xlu0 %2563
    %v2565 = vsub.f32 %v2561, %v2564
    %v2566 = vmul.f32 %v2565, 1.442695
    %v2567 = vpow.pop %v2566
    %v2568 = vsel %vm1983, %v2567, 0.0
    %2569 = vadd.xlane.f32.xlu0 %v2568
    %v2570 = vpop.xlane.xlu0 %2569
    %v2571 = vrcp.pop %v2570
    %v2572 = vmul.f32 %v2567, %v2571
    %v2573 = vlaneseq
    %v2574 = vshrl.u32 %v2573, 7
    %v2575 = vsub.s32 0, %v2574
    %v2576 = vrot.slane %v2572, %v2575
    %2578 = vbcast.lane.b32.xlu0 %v2576, 256
    %v2579 = vpop.permute.xlu0 %2578
    %v2580 = vlaneseq
    %v2581 = vshrl.u32 %v2580, 7
    %v2582 = vsub.s32 1, %v2581
    %v2583 = vrot.slane %v2572, %v2582
    %2585 = vbcast.lane.b32.xlu0 %v2583, 256
    %v2586 = vpop.permute.xlu0 %2585
    %v2587 = vmul.f32 %v2579, %v1633
    %v2588 = vmul.f32 %v2586, %v1638
    %v2589 = vsel %vm96, %v2587, 0.0
    %v2590 = vrot.slane %v2589, 4
    %v2591 = vadd.f32 %v2589, %v2590
    %v2592 = vrot.slane %v2591, 2
    %v2593 = vadd.f32 %v2591, %v2592
    %v2594 = vrot.slane %v2593, 1
    %v2595 = vadd.f32 %v2593, %v2594
    %v2596 = vsel %vm96, %v2588, 0.0
    %v2597 = vrot.slane %v2596, 4
    %v2598 = vadd.f32 %v2596, %v2597
    %v2599 = vrot.slane %v2598, 2
    %v2600 = vadd.f32 %v2598, %v2599
    %v2601 = vrot.slane %v2600, 1
    %v2602 = vadd.f32 %v2600, %v2601
    %v2604 = vrot.slane %v2443, 1
    %2605 = vrot.lane.b32.xlu0 %v2443, 96
    %v2606 = vpop.permute.xlu0 %2605
    %2607 = vrot.lane.b32.xlu0 %v2604, 96
    %v2608 = vpop.permute.xlu0 %2607
    %v2611 = vadd.f32 %v2595, %v2606
    %v2612 = vadd.f32 %v2602, %v2608
    %v2613 = vadd.f32 %v2611, %v2097
    %v2614 = vadd.f32 %v2612, %v2097
    %v2615 = vtanh.pop %v2613
    %v2616 = vtanh.pop %v2614
    %v2617 = vmul.f32 %v2572, %v2128
    %v2618 = vsel %vm1983, %v2617, -inf
    %2619 = vmax.xlane.f32.xlu0 %v2618
    %v2620 = vpop.xlane.xlu0 %2619
    %vm2621 = vcmp.eq.f32.partialorder %v2617, %v2620
    %v2622 = vsel %vm2621, %v1642, 8
    %v2623 = vsel %vm1983, %v2622, 2147483647
    %v2624 = vand.u32 %v2623, 65535
    %v2625 = vshra.s32 %v2623, 16
    %v2626 = vcvt.s32.f32 %v2624
    %v2627 = vcvt.s32.f32 %v2625
    %2628 = vmin.xlane.f32.xlu0 %v2627
    %v2629 = vpop.xlane.xlu0 %2628
    %vm2630 = vcmp.eq.f32.partialorder %v2627, %v2629
    %v2631 = vsel %vm2630, %v2626, inf
    %2632 = vmin.xlane.f32.xlu0 %v2631
    %v2633 = vpop.xlane.xlu0 %2632
    %v2634 = vcvt.f32.s32 %v2633
    %v2635 = vcvt.f32.s32 %v2629
    %v2636 = vshll.u32 %v2635, 16
    %v2637 = vadd.s32 %v2636, %v2634
    %vm2638 = vcmp.eq.s32.totalorder %v1642, %v2637
    %v2639 = vsel %vm2638, 1, 0
    %v2640 = vcvt.s32.f32 %v2639
    %v2641 = vsub.f32 1.0, %v2640
    %v2642 = vmul.f32 %v2128, %v2641
    %v2643 = vlaneseq
    %v2644 = vshrl.u32 %v2643, 7
    %v2645 = vsub.s32 0, %v2644
    %v2646 = vrot.slane %v2640, %v2645
    %2648 = vbcast.lane.b32.xlu0 %v2646, 256
    %v2649 = vpop.permute.xlu0 %2648
    %v2650 = vlaneseq
    %v2651 = vshrl.u32 %v2650, 7
    %v2652 = vsub.s32 1, %v2651
    %v2653 = vrot.slane %v2640, %v2652
    %2655 = vbcast.lane.b32.xlu0 %v2653, 256
    %v2656 = vpop.permute.xlu0 %2655
    %v2657 = vmul.f32 %v2649, %v249
    %v2658 = vmul.f32 %v2656, %v254
    %v2659 = vrot.slane %v2657, 4
    %v2660 = vadd.f32 %v2657, %v2659
    %v2661 = vrot.slane %v2660, 2
    %v2662 = vadd.f32 %v2660, %v2661
    %v2663 = vrot.slane %v2662, 1
    %v2664 = vadd.f32 %v2662, %v2663
    %v2665 = vrot.slane %v2658, 4
    %v2666 = vadd.f32 %v2658, %v2665
    %v2667 = vrot.slane %v2666, 2
    %v2668 = vadd.f32 %v2666, %v2667
    %v2669 = vrot.slane %v2668, 1
    %v2670 = vadd.f32 %v2668, %v2669
    %v2673 = vunpack.c.l.s4 1966171168
    %v2674 = vunpack.c.0.s8 %v2673
    %v2675 = vlaneseq
    %v2676 = vshrl.u32 %v2675, 7
    %v2677 = vsub.s32 %v2674, %v2676
    %v2678 = vrot.slane %v2572, %v2677
    %v2679 = vcombine.high %v2678, %v2678
    %v2681 = vunpack.c.l.s4 1966171168
    %v2682 = vunpack.c.0.s8 %v2681
    %v2683 = vlaneseq
    %v2684 = vshrl.u32 %v2683, 7
    %v2685 = vsub.s32 %v2682, %v2684
    %v2686 = vrot.slane %v2678, %v2685
    %v2688 = vunpack.c.l.s4 1966171168
    %v2689 = vunpack.c.0.s8 %v2688
    %v2690 = vlaneseq
    %v2691 = vshrl.u32 %v2690, 7
    %v2692 = vsub.s32 %v2689, %v2691
    %v2693 = vrot.slane %v2679, %v2692
    %v2694 = vlaneseq
    %v2695 = vshrl.u32 %v2694, 7
    %v2696 = vsub.s32 0, %v2695
    %v2697 = vrot.slane %v2686, %v2696
    %v2698 = vlaneseq
    %v2699 = vshrl.u32 %v2698, 7
    %v2700 = vsub.s32 0, %v2699
    %v2701 = vrot.slane %v2693, %v2700
    %v2704 = vsel %vm544, %v2697, %v2190
    %v2705 = vsel %vm544, %v2701, %v2191
    %2708 = vset.pattern.permute.xlu0 0
    %2709 = vperm.xlu0 %2708, %v2557
    %v2710 = vpop.permute.xlu0 %2709
    %2711 = vset.pattern.permute.xlu0 0
    %2712 = vperm.xlu0 %2711, %v2559
    %v2713 = vpop.permute.xlu0 %2712
    %v2714 = vlaneseq
    %v2715 = vshrl.u32 %v2714, 7
    %v2716 = vsub.s32 %v1642, %v2715
    %v2717 = vrot.slane %v2710, %v2716
    %v2718 = vlaneseq
    %v2719 = vshrl.u32 %v2718, 7
    %v2720 = vsub.s32 %v1642, %v2719
    %v2721 = vrot.slane %v2713, %v2720
    %v2722 = vsel %vm2208, %v2717, %v2717
    %v2723 = vsel %vm2210, %v2717, %v2722
    %v2724 = vsel %vm2212, %v2717, %v2723
    %v2725 = vsel %vm2214, %v2717, %v2724
    %v2726 = vsel %vm2216, %v2717, %v2725
    %v2727 = vsel %vm2218, %v2717, %v2726
    %v2728 = vsel %vm2208, %v2721, %v2721
    %v2729 = vsel %vm2210, %v2721, %v2728
    %v2730 = vsel %vm2212, %v2721, %v2729
    %v2731 = vsel %vm2214, %v2721, %v2730
    %v2732 = vsel %vm2216, %v2721, %v2731
    %v2733 = vsel %vm2218, %v2721, %v2732
    %v2736 = vsel %vm544, %v2727, %v2228
    %v2737 = vsel %vm544, %v2733, %v2229
    %vm2738 = vcmp.eq.s32.totalorder %v1642, 1
    %v2739 = vsel %vm2738, %v2637, %v2231
    %v2742 = vrot.slane %v2616, 7
    %v2743 = vsel %vm408, %v2742, %v2615
    %v2744 = vsel %vm96, %v2743, 0
    %2746 = vmatprep.subr.mxu0 0.0
    %2747 = vmatpush1.msra.mxu0 %v73
    %2748 = vmatprep.subr.mxu0 0.0
    %2749 = vmatpush1.msra.mxu0 %v74
    %2750 = vmatprep.subr.mxu0 0.0
    %2751 = vmatpush1.msra.mxu0 %v75
    %2752 = vmatprep.subr.mxu0 0.0
    %2753 = vmatpush1.msra.mxu0 %v76
    %2754 = vmatprep.subr.mxu0 0.0
    %2755 = vmatpush1.msra.mxu0 0.0
    %2756 = vmatprep.subr.mxu0 0.0
    %2757 = vmatpush1.msra.mxu0 0.0
    %2758 = vmatprep.subr.mxu0 0.0
    %2759 = vmatpush1.msra.mxu0 0.0
    %2760 = vmatprep.subr.mxu0 0.0
    %2761 = vmatpush1.msra.mxu0 0.0
    %2762 = vmatprep.subr.mxu0 0.0
    %2763 = vmatpush1.msra.mxu0 0.0
    %2764 = vmatprep.subr.mxu0 0.0
    %2765 = vmatpush1.msra.mxu0 0.0
    %2766 = vmatprep.subr.mxu0 0.0
    %2767 = vmatpush1.msra.mxu0 0.0
    %2768 = vmatprep.subr.mxu0 0.0
    %2769 = vmatpush1.msra.mxu0 0.0
    %2770 = vmatprep.subr.mxu0 0.0
    %2771 = vmatpush1.msra.mxu0 0.0
    %2772 = vmatprep.subr.mxu0 0.0
    %2773 = vmatpush1.msra.mxu0 0.0
    %2774 = vmatprep.subr.mxu0 0.0
    %2775 = vmatpush1.msra.mxu0 0.0
    %2776 = vmatprep.subr.mxu0 0.0
    %2777 = vmatpush1.msra.mxu0 0.0
    %2778 = vmatprep.subr.mxu0 0.0
    %2779 = vmatpush1.msra.mxu0 0.0
    %2780 = vmatprep.subr.mxu0 0.0
    %2781 = vmatpush1.msra.mxu0 0.0
    %2782 = vmatprep.subr.mxu0 0.0
    %2783 = vmatpush1.msra.mxu0 0.0
    %2784 = vmatprep.subr.mxu0 0.0
    %2785 = vmatpush1.msra.mxu0 0.0
    %2786 = vmatprep.subr.mxu0 0.0
    %2787 = vmatpush1.msra.mxu0 0.0
    %2788 = vmatprep.subr.mxu0 0.0
    %2789 = vmatpush1.msra.mxu0 0.0
    %2790 = vmatprep.subr.mxu0 0.0
    %2791 = vmatpush1.msra.mxu0 0.0
    %2792 = vmatprep.subr.mxu0 0.0
    %2793 = vmatpush1.msra.mxu0 0.0
    %2794 = vmatprep.subr.mxu0 0.0
    %2795 = vmatpush1.msra.mxu0 0.0
    %2796 = vmatprep.subr.mxu0 0.0
    %2797 = vmatpush1.msra.mxu0 0.0
    %2798 = vmatprep.subr.mxu0 0.0
    %2799 = vmatpush1.msra.mxu0 0.0
    %2800 = vmatprep.subr.mxu0 0.0
    %2801 = vmatpush1.msra.mxu0 0.0
    %2802 = vmatprep.subr.mxu0 0.0
    %2803 = vmatpush1.msra.mxu0 0.0
    %2804 = vmatprep.subr.mxu0 0.0
    %2805 = vmatpush1.msra.mxu0 0.0
    %2806 = vmatprep.subr.mxu0 0.0
    %2807 = vmatpush1.msra.mxu0 0.0
    %2808 = vmatprep.subr.mxu0 0.0
    %2809 = vmatpush1.msra.mxu0 0.0
    %2810 = vmatprep.mubr.f32.mxu0 0.0
    %2811 = vmatmul.mubr.f32.gmra.mrb[0].mxu0 %v2744
    %v2812 = vpop.f32.mrb[0].mxu0
    %v2813 = vadd.f32 0.0, %v2812
    %v2814 = vpop.f32.mrb[0].mxu0
    %2815 = vdwg.mxu0
    %v2817 = vrot.slane %v2813, 1
    %v2820 = vadd.f32 %v2664, %v2813
    %v2821 = vadd.f32 %v2670, %v2817
    %v2822 = vadd.f32 %v2820, %v1805
    %v2823 = vadd.f32 %v2821, %v1805
    %v2824 = vsub.f32 0.0, %v2822
    %v2825 = vsub.f32 0.0, %v2823
    %v2826 = vmul.f32 %v2824, 1.442695
    %v2827 = vpow.pop %v2826
    %v2828 = vmul.f32 %v2825, 1.442695
    %v2829 = vpow.pop %v2828
    %v2830 = vadd.f32 %v2827, 1.0
    %v2831 = vadd.f32 %v2829, 1.0
    %v2832 = vrcp.pop %v2830
    %v2833 = vmul.f32 1.0, %v2832
    %v2834 = vrcp.pop %v2831
    %v2835 = vmul.f32 1.0, %v2834
    %v2836 = vtanh.pop %v2822
    %v2837 = vtanh.pop %v2823
    %v2838 = vmul.f32 %v2833, %v2354
    %v2839 = vmul.f32 %v2835, %v2355
    %2842 = vrot.lane.b32.xlu0 %v2836, 64
    %v2843 = vpop.permute.xlu0 %2842
    %2844 = vrot.lane.b32.xlu0 %v2837, 64
    %v2845 = vpop.permute.xlu0 %2844
    %v2848 = vmul.f32 %v2833, %v2843
    %v2849 = vmul.f32 %v2835, %v2845
    %2852 = vrot.lane.b32.xlu0 %v2848, 32
    %v2853 = vpop.permute.xlu0 %2852
    %2854 = vrot.lane.b32.xlu0 %v2849, 32
    %v2855 = vpop.permute.xlu0 %2854
    %v2858 = vadd.f32 %v2838, %v2853
    %v2859 = vadd.f32 %v2839, %v2855
    %v2860 = vtanh.pop %v2858
    %v2861 = vtanh.pop %v2859
    %2864 = vrot.lane.b32.xlu0 %v2860, 64
    %v2865 = vpop.permute.xlu0 %2864
    %2866 = vrot.lane.b32.xlu0 %v2861, 64
    %v2867 = vpop.permute.xlu0 %2866
    %v2870 = vmul.f32 %v2833, %v2865
    %v2871 = vmul.f32 %v2835, %v2867
    %v2874 = vrot.slane %v2871, 7
    %v2875 = vsel %vm408, %v2874, %v2870
    %2876 = vrot.lane.b32.xlu0 %v2875, 32
    %v2877 = vpop.permute.xlu0 %2876
    %v2878 = vsel %vm96, %v2877, 0
    %2880 = vmatprep.subr.mxu0 0.0
    %2881 = vmatpush1.msra.mxu0 %v78
    %2882 = vmatprep.subr.mxu0 0.0
    %2883 = vmatpush1.msra.mxu0 %v79
    %2884 = vmatprep.subr.mxu0 0.0
    %2885 = vmatpush1.msra.mxu0 %v80
    %2886 = vmatprep.subr.mxu0 0.0
    %2887 = vmatpush1.msra.mxu0 %v81
    %2888 = vmatprep.subr.mxu0 0.0
    %2889 = vmatpush1.msra.mxu0 0.0
    %2890 = vmatprep.subr.mxu0 0.0
    %2891 = vmatpush1.msra.mxu0 0.0
    %2892 = vmatprep.subr.mxu0 0.0
    %2893 = vmatpush1.msra.mxu0 0.0
    %2894 = vmatprep.subr.mxu0 0.0
    %2895 = vmatpush1.msra.mxu0 0.0
    %2896 = vmatprep.subr.mxu0 0.0
    %2897 = vmatpush1.msra.mxu0 0.0
    %2898 = vmatprep.subr.mxu0 0.0
    %2899 = vmatpush1.msra.mxu0 0.0
    %2900 = vmatprep.subr.mxu0 0.0
    %2901 = vmatpush1.msra.mxu0 0.0
    %2902 = vmatprep.subr.mxu0 0.0
    %2903 = vmatpush1.msra.mxu0 0.0
    %2904 = vmatprep.subr.mxu0 0.0
    %2905 = vmatpush1.msra.mxu0 0.0
    %2906 = vmatprep.subr.mxu0 0.0
    %2907 = vmatpush1.msra.mxu0 0.0
    %2908 = vmatprep.subr.mxu0 0.0
    %2909 = vmatpush1.msra.mxu0 0.0
    %2910 = vmatprep.subr.mxu0 0.0
    %2911 = vmatpush1.msra.mxu0 0.0
    %2912 = vmatprep.subr.mxu0 0.0
    %2913 = vmatpush1.msra.mxu0 0.0
    %2914 = vmatprep.subr.mxu0 0.0
    %2915 = vmatpush1.msra.mxu0 0.0
    %2916 = vmatprep.subr.mxu0 0.0
    %2917 = vmatpush1.msra.mxu0 0.0
    %2918 = vmatprep.subr.mxu0 0.0
    %2919 = vmatpush1.msra.mxu0 0.0
    %2920 = vmatprep.subr.mxu0 0.0
    %2921 = vmatpush1.msra.mxu0 0.0
    %2922 = vmatprep.subr.mxu0 0.0
    %2923 = vmatpush1.msra.mxu0 0.0
    %2924 = vmatprep.subr.mxu0 0.0
    %2925 = vmatpush1.msra.mxu0 0.0
    %2926 = vmatprep.subr.mxu0 0.0
    %2927 = vmatpush1.msra.mxu0 0.0
    %2928 = vmatprep.subr.mxu0 0.0
    %2929 = vmatpush1.msra.mxu0 0.0
    %2930 = vmatprep.subr.mxu0 0.0
    %2931 = vmatpush1.msra.mxu0 0.0
    %2932 = vmatprep.subr.mxu0 0.0
    %2933 = vmatpush1.msra.mxu0 0.0
    %2934 = vmatprep.subr.mxu0 0.0
    %2935 = vmatpush1.msra.mxu0 0.0
    %2936 = vmatprep.subr.mxu0 0.0
    %2937 = vmatpush1.msra.mxu0 0.0
    %2938 = vmatprep.subr.mxu0 0.0
    %2939 = vmatpush1.msra.mxu0 0.0
    %2940 = vmatprep.subr.mxu0 0.0
    %2941 = vmatpush1.msra.mxu0 0.0
    %2942 = vmatprep.subr.mxu0 0.0
    %2943 = vmatpush1.msra.mxu0 0.0
    %2944 = vmatprep.mubr.f32.mxu0 0.0
    %2945 = vmatmul.mubr.f32.gmra.mrb[0].mxu0 %v2878
    %v2946 = vpop.f32.mrb[0].mxu0
    %v2947 = vadd.f32 0.0, %v2946
    %v2948 = vpop.f32.mrb[0].mxu0
    %2949 = vdwg.mxu0
    %v2950 = vadd.f32 %v2947, %v1917
    %v2953 = vunpack.c.l.s4 1966171168
    %v2954 = vunpack.c.0.s8 %v2953
    %v2955 = vlaneseq
    %v2956 = vshrl.u32 %v2955, 7
    %v2957 = vsub.s32 %v2954, %v2956
    %v2958 = vrot.slane %v2950, %v2957
    %v2959 = vcombine.high %v2958, %v2958
    %v2961 = vunpack.c.l.s4 1966171168
    %v2962 = vunpack.c.0.s8 %v2961
    %v2963 = vlaneseq
    %v2964 = vshrl.u32 %v2963, 7
    %v2965 = vsub.s32 %v2962, %v2964
    %v2966 = vrot.slane %v2958, %v2965
    %v2968 = vunpack.c.l.s4 1966171168
    %v2969 = vunpack.c.0.s8 %v2968
    %v2970 = vlaneseq
    %v2971 = vshrl.u32 %v2970, 7
    %v2972 = vsub.s32 %v2969, %v2971
    %v2973 = vrot.slane %v2959, %v2972
    %v2974 = vlaneseq
    %v2975 = vshrl.u32 %v2974, 7
    %v2976 = vsub.s32 0, %v2975
    %v2977 = vrot.slane %v2966, %v2976
    %v2978 = vlaneseq
    %v2979 = vshrl.u32 %v2978, 7
    %v2980 = vsub.s32 0, %v2979
    %v2981 = vrot.slane %v2973, %v2980
    %v2984 = vadd.f32 %v2977, %v1548
    %v2985 = vadd.f32 %v2981, %v1553
    %v2986 = vtanh.pop %v2984
    %v2987 = vtanh.pop %v2985
    %v2988 = vmul.f32 %v1961, %v2986
    %v2989 = vmul.f32 %v1961, %v2987
    %v2990 = vsel %vm96, %v2988, 0.0
    %2991 = vadd.xlane.f32.xlu0 %v2990
    %v2992 = vpop.xlane.xlu0 %2991
    %v2993 = vsel %vm96, %v2989, 0.0
    %2994 = vadd.xlane.f32.xlu0 %v2993
    %v2995 = vpop.xlane.xlu0 %2994
    %v2998 = vlaneseq
    %v2999 = vshrl.u32 %v2998, 7
    %v3000 = vsub.s32 %v1642, %v2999
    %v3001 = vrot.slane %v2992, %v3000
    %v3002 = vlaneseq
    %v3003 = vshrl.u32 %v3002, 7
    %v3004 = vsub.s32 %v1642, %v3003
    %v3005 = vrot.slane %v2995, %v3004
    %v3006 = vsel %vm408, %v3005, %v3001
    %v3008 = vsel %vm1983, %v3006, -inf
    %3009 = vmax.xlane.f32.xlu0 %v3008
    %v3010 = vpop.xlane.xlu0 %3009
    %v3012 = vlaneseq
    %v3013 = vshrl.u32 %v3012, 7
    %v3014 = vsub.s32 0, %v3013
    %v3015 = vrot.slane %v3010, %v3014
    %v3016 = vlaneseq
    %v3017 = vshrl.u32 %v3016, 7
    %v3018 = vsub.s32 1, %v3017
    %v3019 = vrot.slane %v3010, %v3018
    %v3022 = vsub.f32 %v2992, %v3015
    %v3023 = vsub.f32 %v2995, %v3019
    %v3024 = vmul.f32 %v3022, 1.442695
    %v3025 = vpow.pop %v3024
    %v3026 = vmul.f32 %v3023, 1.442695
    %v3027 = vpow.pop %v3026
    %3030 = vset.pattern.permute.xlu0 0
    %3031 = vperm.xlu0 %3030, %v3025
    %v3032 = vpop.permute.xlu0 %3031
    %3033 = vset.pattern.permute.xlu0 0
    %3034 = vperm.xlu0 %3033, %v3027
    %v3035 = vpop.permute.xlu0 %3034
    %v3036 = vlaneseq
    %v3037 = vshrl.u32 %v3036, 7
    %v3038 = vsub.s32 %v1642, %v3037
    %v3039 = vrot.slane %v3032, %v3038
    %v3040 = vlaneseq
    %v3041 = vshrl.u32 %v3040, 7
    %v3042 = vsub.s32 %v1642, %v3041
    %v3043 = vrot.slane %v3035, %v3042
    %v3044 = vsel %vm408, %v3043, %v3039
    %v3046 = vsel %vm1983, %v3044, 0.0
    %3047 = vadd.xlane.f32.xlu0 %v3046
    %v3048 = vpop.xlane.xlu0 %3047
    %v3050 = vlaneseq
    %v3051 = vshrl.u32 %v3050, 7
    %v3052 = vsub.s32 0, %v3051
    %v3053 = vrot.slane %v3048, %v3052
    %v3054 = vlaneseq
    %v3055 = vshrl.u32 %v3054, 7
    %v3056 = vsub.s32 1, %v3055
    %v3057 = vrot.slane %v3048, %v3056
    %v3060 = vrcp.pop %v3053
    %v3061 = vmul.f32 %v3025, %v3060
    %v3062 = vrcp.pop %v3057
    %v3063 = vmul.f32 %v3027, %v3062
    %vm3064 = vcmp.eq.f32.partialorder %v2642, 0.0
    %v3065 = vsel %vm3064, -inf, %v3006
    %v3066 = vsel %vm1983, %v3065, -inf
    %3067 = vmax.xlane.f32.xlu0 %v3066
    %v3068 = vpop.xlane.xlu0 %3067
    %v3069 = vsub.f32 %v3065, %v3068
    %v3070 = vmul.f32 %v3069, 1.442695
    %v3071 = vpow.pop %v3070
    %v3072 = vsel %vm1983, %v3071, 0.0
    %3073 = vadd.xlane.f32.xlu0 %v3072
    %v3074 = vpop.xlane.xlu0 %3073
    %v3075 = vrcp.pop %v3074
    %v3076 = vmul.f32 %v3071, %v3075
    %v3077 = vlaneseq
    %v3078 = vshrl.u32 %v3077, 7
    %v3079 = vsub.s32 0, %v3078
    %v3080 = vrot.slane %v3076, %v3079
    %3082 = vbcast.lane.b32.xlu0 %v3080, 256
    %v3083 = vpop.permute.xlu0 %3082
    %v3084 = vlaneseq
    %v3085 = vshrl.u32 %v3084, 7
    %v3086 = vsub.s32 1, %v3085
    %v3087 = vrot.slane %v3076, %v3086
    %3089 = vbcast.lane.b32.xlu0 %v3087, 256
    %v3090 = vpop.permute.xlu0 %3089
    %v3091 = vmul.f32 %v3083, %v1633
    %v3092 = vmul.f32 %v3090, %v1638
    %v3093 = vsel %vm96, %v3091, 0.0
    %v3094 = vrot.slane %v3093, 4
    %v3095 = vadd.f32 %v3093, %v3094
    %v3096 = vrot.slane %v3095, 2
    %v3097 = vadd.f32 %v3095, %v3096
    %v3098 = vrot.slane %v3097, 1
    %v3099 = vadd.f32 %v3097, %v3098
    %v3100 = vsel %vm96, %v3092, 0.0
    %v3101 = vrot.slane %v3100, 4
    %v3102 = vadd.f32 %v3100, %v3101
    %v3103 = vrot.slane %v3102, 2
    %v3104 = vadd.f32 %v3102, %v3103
    %v3105 = vrot.slane %v3104, 1
    %v3106 = vadd.f32 %v3104, %v3105
    %v3108 = vrot.slane %v2947, 1
    %3109 = vrot.lane.b32.xlu0 %v2947, 96
    %v3110 = vpop.permute.xlu0 %3109
    %3111 = vrot.lane.b32.xlu0 %v3108, 96
    %v3112 = vpop.permute.xlu0 %3111
    %v3115 = vadd.f32 %v3099, %v3110
    %v3116 = vadd.f32 %v3106, %v3112
    %v3117 = vadd.f32 %v3115, %v2097
    %v3118 = vadd.f32 %v3116, %v2097
    %v3119 = vtanh.pop %v3117
    %v3120 = vtanh.pop %v3118
    %v3121 = vmul.f32 %v3076, %v2642
    %v3122 = vsel %vm1983, %v3121, -inf
    %3123 = vmax.xlane.f32.xlu0 %v3122
    %v3124 = vpop.xlane.xlu0 %3123
    %vm3125 = vcmp.eq.f32.partialorder %v3121, %v3124
    %v3126 = vsel %vm3125, %v1642, 8
    %v3127 = vsel %vm1983, %v3126, 2147483647
    %v3128 = vand.u32 %v3127, 65535
    %v3129 = vshra.s32 %v3127, 16
    %v3130 = vcvt.s32.f32 %v3128
    %v3131 = vcvt.s32.f32 %v3129
    %3132 = vmin.xlane.f32.xlu0 %v3131
    %v3133 = vpop.xlane.xlu0 %3132
    %vm3134 = vcmp.eq.f32.partialorder %v3131, %v3133
    %v3135 = vsel %vm3134, %v3130, inf
    %3136 = vmin.xlane.f32.xlu0 %v3135
    %v3137 = vpop.xlane.xlu0 %3136
    %v3138 = vcvt.f32.s32 %v3137
    %v3139 = vcvt.f32.s32 %v3133
    %v3140 = vshll.u32 %v3139, 16
    %v3141 = vadd.s32 %v3140, %v3138
    %vm3142 = vcmp.eq.s32.totalorder %v1642, %v3141
    %v3143 = vsel %vm3142, 1, 0
    %v3144 = vcvt.s32.f32 %v3143
    %v3145 = vsub.f32 1.0, %v3144
    %v3146 = vmul.f32 %v2642, %v3145
    %v3147 = vlaneseq
    %v3148 = vshrl.u32 %v3147, 7
    %v3149 = vsub.s32 0, %v3148
    %v3150 = vrot.slane %v3144, %v3149
    %3152 = vbcast.lane.b32.xlu0 %v3150, 256
    %v3153 = vpop.permute.xlu0 %3152
    %v3154 = vlaneseq
    %v3155 = vshrl.u32 %v3154, 7
    %v3156 = vsub.s32 1, %v3155
    %v3157 = vrot.slane %v3144, %v3156
    %3159 = vbcast.lane.b32.xlu0 %v3157, 256
    %v3160 = vpop.permute.xlu0 %3159
    %v3161 = vmul.f32 %v3153, %v249
    %v3162 = vmul.f32 %v3160, %v254
    %v3163 = vrot.slane %v3161, 4
    %v3164 = vadd.f32 %v3161, %v3163
    %v3165 = vrot.slane %v3164, 2
    %v3166 = vadd.f32 %v3164, %v3165
    %v3167 = vrot.slane %v3166, 1
    %v3168 = vadd.f32 %v3166, %v3167
    %v3169 = vrot.slane %v3162, 4
    %v3170 = vadd.f32 %v3162, %v3169
    %v3171 = vrot.slane %v3170, 2
    %v3172 = vadd.f32 %v3170, %v3171
    %v3173 = vrot.slane %v3172, 1
    %v3174 = vadd.f32 %v3172, %v3173
    %v3177 = vunpack.c.l.s4 1966171168
    %v3178 = vunpack.c.0.s8 %v3177
    %v3179 = vlaneseq
    %v3180 = vshrl.u32 %v3179, 7
    %v3181 = vsub.s32 %v3178, %v3180
    %v3182 = vrot.slane %v3076, %v3181
    %v3183 = vcombine.high %v3182, %v3182
    %v3185 = vunpack.c.l.s4 1966171168
    %v3186 = vunpack.c.0.s8 %v3185
    %v3187 = vlaneseq
    %v3188 = vshrl.u32 %v3187, 7
    %v3189 = vsub.s32 %v3186, %v3188
    %v3190 = vrot.slane %v3182, %v3189
    %v3192 = vunpack.c.l.s4 1966171168
    %v3193 = vunpack.c.0.s8 %v3192
    %v3194 = vlaneseq
    %v3195 = vshrl.u32 %v3194, 7
    %v3196 = vsub.s32 %v3193, %v3195
    %v3197 = vrot.slane %v3183, %v3196
    %v3198 = vlaneseq
    %v3199 = vshrl.u32 %v3198, 7
    %v3200 = vsub.s32 0, %v3199
    %v3201 = vrot.slane %v3190, %v3200
    %v3202 = vlaneseq
    %v3203 = vshrl.u32 %v3202, 7
    %v3204 = vsub.s32 0, %v3203
    %v3205 = vrot.slane %v3197, %v3204
    %v3208 = vsel %vm694, %v3201, %v2704
    %v3209 = vsel %vm694, %v3205, %v2705
    %3212 = vset.pattern.permute.xlu0 0
    %3213 = vperm.xlu0 %3212, %v3061
    %v3214 = vpop.permute.xlu0 %3213
    %3215 = vset.pattern.permute.xlu0 0
    %3216 = vperm.xlu0 %3215, %v3063
    %v3217 = vpop.permute.xlu0 %3216
    %v3218 = vlaneseq
    %v3219 = vshrl.u32 %v3218, 7
    %v3220 = vsub.s32 %v1642, %v3219
    %v3221 = vrot.slane %v3214, %v3220
    %v3222 = vlaneseq
    %v3223 = vshrl.u32 %v3222, 7
    %v3224 = vsub.s32 %v1642, %v3223
    %v3225 = vrot.slane %v3217, %v3224
    %v3226 = vsel %vm2208, %v3221, %v3221
    %v3227 = vsel %vm2210, %v3221, %v3226
    %v3228 = vsel %vm2212, %v3221, %v3227
    %v3229 = vsel %vm2214, %v3221, %v3228
    %v3230 = vsel %vm2216, %v3221, %v3229
    %v3231 = vsel %vm2218, %v3221, %v3230
    %v3232 = vsel %vm2208, %v3225, %v3225
    %v3233 = vsel %vm2210, %v3225, %v3232
    %v3234 = vsel %vm2212, %v3225, %v3233
    %v3235 = vsel %vm2214, %v3225, %v3234
    %v3236 = vsel %vm2216, %v3225, %v3235
    %v3237 = vsel %vm2218, %v3225, %v3236
    %v3240 = vsel %vm694, %v3231, %v2736
    %v3241 = vsel %vm694, %v3237, %v2737
    %vm3242 = vcmp.eq.s32.totalorder %v1642, 2
    %v3243 = vsel %vm3242, %v3141, %v2739
    %v3246 = vrot.slane %v3120, 7
    %v3247 = vsel %vm408, %v3246, %v3119
    %v3248 = vsel %vm96, %v3247, 0
    %3250 = vmatprep.subr.mxu0 0.0
    %3251 = vmatpush1.msra.mxu0 %v73
    %3252 = vmatprep.subr.mxu0 0.0
    %3253 = vmatpush1.msra.mxu0 %v74
    %3254 = vmatprep.subr.mxu0 0.0
    %3255 = vmatpush1.msra.mxu0 %v75
    %3256 = vmatprep.subr.mxu0 0.0
    %3257 = vmatpush1.msra.mxu0 %v76
    %3258 = vmatprep.subr.mxu0 0.0
    %3259 = vmatpush1.msra.mxu0 0.0
    %3260 = vmatprep.subr.mxu0 0.0
    %3261 = vmatpush1.msra.mxu0 0.0
    %3262 = vmatprep.subr.mxu0 0.0
    %3263 = vmatpush1.msra.mxu0 0.0
    %3264 = vmatprep.subr.mxu0 0.0
    %3265 = vmatpush1.msra.mxu0 0.0
    %3266 = vmatprep.subr.mxu0 0.0
    %3267 = vmatpush1.msra.mxu0 0.0
    %3268 = vmatprep.subr.mxu0 0.0
    %3269 = vmatpush1.msra.mxu0 0.0
    %3270 = vmatprep.subr.mxu0 0.0
    %3271 = vmatpush1.msra.mxu0 0.0
    %3272 = vmatprep.subr.mxu0 0.0
    %3273 = vmatpush1.msra.mxu0 0.0
    %3274 = vmatprep.subr.mxu0 0.0
    %3275 = vmatpush1.msra.mxu0 0.0
    %3276 = vmatprep.subr.mxu0 0.0
    %3277 = vmatpush1.msra.mxu0 0.0
    %3278 = vmatprep.subr.mxu0 0.0
    %3279 = vmatpush1.msra.mxu0 0.0
    %3280 = vmatprep.subr.mxu0 0.0
    %3281 = vmatpush1.msra.mxu0 0.0
    %3282 = vmatprep.subr.mxu0 0.0
    %3283 = vmatpush1.msra.mxu0 0.0
    %3284 = vmatprep.subr.mxu0 0.0
    %3285 = vmatpush1.msra.mxu0 0.0
    %3286 = vmatprep.subr.mxu0 0.0
    %3287 = vmatpush1.msra.mxu0 0.0
    %3288 = vmatprep.subr.mxu0 0.0
    %3289 = vmatpush1.msra.mxu0 0.0
    %3290 = vmatprep.subr.mxu0 0.0
    %3291 = vmatpush1.msra.mxu0 0.0
    %3292 = vmatprep.subr.mxu0 0.0
    %3293 = vmatpush1.msra.mxu0 0.0
    %3294 = vmatprep.subr.mxu0 0.0
    %3295 = vmatpush1.msra.mxu0 0.0
    %3296 = vmatprep.subr.mxu0 0.0
    %3297 = vmatpush1.msra.mxu0 0.0
    %3298 = vmatprep.subr.mxu0 0.0
    %3299 = vmatpush1.msra.mxu0 0.0
    %3300 = vmatprep.subr.mxu0 0.0
    %3301 = vmatpush1.msra.mxu0 0.0
    %3302 = vmatprep.subr.mxu0 0.0
    %3303 = vmatpush1.msra.mxu0 0.0
    %3304 = vmatprep.subr.mxu0 0.0
    %3305 = vmatpush1.msra.mxu0 0.0
    %3306 = vmatprep.subr.mxu0 0.0
    %3307 = vmatpush1.msra.mxu0 0.0
    %3308 = vmatprep.subr.mxu0 0.0
    %3309 = vmatpush1.msra.mxu0 0.0
    %3310 = vmatprep.subr.mxu0 0.0
    %3311 = vmatpush1.msra.mxu0 0.0
    %3312 = vmatprep.subr.mxu0 0.0
    %3313 = vmatpush1.msra.mxu0 0.0
    %3314 = vmatprep.mubr.f32.mxu0 0.0
    %3315 = vmatmul.mubr.f32.gmra.mrb[0].mxu0 %v3248
    %v3316 = vpop.f32.mrb[0].mxu0
    %v3317 = vadd.f32 0.0, %v3316
    %v3318 = vpop.f32.mrb[0].mxu0
    %3319 = vdwg.mxu0
    %v3321 = vrot.slane %v3317, 1
    %v3324 = vadd.f32 %v3168, %v3317
    %v3325 = vadd.f32 %v3174, %v3321
    %v3326 = vadd.f32 %v3324, %v1805
    %v3327 = vadd.f32 %v3325, %v1805
    %v3328 = vsub.f32 0.0, %v3326
    %v3329 = vsub.f32 0.0, %v3327
    %v3330 = vmul.f32 %v3328, 1.442695
    %v3331 = vpow.pop %v3330
    %v3332 = vmul.f32 %v3329, 1.442695
    %v3333 = vpow.pop %v3332
    %v3334 = vadd.f32 %v3331, 1.0
    %v3335 = vadd.f32 %v3333, 1.0
    %v3336 = vrcp.pop %v3334
    %v3337 = vmul.f32 1.0, %v3336
    %v3338 = vrcp.pop %v3335
    %v3339 = vmul.f32 1.0, %v3338
    %v3340 = vtanh.pop %v3326
    %v3341 = vtanh.pop %v3327
    %v3342 = vmul.f32 %v3337, %v2858
    %v3343 = vmul.f32 %v3339, %v2859
    %3346 = vrot.lane.b32.xlu0 %v3340, 64
    %v3347 = vpop.permute.xlu0 %3346
    %3348 = vrot.lane.b32.xlu0 %v3341, 64
    %v3349 = vpop.permute.xlu0 %3348
    %v3352 = vmul.f32 %v3337, %v3347
    %v3353 = vmul.f32 %v3339, %v3349
    %3356 = vrot.lane.b32.xlu0 %v3352, 32
    %v3357 = vpop.permute.xlu0 %3356
    %3358 = vrot.lane.b32.xlu0 %v3353, 32
    %v3359 = vpop.permute.xlu0 %3358
    %v3362 = vadd.f32 %v3342, %v3357
    %v3363 = vadd.f32 %v3343, %v3359
    %v3364 = vtanh.pop %v3362
    %v3365 = vtanh.pop %v3363
    %3368 = vrot.lane.b32.xlu0 %v3364, 64
    %v3369 = vpop.permute.xlu0 %3368
    %3370 = vrot.lane.b32.xlu0 %v3365, 64
    %v3371 = vpop.permute.xlu0 %3370
    %v3374 = vmul.f32 %v3337, %v3369
    %v3375 = vmul.f32 %v3339, %v3371
    %v3378 = vrot.slane %v3375, 7
    %v3379 = vsel %vm408, %v3378, %v3374
    %3380 = vrot.lane.b32.xlu0 %v3379, 32
    %v3381 = vpop.permute.xlu0 %3380
    %v3382 = vsel %vm96, %v3381, 0
    %3384 = vmatprep.subr.mxu0 0.0
    %3385 = vmatpush1.msra.mxu0 %v78
    %3386 = vmatprep.subr.mxu0 0.0
    %3387 = vmatpush1.msra.mxu0 %v79
    %3388 = vmatprep.subr.mxu0 0.0
    %3389 = vmatpush1.msra.mxu0 %v80
    %3390 = vmatprep.subr.mxu0 0.0
    %3391 = vmatpush1.msra.mxu0 %v81
    %3392 = vmatprep.subr.mxu0 0.0
    %3393 = vmatpush1.msra.mxu0 0.0
    %3394 = vmatprep.subr.mxu0 0.0
    %3395 = vmatpush1.msra.mxu0 0.0
    %3396 = vmatprep.subr.mxu0 0.0
    %3397 = vmatpush1.msra.mxu0 0.0
    %3398 = vmatprep.subr.mxu0 0.0
    %3399 = vmatpush1.msra.mxu0 0.0
    %3400 = vmatprep.subr.mxu0 0.0
    %3401 = vmatpush1.msra.mxu0 0.0
    %3402 = vmatprep.subr.mxu0 0.0
    %3403 = vmatpush1.msra.mxu0 0.0
    %3404 = vmatprep.subr.mxu0 0.0
    %3405 = vmatpush1.msra.mxu0 0.0
    %3406 = vmatprep.subr.mxu0 0.0
    %3407 = vmatpush1.msra.mxu0 0.0
    %3408 = vmatprep.subr.mxu0 0.0
    %3409 = vmatpush1.msra.mxu0 0.0
    %3410 = vmatprep.subr.mxu0 0.0
    %3411 = vmatpush1.msra.mxu0 0.0
    %3412 = vmatprep.subr.mxu0 0.0
    %3413 = vmatpush1.msra.mxu0 0.0
    %3414 = vmatprep.subr.mxu0 0.0
    %3415 = vmatpush1.msra.mxu0 0.0
    %3416 = vmatprep.subr.mxu0 0.0
    %3417 = vmatpush1.msra.mxu0 0.0
    %3418 = vmatprep.subr.mxu0 0.0
    %3419 = vmatpush1.msra.mxu0 0.0
    %3420 = vmatprep.subr.mxu0 0.0
    %3421 = vmatpush1.msra.mxu0 0.0
    %3422 = vmatprep.subr.mxu0 0.0
    %3423 = vmatpush1.msra.mxu0 0.0
    %3424 = vmatprep.subr.mxu0 0.0
    %3425 = vmatpush1.msra.mxu0 0.0
    %3426 = vmatprep.subr.mxu0 0.0
    %3427 = vmatpush1.msra.mxu0 0.0
    %3428 = vmatprep.subr.mxu0 0.0
    %3429 = vmatpush1.msra.mxu0 0.0
    %3430 = vmatprep.subr.mxu0 0.0
    %3431 = vmatpush1.msra.mxu0 0.0
    %3432 = vmatprep.subr.mxu0 0.0
    %3433 = vmatpush1.msra.mxu0 0.0
    %3434 = vmatprep.subr.mxu0 0.0
    %3435 = vmatpush1.msra.mxu0 0.0
    %3436 = vmatprep.subr.mxu0 0.0
    %3437 = vmatpush1.msra.mxu0 0.0
    %3438 = vmatprep.subr.mxu0 0.0
    %3439 = vmatpush1.msra.mxu0 0.0
    %3440 = vmatprep.subr.mxu0 0.0
    %3441 = vmatpush1.msra.mxu0 0.0
    %3442 = vmatprep.subr.mxu0 0.0
    %3443 = vmatpush1.msra.mxu0 0.0
    %3444 = vmatprep.subr.mxu0 0.0
    %3445 = vmatpush1.msra.mxu0 0.0
    %3446 = vmatprep.subr.mxu0 0.0
    %3447 = vmatpush1.msra.mxu0 0.0
    %3448 = vmatprep.mubr.f32.mxu0 0.0
    %3449 = vmatmul.mubr.f32.gmra.mrb[0].mxu0 %v3382
    %v3450 = vpop.f32.mrb[0].mxu0
    %v3451 = vadd.f32 0.0, %v3450
    %v3452 = vpop.f32.mrb[0].mxu0
    %3453 = vdwg.mxu0
    %v3454 = vadd.f32 %v3451, %v1917
    %v3457 = vunpack.c.l.s4 1966171168
    %v3458 = vunpack.c.0.s8 %v3457
    %v3459 = vlaneseq
    %v3460 = vshrl.u32 %v3459, 7
    %v3461 = vsub.s32 %v3458, %v3460
    %v3462 = vrot.slane %v3454, %v3461
    %v3463 = vcombine.high %v3462, %v3462
    %v3465 = vunpack.c.l.s4 1966171168
    %v3466 = vunpack.c.0.s8 %v3465
    %v3467 = vlaneseq
    %v3468 = vshrl.u32 %v3467, 7
    %v3469 = vsub.s32 %v3466, %v3468
    %v3470 = vrot.slane %v3462, %v3469
    %v3472 = vunpack.c.l.s4 1966171168
    %v3473 = vunpack.c.0.s8 %v3472
    %v3474 = vlaneseq
    %v3475 = vshrl.u32 %v3474, 7
    %v3476 = vsub.s32 %v3473, %v3475
    %v3477 = vrot.slane %v3463, %v3476
    %v3478 = vlaneseq
    %v3479 = vshrl.u32 %v3478, 7
    %v3480 = vsub.s32 0, %v3479
    %v3481 = vrot.slane %v3470, %v3480
    %v3482 = vlaneseq
    %v3483 = vshrl.u32 %v3482, 7
    %v3484 = vsub.s32 0, %v3483
    %v3485 = vrot.slane %v3477, %v3484
    %v3488 = vadd.f32 %v3481, %v1548
    %v3489 = vadd.f32 %v3485, %v1553
    %v3490 = vtanh.pop %v3488
    %v3491 = vtanh.pop %v3489
    %v3492 = vmul.f32 %v1961, %v3490
    %v3493 = vmul.f32 %v1961, %v3491
    %v3494 = vsel %vm96, %v3492, 0.0
    %3495 = vadd.xlane.f32.xlu0 %v3494
    %v3496 = vpop.xlane.xlu0 %3495
    %v3497 = vsel %vm96, %v3493, 0.0
    %3498 = vadd.xlane.f32.xlu0 %v3497
    %v3499 = vpop.xlane.xlu0 %3498
    %v3502 = vlaneseq
    %v3503 = vshrl.u32 %v3502, 7
    %v3504 = vsub.s32 %v1642, %v3503
    %v3505 = vrot.slane %v3496, %v3504
    %v3506 = vlaneseq
    %v3507 = vshrl.u32 %v3506, 7
    %v3508 = vsub.s32 %v1642, %v3507
    %v3509 = vrot.slane %v3499, %v3508
    %v3510 = vsel %vm408, %v3509, %v3505
    %v3512 = vsel %vm1983, %v3510, -inf
    %3513 = vmax.xlane.f32.xlu0 %v3512
    %v3514 = vpop.xlane.xlu0 %3513
    %v3516 = vlaneseq
    %v3517 = vshrl.u32 %v3516, 7
    %v3518 = vsub.s32 0, %v3517
    %v3519 = vrot.slane %v3514, %v3518
    %v3520 = vlaneseq
    %v3521 = vshrl.u32 %v3520, 7
    %v3522 = vsub.s32 1, %v3521
    %v3523 = vrot.slane %v3514, %v3522
    %v3526 = vsub.f32 %v3496, %v3519
    %v3527 = vsub.f32 %v3499, %v3523
    %v3528 = vmul.f32 %v3526, 1.442695
    %v3529 = vpow.pop %v3528
    %v3530 = vmul.f32 %v3527, 1.442695
    %v3531 = vpow.pop %v3530
    %3534 = vset.pattern.permute.xlu0 0
    %3535 = vperm.xlu0 %3534, %v3529
    %v3536 = vpop.permute.xlu0 %3535
    %3537 = vset.pattern.permute.xlu0 0
    %3538 = vperm.xlu0 %3537, %v3531
    %v3539 = vpop.permute.xlu0 %3538
    %v3540 = vlaneseq
    %v3541 = vshrl.u32 %v3540, 7
    %v3542 = vsub.s32 %v1642, %v3541
    %v3543 = vrot.slane %v3536, %v3542
    %v3544 = vlaneseq
    %v3545 = vshrl.u32 %v3544, 7
    %v3546 = vsub.s32 %v1642, %v3545
    %v3547 = vrot.slane %v3539, %v3546
    %v3548 = vsel %vm408, %v3547, %v3543
    %v3550 = vsel %vm1983, %v3548, 0.0
    %3551 = vadd.xlane.f32.xlu0 %v3550
    %v3552 = vpop.xlane.xlu0 %3551
    %v3554 = vlaneseq
    %v3555 = vshrl.u32 %v3554, 7
    %v3556 = vsub.s32 0, %v3555
    %v3557 = vrot.slane %v3552, %v3556
    %v3558 = vlaneseq
    %v3559 = vshrl.u32 %v3558, 7
    %v3560 = vsub.s32 1, %v3559
    %v3561 = vrot.slane %v3552, %v3560
    %v3564 = vrcp.pop %v3557
    %v3565 = vmul.f32 %v3529, %v3564
    %v3566 = vrcp.pop %v3561
    %v3567 = vmul.f32 %v3531, %v3566
    %vm3568 = vcmp.eq.f32.partialorder %v3146, 0.0
    %v3569 = vsel %vm3568, -inf, %v3510
    %v3570 = vsel %vm1983, %v3569, -inf
    %3571 = vmax.xlane.f32.xlu0 %v3570
    %v3572 = vpop.xlane.xlu0 %3571
    %v3573 = vsub.f32 %v3569, %v3572
    %v3574 = vmul.f32 %v3573, 1.442695
    %v3575 = vpow.pop %v3574
    %v3576 = vsel %vm1983, %v3575, 0.0
    %3577 = vadd.xlane.f32.xlu0 %v3576
    %v3578 = vpop.xlane.xlu0 %3577
    %v3579 = vrcp.pop %v3578
    %v3580 = vmul.f32 %v3575, %v3579
    %v3581 = vlaneseq
    %v3582 = vshrl.u32 %v3581, 7
    %v3583 = vsub.s32 0, %v3582
    %v3584 = vrot.slane %v3580, %v3583
    %3586 = vbcast.lane.b32.xlu0 %v3584, 256
    %v3587 = vpop.permute.xlu0 %3586
    %v3588 = vlaneseq
    %v3589 = vshrl.u32 %v3588, 7
    %v3590 = vsub.s32 1, %v3589
    %v3591 = vrot.slane %v3580, %v3590
    %3593 = vbcast.lane.b32.xlu0 %v3591, 256
    %v3594 = vpop.permute.xlu0 %3593
    %v3595 = vmul.f32 %v3587, %v1633
    %v3596 = vmul.f32 %v3594, %v1638
    %v3597 = vsel %vm96, %v3595, 0.0
    %v3598 = vrot.slane %v3597, 4
    %v3599 = vadd.f32 %v3597, %v3598
    %v3600 = vrot.slane %v3599, 2
    %v3601 = vadd.f32 %v3599, %v3600
    %v3602 = vrot.slane %v3601, 1
    %v3603 = vadd.f32 %v3601, %v3602
    %v3604 = vsel %vm96, %v3596, 0.0
    %v3605 = vrot.slane %v3604, 4
    %v3606 = vadd.f32 %v3604, %v3605
    %v3607 = vrot.slane %v3606, 2
    %v3608 = vadd.f32 %v3606, %v3607
    %v3609 = vrot.slane %v3608, 1
    %v3610 = vadd.f32 %v3608, %v3609
    %v3612 = vrot.slane %v3451, 1
    %3613 = vrot.lane.b32.xlu0 %v3451, 96
    %v3614 = vpop.permute.xlu0 %3613
    %3615 = vrot.lane.b32.xlu0 %v3612, 96
    %v3616 = vpop.permute.xlu0 %3615
    %v3619 = vadd.f32 %v3603, %v3614
    %v3620 = vadd.f32 %v3610, %v3616
    %v3621 = vadd.f32 %v3619, %v2097
    %v3622 = vadd.f32 %v3620, %v2097
    %v3623 = vtanh.pop %v3621
    %v3624 = vtanh.pop %v3622
    %v3625 = vmul.f32 %v3580, %v3146
    %v3626 = vsel %vm1983, %v3625, -inf
    %3627 = vmax.xlane.f32.xlu0 %v3626
    %v3628 = vpop.xlane.xlu0 %3627
    %vm3629 = vcmp.eq.f32.partialorder %v3625, %v3628
    %v3630 = vsel %vm3629, %v1642, 8
    %v3631 = vsel %vm1983, %v3630, 2147483647
    %v3632 = vand.u32 %v3631, 65535
    %v3633 = vshra.s32 %v3631, 16
    %v3634 = vcvt.s32.f32 %v3632
    %v3635 = vcvt.s32.f32 %v3633
    %3636 = vmin.xlane.f32.xlu0 %v3635
    %v3637 = vpop.xlane.xlu0 %3636
    %vm3638 = vcmp.eq.f32.partialorder %v3635, %v3637
    %v3639 = vsel %vm3638, %v3634, inf
    %3640 = vmin.xlane.f32.xlu0 %v3639
    %v3641 = vpop.xlane.xlu0 %3640
    %v3642 = vcvt.f32.s32 %v3641
    %v3643 = vcvt.f32.s32 %v3637
    %v3644 = vshll.u32 %v3643, 16
    %v3645 = vadd.s32 %v3644, %v3642
    %vm3646 = vcmp.eq.s32.totalorder %v1642, %v3645
    %v3647 = vsel %vm3646, 1, 0
    %v3648 = vcvt.s32.f32 %v3647
    %v3649 = vsub.f32 1.0, %v3648
    %v3650 = vmul.f32 %v3146, %v3649
    %v3651 = vlaneseq
    %v3652 = vshrl.u32 %v3651, 7
    %v3653 = vsub.s32 0, %v3652
    %v3654 = vrot.slane %v3648, %v3653
    %3656 = vbcast.lane.b32.xlu0 %v3654, 256
    %v3657 = vpop.permute.xlu0 %3656
    %v3658 = vlaneseq
    %v3659 = vshrl.u32 %v3658, 7
    %v3660 = vsub.s32 1, %v3659
    %v3661 = vrot.slane %v3648, %v3660
    %3663 = vbcast.lane.b32.xlu0 %v3661, 256
    %v3664 = vpop.permute.xlu0 %3663
    %v3665 = vmul.f32 %v3657, %v249
    %v3666 = vmul.f32 %v3664, %v254
    %v3667 = vrot.slane %v3665, 4
    %v3668 = vadd.f32 %v3665, %v3667
    %v3669 = vrot.slane %v3668, 2
    %v3670 = vadd.f32 %v3668, %v3669
    %v3671 = vrot.slane %v3670, 1
    %v3672 = vadd.f32 %v3670, %v3671
    %v3673 = vrot.slane %v3666, 4
    %v3674 = vadd.f32 %v3666, %v3673
    %v3675 = vrot.slane %v3674, 2
    %v3676 = vadd.f32 %v3674, %v3675
    %v3677 = vrot.slane %v3676, 1
    %v3678 = vadd.f32 %v3676, %v3677
    %v3681 = vunpack.c.l.s4 1966171168
    %v3682 = vunpack.c.0.s8 %v3681
    %v3683 = vlaneseq
    %v3684 = vshrl.u32 %v3683, 7
    %v3685 = vsub.s32 %v3682, %v3684
    %v3686 = vrot.slane %v3580, %v3685
    %v3687 = vcombine.high %v3686, %v3686
    %v3689 = vunpack.c.l.s4 1966171168
    %v3690 = vunpack.c.0.s8 %v3689
    %v3691 = vlaneseq
    %v3692 = vshrl.u32 %v3691, 7
    %v3693 = vsub.s32 %v3690, %v3692
    %v3694 = vrot.slane %v3686, %v3693
    %v3696 = vunpack.c.l.s4 1966171168
    %v3697 = vunpack.c.0.s8 %v3696
    %v3698 = vlaneseq
    %v3699 = vshrl.u32 %v3698, 7
    %v3700 = vsub.s32 %v3697, %v3699
    %v3701 = vrot.slane %v3687, %v3700
    %v3702 = vlaneseq
    %v3703 = vshrl.u32 %v3702, 7
    %v3704 = vsub.s32 0, %v3703
    %v3705 = vrot.slane %v3694, %v3704
    %v3706 = vlaneseq
    %v3707 = vshrl.u32 %v3706, 7
    %v3708 = vsub.s32 0, %v3707
    %v3709 = vrot.slane %v3701, %v3708
    %v3712 = vsel %vm845, %v3705, %v3208
    %v3713 = vsel %vm845, %v3709, %v3209
    %3716 = vset.pattern.permute.xlu0 0
    %3717 = vperm.xlu0 %3716, %v3565
    %v3718 = vpop.permute.xlu0 %3717
    %3719 = vset.pattern.permute.xlu0 0
    %3720 = vperm.xlu0 %3719, %v3567
    %v3721 = vpop.permute.xlu0 %3720
    %v3722 = vlaneseq
    %v3723 = vshrl.u32 %v3722, 7
    %v3724 = vsub.s32 %v1642, %v3723
    %v3725 = vrot.slane %v3718, %v3724
    %v3726 = vlaneseq
    %v3727 = vshrl.u32 %v3726, 7
    %v3728 = vsub.s32 %v1642, %v3727
    %v3729 = vrot.slane %v3721, %v3728
    %v3730 = vsel %vm2208, %v3725, %v3725
    %v3731 = vsel %vm2210, %v3725, %v3730
    %v3732 = vsel %vm2212, %v3725, %v3731
    %v3733 = vsel %vm2214, %v3725, %v3732
    %v3734 = vsel %vm2216, %v3725, %v3733
    %v3735 = vsel %vm2218, %v3725, %v3734
    %v3736 = vsel %vm2208, %v3729, %v3729
    %v3737 = vsel %vm2210, %v3729, %v3736
    %v3738 = vsel %vm2212, %v3729, %v3737
    %v3739 = vsel %vm2214, %v3729, %v3738
    %v3740 = vsel %vm2216, %v3729, %v3739
    %v3741 = vsel %vm2218, %v3729, %v3740
    %v3744 = vsel %vm845, %v3735, %v3240
    %v3745 = vsel %vm845, %v3741, %v3241
    %vm3746 = vcmp.eq.s32.totalorder %v1642, 3
    %v3747 = vsel %vm3746, %v3645, %v3243
    %v3750 = vrot.slane %v3624, 7
    %v3751 = vsel %vm408, %v3750, %v3623
    %v3752 = vsel %vm96, %v3751, 0
    %3754 = vmatprep.subr.mxu0 0.0
    %3755 = vmatpush1.msra.mxu0 %v73
    %3756 = vmatprep.subr.mxu0 0.0
    %3757 = vmatpush1.msra.mxu0 %v74
    %3758 = vmatprep.subr.mxu0 0.0
    %3759 = vmatpush1.msra.mxu0 %v75
    %3760 = vmatprep.subr.mxu0 0.0
    %3761 = vmatpush1.msra.mxu0 %v76
    %3762 = vmatprep.subr.mxu0 0.0
    %3763 = vmatpush1.msra.mxu0 0.0
    %3764 = vmatprep.subr.mxu0 0.0
    %3765 = vmatpush1.msra.mxu0 0.0
    %3766 = vmatprep.subr.mxu0 0.0
    %3767 = vmatpush1.msra.mxu0 0.0
    %3768 = vmatprep.subr.mxu0 0.0
    %3769 = vmatpush1.msra.mxu0 0.0
    %3770 = vmatprep.subr.mxu0 0.0
    %3771 = vmatpush1.msra.mxu0 0.0
    %3772 = vmatprep.subr.mxu0 0.0
    %3773 = vmatpush1.msra.mxu0 0.0
    %3774 = vmatprep.subr.mxu0 0.0
    %3775 = vmatpush1.msra.mxu0 0.0
    %3776 = vmatprep.subr.mxu0 0.0
    %3777 = vmatpush1.msra.mxu0 0.0
    %3778 = vmatprep.subr.mxu0 0.0
    %3779 = vmatpush1.msra.mxu0 0.0
    %3780 = vmatprep.subr.mxu0 0.0
    %3781 = vmatpush1.msra.mxu0 0.0
    %3782 = vmatprep.subr.mxu0 0.0
    %3783 = vmatpush1.msra.mxu0 0.0
    %3784 = vmatprep.subr.mxu0 0.0
    %3785 = vmatpush1.msra.mxu0 0.0
    %3786 = vmatprep.subr.mxu0 0.0
    %3787 = vmatpush1.msra.mxu0 0.0
    %3788 = vmatprep.subr.mxu0 0.0
    %3789 = vmatpush1.msra.mxu0 0.0
    %3790 = vmatprep.subr.mxu0 0.0
    %3791 = vmatpush1.msra.mxu0 0.0
    %3792 = vmatprep.subr.mxu0 0.0
    %3793 = vmatpush1.msra.mxu0 0.0
    %3794 = vmatprep.subr.mxu0 0.0
    %3795 = vmatpush1.msra.mxu0 0.0
    %3796 = vmatprep.subr.mxu0 0.0
    %3797 = vmatpush1.msra.mxu0 0.0
    %3798 = vmatprep.subr.mxu0 0.0
    %3799 = vmatpush1.msra.mxu0 0.0
    %3800 = vmatprep.subr.mxu0 0.0
    %3801 = vmatpush1.msra.mxu0 0.0
    %3802 = vmatprep.subr.mxu0 0.0
    %3803 = vmatpush1.msra.mxu0 0.0
    %3804 = vmatprep.subr.mxu0 0.0
    %3805 = vmatpush1.msra.mxu0 0.0
    %3806 = vmatprep.subr.mxu0 0.0
    %3807 = vmatpush1.msra.mxu0 0.0
    %3808 = vmatprep.subr.mxu0 0.0
    %3809 = vmatpush1.msra.mxu0 0.0
    %3810 = vmatprep.subr.mxu0 0.0
    %3811 = vmatpush1.msra.mxu0 0.0
    %3812 = vmatprep.subr.mxu0 0.0
    %3813 = vmatpush1.msra.mxu0 0.0
    %3814 = vmatprep.subr.mxu0 0.0
    %3815 = vmatpush1.msra.mxu0 0.0
    %3816 = vmatprep.subr.mxu0 0.0
    %3817 = vmatpush1.msra.mxu0 0.0
    %3818 = vmatprep.mubr.f32.mxu0 0.0
    %3819 = vmatmul.mubr.f32.gmra.mrb[0].mxu0 %v3752
    %v3820 = vpop.f32.mrb[0].mxu0
    %v3821 = vadd.f32 0.0, %v3820
    %v3822 = vpop.f32.mrb[0].mxu0
    %3823 = vdwg.mxu0
    %v3825 = vrot.slane %v3821, 1
    %v3828 = vadd.f32 %v3672, %v3821
    %v3829 = vadd.f32 %v3678, %v3825
    %v3830 = vadd.f32 %v3828, %v1805
    %v3831 = vadd.f32 %v3829, %v1805
    %v3832 = vsub.f32 0.0, %v3830
    %v3833 = vsub.f32 0.0, %v3831
    %v3834 = vmul.f32 %v3832, 1.442695
    %v3835 = vpow.pop %v3834
    %v3836 = vmul.f32 %v3833, 1.442695
    %v3837 = vpow.pop %v3836
    %v3838 = vadd.f32 %v3835, 1.0
    %v3839 = vadd.f32 %v3837, 1.0
    %v3840 = vrcp.pop %v3838
    %v3841 = vmul.f32 1.0, %v3840
    %v3842 = vrcp.pop %v3839
    %v3843 = vmul.f32 1.0, %v3842
    %v3844 = vtanh.pop %v3830
    %v3845 = vtanh.pop %v3831
    %v3846 = vmul.f32 %v3841, %v3362
    %v3847 = vmul.f32 %v3843, %v3363
    %3850 = vrot.lane.b32.xlu0 %v3844, 64
    %v3851 = vpop.permute.xlu0 %3850
    %3852 = vrot.lane.b32.xlu0 %v3845, 64
    %v3853 = vpop.permute.xlu0 %3852
    %v3856 = vmul.f32 %v3841, %v3851
    %v3857 = vmul.f32 %v3843, %v3853
    %3860 = vrot.lane.b32.xlu0 %v3856, 32
    %v3861 = vpop.permute.xlu0 %3860
    %3862 = vrot.lane.b32.xlu0 %v3857, 32
    %v3863 = vpop.permute.xlu0 %3862
    %v3866 = vadd.f32 %v3846, %v3861
    %v3867 = vadd.f32 %v3847, %v3863
    %v3868 = vtanh.pop %v3866
    %v3869 = vtanh.pop %v3867
    %3872 = vrot.lane.b32.xlu0 %v3868, 64
    %v3873 = vpop.permute.xlu0 %3872
    %3874 = vrot.lane.b32.xlu0 %v3869, 64
    %v3875 = vpop.permute.xlu0 %3874
    %v3878 = vmul.f32 %v3841, %v3873
    %v3879 = vmul.f32 %v3843, %v3875
    %v3882 = vrot.slane %v3879, 7
    %v3883 = vsel %vm408, %v3882, %v3878
    %3884 = vrot.lane.b32.xlu0 %v3883, 32
    %v3885 = vpop.permute.xlu0 %3884
    %v3886 = vsel %vm96, %v3885, 0
    %3888 = vmatprep.subr.mxu0 0.0
    %3889 = vmatpush1.msra.mxu0 %v78
    %3890 = vmatprep.subr.mxu0 0.0
    %3891 = vmatpush1.msra.mxu0 %v79
    %3892 = vmatprep.subr.mxu0 0.0
    %3893 = vmatpush1.msra.mxu0 %v80
    %3894 = vmatprep.subr.mxu0 0.0
    %3895 = vmatpush1.msra.mxu0 %v81
    %3896 = vmatprep.subr.mxu0 0.0
    %3897 = vmatpush1.msra.mxu0 0.0
    %3898 = vmatprep.subr.mxu0 0.0
    %3899 = vmatpush1.msra.mxu0 0.0
    %3900 = vmatprep.subr.mxu0 0.0
    %3901 = vmatpush1.msra.mxu0 0.0
    %3902 = vmatprep.subr.mxu0 0.0
    %3903 = vmatpush1.msra.mxu0 0.0
    %3904 = vmatprep.subr.mxu0 0.0
    %3905 = vmatpush1.msra.mxu0 0.0
    %3906 = vmatprep.subr.mxu0 0.0
    %3907 = vmatpush1.msra.mxu0 0.0
    %3908 = vmatprep.subr.mxu0 0.0
    %3909 = vmatpush1.msra.mxu0 0.0
    %3910 = vmatprep.subr.mxu0 0.0
    %3911 = vmatpush1.msra.mxu0 0.0
    %3912 = vmatprep.subr.mxu0 0.0
    %3913 = vmatpush1.msra.mxu0 0.0
    %3914 = vmatprep.subr.mxu0 0.0
    %3915 = vmatpush1.msra.mxu0 0.0
    %3916 = vmatprep.subr.mxu0 0.0
    %3917 = vmatpush1.msra.mxu0 0.0
    %3918 = vmatprep.subr.mxu0 0.0
    %3919 = vmatpush1.msra.mxu0 0.0
    %3920 = vmatprep.subr.mxu0 0.0
    %3921 = vmatpush1.msra.mxu0 0.0
    %3922 = vmatprep.subr.mxu0 0.0
    %3923 = vmatpush1.msra.mxu0 0.0
    %3924 = vmatprep.subr.mxu0 0.0
    %3925 = vmatpush1.msra.mxu0 0.0
    %3926 = vmatprep.subr.mxu0 0.0
    %3927 = vmatpush1.msra.mxu0 0.0
    %3928 = vmatprep.subr.mxu0 0.0
    %3929 = vmatpush1.msra.mxu0 0.0
    %3930 = vmatprep.subr.mxu0 0.0
    %3931 = vmatpush1.msra.mxu0 0.0
    %3932 = vmatprep.subr.mxu0 0.0
    %3933 = vmatpush1.msra.mxu0 0.0
    %3934 = vmatprep.subr.mxu0 0.0
    %3935 = vmatpush1.msra.mxu0 0.0
    %3936 = vmatprep.subr.mxu0 0.0
    %3937 = vmatpush1.msra.mxu0 0.0
    %3938 = vmatprep.subr.mxu0 0.0
    %3939 = vmatpush1.msra.mxu0 0.0
    %3940 = vmatprep.subr.mxu0 0.0
    %3941 = vmatpush1.msra.mxu0 0.0
    %3942 = vmatprep.subr.mxu0 0.0
    %3943 = vmatpush1.msra.mxu0 0.0
    %3944 = vmatprep.subr.mxu0 0.0
    %3945 = vmatpush1.msra.mxu0 0.0
    %3946 = vmatprep.subr.mxu0 0.0
    %3947 = vmatpush1.msra.mxu0 0.0
    %3948 = vmatprep.subr.mxu0 0.0
    %3949 = vmatpush1.msra.mxu0 0.0
    %3950 = vmatprep.subr.mxu0 0.0
    %3951 = vmatpush1.msra.mxu0 0.0
    %3952 = vmatprep.mubr.f32.mxu0 0.0
    %3953 = vmatmul.mubr.f32.gmra.mrb[0].mxu0 %v3886
    %v3954 = vpop.f32.mrb[0].mxu0
    %v3955 = vadd.f32 0.0, %v3954
    %v3956 = vpop.f32.mrb[0].mxu0
    %3957 = vdwg.mxu0
    %v3958 = vadd.f32 %v3955, %v1917
    %v3961 = vunpack.c.l.s4 1966171168
    %v3962 = vunpack.c.0.s8 %v3961
    %v3963 = vlaneseq
    %v3964 = vshrl.u32 %v3963, 7
    %v3965 = vsub.s32 %v3962, %v3964
    %v3966 = vrot.slane %v3958, %v3965
    %v3967 = vcombine.high %v3966, %v3966
    %v3969 = vunpack.c.l.s4 1966171168
    %v3970 = vunpack.c.0.s8 %v3969
    %v3971 = vlaneseq
    %v3972 = vshrl.u32 %v3971, 7
    %v3973 = vsub.s32 %v3970, %v3972
    %v3974 = vrot.slane %v3966, %v3973
    %v3976 = vunpack.c.l.s4 1966171168
    %v3977 = vunpack.c.0.s8 %v3976
    %v3978 = vlaneseq
    %v3979 = vshrl.u32 %v3978, 7
    %v3980 = vsub.s32 %v3977, %v3979
    %v3981 = vrot.slane %v3967, %v3980
    %v3982 = vlaneseq
    %v3983 = vshrl.u32 %v3982, 7
    %v3984 = vsub.s32 0, %v3983
    %v3985 = vrot.slane %v3974, %v3984
    %v3986 = vlaneseq
    %v3987 = vshrl.u32 %v3986, 7
    %v3988 = vsub.s32 0, %v3987
    %v3989 = vrot.slane %v3981, %v3988
    %v3992 = vadd.f32 %v3985, %v1548
    %v3993 = vadd.f32 %v3989, %v1553
    %v3994 = vtanh.pop %v3992
    %v3995 = vtanh.pop %v3993
    %v3996 = vmul.f32 %v1961, %v3994
    %v3997 = vmul.f32 %v1961, %v3995
    %v3998 = vsel %vm96, %v3996, 0.0
    %3999 = vadd.xlane.f32.xlu0 %v3998
    %v4000 = vpop.xlane.xlu0 %3999
    %v4001 = vsel %vm96, %v3997, 0.0
    %4002 = vadd.xlane.f32.xlu0 %v4001
    %v4003 = vpop.xlane.xlu0 %4002
    %v4006 = vlaneseq
    %v4007 = vshrl.u32 %v4006, 7
    %v4008 = vsub.s32 %v1642, %v4007
    %v4009 = vrot.slane %v4000, %v4008
    %v4010 = vlaneseq
    %v4011 = vshrl.u32 %v4010, 7
    %v4012 = vsub.s32 %v1642, %v4011
    %v4013 = vrot.slane %v4003, %v4012
    %v4014 = vsel %vm408, %v4013, %v4009
    %v4016 = vsel %vm1983, %v4014, -inf
    %4017 = vmax.xlane.f32.xlu0 %v4016
    %v4018 = vpop.xlane.xlu0 %4017
    %v4020 = vlaneseq
    %v4021 = vshrl.u32 %v4020, 7
    %v4022 = vsub.s32 0, %v4021
    %v4023 = vrot.slane %v4018, %v4022
    %v4024 = vlaneseq
    %v4025 = vshrl.u32 %v4024, 7
    %v4026 = vsub.s32 1, %v4025
    %v4027 = vrot.slane %v4018, %v4026
    %v4030 = vsub.f32 %v4000, %v4023
    %v4031 = vsub.f32 %v4003, %v4027
    %v4032 = vmul.f32 %v4030, 1.442695
    %v4033 = vpow.pop %v4032
    %v4034 = vmul.f32 %v4031, 1.442695
    %v4035 = vpow.pop %v4034
    %4038 = vset.pattern.permute.xlu0 0
    %4039 = vperm.xlu0 %4038, %v4033
    %v4040 = vpop.permute.xlu0 %4039
    %4041 = vset.pattern.permute.xlu0 0
    %4042 = vperm.xlu0 %4041, %v4035
    %v4043 = vpop.permute.xlu0 %4042
    %v4044 = vlaneseq
    %v4045 = vshrl.u32 %v4044, 7
    %v4046 = vsub.s32 %v1642, %v4045
    %v4047 = vrot.slane %v4040, %v4046
    %v4048 = vlaneseq
    %v4049 = vshrl.u32 %v4048, 7
    %v4050 = vsub.s32 %v1642, %v4049
    %v4051 = vrot.slane %v4043, %v4050
    %v4052 = vsel %vm408, %v4051, %v4047
    %v4054 = vsel %vm1983, %v4052, 0.0
    %4055 = vadd.xlane.f32.xlu0 %v4054
    %v4056 = vpop.xlane.xlu0 %4055
    %v4058 = vlaneseq
    %v4059 = vshrl.u32 %v4058, 7
    %v4060 = vsub.s32 0, %v4059
    %v4061 = vrot.slane %v4056, %v4060
    %v4062 = vlaneseq
    %v4063 = vshrl.u32 %v4062, 7
    %v4064 = vsub.s32 1, %v4063
    %v4065 = vrot.slane %v4056, %v4064
    %v4068 = vrcp.pop %v4061
    %v4069 = vmul.f32 %v4033, %v4068
    %v4070 = vrcp.pop %v4065
    %v4071 = vmul.f32 %v4035, %v4070
    %vm4072 = vcmp.eq.f32.partialorder %v3650, 0.0
    %v4073 = vsel %vm4072, -inf, %v4014
    %v4074 = vsel %vm1983, %v4073, -inf
    %4075 = vmax.xlane.f32.xlu0 %v4074
    %v4076 = vpop.xlane.xlu0 %4075
    %v4077 = vsub.f32 %v4073, %v4076
    %v4078 = vmul.f32 %v4077, 1.442695
    %v4079 = vpow.pop %v4078
    %v4080 = vsel %vm1983, %v4079, 0.0
    %4081 = vadd.xlane.f32.xlu0 %v4080
    %v4082 = vpop.xlane.xlu0 %4081
    %v4083 = vrcp.pop %v4082
    %v4084 = vmul.f32 %v4079, %v4083
    %v4085 = vlaneseq
    %v4086 = vshrl.u32 %v4085, 7
    %v4087 = vsub.s32 0, %v4086
    %v4088 = vrot.slane %v4084, %v4087
    %4090 = vbcast.lane.b32.xlu0 %v4088, 256
    %v4091 = vpop.permute.xlu0 %4090
    %v4092 = vlaneseq
    %v4093 = vshrl.u32 %v4092, 7
    %v4094 = vsub.s32 1, %v4093
    %v4095 = vrot.slane %v4084, %v4094
    %4097 = vbcast.lane.b32.xlu0 %v4095, 256
    %v4098 = vpop.permute.xlu0 %4097
    %v4099 = vmul.f32 %v4091, %v1633
    %v4100 = vmul.f32 %v4098, %v1638
    %v4101 = vsel %vm96, %v4099, 0.0
    %v4102 = vrot.slane %v4101, 4
    %v4103 = vadd.f32 %v4101, %v4102
    %v4104 = vrot.slane %v4103, 2
    %v4105 = vadd.f32 %v4103, %v4104
    %v4106 = vrot.slane %v4105, 1
    %v4107 = vadd.f32 %v4105, %v4106
    %v4108 = vsel %vm96, %v4100, 0.0
    %v4109 = vrot.slane %v4108, 4
    %v4110 = vadd.f32 %v4108, %v4109
    %v4111 = vrot.slane %v4110, 2
    %v4112 = vadd.f32 %v4110, %v4111
    %v4113 = vrot.slane %v4112, 1
    %v4114 = vadd.f32 %v4112, %v4113
    %v4116 = vrot.slane %v3955, 1
    %4117 = vrot.lane.b32.xlu0 %v3955, 96
    %v4118 = vpop.permute.xlu0 %4117
    %4119 = vrot.lane.b32.xlu0 %v4116, 96
    %v4120 = vpop.permute.xlu0 %4119
    %v4123 = vadd.f32 %v4107, %v4118
    %v4124 = vadd.f32 %v4114, %v4120
    %v4125 = vadd.f32 %v4123, %v2097
    %v4126 = vadd.f32 %v4124, %v2097
    %v4127 = vtanh.pop %v4125
    %v4128 = vtanh.pop %v4126
    %v4129 = vmul.f32 %v4084, %v3650
    %v4130 = vsel %vm1983, %v4129, -inf
    %4131 = vmax.xlane.f32.xlu0 %v4130
    %v4132 = vpop.xlane.xlu0 %4131
    %vm4133 = vcmp.eq.f32.partialorder %v4129, %v4132
    %v4134 = vsel %vm4133, %v1642, 8
    %v4135 = vsel %vm1983, %v4134, 2147483647
    %v4136 = vand.u32 %v4135, 65535
    %v4137 = vshra.s32 %v4135, 16
    %v4138 = vcvt.s32.f32 %v4136
    %v4139 = vcvt.s32.f32 %v4137
    %4140 = vmin.xlane.f32.xlu0 %v4139
    %v4141 = vpop.xlane.xlu0 %4140
    %vm4142 = vcmp.eq.f32.partialorder %v4139, %v4141
    %v4143 = vsel %vm4142, %v4138, inf
    %4144 = vmin.xlane.f32.xlu0 %v4143
    %v4145 = vpop.xlane.xlu0 %4144
    %v4146 = vcvt.f32.s32 %v4145
    %v4147 = vcvt.f32.s32 %v4141
    %v4148 = vshll.u32 %v4147, 16
    %v4149 = vadd.s32 %v4148, %v4146
    %vm4150 = vcmp.eq.s32.totalorder %v1642, %v4149
    %v4151 = vsel %vm4150, 1, 0
    %v4152 = vcvt.s32.f32 %v4151
    %v4153 = vsub.f32 1.0, %v4152
    %v4154 = vmul.f32 %v3650, %v4153
    %v4155 = vlaneseq
    %v4156 = vshrl.u32 %v4155, 7
    %v4157 = vsub.s32 0, %v4156
    %v4158 = vrot.slane %v4152, %v4157
    %4160 = vbcast.lane.b32.xlu0 %v4158, 256
    %v4161 = vpop.permute.xlu0 %4160
    %v4162 = vlaneseq
    %v4163 = vshrl.u32 %v4162, 7
    %v4164 = vsub.s32 1, %v4163
    %v4165 = vrot.slane %v4152, %v4164
    %4167 = vbcast.lane.b32.xlu0 %v4165, 256
    %v4168 = vpop.permute.xlu0 %4167
    %v4169 = vmul.f32 %v4161, %v249
    %v4170 = vmul.f32 %v4168, %v254
    %v4171 = vrot.slane %v4169, 4
    %v4172 = vadd.f32 %v4169, %v4171
    %v4173 = vrot.slane %v4172, 2
    %v4174 = vadd.f32 %v4172, %v4173
    %v4175 = vrot.slane %v4174, 1
    %v4176 = vadd.f32 %v4174, %v4175
    %v4177 = vrot.slane %v4170, 4
    %v4178 = vadd.f32 %v4170, %v4177
    %v4179 = vrot.slane %v4178, 2
    %v4180 = vadd.f32 %v4178, %v4179
    %v4181 = vrot.slane %v4180, 1
    %v4182 = vadd.f32 %v4180, %v4181
    %v4185 = vunpack.c.l.s4 1966171168
    %v4186 = vunpack.c.0.s8 %v4185
    %v4187 = vlaneseq
    %v4188 = vshrl.u32 %v4187, 7
    %v4189 = vsub.s32 %v4186, %v4188
    %v4190 = vrot.slane %v4084, %v4189
    %v4191 = vcombine.high %v4190, %v4190
    %v4193 = vunpack.c.l.s4 1966171168
    %v4194 = vunpack.c.0.s8 %v4193
    %v4195 = vlaneseq
    %v4196 = vshrl.u32 %v4195, 7
    %v4197 = vsub.s32 %v4194, %v4196
    %v4198 = vrot.slane %v4190, %v4197
    %v4200 = vunpack.c.l.s4 1966171168
    %v4201 = vunpack.c.0.s8 %v4200
    %v4202 = vlaneseq
    %v4203 = vshrl.u32 %v4202, 7
    %v4204 = vsub.s32 %v4201, %v4203
    %v4205 = vrot.slane %v4191, %v4204
    %v4206 = vlaneseq
    %v4207 = vshrl.u32 %v4206, 7
    %v4208 = vsub.s32 0, %v4207
    %v4209 = vrot.slane %v4198, %v4208
    %v4210 = vlaneseq
    %v4211 = vshrl.u32 %v4210, 7
    %v4212 = vsub.s32 0, %v4211
    %v4213 = vrot.slane %v4205, %v4212
    %v4216 = vsel %vm996, %v4209, %v3712
    %v4217 = vsel %vm996, %v4213, %v3713
    %4220 = vset.pattern.permute.xlu0 0
    %4221 = vperm.xlu0 %4220, %v4069
    %v4222 = vpop.permute.xlu0 %4221
    %4223 = vset.pattern.permute.xlu0 0
    %4224 = vperm.xlu0 %4223, %v4071
    %v4225 = vpop.permute.xlu0 %4224
    %v4226 = vlaneseq
    %v4227 = vshrl.u32 %v4226, 7
    %v4228 = vsub.s32 %v1642, %v4227
    %v4229 = vrot.slane %v4222, %v4228
    %v4230 = vlaneseq
    %v4231 = vshrl.u32 %v4230, 7
    %v4232 = vsub.s32 %v1642, %v4231
    %v4233 = vrot.slane %v4225, %v4232
    %v4234 = vsel %vm2208, %v4229, %v4229
    %v4235 = vsel %vm2210, %v4229, %v4234
    %v4236 = vsel %vm2212, %v4229, %v4235
    %v4237 = vsel %vm2214, %v4229, %v4236
    %v4238 = vsel %vm2216, %v4229, %v4237
    %v4239 = vsel %vm2218, %v4229, %v4238
    %v4240 = vsel %vm2208, %v4233, %v4233
    %v4241 = vsel %vm2210, %v4233, %v4240
    %v4242 = vsel %vm2212, %v4233, %v4241
    %v4243 = vsel %vm2214, %v4233, %v4242
    %v4244 = vsel %vm2216, %v4233, %v4243
    %v4245 = vsel %vm2218, %v4233, %v4244
    %v4248 = vsel %vm996, %v4239, %v3744
    %v4249 = vsel %vm996, %v4245, %v3745
    %vm4250 = vcmp.eq.s32.totalorder %v1642, 4
    %v4251 = vsel %vm4250, %v4149, %v3747
    %v4254 = vrot.slane %v4128, 7
    %v4255 = vsel %vm408, %v4254, %v4127
    %v4256 = vsel %vm96, %v4255, 0
    %4258 = vmatprep.subr.mxu0 0.0
    %4259 = vmatpush1.msra.mxu0 %v73
    %4260 = vmatprep.subr.mxu0 0.0
    %4261 = vmatpush1.msra.mxu0 %v74
    %4262 = vmatprep.subr.mxu0 0.0
    %4263 = vmatpush1.msra.mxu0 %v75
    %4264 = vmatprep.subr.mxu0 0.0
    %4265 = vmatpush1.msra.mxu0 %v76
    %4266 = vmatprep.subr.mxu0 0.0
    %4267 = vmatpush1.msra.mxu0 0.0
    %4268 = vmatprep.subr.mxu0 0.0
    %4269 = vmatpush1.msra.mxu0 0.0
    %4270 = vmatprep.subr.mxu0 0.0
    %4271 = vmatpush1.msra.mxu0 0.0
    %4272 = vmatprep.subr.mxu0 0.0
    %4273 = vmatpush1.msra.mxu0 0.0
    %4274 = vmatprep.subr.mxu0 0.0
    %4275 = vmatpush1.msra.mxu0 0.0
    %4276 = vmatprep.subr.mxu0 0.0
    %4277 = vmatpush1.msra.mxu0 0.0
    %4278 = vmatprep.subr.mxu0 0.0
    %4279 = vmatpush1.msra.mxu0 0.0
    %4280 = vmatprep.subr.mxu0 0.0
    %4281 = vmatpush1.msra.mxu0 0.0
    %4282 = vmatprep.subr.mxu0 0.0
    %4283 = vmatpush1.msra.mxu0 0.0
    %4284 = vmatprep.subr.mxu0 0.0
    %4285 = vmatpush1.msra.mxu0 0.0
    %4286 = vmatprep.subr.mxu0 0.0
    %4287 = vmatpush1.msra.mxu0 0.0
    %4288 = vmatprep.subr.mxu0 0.0
    %4289 = vmatpush1.msra.mxu0 0.0
    %4290 = vmatprep.subr.mxu0 0.0
    %4291 = vmatpush1.msra.mxu0 0.0
    %4292 = vmatprep.subr.mxu0 0.0
    %4293 = vmatpush1.msra.mxu0 0.0
    %4294 = vmatprep.subr.mxu0 0.0
    %4295 = vmatpush1.msra.mxu0 0.0
    %4296 = vmatprep.subr.mxu0 0.0
    %4297 = vmatpush1.msra.mxu0 0.0
    %4298 = vmatprep.subr.mxu0 0.0
    %4299 = vmatpush1.msra.mxu0 0.0
    %4300 = vmatprep.subr.mxu0 0.0
    %4301 = vmatpush1.msra.mxu0 0.0
    %4302 = vmatprep.subr.mxu0 0.0
    %4303 = vmatpush1.msra.mxu0 0.0
    %4304 = vmatprep.subr.mxu0 0.0
    %4305 = vmatpush1.msra.mxu0 0.0
    %4306 = vmatprep.subr.mxu0 0.0
    %4307 = vmatpush1.msra.mxu0 0.0
    %4308 = vmatprep.subr.mxu0 0.0
    %4309 = vmatpush1.msra.mxu0 0.0
    %4310 = vmatprep.subr.mxu0 0.0
    %4311 = vmatpush1.msra.mxu0 0.0
    %4312 = vmatprep.subr.mxu0 0.0
    %4313 = vmatpush1.msra.mxu0 0.0
    %4314 = vmatprep.subr.mxu0 0.0
    %4315 = vmatpush1.msra.mxu0 0.0
    %4316 = vmatprep.subr.mxu0 0.0
    %4317 = vmatpush1.msra.mxu0 0.0
    %4318 = vmatprep.subr.mxu0 0.0
    %4319 = vmatpush1.msra.mxu0 0.0
    %4320 = vmatprep.subr.mxu0 0.0
    %4321 = vmatpush1.msra.mxu0 0.0
    %4322 = vmatprep.mubr.f32.mxu0 0.0
    %4323 = vmatmul.mubr.f32.gmra.mrb[0].mxu0 %v4256
    %v4324 = vpop.f32.mrb[0].mxu0
    %v4325 = vadd.f32 0.0, %v4324
    %v4326 = vpop.f32.mrb[0].mxu0
    %4327 = vdwg.mxu0
    %v4329 = vrot.slane %v4325, 1
    %v4332 = vadd.f32 %v4176, %v4325
    %v4333 = vadd.f32 %v4182, %v4329
    %v4334 = vadd.f32 %v4332, %v1805
    %v4335 = vadd.f32 %v4333, %v1805
    %v4336 = vsub.f32 0.0, %v4334
    %v4337 = vsub.f32 0.0, %v4335
    %v4338 = vmul.f32 %v4336, 1.442695
    %v4339 = vpow.pop %v4338
    %v4340 = vmul.f32 %v4337, 1.442695
    %v4341 = vpow.pop %v4340
    %v4342 = vadd.f32 %v4339, 1.0
    %v4343 = vadd.f32 %v4341, 1.0
    %v4344 = vrcp.pop %v4342
    %v4345 = vmul.f32 1.0, %v4344
    %v4346 = vrcp.pop %v4343
    %v4347 = vmul.f32 1.0, %v4346
    %v4348 = vtanh.pop %v4334
    %v4349 = vtanh.pop %v4335
    %v4350 = vmul.f32 %v4345, %v3866
    %v4351 = vmul.f32 %v4347, %v3867
    %4354 = vrot.lane.b32.xlu0 %v4348, 64
    %v4355 = vpop.permute.xlu0 %4354
    %4356 = vrot.lane.b32.xlu0 %v4349, 64
    %v4357 = vpop.permute.xlu0 %4356
    %v4360 = vmul.f32 %v4345, %v4355
    %v4361 = vmul.f32 %v4347, %v4357
    %4364 = vrot.lane.b32.xlu0 %v4360, 32
    %v4365 = vpop.permute.xlu0 %4364
    %4366 = vrot.lane.b32.xlu0 %v4361, 32
    %v4367 = vpop.permute.xlu0 %4366
    %v4370 = vadd.f32 %v4350, %v4365
    %v4371 = vadd.f32 %v4351, %v4367
    %v4372 = vtanh.pop %v4370
    %v4373 = vtanh.pop %v4371
    %4376 = vrot.lane.b32.xlu0 %v4372, 64
    %v4377 = vpop.permute.xlu0 %4376
    %4378 = vrot.lane.b32.xlu0 %v4373, 64
    %v4379 = vpop.permute.xlu0 %4378
    %v4382 = vmul.f32 %v4345, %v4377
    %v4383 = vmul.f32 %v4347, %v4379
    %v4386 = vrot.slane %v4383, 7
    %v4387 = vsel %vm408, %v4386, %v4382
    %4388 = vrot.lane.b32.xlu0 %v4387, 32
    %v4389 = vpop.permute.xlu0 %4388
    %v4390 = vsel %vm96, %v4389, 0
    %4392 = vmatprep.subr.mxu0 0.0
    %4393 = vmatpush1.msra.mxu0 %v78
    %4394 = vmatprep.subr.mxu0 0.0
    %4395 = vmatpush1.msra.mxu0 %v79
    %4396 = vmatprep.subr.mxu0 0.0
    %4397 = vmatpush1.msra.mxu0 %v80
    %4398 = vmatprep.subr.mxu0 0.0
    %4399 = vmatpush1.msra.mxu0 %v81
    %4400 = vmatprep.subr.mxu0 0.0
    %4401 = vmatpush1.msra.mxu0 0.0
    %4402 = vmatprep.subr.mxu0 0.0
    %4403 = vmatpush1.msra.mxu0 0.0
    %4404 = vmatprep.subr.mxu0 0.0
    %4405 = vmatpush1.msra.mxu0 0.0
    %4406 = vmatprep.subr.mxu0 0.0
    %4407 = vmatpush1.msra.mxu0 0.0
    %4408 = vmatprep.subr.mxu0 0.0
    %4409 = vmatpush1.msra.mxu0 0.0
    %4410 = vmatprep.subr.mxu0 0.0
    %4411 = vmatpush1.msra.mxu0 0.0
    %4412 = vmatprep.subr.mxu0 0.0
    %4413 = vmatpush1.msra.mxu0 0.0
    %4414 = vmatprep.subr.mxu0 0.0
    %4415 = vmatpush1.msra.mxu0 0.0
    %4416 = vmatprep.subr.mxu0 0.0
    %4417 = vmatpush1.msra.mxu0 0.0
    %4418 = vmatprep.subr.mxu0 0.0
    %4419 = vmatpush1.msra.mxu0 0.0
    %4420 = vmatprep.subr.mxu0 0.0
    %4421 = vmatpush1.msra.mxu0 0.0
    %4422 = vmatprep.subr.mxu0 0.0
    %4423 = vmatpush1.msra.mxu0 0.0
    %4424 = vmatprep.subr.mxu0 0.0
    %4425 = vmatpush1.msra.mxu0 0.0
    %4426 = vmatprep.subr.mxu0 0.0
    %4427 = vmatpush1.msra.mxu0 0.0
    %4428 = vmatprep.subr.mxu0 0.0
    %4429 = vmatpush1.msra.mxu0 0.0
    %4430 = vmatprep.subr.mxu0 0.0
    %4431 = vmatpush1.msra.mxu0 0.0
    %4432 = vmatprep.subr.mxu0 0.0
    %4433 = vmatpush1.msra.mxu0 0.0
    %4434 = vmatprep.subr.mxu0 0.0
    %4435 = vmatpush1.msra.mxu0 0.0
    %4436 = vmatprep.subr.mxu0 0.0
    %4437 = vmatpush1.msra.mxu0 0.0
    %4438 = vmatprep.subr.mxu0 0.0
    %4439 = vmatpush1.msra.mxu0 0.0
    %4440 = vmatprep.subr.mxu0 0.0
    %4441 = vmatpush1.msra.mxu0 0.0
    %4442 = vmatprep.subr.mxu0 0.0
    %4443 = vmatpush1.msra.mxu0 0.0
    %4444 = vmatprep.subr.mxu0 0.0
    %4445 = vmatpush1.msra.mxu0 0.0
    %4446 = vmatprep.subr.mxu0 0.0
    %4447 = vmatpush1.msra.mxu0 0.0
    %4448 = vmatprep.subr.mxu0 0.0
    %4449 = vmatpush1.msra.mxu0 0.0
    %4450 = vmatprep.subr.mxu0 0.0
    %4451 = vmatpush1.msra.mxu0 0.0
    %4452 = vmatprep.subr.mxu0 0.0
    %4453 = vmatpush1.msra.mxu0 0.0
    %4454 = vmatprep.subr.mxu0 0.0
    %4455 = vmatpush1.msra.mxu0 0.0
    %4456 = vmatprep.mubr.f32.mxu0 0.0
    %4457 = vmatmul.mubr.f32.gmra.mrb[0].mxu0 %v4390
    %v4458 = vpop.f32.mrb[0].mxu0
    %v4459 = vadd.f32 0.0, %v4458
    %v4460 = vpop.f32.mrb[0].mxu0
    %4461 = vdwg.mxu0
    %v4462 = vadd.f32 %v4459, %v1917
    %v4465 = vunpack.c.l.s4 1966171168
    %v4466 = vunpack.c.0.s8 %v4465
    %v4467 = vlaneseq
    %v4468 = vshrl.u32 %v4467, 7
    %v4469 = vsub.s32 %v4466, %v4468
    %v4470 = vrot.slane %v4462, %v4469
    %v4471 = vcombine.high %v4470, %v4470
    %v4473 = vunpack.c.l.s4 1966171168
    %v4474 = vunpack.c.0.s8 %v4473
    %v4475 = vlaneseq
    %v4476 = vshrl.u32 %v4475, 7
    %v4477 = vsub.s32 %v4474, %v4476
    %v4478 = vrot.slane %v4470, %v4477
    %v4480 = vunpack.c.l.s4 1966171168
    %v4481 = vunpack.c.0.s8 %v4480
    %v4482 = vlaneseq
    %v4483 = vshrl.u32 %v4482, 7
    %v4484 = vsub.s32 %v4481, %v4483
    %v4485 = vrot.slane %v4471, %v4484
    %v4486 = vlaneseq
    %v4487 = vshrl.u32 %v4486, 7
    %v4488 = vsub.s32 0, %v4487
    %v4489 = vrot.slane %v4478, %v4488
    %v4490 = vlaneseq
    %v4491 = vshrl.u32 %v4490, 7
    %v4492 = vsub.s32 0, %v4491
    %v4493 = vrot.slane %v4485, %v4492
    %v4496 = vadd.f32 %v4489, %v1548
    %v4497 = vadd.f32 %v4493, %v1553
    %v4498 = vtanh.pop %v4496
    %v4499 = vtanh.pop %v4497
    %v4500 = vmul.f32 %v1961, %v4498
    %v4501 = vmul.f32 %v1961, %v4499
    %v4502 = vsel %vm96, %v4500, 0.0
    %4503 = vadd.xlane.f32.xlu0 %v4502
    %v4504 = vpop.xlane.xlu0 %4503
    %v4505 = vsel %vm96, %v4501, 0.0
    %4506 = vadd.xlane.f32.xlu0 %v4505
    %v4507 = vpop.xlane.xlu0 %4506
    %v4510 = vlaneseq
    %v4511 = vshrl.u32 %v4510, 7
    %v4512 = vsub.s32 %v1642, %v4511
    %v4513 = vrot.slane %v4504, %v4512
    %v4514 = vlaneseq
    %v4515 = vshrl.u32 %v4514, 7
    %v4516 = vsub.s32 %v1642, %v4515
    %v4517 = vrot.slane %v4507, %v4516
    %v4518 = vsel %vm408, %v4517, %v4513
    %v4520 = vsel %vm1983, %v4518, -inf
    %4521 = vmax.xlane.f32.xlu0 %v4520
    %v4522 = vpop.xlane.xlu0 %4521
    %v4524 = vlaneseq
    %v4525 = vshrl.u32 %v4524, 7
    %v4526 = vsub.s32 0, %v4525
    %v4527 = vrot.slane %v4522, %v4526
    %v4528 = vlaneseq
    %v4529 = vshrl.u32 %v4528, 7
    %v4530 = vsub.s32 1, %v4529
    %v4531 = vrot.slane %v4522, %v4530
    %v4534 = vsub.f32 %v4504, %v4527
    %v4535 = vsub.f32 %v4507, %v4531
    %v4536 = vmul.f32 %v4534, 1.442695
    %v4537 = vpow.pop %v4536
    %v4538 = vmul.f32 %v4535, 1.442695
    %v4539 = vpow.pop %v4538
    %4542 = vset.pattern.permute.xlu0 0
    %4543 = vperm.xlu0 %4542, %v4537
    %v4544 = vpop.permute.xlu0 %4543
    %4545 = vset.pattern.permute.xlu0 0
    %4546 = vperm.xlu0 %4545, %v4539
    %v4547 = vpop.permute.xlu0 %4546
    %v4548 = vlaneseq
    %v4549 = vshrl.u32 %v4548, 7
    %v4550 = vsub.s32 %v1642, %v4549
    %v4551 = vrot.slane %v4544, %v4550
    %v4552 = vlaneseq
    %v4553 = vshrl.u32 %v4552, 7
    %v4554 = vsub.s32 %v1642, %v4553
    %v4555 = vrot.slane %v4547, %v4554
    %v4556 = vsel %vm408, %v4555, %v4551
    %v4558 = vsel %vm1983, %v4556, 0.0
    %4559 = vadd.xlane.f32.xlu0 %v4558
    %v4560 = vpop.xlane.xlu0 %4559
    %v4562 = vlaneseq
    %v4563 = vshrl.u32 %v4562, 7
    %v4564 = vsub.s32 0, %v4563
    %v4565 = vrot.slane %v4560, %v4564
    %v4566 = vlaneseq
    %v4567 = vshrl.u32 %v4566, 7
    %v4568 = vsub.s32 1, %v4567
    %v4569 = vrot.slane %v4560, %v4568
    %v4572 = vrcp.pop %v4565
    %v4573 = vmul.f32 %v4537, %v4572
    %v4574 = vrcp.pop %v4569
    %v4575 = vmul.f32 %v4539, %v4574
    %vm4576 = vcmp.eq.f32.partialorder %v4154, 0.0
    %v4577 = vsel %vm4576, -inf, %v4518
    %v4578 = vsel %vm1983, %v4577, -inf
    %4579 = vmax.xlane.f32.xlu0 %v4578
    %v4580 = vpop.xlane.xlu0 %4579
    %v4581 = vsub.f32 %v4577, %v4580
    %v4582 = vmul.f32 %v4581, 1.442695
    %v4583 = vpow.pop %v4582
    %v4584 = vsel %vm1983, %v4583, 0.0
    %4585 = vadd.xlane.f32.xlu0 %v4584
    %v4586 = vpop.xlane.xlu0 %4585
    %v4587 = vrcp.pop %v4586
    %v4588 = vmul.f32 %v4583, %v4587
    %v4589 = vlaneseq
    %v4590 = vshrl.u32 %v4589, 7
    %v4591 = vsub.s32 0, %v4590
    %v4592 = vrot.slane %v4588, %v4591
    %4594 = vbcast.lane.b32.xlu0 %v4592, 256
    %v4595 = vpop.permute.xlu0 %4594
    %v4596 = vlaneseq
    %v4597 = vshrl.u32 %v4596, 7
    %v4598 = vsub.s32 1, %v4597
    %v4599 = vrot.slane %v4588, %v4598
    %4601 = vbcast.lane.b32.xlu0 %v4599, 256
    %v4602 = vpop.permute.xlu0 %4601
    %v4603 = vmul.f32 %v4595, %v1633
    %v4604 = vmul.f32 %v4602, %v1638
    %v4605 = vsel %vm96, %v4603, 0.0
    %v4606 = vrot.slane %v4605, 4
    %v4607 = vadd.f32 %v4605, %v4606
    %v4608 = vrot.slane %v4607, 2
    %v4609 = vadd.f32 %v4607, %v4608
    %v4610 = vrot.slane %v4609, 1
    %v4611 = vadd.f32 %v4609, %v4610
    %v4612 = vsel %vm96, %v4604, 0.0
    %v4613 = vrot.slane %v4612, 4
    %v4614 = vadd.f32 %v4612, %v4613
    %v4615 = vrot.slane %v4614, 2
    %v4616 = vadd.f32 %v4614, %v4615
    %v4617 = vrot.slane %v4616, 1
    %v4618 = vadd.f32 %v4616, %v4617
    %v4620 = vrot.slane %v4459, 1
    %4621 = vrot.lane.b32.xlu0 %v4459, 96
    %v4622 = vpop.permute.xlu0 %4621
    %4623 = vrot.lane.b32.xlu0 %v4620, 96
    %v4624 = vpop.permute.xlu0 %4623
    %v4627 = vadd.f32 %v4611, %v4622
    %v4628 = vadd.f32 %v4618, %v4624
    %v4629 = vadd.f32 %v4627, %v2097
    %v4630 = vadd.f32 %v4628, %v2097
    %v4631 = vtanh.pop %v4629
    %v4632 = vtanh.pop %v4630
    %v4633 = vmul.f32 %v4588, %v4154
    %v4634 = vsel %vm1983, %v4633, -inf
    %4635 = vmax.xlane.f32.xlu0 %v4634
    %v4636 = vpop.xlane.xlu0 %4635
    %vm4637 = vcmp.eq.f32.partialorder %v4633, %v4636
    %v4638 = vsel %vm4637, %v1642, 8
    %v4639 = vsel %vm1983, %v4638, 2147483647
    %v4640 = vand.u32 %v4639, 65535
    %v4641 = vshra.s32 %v4639, 16
    %v4642 = vcvt.s32.f32 %v4640
    %v4643 = vcvt.s32.f32 %v4641
    %4644 = vmin.xlane.f32.xlu0 %v4643
    %v4645 = vpop.xlane.xlu0 %4644
    %vm4646 = vcmp.eq.f32.partialorder %v4643, %v4645
    %v4647 = vsel %vm4646, %v4642, inf
    %4648 = vmin.xlane.f32.xlu0 %v4647
    %v4649 = vpop.xlane.xlu0 %4648
    %v4650 = vcvt.f32.s32 %v4649
    %v4651 = vcvt.f32.s32 %v4645
    %v4652 = vshll.u32 %v4651, 16
    %v4653 = vadd.s32 %v4652, %v4650
    %vm4654 = vcmp.eq.s32.totalorder %v1642, %v4653
    %v4655 = vsel %vm4654, 1, 0
    %v4656 = vcvt.s32.f32 %v4655
    %v4657 = vsub.f32 1.0, %v4656
    %v4658 = vmul.f32 %v4154, %v4657
    %v4659 = vlaneseq
    %v4660 = vshrl.u32 %v4659, 7
    %v4661 = vsub.s32 0, %v4660
    %v4662 = vrot.slane %v4656, %v4661
    %4664 = vbcast.lane.b32.xlu0 %v4662, 256
    %v4665 = vpop.permute.xlu0 %4664
    %v4666 = vlaneseq
    %v4667 = vshrl.u32 %v4666, 7
    %v4668 = vsub.s32 1, %v4667
    %v4669 = vrot.slane %v4656, %v4668
    %4671 = vbcast.lane.b32.xlu0 %v4669, 256
    %v4672 = vpop.permute.xlu0 %4671
    %v4673 = vmul.f32 %v4665, %v249
    %v4674 = vmul.f32 %v4672, %v254
    %v4675 = vrot.slane %v4673, 4
    %v4676 = vadd.f32 %v4673, %v4675
    %v4677 = vrot.slane %v4676, 2
    %v4678 = vadd.f32 %v4676, %v4677
    %v4679 = vrot.slane %v4678, 1
    %v4680 = vadd.f32 %v4678, %v4679
    %v4681 = vrot.slane %v4674, 4
    %v4682 = vadd.f32 %v4674, %v4681
    %v4683 = vrot.slane %v4682, 2
    %v4684 = vadd.f32 %v4682, %v4683
    %v4685 = vrot.slane %v4684, 1
    %v4686 = vadd.f32 %v4684, %v4685
    %v4689 = vunpack.c.l.s4 1966171168
    %v4690 = vunpack.c.0.s8 %v4689
    %v4691 = vlaneseq
    %v4692 = vshrl.u32 %v4691, 7
    %v4693 = vsub.s32 %v4690, %v4692
    %v4694 = vrot.slane %v4588, %v4693
    %v4695 = vcombine.high %v4694, %v4694
    %v4697 = vunpack.c.l.s4 1966171168
    %v4698 = vunpack.c.0.s8 %v4697
    %v4699 = vlaneseq
    %v4700 = vshrl.u32 %v4699, 7
    %v4701 = vsub.s32 %v4698, %v4700
    %v4702 = vrot.slane %v4694, %v4701
    %v4704 = vunpack.c.l.s4 1966171168
    %v4705 = vunpack.c.0.s8 %v4704
    %v4706 = vlaneseq
    %v4707 = vshrl.u32 %v4706, 7
    %v4708 = vsub.s32 %v4705, %v4707
    %v4709 = vrot.slane %v4695, %v4708
    %v4710 = vlaneseq
    %v4711 = vshrl.u32 %v4710, 7
    %v4712 = vsub.s32 0, %v4711
    %v4713 = vrot.slane %v4702, %v4712
    %v4714 = vlaneseq
    %v4715 = vshrl.u32 %v4714, 7
    %v4716 = vsub.s32 0, %v4715
    %v4717 = vrot.slane %v4709, %v4716
    %v4720 = vsel %vm1147, %v4713, %v4216
    %v4721 = vsel %vm1147, %v4717, %v4217
    %4724 = vset.pattern.permute.xlu0 0
    %4725 = vperm.xlu0 %4724, %v4573
    %v4726 = vpop.permute.xlu0 %4725
    %4727 = vset.pattern.permute.xlu0 0
    %4728 = vperm.xlu0 %4727, %v4575
    %v4729 = vpop.permute.xlu0 %4728
    %v4730 = vlaneseq
    %v4731 = vshrl.u32 %v4730, 7
    %v4732 = vsub.s32 %v1642, %v4731
    %v4733 = vrot.slane %v4726, %v4732
    %v4734 = vlaneseq
    %v4735 = vshrl.u32 %v4734, 7
    %v4736 = vsub.s32 %v1642, %v4735
    %v4737 = vrot.slane %v4729, %v4736
    %v4738 = vsel %vm2208, %v4733, %v4733
    %v4739 = vsel %vm2210, %v4733, %v4738
    %v4740 = vsel %vm2212, %v4733, %v4739
    %v4741 = vsel %vm2214, %v4733, %v4740
    %v4742 = vsel %vm2216, %v4733, %v4741
    %v4743 = vsel %vm2218, %v4733, %v4742
    %v4744 = vsel %vm2208, %v4737, %v4737
    %v4745 = vsel %vm2210, %v4737, %v4744
    %v4746 = vsel %vm2212, %v4737, %v4745
    %v4747 = vsel %vm2214, %v4737, %v4746
    %v4748 = vsel %vm2216, %v4737, %v4747
    %v4749 = vsel %vm2218, %v4737, %v4748
    %v4752 = vsel %vm1147, %v4743, %v4248
    %v4753 = vsel %vm1147, %v4749, %v4249
    %vm4754 = vcmp.eq.s32.totalorder %v1642, 5
    %v4755 = vsel %vm4754, %v4653, %v4251
    %v4758 = vrot.slane %v4632, 7
    %v4759 = vsel %vm408, %v4758, %v4631
    %v4760 = vsel %vm96, %v4759, 0
    %4762 = vmatprep.subr.mxu0 0.0
    %4763 = vmatpush1.msra.mxu0 %v73
    %4764 = vmatprep.subr.mxu0 0.0
    %4765 = vmatpush1.msra.mxu0 %v74
    %4766 = vmatprep.subr.mxu0 0.0
    %4767 = vmatpush1.msra.mxu0 %v75
    %4768 = vmatprep.subr.mxu0 0.0
    %4769 = vmatpush1.msra.mxu0 %v76
    %4770 = vmatprep.subr.mxu0 0.0
    %4771 = vmatpush1.msra.mxu0 0.0
    %4772 = vmatprep.subr.mxu0 0.0
    %4773 = vmatpush1.msra.mxu0 0.0
    %4774 = vmatprep.subr.mxu0 0.0
    %4775 = vmatpush1.msra.mxu0 0.0
    %4776 = vmatprep.subr.mxu0 0.0
    %4777 = vmatpush1.msra.mxu0 0.0
    %4778 = vmatprep.subr.mxu0 0.0
    %4779 = vmatpush1.msra.mxu0 0.0
    %4780 = vmatprep.subr.mxu0 0.0
    %4781 = vmatpush1.msra.mxu0 0.0
    %4782 = vmatprep.subr.mxu0 0.0
    %4783 = vmatpush1.msra.mxu0 0.0
    %4784 = vmatprep.subr.mxu0 0.0
    %4785 = vmatpush1.msra.mxu0 0.0
    %4786 = vmatprep.subr.mxu0 0.0
    %4787 = vmatpush1.msra.mxu0 0.0
    %4788 = vmatprep.subr.mxu0 0.0
    %4789 = vmatpush1.msra.mxu0 0.0
    %4790 = vmatprep.subr.mxu0 0.0
    %4791 = vmatpush1.msra.mxu0 0.0
    %4792 = vmatprep.subr.mxu0 0.0
    %4793 = vmatpush1.msra.mxu0 0.0
    %4794 = vmatprep.subr.mxu0 0.0
    %4795 = vmatpush1.msra.mxu0 0.0
    %4796 = vmatprep.subr.mxu0 0.0
    %4797 = vmatpush1.msra.mxu0 0.0
    %4798 = vmatprep.subr.mxu0 0.0
    %4799 = vmatpush1.msra.mxu0 0.0
    %4800 = vmatprep.subr.mxu0 0.0
    %4801 = vmatpush1.msra.mxu0 0.0
    %4802 = vmatprep.subr.mxu0 0.0
    %4803 = vmatpush1.msra.mxu0 0.0
    %4804 = vmatprep.subr.mxu0 0.0
    %4805 = vmatpush1.msra.mxu0 0.0
    %4806 = vmatprep.subr.mxu0 0.0
    %4807 = vmatpush1.msra.mxu0 0.0
    %4808 = vmatprep.subr.mxu0 0.0
    %4809 = vmatpush1.msra.mxu0 0.0
    %4810 = vmatprep.subr.mxu0 0.0
    %4811 = vmatpush1.msra.mxu0 0.0
    %4812 = vmatprep.subr.mxu0 0.0
    %4813 = vmatpush1.msra.mxu0 0.0
    %4814 = vmatprep.subr.mxu0 0.0
    %4815 = vmatpush1.msra.mxu0 0.0
    %4816 = vmatprep.subr.mxu0 0.0
    %4817 = vmatpush1.msra.mxu0 0.0
    %4818 = vmatprep.subr.mxu0 0.0
    %4819 = vmatpush1.msra.mxu0 0.0
    %4820 = vmatprep.subr.mxu0 0.0
    %4821 = vmatpush1.msra.mxu0 0.0
    %4822 = vmatprep.subr.mxu0 0.0
    %4823 = vmatpush1.msra.mxu0 0.0
    %4824 = vmatprep.subr.mxu0 0.0
    %4825 = vmatpush1.msra.mxu0 0.0
    %4826 = vmatprep.mubr.f32.mxu0 0.0
    %4827 = vmatmul.mubr.f32.gmra.mrb[0].mxu0 %v4760
    %v4828 = vpop.f32.mrb[0].mxu0
    %v4829 = vadd.f32 0.0, %v4828
    %v4830 = vpop.f32.mrb[0].mxu0
    %4831 = vdwg.mxu0
    %v4833 = vrot.slane %v4829, 1
    %v4836 = vadd.f32 %v4680, %v4829
    %v4837 = vadd.f32 %v4686, %v4833
    %v4838 = vadd.f32 %v4836, %v1805
    %v4839 = vadd.f32 %v4837, %v1805
    %v4840 = vsub.f32 0.0, %v4838
    %v4841 = vsub.f32 0.0, %v4839
    %v4842 = vmul.f32 %v4840, 1.442695
    %v4843 = vpow.pop %v4842
    %v4844 = vmul.f32 %v4841, 1.442695
    %v4845 = vpow.pop %v4844
    %v4846 = vadd.f32 %v4843, 1.0
    %v4847 = vadd.f32 %v4845, 1.0
    %v4848 = vrcp.pop %v4846
    %v4849 = vmul.f32 1.0, %v4848
    %v4850 = vrcp.pop %v4847
    %v4851 = vmul.f32 1.0, %v4850
    %v4852 = vtanh.pop %v4838
    %v4853 = vtanh.pop %v4839
    %v4854 = vmul.f32 %v4849, %v4370
    %v4855 = vmul.f32 %v4851, %v4371
    %4858 = vrot.lane.b32.xlu0 %v4852, 64
    %v4859 = vpop.permute.xlu0 %4858
    %4860 = vrot.lane.b32.xlu0 %v4853, 64
    %v4861 = vpop.permute.xlu0 %4860
    %v4864 = vmul.f32 %v4849, %v4859
    %v4865 = vmul.f32 %v4851, %v4861
    %4868 = vrot.lane.b32.xlu0 %v4864, 32
    %v4869 = vpop.permute.xlu0 %4868
    %4870 = vrot.lane.b32.xlu0 %v4865, 32
    %v4871 = vpop.permute.xlu0 %4870
    %v4874 = vadd.f32 %v4854, %v4869
    %v4875 = vadd.f32 %v4855, %v4871
    %v4876 = vtanh.pop %v4874
    %v4877 = vtanh.pop %v4875
    %4880 = vrot.lane.b32.xlu0 %v4876, 64
    %v4881 = vpop.permute.xlu0 %4880
    %4882 = vrot.lane.b32.xlu0 %v4877, 64
    %v4883 = vpop.permute.xlu0 %4882
    %v4886 = vmul.f32 %v4849, %v4881
    %v4887 = vmul.f32 %v4851, %v4883
    %v4890 = vrot.slane %v4887, 7
    %v4891 = vsel %vm408, %v4890, %v4886
    %4892 = vrot.lane.b32.xlu0 %v4891, 32
    %v4893 = vpop.permute.xlu0 %4892
    %v4894 = vsel %vm96, %v4893, 0
    %4896 = vmatprep.subr.mxu0 0.0
    %4897 = vmatpush1.msra.mxu0 %v78
    %4898 = vmatprep.subr.mxu0 0.0
    %4899 = vmatpush1.msra.mxu0 %v79
    %4900 = vmatprep.subr.mxu0 0.0
    %4901 = vmatpush1.msra.mxu0 %v80
    %4902 = vmatprep.subr.mxu0 0.0
    %4903 = vmatpush1.msra.mxu0 %v81
    %4904 = vmatprep.subr.mxu0 0.0
    %4905 = vmatpush1.msra.mxu0 0.0
    %4906 = vmatprep.subr.mxu0 0.0
    %4907 = vmatpush1.msra.mxu0 0.0
    %4908 = vmatprep.subr.mxu0 0.0
    %4909 = vmatpush1.msra.mxu0 0.0
    %4910 = vmatprep.subr.mxu0 0.0
    %4911 = vmatpush1.msra.mxu0 0.0
    %4912 = vmatprep.subr.mxu0 0.0
    %4913 = vmatpush1.msra.mxu0 0.0
    %4914 = vmatprep.subr.mxu0 0.0
    %4915 = vmatpush1.msra.mxu0 0.0
    %4916 = vmatprep.subr.mxu0 0.0
    %4917 = vmatpush1.msra.mxu0 0.0
    %4918 = vmatprep.subr.mxu0 0.0
    %4919 = vmatpush1.msra.mxu0 0.0
    %4920 = vmatprep.subr.mxu0 0.0
    %4921 = vmatpush1.msra.mxu0 0.0
    %4922 = vmatprep.subr.mxu0 0.0
    %4923 = vmatpush1.msra.mxu0 0.0
    %4924 = vmatprep.subr.mxu0 0.0
    %4925 = vmatpush1.msra.mxu0 0.0
    %4926 = vmatprep.subr.mxu0 0.0
    %4927 = vmatpush1.msra.mxu0 0.0
    %4928 = vmatprep.subr.mxu0 0.0
    %4929 = vmatpush1.msra.mxu0 0.0
    %4930 = vmatprep.subr.mxu0 0.0
    %4931 = vmatpush1.msra.mxu0 0.0
    %4932 = vmatprep.subr.mxu0 0.0
    %4933 = vmatpush1.msra.mxu0 0.0
    %4934 = vmatprep.subr.mxu0 0.0
    %4935 = vmatpush1.msra.mxu0 0.0
    %4936 = vmatprep.subr.mxu0 0.0
    %4937 = vmatpush1.msra.mxu0 0.0
    %4938 = vmatprep.subr.mxu0 0.0
    %4939 = vmatpush1.msra.mxu0 0.0
    %4940 = vmatprep.subr.mxu0 0.0
    %4941 = vmatpush1.msra.mxu0 0.0
    %4942 = vmatprep.subr.mxu0 0.0
    %4943 = vmatpush1.msra.mxu0 0.0
    %4944 = vmatprep.subr.mxu0 0.0
    %4945 = vmatpush1.msra.mxu0 0.0
    %4946 = vmatprep.subr.mxu0 0.0
    %4947 = vmatpush1.msra.mxu0 0.0
    %4948 = vmatprep.subr.mxu0 0.0
    %4949 = vmatpush1.msra.mxu0 0.0
    %4950 = vmatprep.subr.mxu0 0.0
    %4951 = vmatpush1.msra.mxu0 0.0
    %4952 = vmatprep.subr.mxu0 0.0
    %4953 = vmatpush1.msra.mxu0 0.0
    %4954 = vmatprep.subr.mxu0 0.0
    %4955 = vmatpush1.msra.mxu0 0.0
    %4956 = vmatprep.subr.mxu0 0.0
    %4957 = vmatpush1.msra.mxu0 0.0
    %4958 = vmatprep.subr.mxu0 0.0
    %4959 = vmatpush1.msra.mxu0 0.0
    %4960 = vmatprep.mubr.f32.mxu0 0.0
    %4961 = vmatmul.mubr.f32.gmra.mrb[0].mxu0 %v4894
    %v4962 = vpop.f32.mrb[0].mxu0
    %v4963 = vadd.f32 0.0, %v4962
    %v4964 = vpop.f32.mrb[0].mxu0
    %4965 = vdwg.mxu0
    %v4966 = vadd.f32 %v4963, %v1917
    %v4969 = vunpack.c.l.s4 1966171168
    %v4970 = vunpack.c.0.s8 %v4969
    %v4971 = vlaneseq
    %v4972 = vshrl.u32 %v4971, 7
    %v4973 = vsub.s32 %v4970, %v4972
    %v4974 = vrot.slane %v4966, %v4973
    %v4975 = vcombine.high %v4974, %v4974
    %v4977 = vunpack.c.l.s4 1966171168
    %v4978 = vunpack.c.0.s8 %v4977
    %v4979 = vlaneseq
    %v4980 = vshrl.u32 %v4979, 7
    %v4981 = vsub.s32 %v4978, %v4980
    %v4982 = vrot.slane %v4974, %v4981
    %v4984 = vunpack.c.l.s4 1966171168
    %v4985 = vunpack.c.0.s8 %v4984
    %v4986 = vlaneseq
    %v4987 = vshrl.u32 %v4986, 7
    %v4988 = vsub.s32 %v4985, %v4987
    %v4989 = vrot.slane %v4975, %v4988
    %v4990 = vlaneseq
    %v4991 = vshrl.u32 %v4990, 7
    %v4992 = vsub.s32 0, %v4991
    %v4993 = vrot.slane %v4982, %v4992
    %v4994 = vlaneseq
    %v4995 = vshrl.u32 %v4994, 7
    %v4996 = vsub.s32 0, %v4995
    %v4997 = vrot.slane %v4989, %v4996
    %v5000 = vadd.f32 %v4993, %v1548
    %v5001 = vadd.f32 %v4997, %v1553
    %v5002 = vtanh.pop %v5000
    %v5003 = vtanh.pop %v5001
    %v5004 = vmul.f32 %v1961, %v5002
    %v5005 = vmul.f32 %v1961, %v5003
    %v5006 = vsel %vm96, %v5004, 0.0
    %5007 = vadd.xlane.f32.xlu0 %v5006
    %v5008 = vpop.xlane.xlu0 %5007
    %v5009 = vsel %vm96, %v5005, 0.0
    %5010 = vadd.xlane.f32.xlu0 %v5009
    %v5011 = vpop.xlane.xlu0 %5010
    %v5014 = vlaneseq
    %v5015 = vshrl.u32 %v5014, 7
    %v5016 = vsub.s32 %v1642, %v5015
    %v5017 = vrot.slane %v5008, %v5016
    %v5018 = vlaneseq
    %v5019 = vshrl.u32 %v5018, 7
    %v5020 = vsub.s32 %v1642, %v5019
    %v5021 = vrot.slane %v5011, %v5020
    %v5022 = vsel %vm408, %v5021, %v5017
    %v5024 = vsel %vm1983, %v5022, -inf
    %5025 = vmax.xlane.f32.xlu0 %v5024
    %v5026 = vpop.xlane.xlu0 %5025
    %v5028 = vlaneseq
    %v5029 = vshrl.u32 %v5028, 7
    %v5030 = vsub.s32 0, %v5029
    %v5031 = vrot.slane %v5026, %v5030
    %v5032 = vlaneseq
    %v5033 = vshrl.u32 %v5032, 7
    %v5034 = vsub.s32 1, %v5033
    %v5035 = vrot.slane %v5026, %v5034
    %v5038 = vsub.f32 %v5008, %v5031
    %v5039 = vsub.f32 %v5011, %v5035
    %v5040 = vmul.f32 %v5038, 1.442695
    %v5041 = vpow.pop %v5040
    %v5042 = vmul.f32 %v5039, 1.442695
    %v5043 = vpow.pop %v5042
    %5046 = vset.pattern.permute.xlu0 0
    %5047 = vperm.xlu0 %5046, %v5041
    %v5048 = vpop.permute.xlu0 %5047
    %5049 = vset.pattern.permute.xlu0 0
    %5050 = vperm.xlu0 %5049, %v5043
    %v5051 = vpop.permute.xlu0 %5050
    %v5052 = vlaneseq
    %v5053 = vshrl.u32 %v5052, 7
    %v5054 = vsub.s32 %v1642, %v5053
    %v5055 = vrot.slane %v5048, %v5054
    %v5056 = vlaneseq
    %v5057 = vshrl.u32 %v5056, 7
    %v5058 = vsub.s32 %v1642, %v5057
    %v5059 = vrot.slane %v5051, %v5058
    %v5060 = vsel %vm408, %v5059, %v5055
    %v5062 = vsel %vm1983, %v5060, 0.0
    %5063 = vadd.xlane.f32.xlu0 %v5062
    %v5064 = vpop.xlane.xlu0 %5063
    %v5066 = vlaneseq
    %v5067 = vshrl.u32 %v5066, 7
    %v5068 = vsub.s32 0, %v5067
    %v5069 = vrot.slane %v5064, %v5068
    %v5070 = vlaneseq
    %v5071 = vshrl.u32 %v5070, 7
    %v5072 = vsub.s32 1, %v5071
    %v5073 = vrot.slane %v5064, %v5072
    %v5076 = vrcp.pop %v5069
    %v5077 = vmul.f32 %v5041, %v5076
    %v5078 = vrcp.pop %v5073
    %v5079 = vmul.f32 %v5043, %v5078
    %vm5080 = vcmp.eq.f32.partialorder %v4658, 0.0
    %v5081 = vsel %vm5080, -inf, %v5022
    %v5082 = vsel %vm1983, %v5081, -inf
    %5083 = vmax.xlane.f32.xlu0 %v5082
    %v5084 = vpop.xlane.xlu0 %5083
    %v5085 = vsub.f32 %v5081, %v5084
    %v5086 = vmul.f32 %v5085, 1.442695
    %v5087 = vpow.pop %v5086
    %v5088 = vsel %vm1983, %v5087, 0.0
    %5089 = vadd.xlane.f32.xlu0 %v5088
    %v5090 = vpop.xlane.xlu0 %5089
    %v5091 = vrcp.pop %v5090
    %v5092 = vmul.f32 %v5087, %v5091
    %v5093 = vlaneseq
    %v5094 = vshrl.u32 %v5093, 7
    %v5095 = vsub.s32 0, %v5094
    %v5096 = vrot.slane %v5092, %v5095
    %5098 = vbcast.lane.b32.xlu0 %v5096, 256
    %v5099 = vpop.permute.xlu0 %5098
    %v5100 = vlaneseq
    %v5101 = vshrl.u32 %v5100, 7
    %v5102 = vsub.s32 1, %v5101
    %v5103 = vrot.slane %v5092, %v5102
    %5105 = vbcast.lane.b32.xlu0 %v5103, 256
    %v5106 = vpop.permute.xlu0 %5105
    %v5107 = vmul.f32 %v5099, %v1633
    %v5108 = vmul.f32 %v5106, %v1638
    %v5109 = vsel %vm96, %v5107, 0.0
    %v5110 = vrot.slane %v5109, 4
    %v5111 = vadd.f32 %v5109, %v5110
    %v5112 = vrot.slane %v5111, 2
    %v5113 = vadd.f32 %v5111, %v5112
    %v5114 = vrot.slane %v5113, 1
    %v5115 = vadd.f32 %v5113, %v5114
    %v5116 = vsel %vm96, %v5108, 0.0
    %v5117 = vrot.slane %v5116, 4
    %v5118 = vadd.f32 %v5116, %v5117
    %v5119 = vrot.slane %v5118, 2
    %v5120 = vadd.f32 %v5118, %v5119
    %v5121 = vrot.slane %v5120, 1
    %v5122 = vadd.f32 %v5120, %v5121
    %v5124 = vrot.slane %v4963, 1
    %5125 = vrot.lane.b32.xlu0 %v4963, 96
    %v5126 = vpop.permute.xlu0 %5125
    %5127 = vrot.lane.b32.xlu0 %v5124, 96
    %v5128 = vpop.permute.xlu0 %5127
    %v5131 = vadd.f32 %v5115, %v5126
    %v5132 = vadd.f32 %v5122, %v5128
    %v5133 = vadd.f32 %v5131, %v2097
    %v5134 = vadd.f32 %v5132, %v2097
    %v5135 = vtanh.pop %v5133
    %v5136 = vtanh.pop %v5134
    %v5137 = vmul.f32 %v5092, %v4658
    %v5138 = vsel %vm1983, %v5137, -inf
    %5139 = vmax.xlane.f32.xlu0 %v5138
    %v5140 = vpop.xlane.xlu0 %5139
    %vm5141 = vcmp.eq.f32.partialorder %v5137, %v5140
    %v5142 = vsel %vm5141, %v1642, 8
    %v5143 = vsel %vm1983, %v5142, 2147483647
    %v5144 = vand.u32 %v5143, 65535
    %v5145 = vshra.s32 %v5143, 16
    %v5146 = vcvt.s32.f32 %v5144
    %v5147 = vcvt.s32.f32 %v5145
    %5148 = vmin.xlane.f32.xlu0 %v5147
    %v5149 = vpop.xlane.xlu0 %5148
    %vm5150 = vcmp.eq.f32.partialorder %v5147, %v5149
    %v5151 = vsel %vm5150, %v5146, inf
    %5152 = vmin.xlane.f32.xlu0 %v5151
    %v5153 = vpop.xlane.xlu0 %5152
    %v5154 = vcvt.f32.s32 %v5153
    %v5155 = vcvt.f32.s32 %v5149
    %v5156 = vshll.u32 %v5155, 16
    %v5157 = vadd.s32 %v5156, %v5154
    %vm5158 = vcmp.eq.s32.totalorder %v1642, %v5157
    %v5159 = vsel %vm5158, 1, 0
    %v5160 = vcvt.s32.f32 %v5159
    %v5161 = vsub.f32 1.0, %v5160
    %v5162 = vmul.f32 %v4658, %v5161
    %v5163 = vlaneseq
    %v5164 = vshrl.u32 %v5163, 7
    %v5165 = vsub.s32 0, %v5164
    %v5166 = vrot.slane %v5160, %v5165
    %5168 = vbcast.lane.b32.xlu0 %v5166, 256
    %v5169 = vpop.permute.xlu0 %5168
    %v5170 = vlaneseq
    %v5171 = vshrl.u32 %v5170, 7
    %v5172 = vsub.s32 1, %v5171
    %v5173 = vrot.slane %v5160, %v5172
    %5175 = vbcast.lane.b32.xlu0 %v5173, 256
    %v5176 = vpop.permute.xlu0 %5175
    %v5177 = vmul.f32 %v5169, %v249
    %v5178 = vmul.f32 %v5176, %v254
    %v5179 = vrot.slane %v5177, 4
    %v5180 = vadd.f32 %v5177, %v5179
    %v5181 = vrot.slane %v5180, 2
    %v5182 = vadd.f32 %v5180, %v5181
    %v5183 = vrot.slane %v5182, 1
    %v5184 = vadd.f32 %v5182, %v5183
    %v5185 = vrot.slane %v5178, 4
    %v5186 = vadd.f32 %v5178, %v5185
    %v5187 = vrot.slane %v5186, 2
    %v5188 = vadd.f32 %v5186, %v5187
    %v5189 = vrot.slane %v5188, 1
    %v5190 = vadd.f32 %v5188, %v5189
    %v5193 = vunpack.c.l.s4 1966171168
    %v5194 = vunpack.c.0.s8 %v5193
    %v5195 = vlaneseq
    %v5196 = vshrl.u32 %v5195, 7
    %v5197 = vsub.s32 %v5194, %v5196
    %v5198 = vrot.slane %v5092, %v5197
    %v5199 = vcombine.high %v5198, %v5198
    %v5201 = vunpack.c.l.s4 1966171168
    %v5202 = vunpack.c.0.s8 %v5201
    %v5203 = vlaneseq
    %v5204 = vshrl.u32 %v5203, 7
    %v5205 = vsub.s32 %v5202, %v5204
    %v5206 = vrot.slane %v5198, %v5205
    %v5208 = vunpack.c.l.s4 1966171168
    %v5209 = vunpack.c.0.s8 %v5208
    %v5210 = vlaneseq
    %v5211 = vshrl.u32 %v5210, 7
    %v5212 = vsub.s32 %v5209, %v5211
    %v5213 = vrot.slane %v5199, %v5212
    %v5214 = vlaneseq
    %v5215 = vshrl.u32 %v5214, 7
    %v5216 = vsub.s32 0, %v5215
    %v5217 = vrot.slane %v5206, %v5216
    %v5218 = vlaneseq
    %v5219 = vshrl.u32 %v5218, 7
    %v5220 = vsub.s32 0, %v5219
    %v5221 = vrot.slane %v5213, %v5220
    %v5224 = vsel %vm1298, %v5217, %v4720
    %v5225 = vsel %vm1298, %v5221, %v4721
    %5228 = vset.pattern.permute.xlu0 0
    %5229 = vperm.xlu0 %5228, %v5077
    %v5230 = vpop.permute.xlu0 %5229
    %5231 = vset.pattern.permute.xlu0 0
    %5232 = vperm.xlu0 %5231, %v5079
    %v5233 = vpop.permute.xlu0 %5232
    %v5234 = vlaneseq
    %v5235 = vshrl.u32 %v5234, 7
    %v5236 = vsub.s32 %v1642, %v5235
    %v5237 = vrot.slane %v5230, %v5236
    %v5238 = vlaneseq
    %v5239 = vshrl.u32 %v5238, 7
    %v5240 = vsub.s32 %v1642, %v5239
    %v5241 = vrot.slane %v5233, %v5240
    %v5242 = vsel %vm2208, %v5237, %v5237
    %v5243 = vsel %vm2210, %v5237, %v5242
    %v5244 = vsel %vm2212, %v5237, %v5243
    %v5245 = vsel %vm2214, %v5237, %v5244
    %v5246 = vsel %vm2216, %v5237, %v5245
    %v5247 = vsel %vm2218, %v5237, %v5246
    %v5248 = vsel %vm2208, %v5241, %v5241
    %v5249 = vsel %vm2210, %v5241, %v5248
    %v5250 = vsel %vm2212, %v5241, %v5249
    %v5251 = vsel %vm2214, %v5241, %v5250
    %v5252 = vsel %vm2216, %v5241, %v5251
    %v5253 = vsel %vm2218, %v5241, %v5252
    %v5256 = vsel %vm1298, %v5247, %v4752
    %v5257 = vsel %vm1298, %v5253, %v4753
    %vm5258 = vcmp.eq.s32.totalorder %v1642, 6
    %v5259 = vsel %vm5258, %v5157, %v4755
    %v5262 = vrot.slane %v5136, 7
    %v5263 = vsel %vm408, %v5262, %v5135
    %v5264 = vsel %vm96, %v5263, 0
    %5266 = vmatprep.subr.mxu0 0.0
    %5267 = vmatpush1.msra.mxu0 %v73
    %5268 = vmatprep.subr.mxu0 0.0
    %5269 = vmatpush1.msra.mxu0 %v74
    %5270 = vmatprep.subr.mxu0 0.0
    %5271 = vmatpush1.msra.mxu0 %v75
    %5272 = vmatprep.subr.mxu0 0.0
    %5273 = vmatpush1.msra.mxu0 %v76
    %5274 = vmatprep.subr.mxu0 0.0
    %5275 = vmatpush1.msra.mxu0 0.0
    %5276 = vmatprep.subr.mxu0 0.0
    %5277 = vmatpush1.msra.mxu0 0.0
    %5278 = vmatprep.subr.mxu0 0.0
    %5279 = vmatpush1.msra.mxu0 0.0
    %5280 = vmatprep.subr.mxu0 0.0
    %5281 = vmatpush1.msra.mxu0 0.0
    %5282 = vmatprep.subr.mxu0 0.0
    %5283 = vmatpush1.msra.mxu0 0.0
    %5284 = vmatprep.subr.mxu0 0.0
    %5285 = vmatpush1.msra.mxu0 0.0
    %5286 = vmatprep.subr.mxu0 0.0
    %5287 = vmatpush1.msra.mxu0 0.0
    %5288 = vmatprep.subr.mxu0 0.0
    %5289 = vmatpush1.msra.mxu0 0.0
    %5290 = vmatprep.subr.mxu0 0.0
    %5291 = vmatpush1.msra.mxu0 0.0
    %5292 = vmatprep.subr.mxu0 0.0
    %5293 = vmatpush1.msra.mxu0 0.0
    %5294 = vmatprep.subr.mxu0 0.0
    %5295 = vmatpush1.msra.mxu0 0.0
    %5296 = vmatprep.subr.mxu0 0.0
    %5297 = vmatpush1.msra.mxu0 0.0
    %5298 = vmatprep.subr.mxu0 0.0
    %5299 = vmatpush1.msra.mxu0 0.0
    %5300 = vmatprep.subr.mxu0 0.0
    %5301 = vmatpush1.msra.mxu0 0.0
    %5302 = vmatprep.subr.mxu0 0.0
    %5303 = vmatpush1.msra.mxu0 0.0
    %5304 = vmatprep.subr.mxu0 0.0
    %5305 = vmatpush1.msra.mxu0 0.0
    %5306 = vmatprep.subr.mxu0 0.0
    %5307 = vmatpush1.msra.mxu0 0.0
    %5308 = vmatprep.subr.mxu0 0.0
    %5309 = vmatpush1.msra.mxu0 0.0
    %5310 = vmatprep.subr.mxu0 0.0
    %5311 = vmatpush1.msra.mxu0 0.0
    %5312 = vmatprep.subr.mxu0 0.0
    %5313 = vmatpush1.msra.mxu0 0.0
    %5314 = vmatprep.subr.mxu0 0.0
    %5315 = vmatpush1.msra.mxu0 0.0
    %5316 = vmatprep.subr.mxu0 0.0
    %5317 = vmatpush1.msra.mxu0 0.0
    %5318 = vmatprep.subr.mxu0 0.0
    %5319 = vmatpush1.msra.mxu0 0.0
    %5320 = vmatprep.subr.mxu0 0.0
    %5321 = vmatpush1.msra.mxu0 0.0
    %5322 = vmatprep.subr.mxu0 0.0
    %5323 = vmatpush1.msra.mxu0 0.0
    %5324 = vmatprep.subr.mxu0 0.0
    %5325 = vmatpush1.msra.mxu0 0.0
    %5326 = vmatprep.subr.mxu0 0.0
    %5327 = vmatpush1.msra.mxu0 0.0
    %5328 = vmatprep.subr.mxu0 0.0
    %5329 = vmatpush1.msra.mxu0 0.0
    %5330 = vmatprep.mubr.f32.mxu0 0.0
    %5331 = vmatmul.mubr.f32.gmra.mrb[0].mxu0 %v5264
    %v5332 = vpop.f32.mrb[0].mxu0
    %v5333 = vadd.f32 0.0, %v5332
    %v5334 = vpop.f32.mrb[0].mxu0
    %5335 = vdwg.mxu0
    %v5337 = vrot.slane %v5333, 1
    %v5340 = vadd.f32 %v5184, %v5333
    %v5341 = vadd.f32 %v5190, %v5337
    %v5342 = vadd.f32 %v5340, %v1805
    %v5343 = vadd.f32 %v5341, %v1805
    %v5344 = vsub.f32 0.0, %v5342
    %v5345 = vsub.f32 0.0, %v5343
    %v5346 = vmul.f32 %v5344, 1.442695
    %v5347 = vpow.pop %v5346
    %v5348 = vmul.f32 %v5345, 1.442695
    %v5349 = vpow.pop %v5348
    %v5350 = vadd.f32 %v5347, 1.0
    %v5351 = vadd.f32 %v5349, 1.0
    %v5352 = vrcp.pop %v5350
    %v5353 = vmul.f32 1.0, %v5352
    %v5354 = vrcp.pop %v5351
    %v5355 = vmul.f32 1.0, %v5354
    %v5356 = vtanh.pop %v5342
    %v5357 = vtanh.pop %v5343
    %v5358 = vmul.f32 %v5353, %v4874
    %v5359 = vmul.f32 %v5355, %v4875
    %5362 = vrot.lane.b32.xlu0 %v5356, 64
    %v5363 = vpop.permute.xlu0 %5362
    %5364 = vrot.lane.b32.xlu0 %v5357, 64
    %v5365 = vpop.permute.xlu0 %5364
    %v5368 = vmul.f32 %v5353, %v5363
    %v5369 = vmul.f32 %v5355, %v5365
    %5372 = vrot.lane.b32.xlu0 %v5368, 32
    %v5373 = vpop.permute.xlu0 %5372
    %5374 = vrot.lane.b32.xlu0 %v5369, 32
    %v5375 = vpop.permute.xlu0 %5374
    %v5378 = vadd.f32 %v5358, %v5373
    %v5379 = vadd.f32 %v5359, %v5375
    %v5380 = vtanh.pop %v5378
    %v5381 = vtanh.pop %v5379
    %5384 = vrot.lane.b32.xlu0 %v5380, 64
    %v5385 = vpop.permute.xlu0 %5384
    %5386 = vrot.lane.b32.xlu0 %v5381, 64
    %v5387 = vpop.permute.xlu0 %5386
    %v5390 = vmul.f32 %v5353, %v5385
    %v5391 = vmul.f32 %v5355, %v5387
    %v5394 = vrot.slane %v5391, 7
    %v5395 = vsel %vm408, %v5394, %v5390
    %5396 = vrot.lane.b32.xlu0 %v5395, 32
    %v5397 = vpop.permute.xlu0 %5396
    %v5398 = vsel %vm96, %v5397, 0
    %5400 = vmatprep.subr.mxu0 0.0
    %5401 = vmatpush1.msra.mxu0 %v78
    %5402 = vmatprep.subr.mxu0 0.0
    %5403 = vmatpush1.msra.mxu0 %v79
    %5404 = vmatprep.subr.mxu0 0.0
    %5405 = vmatpush1.msra.mxu0 %v80
    %5406 = vmatprep.subr.mxu0 0.0
    %5407 = vmatpush1.msra.mxu0 %v81
    %5408 = vmatprep.subr.mxu0 0.0
    %5409 = vmatpush1.msra.mxu0 0.0
    %5410 = vmatprep.subr.mxu0 0.0
    %5411 = vmatpush1.msra.mxu0 0.0
    %5412 = vmatprep.subr.mxu0 0.0
    %5413 = vmatpush1.msra.mxu0 0.0
    %5414 = vmatprep.subr.mxu0 0.0
    %5415 = vmatpush1.msra.mxu0 0.0
    %5416 = vmatprep.subr.mxu0 0.0
    %5417 = vmatpush1.msra.mxu0 0.0
    %5418 = vmatprep.subr.mxu0 0.0
    %5419 = vmatpush1.msra.mxu0 0.0
    %5420 = vmatprep.subr.mxu0 0.0
    %5421 = vmatpush1.msra.mxu0 0.0
    %5422 = vmatprep.subr.mxu0 0.0
    %5423 = vmatpush1.msra.mxu0 0.0
    %5424 = vmatprep.subr.mxu0 0.0
    %5425 = vmatpush1.msra.mxu0 0.0
    %5426 = vmatprep.subr.mxu0 0.0
    %5427 = vmatpush1.msra.mxu0 0.0
    %5428 = vmatprep.subr.mxu0 0.0
    %5429 = vmatpush1.msra.mxu0 0.0
    %5430 = vmatprep.subr.mxu0 0.0
    %5431 = vmatpush1.msra.mxu0 0.0
    %5432 = vmatprep.subr.mxu0 0.0
    %5433 = vmatpush1.msra.mxu0 0.0
    %5434 = vmatprep.subr.mxu0 0.0
    %5435 = vmatpush1.msra.mxu0 0.0
    %5436 = vmatprep.subr.mxu0 0.0
    %5437 = vmatpush1.msra.mxu0 0.0
    %5438 = vmatprep.subr.mxu0 0.0
    %5439 = vmatpush1.msra.mxu0 0.0
    %5440 = vmatprep.subr.mxu0 0.0
    %5441 = vmatpush1.msra.mxu0 0.0
    %5442 = vmatprep.subr.mxu0 0.0
    %5443 = vmatpush1.msra.mxu0 0.0
    %5444 = vmatprep.subr.mxu0 0.0
    %5445 = vmatpush1.msra.mxu0 0.0
    %5446 = vmatprep.subr.mxu0 0.0
    %5447 = vmatpush1.msra.mxu0 0.0
    %5448 = vmatprep.subr.mxu0 0.0
    %5449 = vmatpush1.msra.mxu0 0.0
    %5450 = vmatprep.subr.mxu0 0.0
    %5451 = vmatpush1.msra.mxu0 0.0
    %5452 = vmatprep.subr.mxu0 0.0
    %5453 = vmatpush1.msra.mxu0 0.0
    %5454 = vmatprep.subr.mxu0 0.0
    %5455 = vmatpush1.msra.mxu0 0.0
    %5456 = vmatprep.subr.mxu0 0.0
    %5457 = vmatpush1.msra.mxu0 0.0
    %5458 = vmatprep.subr.mxu0 0.0
    %5459 = vmatpush1.msra.mxu0 0.0
    %5460 = vmatprep.subr.mxu0 0.0
    %5461 = vmatpush1.msra.mxu0 0.0
    %5462 = vmatprep.subr.mxu0 0.0
    %5463 = vmatpush1.msra.mxu0 0.0
    %5464 = vmatprep.mubr.f32.mxu0 0.0
    %5465 = vmatmul.mubr.f32.gmra.mrb[0].mxu0 %v5398
    %v5466 = vpop.f32.mrb[0].mxu0
    %v5467 = vadd.f32 0.0, %v5466
    %v5468 = vpop.f32.mrb[0].mxu0
    %5469 = vdwg.mxu0
    %v5470 = vadd.f32 %v5467, %v1917
    %v5473 = vunpack.c.l.s4 1966171168
    %v5474 = vunpack.c.0.s8 %v5473
    %v5475 = vlaneseq
    %v5476 = vshrl.u32 %v5475, 7
    %v5477 = vsub.s32 %v5474, %v5476
    %v5478 = vrot.slane %v5470, %v5477
    %v5479 = vcombine.high %v5478, %v5478
    %v5481 = vunpack.c.l.s4 1966171168
    %v5482 = vunpack.c.0.s8 %v5481
    %v5483 = vlaneseq
    %v5484 = vshrl.u32 %v5483, 7
    %v5485 = vsub.s32 %v5482, %v5484
    %v5486 = vrot.slane %v5478, %v5485
    %v5488 = vunpack.c.l.s4 1966171168
    %v5489 = vunpack.c.0.s8 %v5488
    %v5490 = vlaneseq
    %v5491 = vshrl.u32 %v5490, 7
    %v5492 = vsub.s32 %v5489, %v5491
    %v5493 = vrot.slane %v5479, %v5492
    %v5494 = vlaneseq
    %v5495 = vshrl.u32 %v5494, 7
    %v5496 = vsub.s32 0, %v5495
    %v5497 = vrot.slane %v5486, %v5496
    %v5498 = vlaneseq
    %v5499 = vshrl.u32 %v5498, 7
    %v5500 = vsub.s32 0, %v5499
    %v5501 = vrot.slane %v5493, %v5500
    %v5504 = vadd.f32 %v5497, %v1548
    %v5505 = vadd.f32 %v5501, %v1553
    %v5506 = vtanh.pop %v5504
    %v5507 = vtanh.pop %v5505
    %v5508 = vmul.f32 %v1961, %v5506
    %v5509 = vmul.f32 %v1961, %v5507
    %v5510 = vsel %vm96, %v5508, 0.0
    %5511 = vadd.xlane.f32.xlu0 %v5510
    %v5512 = vpop.xlane.xlu0 %5511
    %v5513 = vsel %vm96, %v5509, 0.0
    %5514 = vadd.xlane.f32.xlu0 %v5513
    %v5515 = vpop.xlane.xlu0 %5514
    %v5518 = vlaneseq
    %v5519 = vshrl.u32 %v5518, 7
    %v5520 = vsub.s32 %v1642, %v5519
    %v5521 = vrot.slane %v5512, %v5520
    %v5522 = vlaneseq
    %v5523 = vshrl.u32 %v5522, 7
    %v5524 = vsub.s32 %v1642, %v5523
    %v5525 = vrot.slane %v5515, %v5524
    %v5526 = vsel %vm408, %v5525, %v5521
    %v5528 = vsel %vm1983, %v5526, -inf
    %5529 = vmax.xlane.f32.xlu0 %v5528
    %v5530 = vpop.xlane.xlu0 %5529
    %v5532 = vlaneseq
    %v5533 = vshrl.u32 %v5532, 7
    %v5534 = vsub.s32 0, %v5533
    %v5535 = vrot.slane %v5530, %v5534
    %v5536 = vlaneseq
    %v5537 = vshrl.u32 %v5536, 7
    %v5538 = vsub.s32 1, %v5537
    %v5539 = vrot.slane %v5530, %v5538
    %v5542 = vsub.f32 %v5512, %v5535
    %v5543 = vsub.f32 %v5515, %v5539
    %v5544 = vmul.f32 %v5542, 1.442695
    %v5545 = vpow.pop %v5544
    %v5546 = vmul.f32 %v5543, 1.442695
    %v5547 = vpow.pop %v5546
    %5550 = vset.pattern.permute.xlu0 0
    %5551 = vperm.xlu0 %5550, %v5545
    %v5552 = vpop.permute.xlu0 %5551
    %5553 = vset.pattern.permute.xlu0 0
    %5554 = vperm.xlu0 %5553, %v5547
    %v5555 = vpop.permute.xlu0 %5554
    %v5556 = vlaneseq
    %v5557 = vshrl.u32 %v5556, 7
    %v5558 = vsub.s32 %v1642, %v5557
    %v5559 = vrot.slane %v5552, %v5558
    %v5560 = vlaneseq
    %v5561 = vshrl.u32 %v5560, 7
    %v5562 = vsub.s32 %v1642, %v5561
    %v5563 = vrot.slane %v5555, %v5562
    %v5564 = vsel %vm408, %v5563, %v5559
    %v5566 = vsel %vm1983, %v5564, 0.0
    %5567 = vadd.xlane.f32.xlu0 %v5566
    %v5568 = vpop.xlane.xlu0 %5567
    %v5570 = vlaneseq
    %v5571 = vshrl.u32 %v5570, 7
    %v5572 = vsub.s32 0, %v5571
    %v5573 = vrot.slane %v5568, %v5572
    %v5574 = vlaneseq
    %v5575 = vshrl.u32 %v5574, 7
    %v5576 = vsub.s32 1, %v5575
    %v5577 = vrot.slane %v5568, %v5576
    %v5580 = vrcp.pop %v5573
    %v5581 = vmul.f32 %v5545, %v5580
    %v5582 = vrcp.pop %v5577
    %v5583 = vmul.f32 %v5547, %v5582
    %vm5584 = vcmp.eq.f32.partialorder %v5162, 0.0
    %v5585 = vsel %vm5584, -inf, %v5526
    %v5586 = vsel %vm1983, %v5585, -inf
    %5587 = vmax.xlane.f32.xlu0 %v5586
    %v5588 = vpop.xlane.xlu0 %5587
    %v5589 = vsub.f32 %v5585, %v5588
    %v5590 = vmul.f32 %v5589, 1.442695
    %v5591 = vpow.pop %v5590
    %v5592 = vsel %vm1983, %v5591, 0.0
    %5593 = vadd.xlane.f32.xlu0 %v5592
    %v5594 = vpop.xlane.xlu0 %5593
    %v5595 = vrcp.pop %v5594
    %v5596 = vmul.f32 %v5591, %v5595
    %v5597 = vmul.f32 %v5596, %v5162
    %v5598 = vsel %vm1983, %v5597, -inf
    %5599 = vmax.xlane.f32.xlu0 %v5598
    %v5600 = vpop.xlane.xlu0 %5599
    %vm5601 = vcmp.eq.f32.partialorder %v5597, %v5600
    %v5602 = vsel %vm5601, %v1642, 8
    %v5603 = vsel %vm1983, %v5602, 2147483647
    %v5604 = vand.u32 %v5603, 65535
    %v5605 = vshra.s32 %v5603, 16
    %v5606 = vcvt.s32.f32 %v5604
    %v5607 = vcvt.s32.f32 %v5605
    %5608 = vmin.xlane.f32.xlu0 %v5607
    %v5609 = vpop.xlane.xlu0 %5608
    %vm5610 = vcmp.eq.f32.partialorder %v5607, %v5609
    %v5611 = vsel %vm5610, %v5606, inf
    %5612 = vmin.xlane.f32.xlu0 %v5611
    %v5613 = vpop.xlane.xlu0 %5612
    %v5614 = vcvt.f32.s32 %v5613
    %v5615 = vcvt.f32.s32 %v5609
    %v5616 = vshll.u32 %v5615, 16
    %v5617 = vadd.s32 %v5616, %v5614
    %v5620 = vunpack.c.l.s4 1966171168
    %v5621 = vunpack.c.0.s8 %v5620
    %v5622 = vlaneseq
    %v5623 = vshrl.u32 %v5622, 7
    %v5624 = vsub.s32 %v5621, %v5623
    %v5625 = vrot.slane %v5596, %v5624
    %v5626 = vcombine.high %v5625, %v5625
    %v5628 = vunpack.c.l.s4 1966171168
    %v5629 = vunpack.c.0.s8 %v5628
    %v5630 = vlaneseq
    %v5631 = vshrl.u32 %v5630, 7
    %v5632 = vsub.s32 %v5629, %v5631
    %v5633 = vrot.slane %v5625, %v5632
    %v5635 = vunpack.c.l.s4 1966171168
    %v5636 = vunpack.c.0.s8 %v5635
    %v5637 = vlaneseq
    %v5638 = vshrl.u32 %v5637, 7
    %v5639 = vsub.s32 %v5636, %v5638
    %v5640 = vrot.slane %v5626, %v5639
    %v5641 = vlaneseq
    %v5642 = vshrl.u32 %v5641, 7
    %v5643 = vsub.s32 0, %v5642
    %v5644 = vrot.slane %v5633, %v5643
    %v5645 = vlaneseq
    %v5646 = vshrl.u32 %v5645, 7
    %v5647 = vsub.s32 0, %v5646
    %v5648 = vrot.slane %v5640, %v5647
    %v5651 = vsel %vm1449, %v5644, %v5224
    %v5652 = vsel %vm1449, %v5648, %v5225
    %5655 = vset.pattern.permute.xlu0 0
    %5656 = vperm.xlu0 %5655, %v5581
    %v5657 = vpop.permute.xlu0 %5656
    %5658 = vset.pattern.permute.xlu0 0
    %5659 = vperm.xlu0 %5658, %v5583
    %v5660 = vpop.permute.xlu0 %5659
    %v5661 = vlaneseq
    %v5662 = vshrl.u32 %v5661, 7
    %v5663 = vsub.s32 %v1642, %v5662
    %v5664 = vrot.slane %v5657, %v5663
    %v5665 = vlaneseq
    %v5666 = vshrl.u32 %v5665, 7
    %v5667 = vsub.s32 %v1642, %v5666
    %v5668 = vrot.slane %v5660, %v5667
    %v5669 = vsel %vm2208, %v5664, %v5664
    %v5670 = vsel %vm2210, %v5664, %v5669
    %v5671 = vsel %vm2212, %v5664, %v5670
    %v5672 = vsel %vm2214, %v5664, %v5671
    %v5673 = vsel %vm2216, %v5664, %v5672
    %v5674 = vsel %vm2218, %v5664, %v5673
    %v5675 = vsel %vm2208, %v5668, %v5668
    %v5676 = vsel %vm2210, %v5668, %v5675
    %v5677 = vsel %vm2212, %v5668, %v5676
    %v5678 = vsel %vm2214, %v5668, %v5677
    %v5679 = vsel %vm2216, %v5668, %v5678
    %v5680 = vsel %vm2218, %v5668, %v5679
    %v5683 = vsel %vm1449, %v5674, %v5256
    %v5684 = vsel %vm1449, %v5680, %v5257
    %vm5685 = vcmp.eq.s32.totalorder %v1642, 7
    %v5686 = vsel %vm5685, %v5617, %v5259
    %vm5687 = vcmask 64512
    %5688 = vst.msk [vmem:[#allocation2] sm:$0xff] %vm5687, %v5651
    %5689 = vst.msk [vmem:[#allocation2 + $0x8] sm:$0xff] %vm5687, %v5652
    %5690 = vst.msk [vmem:[#allocation4] sm:$0xff] %vm5687, %v5683
    %5691 = vst.msk [vmem:[#allocation4 + $0x8] sm:$0xff] %vm5687, %v5684
    %5692 = vst.msk [vmem:[#allocation6] sm:$0x3] %vm1983, %v5686
    // Predicated region
    $region74: #{pointer_net_forward.1} parent=1 // pred_check
      _
    $region75: #{pointer_net_forward.1} parent=1 // pred_check_branch
      %5694 = sbr.rel (0) target = $region77
    $region76: #{pointer_net_forward.1} parent=1 // pred_region
      %s5696 = ssub.s32 256, 256
      %5697 = vsyncadd [#allocation3], %s5696
      %s5698 = sshll.u32 [#allocation2], 4
      %s5699 = int_to_ptr.vmem [resolvable:$true] %s5698
      %5704 = dma.vmem_to_hbm [thread:$0]  %s5699, 256, %s18, [#allocation3], 128, 128, 8
    $region77: #{pointer_net_forward.1} parent=1 // pred_fallthru
      _
    // Predicated region
    $region78: #{pointer_net_forward.1} parent=1 // pred_check
      _
    $region79: #{pointer_net_forward.1} parent=1 // pred_check_branch
      %5706 = sbr.rel (0) target = $region81
    $region80: #{pointer_net_forward.1} parent=1 // pred_region
      %s5708 = ssub.s32 256, 256
      %5709 = vsyncadd [#allocation5], %s5708
      %s5710 = sshll.u32 [#allocation4], 4
      %s5711 = int_to_ptr.vmem [resolvable:$true] %s5710
      %5716 = dma.vmem_to_hbm [thread:$0]  %s5711, 256, %s19, [#allocation5], 128, 128, 8
    $region81: #{pointer_net_forward.1} parent=1 // pred_fallthru
      _
    // Predicated region
    $region82: #{pointer_net_forward.1} parent=1 // pred_check
      _
    $region83: #{pointer_net_forward.1} parent=1 // pred_check_branch
      %5718 = sbr.rel (0) target = $region85
    $region84: #{pointer_net_forward.1} parent=1 // pred_region
      %s5720 = ssub.s32 32, 32
      %5721 = vsyncadd [#allocation5], %s5720
      %s5723 = sshll.u32 [#allocation6], 4
      %s5724 = int_to_ptr.vmem [resolvable:$true] %s5723
      %5726 = dma.vmem_to_hbm [thread:$0]  %s5724, 32, %s20, [#allocation5]
    $region85: #{pointer_net_forward.1} parent=1 // pred_fallthru
      _
    // Predicated region
    $region86: #{pointer_net_forward.1} parent=1 // pred_check
      _
    $region87: #{pointer_net_forward.1} parent=1 // pred_check_branch
      %5728 = sbr.rel (0) target = $region89
    $region88: #{pointer_net_forward.1} parent=1 // pred_region
      %5729 = dma.done [#allocation3], 256
    $region89: #{pointer_net_forward.1} parent=1 // pred_fallthru
      _
    // Predicated region
    $region90: #{pointer_net_forward.1} parent=1 // pred_check
      _
    $region91: #{pointer_net_forward.1} parent=1 // pred_check_branch
      %5731 = sbr.rel (0) target = $region93
    $region92: #{pointer_net_forward.1} parent=1 // pred_region
      %5732 = dma.done [#allocation5], 256
    $region93: #{pointer_net_forward.1} parent=1 // pred_fallthru
      _
    // Predicated region
    $region94: #{pointer_net_forward.1} parent=1 // pred_check
      _
    $region95: #{pointer_net_forward.1} parent=1 // pred_check_branch
      %5734 = sbr.rel (0) target = $region97
    $region96: #{pointer_net_forward.1} parent=1 // pred_region
      %5735 = dma.done [#allocation5], 32
    $region97: #{pointer_net_forward.1} parent=1 // pred_fallthru
      _
    %5736 = vsyncpa [#allocation3], 1
    %5737 = vsyncpa [#allocation5], 1

</llo_original>
